<compile_context>
chip_gen: v7x
topology: tpu7x:2x2x1
jax: 0.10.0
libtpu: 0.0.40
codegen_flags: <defaults>
</compile_context>

<pallas_src>
import jax
import jax.numpy as jnp
from jax.experimental import pallas as pl
from jax.experimental.pallas import tpu as pltpu

K = 7          # Conv1d kernel_size
PAD = 3        # Conv1d padding
STRIDE = 2     # Conv1d stride
C1, C2, C3 = 32, 16, 8
CHUNK = 512    # output positions (lanes) per register-resident chunk


def _out_len(l):
    return (l + 2 * PAD - K) // STRIDE + 1


def _round_up(x, m):
    return (x + m - 1) // m * m


def _phase_counts(lout, q):
    """Number of valid outputs in each of q position-phases of a length-lout axis."""
    return [max(0, (lout - 1 - s) // q + 1) for s in range(q)]


def _tap_plan(p, n_out_phases, n_out):
    """Tap schedule for a stride-2 conv whose padded input is stored as p
    position-phases and whose output is emitted as n_out_phases phases.

    Returns (per-output-phase list of (input-phase, offset) per tap,
             per-input-phase required buffer length)."""
    need = [0] * p
    plan = []
    for s in range(n_out_phases):
        taps = []
        for k in range(K):
            idx = STRIDE * s + k
            r, d = idx % p, idx // p
            taps.append((r, d))
            if n_out[s] > 0:
                need[r] = max(need[r], n_out[s] + d)
        plan.append(taps)
    return plan, need


def _producer_map(q):
    """Where output phase s of a layer lands inside the next layer's q-phase
    (padded) input buffers: returns per-s (buffer index, start offset)."""
    return [((s + PAD) % q, (s + PAD) // q) for s in range(q)]


def _zero_regions(q, offsets, written, need):
    """Buffer regions that must hold the conv's zero padding."""
    regions = []
    for s in range(q):
        r, off = offsets[s]
        nd = need[r]
        if nd <= 0:
            continue
        if off > 0:
            regions.append((r, 0, min(off, nd)))
        lo = off + written[s]
        if nd > lo:
            regions.append((r, lo, nd - lo))
    return regions


def _phys_f32_bytes(shape):
    """Physical VMEM bytes of an f32 allocation ((8,128) tile padding included)."""
    shape = tuple(int(d) for d in shape)
    if len(shape) == 1:
        return 4 * 8 * _round_up(shape[0], 128)
    lead = 1
    for d in shape[:-2]:
        lead *= d
    return 4 * lead * _round_up(shape[-2], 8) * _round_up(shape[-1], 128)


def encoder_forward(w, params):
    """w: (B, L, 1) float32 — the tensor the PyTorch forward receives."""
    W1, b1, W2, b2, W3, b3 = params
    B, L, cin = w.shape
    assert cin == 1
    f32 = jnp.float32

    L1 = _out_len(L)
    L2 = _out_len(L1)
    L3 = _out_len(L2)

    # ---------------- polyphase bookkeeping (trace-time Python) -------------
    Lpad8 = _round_up(L, 8)
    Lx8 = Lpad8 // 8

    N1 = _phase_counts(L1, 4)        # conv1 output phase lengths
    N2 = _phase_counts(L2, 2)        # conv2 output phase lengths
    N3 = [L3]                        # conv3 emits the full interleaved output

    c1_taps, x_need = _tap_plan(8, 4, N1)     # conv1 reads the 8 x-phases
    c2_taps, a1_need = _tap_plan(4, 2, N2)    # conv2 reads the 4 a1-phases
    c3_taps, a2_need = _tap_plan(2, 1, N3)    # conv3 reads the 2 a2-phases

    x_dst = _producer_map(8)         # x phase s   -> (xb buffer, offset)
    a1_dst = _producer_map(4)        # conv1 phase -> (a1 buffer, offset)
    a2_dst = _producer_map(2)        # conv2 phase -> (a2 buffer, offset)

    x_written = [Lx8] * 8
    MX = _round_up(max(max(x_need),
                       max(o + wl for (_, o), wl in zip(x_dst, x_written)), 1), 128)
    M1 = _round_up(max(max(a1_need),
                       max(o + N1[s] for s, (_, o) in enumerate(a1_dst)), 1), 128)
    M2 = _round_up(max(max(a2_need),
                       max(o + N2[s] for s, (_, o) in enumerate(a2_dst)), 1), 128)

    x_zero = _zero_regions(8, x_dst, x_written, x_need)
    a1_zero = _zero_regions(4, a1_dst, N1, a1_need)
    a2_zero = _zero_regions(2, a2_dst, N2, a2_need)

    # ---------------- TB selection against real (tile-padded) VMEM ----------
    try:
        info = pltpu.get_tpu_info()
        vmem_cap = int(getattr(info, "vmem_capacity_bytes", 64 * 1024 * 1024))
    except Exception:
        vmem_cap = 64 * 1024 * 1024               # conservative (v7x per-core)
    scratch_budget = max(8 << 20, vmem_cap - (24 << 20))

    def vmem_estimate(tb):
        est = 0
        est += _phys_f32_bytes((8, tb, MX))           # xb phase scratch
        est += _phys_f32_bytes((4, tb, C1, M1))       # a1 phase scratch
        est += _phys_f32_bytes((2, tb, C2, M2))       # a2 phase scratch
        est += 2 * _phys_f32_bytes((8, tb, Lx8))      # double-buffered input block
        est += 2 * _phys_f32_bytes((tb, C3, L3))      # double-buffered output block
        est += 1 << 20                                # weights/biases + slack
        return est

    TB = 1
    for tb in (8, 4, 2, 1):
        if B % tb == 0 and vmem_estimate(tb) <= scratch_budget:
            TB = tb
            break
    nb = B // TB
    vmem_limit = int(max(16 << 20,
                         min(vmem_cap - (8 << 20),
                             max(vmem_estimate(TB) + (8 << 20), 32 << 20))))

    # ---------------- wrapper-side layout plumbing (all in XLA) -------------
    x = w[..., 0].astype(f32)
    if Lpad8 > L:
        x = jnp.pad(x, ((0, 0), (0, Lpad8 - L)))
    # (nb, 8, TB, Lx8): 8 position-phases, positions lane-dense per phase.
    xph = x.reshape(nb, TB, Lx8, 8).transpose(0, 3, 1, 2)

    w1 = W1[:, 0, :].astype(f32)                      # (32, 7)  channel-major taps
    w2 = jnp.transpose(W2, (2, 0, 1)).astype(f32)     # (7, 16, 32): [k] = W2[:, :, k]
    w3 = jnp.transpose(W3, (2, 0, 1)).astype(f32)     # (7, 8, 16)
    b1r = b1.reshape(C1, 1).astype(f32)
    b2r = b2.reshape(C2, 1).astype(f32)
    b3r = b3.reshape(C3, 1).astype(f32)

    def chunks(n):
        c0 = 0
        while c0 < n:
            yield c0, min(CHUNK, n - c0)
            c0 += CHUNK

    # ---------------- the fused kernel ---------------------------------------
    def kernel(x_ref, w1_ref, b1_ref, w2_ref, b2_ref, w3_ref, b3_ref,
               out_ref, xb_ref, a1_ref, a2_ref):
        # stage the 8 input phases into halo-padded VMEM buffers (lane-dense)
        for s in range(8):
            r, off = x_dst[s]
            xb_ref[r, :, off:off + Lx8] = x_ref[s, :, :]
        # only the tiny halo/tail regions are (re)zeroed each step
        for (r, start, length) in x_zero:
            xb_ref[r, :, start:start + length] = jnp.zeros((TB, length), f32)
        for (r, start, length) in a1_zero:
            a1_ref[r, :, :, start:start + length] = jnp.zeros((TB, C1, length), f32)
        for (r, start, length) in a2_zero:
            a2_ref[r, :, :, start:start + length] = jnp.zeros((TB, C2, length), f32)

        w1v = w1_ref[...]          # (32, 7)
        w2v = w2_ref[...]          # (7, 16, 32)
        w3v = w3_ref[...]          # (7, 8, 16)
        b1v = b1_ref[...]          # (32, 1)
        b2v = b2_ref[...]          # (16, 1)
        b3v = b3_ref[...]          # (8, 1)

        # ---- conv1: 1 -> 32, stride 2, emitted as 4 position-phases --------
        for s in range(4):
            ns = N1[s]
            if ns <= 0:
                continue
            dst_r, dst_off = a1_dst[s]
            taps = c1_taps[s]
            for b in range(TB):
                for c0, cn in chunks(ns):
                    acc = jnp.broadcast_to(b1v, (C1, cn))
                    for k in range(K):
                        r, d = taps[k]
                        row = xb_ref[r, b:b + 1, c0 + d:c0 + d + cn]   # (1, cn)
                        acc = acc + w1v[:, k:k + 1] * row              # VPU FMA
                    h = jnp.maximum(acc, 0.0)
                    # TODO(synk): nn.Dropout(p=0.2) is identity in eval mode;
                    # training-mode masking (pltpu.prng_*) intentionally omitted.
                    a1_ref[dst_r, b, :, dst_off + c0:dst_off + c0 + cn] = h

        # ---- conv2: 32 -> 16, stride 2, emitted as 2 position-phases -------
        for s in range(2):
            ns = N2[s]
            if ns <= 0:
                continue
            dst_r, dst_off = a2_dst[s]
            taps = c2_taps[s]
            for b in range(TB):
                for c0, cn in chunks(ns):
                    acc = jnp.broadcast_to(b2v, (C2, cn))
                    for k in range(K):
                        r, d = taps[k]
                        blk = a1_ref[r, b, :, c0 + d:c0 + d + cn]      # (32, cn)
                        acc = acc + jnp.dot(w2v[k], blk,
                                            preferred_element_type=jnp.float32)
                    a2_ref[dst_r, b, :, dst_off + c0:dst_off + c0 + cn] = (
                        jnp.maximum(acc, 0.0))

        # ---- conv3: 16 -> 8, stride 2, final interleaved NCL output --------
        taps = c3_taps[0]
        for b in range(TB):
            for c0, cn in chunks(L3):
                acc = jnp.broadcast_to(b3v, (C3, cn))
                for k in range(K):
                    r, d = taps[k]
                    blk = a2_ref[r, b, :, c0 + d:c0 + d + cn]          # (16, cn)
                    acc = acc + jnp.dot(w3v[k], blk,
                                        preferred_element_type=jnp.float32)
                out_ref[b, :, c0:c0 + cn] = jnp.maximum(acc, 0.0)      # lane-dense

    z = pl.pallas_call(
        kernel,
        out_shape=jax.ShapeDtypeStruct((nb, TB, C3, L3), f32),
        grid=(nb,),
        in_specs=[
            pl.BlockSpec((None, 8, TB, Lx8), lambda i: (i, 0, 0, 0)),  # input phases
            pl.BlockSpec((C1, K), lambda i: (0, 0)),                   # W1 (32,7)
            pl.BlockSpec((C1, 1), lambda i: (0, 0)),                   # b1
            pl.BlockSpec((K, C2, C1), lambda i: (0, 0, 0)),            # W2 per-tap
            pl.BlockSpec((C2, 1), lambda i: (0, 0)),                   # b2
            pl.BlockSpec((K, C3, C2), lambda i: (0, 0, 0)),            # W3 per-tap
            pl.BlockSpec((C3, 1), lambda i: (0, 0)),                   # b3
        ],
        out_specs=pl.BlockSpec((None, TB, C3, L3), lambda i: (i, 0, 0, 0)),
        scratch_shapes=[
            pltpu.VMEM((8, TB, MX), f32),        # padded input phase buffers
            pltpu.VMEM((4, TB, C1, M1), f32),    # conv1 output phase buffers
            pltpu.VMEM((2, TB, C2, M2), f32),    # conv2 output phase buffers
        ],
        compiler_params=pltpu.CompilerParams(
            # TODO(synk): on v7x, pltpu.CORE_PARALLEL on this axis (or
            # pl.core_map over a 2-TensorCore mesh) would shard the batch grid
            # across both cores; kept "parallel" here for portability.
            dimension_semantics=("parallel",),
            vmem_limit_bytes=vmem_limit),
    )(xph, w1, b1r, w2, b2r, w3, b3r)

    # already NCL (B, 8, L3) and lane-dense — just un-block the batch axis
    return z.reshape(B, C3, L3)


def encoder_reference(w, params):
    """Pure-JAX reference mirroring the PyTorch forward (eval mode)."""
    W1, b1, W2, b2, W3, b3 = params
    x = jnp.transpose(w, (0, 2, 1))  # (B, 1, L) — w.permute(0, 2, 1)

    def conv(x, W, b):
        y = jax.lax.conv_general_dilated(
            x, W, window_strides=(STRIDE,), padding=[(PAD, PAD)],
            dimension_numbers=("NCH", "OIH", "NCH"))
        return jax.nn.relu(y + b[None, :, None])

    h = conv(x, W1, b1)   # relu(conv1); dropout is identity in eval
    h = conv(h, W2, b2)   # relu(conv2)
    return conv(h, W3, b3)  # relu(conv3)


def init_params(key):
    ks = jax.random.split(key, 6)

    def u(k, shape, fan_in):
        bound = 1.0 / float(fan_in) ** 0.5
        return jax.random.uniform(k, shape, jnp.float32, -bound, bound)

    W1 = u(ks[0], (C1, 1, K), 1 * K)
    b1 = u(ks[1], (C1,), 1 * K)
    W2 = u(ks[2], (C2, C1, K), C1 * K)
    b2 = u(ks[3], (C2,), C1 * K)
    W3 = u(ks[4], (C3, C2, K), C2 * K)
    b3 = u(ks[5], (C3,), C2 * K)
    return (W1, b1, W2, b2, W3, b3)


if __name__ == "__main__":
    key = jax.random.PRNGKey(0)
    kp, kx = jax.random.split(key)
    params = init_params(kp)

    B, L = 2, 16                                   # input window w: (B, L, 1)
    w = jax.random.normal(kx, (B, L, 1), jnp.float32)

    z = encoder_forward(w, params)
    z = jax.block_until_ready(z)

    z_ref = encoder_reference(w, params)
    L3 = _out_len(_out_len(_out_len(L)))
    assert z.shape == z_ref.shape == (B, C3, L3), z.shape
    assert jnp.allclose(z, z_ref, atol=1e-4, rtol=1e-4), "mismatch vs reference"
    print("KERNEL_OK")
</pallas_src>

<mosaic_0001>
module attributes {stable_mosaic.version = 11 : i64} {
  func.func @kernel(%arg0: i32, %arg1: memref<1x8x2x2xf32, #tpu.memory_space<vmem>>, %arg2: memref<32x7xf32, #tpu.memory_space<vmem>>, %arg3: memref<32x1xf32, #tpu.memory_space<vmem>>, %arg4: memref<7x16x32xf32, #tpu.memory_space<vmem>>, %arg5: memref<16x1xf32, #tpu.memory_space<vmem>>, %arg6: memref<7x8x16xf32, #tpu.memory_space<vmem>>, %arg7: memref<8x1xf32, #tpu.memory_space<vmem>>, %arg8: memref<1x2x8x2xf32, #tpu.memory_space<vmem>>, %arg9: memref<8x2x128xf32, #tpu.memory_space<vmem>>, %arg10: memref<4x2x32x128xf32, #tpu.memory_space<vmem>>, %arg11: memref<2x2x16x128xf32, #tpu.memory_space<vmem>>) attributes {dimension_semantics = [#tpu.dimension_semantics<parallel>], iteration_bounds = array<i64: 1>, scalar_prefetch = 0 : i64, scratch_operands = 3 : i64, tpu.core_type = #tpu.core_type<tc>, window_params = [{transform_indices = @transform_0, window_bounds = array<i64: 1, 8, 2, 2>}, {pipeline_mode = #tpu.pipeline_mode<synchronous>, transform_indices = @transform_1, window_bounds = array<i64: 32, 7>}, {pipeline_mode = #tpu.pipeline_mode<synchronous>, transform_indices = @transform_2, window_bounds = array<i64: 32, 1>}, {pipeline_mode = #tpu.pipeline_mode<synchronous>, transform_indices = @transform_3, window_bounds = array<i64: 7, 16, 32>}, {pipeline_mode = #tpu.pipeline_mode<synchronous>, transform_indices = @transform_4, window_bounds = array<i64: 16, 1>}, {pipeline_mode = #tpu.pipeline_mode<synchronous>, transform_indices = @transform_5, window_bounds = array<i64: 7, 8, 16>}, {pipeline_mode = #tpu.pipeline_mode<synchronous>, transform_indices = @transform_6, window_bounds = array<i64: 8, 1>}, {transform_indices = @transform_7, window_bounds = array<i64: 1, 2, 8, 2>}]} {
    %c0 = arith.constant 0 : index
    %c0_0 = arith.constant 0 : index
    %c0_1 = arith.constant 0 : index
    %c0_2 = arith.constant 0 : index
    %0 = vector.load %arg1[%c0, %c0_0, %c0_1, %c0_2] : memref<1x8x2x2xf32, #tpu.memory_space<vmem>>, vector<1x1x2x2xf32>
    %1 = vector.shape_cast %0 : vector<1x1x2x2xf32> to vector<2x2xf32>
    %c3 = arith.constant 3 : index
    %c0_3 = arith.constant 0 : index
    %c0_4 = arith.constant 0 : index
    %2 = vector.load %arg9[%c3, %c0_3, %c0_4] : memref<8x2x128xf32, #tpu.memory_space<vmem>>, vector<1x2x2xf32>
    %3 = vector.shape_cast %2 : vector<1x2x2xf32> to vector<2x2xf32>
    %4 = vector.shape_cast %1 : vector<2x2xf32> to vector<1x2x2xf32>
    tpu.vector_store %arg9[%c3, %c0_3, %c0_4], %4 {strides = array<i32>} : memref<8x2x128xf32, #tpu.memory_space<vmem>>, vector<1x2x2xf32>,
    %c0_5 = arith.constant 0 : index
    %c1 = arith.constant 1 : index
    %c0_6 = arith.constant 0 : index
    %c0_7 = arith.constant 0 : index
    %5 = vector.load %arg1[%c0_5, %c1, %c0_6, %c0_7] : memref<1x8x2x2xf32, #tpu.memory_space<vmem>>, vector<1x1x2x2xf32>
    %6 = vector.shape_cast %5 : vector<1x1x2x2xf32> to vector<2x2xf32>
    %c4 = arith.constant 4 : index
    %c0_8 = arith.constant 0 : index
    %c0_9 = arith.constant 0 : index
    %7 = vector.load %arg9[%c4, %c0_8, %c0_9] : memref<8x2x128xf32, #tpu.memory_space<vmem>>, vector<1x2x2xf32>
    %8 = vector.shape_cast %7 : vector<1x2x2xf32> to vector<2x2xf32>
    %9 = vector.shape_cast %6 : vector<2x2xf32> to vector<1x2x2xf32>
    tpu.vector_store %arg9[%c4, %c0_8, %c0_9], %9 {strides = array<i32>} : memref<8x2x128xf32, #tpu.memory_space<vmem>>, vector<1x2x2xf32>,
    %c0_10 = arith.constant 0 : index
    %c2 = arith.constant 2 : index
    %c0_11 = arith.constant 0 : index
    %c0_12 = arith.constant 0 : index
    %10 = vector.load %arg1[%c0_10, %c2, %c0_11, %c0_12] : memref<1x8x2x2xf32, #tpu.memory_space<vmem>>, vector<1x1x2x2xf32>
    %11 = vector.shape_cast %10 : vector<1x1x2x2xf32> to vector<2x2xf32>
    %c5 = arith.constant 5 : index
    %c0_13 = arith.constant 0 : index
    %c0_14 = arith.constant 0 : index
    %12 = vector.load %arg9[%c5, %c0_13, %c0_14] : memref<8x2x128xf32, #tpu.memory_space<vmem>>, vector<1x2x2xf32>
    %13 = vector.shape_cast %12 : vector<1x2x2xf32> to vector<2x2xf32>
    %14 = vector.shape_cast %11 : vector<2x2xf32> to vector<1x2x2xf32>
    tpu.vector_store %arg9[%c5, %c0_13, %c0_14], %14 {strides = array<i32>} : memref<8x2x128xf32, #tpu.memory_space<vmem>>, vector<1x2x2xf32>,
    %c0_15 = arith.constant 0 : index
    %c3_16 = arith.constant 3 : index
    %c0_17 = arith.constant 0 : index
    %c0_18 = arith.constant 0 : index
    %15 = vector.load %arg1[%c0_15, %c3_16, %c0_17, %c0_18] : memref<1x8x2x2xf32, #tpu.memory_space<vmem>>, vector<1x1x2x2xf32>
    %16 = vector.shape_cast %15 : vector<1x1x2x2xf32> to vector<2x2xf32>
    %c6 = arith.constant 6 : index
    %c0_19 = arith.constant 0 : index
    %c0_20 = arith.constant 0 : index
    %17 = vector.load %arg9[%c6, %c0_19, %c0_20] : memref<8x2x128xf32, #tpu.memory_space<vmem>>, vector<1x2x2xf32>
    %18 = vector.shape_cast %17 : vector<1x2x2xf32> to vector<2x2xf32>
    %19 = vector.shape_cast %16 : vector<2x2xf32> to vector<1x2x2xf32>
    tpu.vector_store %arg9[%c6, %c0_19, %c0_20], %19 {strides = array<i32>} : memref<8x2x128xf32, #tpu.memory_space<vmem>>, vector<1x2x2xf32>,
    %c0_21 = arith.constant 0 : index
    %c4_22 = arith.constant 4 : index
    %c0_23 = arith.constant 0 : index
    %c0_24 = arith.constant 0 : index
    %20 = vector.load %arg1[%c0_21, %c4_22, %c0_23, %c0_24] : memref<1x8x2x2xf32, #tpu.memory_space<vmem>>, vector<1x1x2x2xf32>
    %21 = vector.shape_cast %20 : vector<1x1x2x2xf32> to vector<2x2xf32>
    %c7 = arith.constant 7 : index
    %c0_25 = arith.constant 0 : index
    %c0_26 = arith.constant 0 : index
    %22 = vector.load %arg9[%c7, %c0_25, %c0_26] : memref<8x2x128xf32, #tpu.memory_space<vmem>>, vector<1x2x2xf32>
    %23 = vector.shape_cast %22 : vector<1x2x2xf32> to vector<2x2xf32>
    %24 = vector.shape_cast %21 : vector<2x2xf32> to vector<1x2x2xf32>
    tpu.vector_store %arg9[%c7, %c0_25, %c0_26], %24 {strides = array<i32>} : memref<8x2x128xf32, #tpu.memory_space<vmem>>, vector<1x2x2xf32>,
    %c0_27 = arith.constant 0 : index
    %c5_28 = arith.constant 5 : index
    %c0_29 = arith.constant 0 : index
    %c0_30 = arith.constant 0 : index
    %25 = vector.load %arg1[%c0_27, %c5_28, %c0_29, %c0_30] : memref<1x8x2x2xf32, #tpu.memory_space<vmem>>, vector<1x1x2x2xf32>
    %26 = vector.shape_cast %25 : vector<1x1x2x2xf32> to vector<2x2xf32>
    %c0_31 = arith.constant 0 : index
    %c0_32 = arith.constant 0 : index
    %c1_33 = arith.constant 1 : index
    %27 = vector.load %arg9[%c0_31, %c0_32, %c1_33] : memref<8x2x128xf32, #tpu.memory_space<vmem>>, vector<1x2x2xf32>
    %28 = vector.shape_cast %27 : vector<1x2x2xf32> to vector<2x2xf32>
    %29 = vector.shape_cast %26 : vector<2x2xf32> to vector<1x2x2xf32>
    tpu.vector_store %arg9[%c0_31, %c0_32, %c1_33], %29 {strides = array<i32>} : memref<8x2x128xf32, #tpu.memory_space<vmem>>, vector<1x2x2xf32>,
    %c0_34 = arith.constant 0 : index
    %c6_35 = arith.constant 6 : index
    %c0_36 = arith.constant 0 : index
    %c0_37 = arith.constant 0 : index
    %30 = vector.load %arg1[%c0_34, %c6_35, %c0_36, %c0_37] : memref<1x8x2x2xf32, #tpu.memory_space<vmem>>, vector<1x1x2x2xf32>
    %31 = vector.shape_cast %30 : vector<1x1x2x2xf32> to vector<2x2xf32>
    %c1_38 = arith.constant 1 : index
    %c0_39 = arith.constant 0 : index
    %c1_40 = arith.constant 1 : index
    %32 = vector.load %arg9[%c1_38, %c0_39, %c1_40] : memref<8x2x128xf32, #tpu.memory_space<vmem>>, vector<1x2x2xf32>
    %33 = vector.shape_cast %32 : vector<1x2x2xf32> to vector<2x2xf32>
    %34 = vector.shape_cast %31 : vector<2x2xf32> to vector<1x2x2xf32>
    tpu.vector_store %arg9[%c1_38, %c0_39, %c1_40], %34 {strides = array<i32>} : memref<8x2x128xf32, #tpu.memory_space<vmem>>, vector<1x2x2xf32>,
    %c0_41 = arith.constant 0 : index
    %c7_42 = arith.constant 7 : index
    %c0_43 = arith.constant 0 : index
    %c0_44 = arith.constant 0 : index
    %35 = vector.load %arg1[%c0_41, %c7_42, %c0_43, %c0_44] : memref<1x8x2x2xf32, #tpu.memory_space<vmem>>, vector<1x1x2x2xf32>
    %36 = vector.shape_cast %35 : vector<1x1x2x2xf32> to vector<2x2xf32>
    %c2_45 = arith.constant 2 : index
    %c0_46 = arith.constant 0 : index
    %c1_47 = arith.constant 1 : index
    %37 = vector.load %arg9[%c2_45, %c0_46, %c1_47] : memref<8x2x128xf32, #tpu.memory_space<vmem>>, vector<1x2x2xf32>
    %38 = vector.shape_cast %37 : vector<1x2x2xf32> to vector<2x2xf32>
    %39 = vector.shape_cast %36 : vector<2x2xf32> to vector<1x2x2xf32>
    tpu.vector_store %arg9[%c2_45, %c0_46, %c1_47], %39 {strides = array<i32>} : memref<8x2x128xf32, #tpu.memory_space<vmem>>, vector<1x2x2xf32>,
    %cst = arith.constant 0.000000e+00 : f32
    %40 = vector.broadcast %cst : f32 to vector<2x1xf32>
    %c3_48 = arith.constant 3 : index
    %c0_49 = arith.constant 0 : index
    %c2_50 = arith.constant 2 : index
    %41 = vector.load %arg9[%c3_48, %c0_49, %c2_50] : memref<8x2x128xf32, #tpu.memory_space<vmem>>, vector<1x2x1xf32>
    %42 = vector.shape_cast %41 : vector<1x2x1xf32> to vector<2x1xf32>
    %43 = vector.shape_cast %40 : vector<2x1xf32> to vector<1x2x1xf32>
    tpu.vector_store %arg9[%c3_48, %c0_49, %c2_50], %43 {strides = array<i32>} : memref<8x2x128xf32, #tpu.memory_space<vmem>>, vector<1x2x1xf32>,
    %cst_51 = arith.constant 0.000000e+00 : f32
    %44 = vector.broadcast %cst_51 : f32 to vector<2x1xf32>
    %c4_52 = arith.constant 4 : index
    %c0_53 = arith.constant 0 : index
    %c2_54 = arith.constant 2 : index
    %45 = vector.load %arg9[%c4_52, %c0_53, %c2_54] : memref<8x2x128xf32, #tpu.memory_space<vmem>>, vector<1x2x1xf32>
    %46 = vector.shape_cast %45 : vector<1x2x1xf32> to vector<2x1xf32>
    %47 = vector.shape_cast %44 : vector<2x1xf32> to vector<1x2x1xf32>
    tpu.vector_store %arg9[%c4_52, %c0_53, %c2_54], %47 {strides = array<i32>} : memref<8x2x128xf32, #tpu.memory_space<vmem>>, vector<1x2x1xf32>,
    %cst_55 = arith.constant 0.000000e+00 : f32
    %48 = vector.broadcast %cst_55 : f32 to vector<2x1xf32>
    %c0_56 = arith.constant 0 : index
    %c0_57 = arith.constant 0 : index
    %c0_58 = arith.constant 0 : index
    %49 = vector.load %arg9[%c0_56, %c0_57, %c0_58] : memref<8x2x128xf32, #tpu.memory_space<vmem>>, vector<1x2x1xf32>
    %50 = vector.shape_cast %49 : vector<1x2x1xf32> to vector<2x1xf32>
    %51 = vector.shape_cast %48 : vector<2x1xf32> to vector<1x2x1xf32>
    tpu.vector_store %arg9[%c0_56, %c0_57, %c0_58], %51 {strides = array<i32>} : memref<8x2x128xf32, #tpu.memory_space<vmem>>, vector<1x2x1xf32>,
    %cst_59 = arith.constant 0.000000e+00 : f32
    %52 = vector.broadcast %cst_59 : f32 to vector<2x1xf32>
    %c1_60 = arith.constant 1 : index
    %c0_61 = arith.constant 0 : index
    %c0_62 = arith.constant 0 : index
    %53 = vector.load %arg9[%c1_60, %c0_61, %c0_62] : memref<8x2x128xf32, #tpu.memory_space<vmem>>, vector<1x2x1xf32>
    %54 = vector.shape_cast %53 : vector<1x2x1xf32> to vector<2x1xf32>
    %55 = vector.shape_cast %52 : vector<2x1xf32> to vector<1x2x1xf32>
    tpu.vector_store %arg9[%c1_60, %c0_61, %c0_62], %55 {strides = array<i32>} : memref<8x2x128xf32, #tpu.memory_space<vmem>>, vector<1x2x1xf32>,
    %cst_63 = arith.constant 0.000000e+00 : f32
    %56 = vector.broadcast %cst_63 : f32 to vector<2x1xf32>
    %c2_64 = arith.constant 2 : index
    %c0_65 = arith.constant 0 : index
    %c0_66 = arith.constant 0 : index
    %57 = vector.load %arg9[%c2_64, %c0_65, %c0_66] : memref<8x2x128xf32, #tpu.memory_space<vmem>>, vector<1x2x1xf32>
    %58 = vector.shape_cast %57 : vector<1x2x1xf32> to vector<2x1xf32>
    %59 = vector.shape_cast %56 : vector<2x1xf32> to vector<1x2x1xf32>
    tpu.vector_store %arg9[%c2_64, %c0_65, %c0_66], %59 {strides = array<i32>} : memref<8x2x128xf32, #tpu.memory_space<vmem>>, vector<1x2x1xf32>,
    %cst_67 = arith.constant 0.000000e+00 : f32
    %60 = vector.broadcast %cst_67 : f32 to vector<2x32x1xf32>
    %c3_68 = arith.constant 3 : index
    %c0_69 = arith.constant 0 : index
    %c0_70 = arith.constant 0 : index
    %c2_71 = arith.constant 2 : index
    %61 = vector.load %arg10[%c3_68, %c0_69, %c0_70, %c2_71] : memref<4x2x32x128xf32, #tpu.memory_space<vmem>>, vector<1x2x32x1xf32>
    %62 = vector.shape_cast %61 : vector<1x2x32x1xf32> to vector<2x32x1xf32>
    %63 = vector.shape_cast %60 : vector<2x32x1xf32> to vector<1x2x32x1xf32>
    tpu.vector_store %arg10[%c3_68, %c0_69, %c0_70, %c2_71], %63 {strides = array<i32>} : memref<4x2x32x128xf32, #tpu.memory_space<vmem>>, vector<1x2x32x1xf32>,
    %cst_72 = arith.constant 0.000000e+00 : f32
    %64 = vector.broadcast %cst_72 : f32 to vector<2x32x1xf32>
    %c0_73 = arith.constant 0 : index
    %c0_74 = arith.constant 0 : index
    %c0_75 = arith.constant 0 : index
    %c0_76 = arith.constant 0 : index
    %65 = vector.load %arg10[%c0_73, %c0_74, %c0_75, %c0_76] : memref<4x2x32x128xf32, #tpu.memory_space<vmem>>, vector<1x2x32x1xf32>
    %66 = vector.shape_cast %65 : vector<1x2x32x1xf32> to vector<2x32x1xf32>
    %67 = vector.shape_cast %64 : vector<2x32x1xf32> to vector<1x2x32x1xf32>
    tpu.vector_store %arg10[%c0_73, %c0_74, %c0_75, %c0_76], %67 {strides = array<i32>} : memref<4x2x32x128xf32, #tpu.memory_space<vmem>>, vector<1x2x32x1xf32>,
    %cst_77 = arith.constant 0.000000e+00 : f32
    %68 = vector.broadcast %cst_77 : f32 to vector<2x32x1xf32>
    %c0_78 = arith.constant 0 : index
    %c0_79 = arith.constant 0 : index
    %c0_80 = arith.constant 0 : index
    %c3_81 = arith.constant 3 : index
    %69 = vector.load %arg10[%c0_78, %c0_79, %c0_80, %c3_81] : memref<4x2x32x128xf32, #tpu.memory_space<vmem>>, vector<1x2x32x1xf32>
    %70 = vector.shape_cast %69 : vector<1x2x32x1xf32> to vector<2x32x1xf32>
    %71 = vector.shape_cast %68 : vector<2x32x1xf32> to vector<1x2x32x1xf32>
    tpu.vector_store %arg10[%c0_78, %c0_79, %c0_80, %c3_81], %71 {strides = array<i32>} : memref<4x2x32x128xf32, #tpu.memory_space<vmem>>, vector<1x2x32x1xf32>,
    %cst_82 = arith.constant 0.000000e+00 : f32
    %72 = vector.broadcast %cst_82 : f32 to vector<2x32x1xf32>
    %c1_83 = arith.constant 1 : index
    %c0_84 = arith.constant 0 : index
    %c0_85 = arith.constant 0 : index
    %c0_86 = arith.constant 0 : index
    %73 = vector.load %arg10[%c1_83, %c0_84, %c0_85, %c0_86] : memref<4x2x32x128xf32, #tpu.memory_space<vmem>>, vector<1x2x32x1xf32>
    %74 = vector.shape_cast %73 : vector<1x2x32x1xf32> to vector<2x32x1xf32>
    %75 = vector.shape_cast %72 : vector<2x32x1xf32> to vector<1x2x32x1xf32>
    tpu.vector_store %arg10[%c1_83, %c0_84, %c0_85, %c0_86], %75 {strides = array<i32>} : memref<4x2x32x128xf32, #tpu.memory_space<vmem>>, vector<1x2x32x1xf32>,
    %cst_87 = arith.constant 0.000000e+00 : f32
    %76 = vector.broadcast %cst_87 : f32 to vector<2x32x1xf32>
    %c2_88 = arith.constant 2 : index
    %c0_89 = arith.constant 0 : index
    %c0_90 = arith.constant 0 : index
    %c0_91 = arith.constant 0 : index
    %77 = vector.load %arg10[%c2_88, %c0_89, %c0_90, %c0_91] : memref<4x2x32x128xf32, #tpu.memory_space<vmem>>, vector<1x2x32x1xf32>
    %78 = vector.shape_cast %77 : vector<1x2x32x1xf32> to vector<2x32x1xf32>
    %79 = vector.shape_cast %76 : vector<2x32x1xf32> to vector<1x2x32x1xf32>
    tpu.vector_store %arg10[%c2_88, %c0_89, %c0_90, %c0_91], %79 {strides = array<i32>} : memref<4x2x32x128xf32, #tpu.memory_space<vmem>>, vector<1x2x32x1xf32>,
    %cst_92 = arith.constant 0.000000e+00 : f32
    %80 = vector.broadcast %cst_92 : f32 to vector<2x16x1xf32>
    %c1_93 = arith.constant 1 : index
    %c0_94 = arith.constant 0 : index
    %c0_95 = arith.constant 0 : index
    %c0_96 = arith.constant 0 : index
    %81 = vector.load %arg11[%c1_93, %c0_94, %c0_95, %c0_96] : memref<2x2x16x128xf32, #tpu.memory_space<vmem>>, vector<1x2x16x1xf32>
    %82 = vector.shape_cast %81 : vector<1x2x16x1xf32> to vector<2x16x1xf32>
    %83 = vector.shape_cast %80 : vector<2x16x1xf32> to vector<1x2x16x1xf32>
    tpu.vector_store %arg11[%c1_93, %c0_94, %c0_95, %c0_96], %83 {strides = array<i32>} : memref<2x2x16x128xf32, #tpu.memory_space<vmem>>, vector<1x2x16x1xf32>,
    %cst_97 = arith.constant 0.000000e+00 : f32
    %84 = vector.broadcast %cst_97 : f32 to vector<2x16x1xf32>
    %c1_98 = arith.constant 1 : index
    %c0_99 = arith.constant 0 : index
    %c0_100 = arith.constant 0 : index
    %c3_101 = arith.constant 3 : index
    %85 = vector.load %arg11[%c1_98, %c0_99, %c0_100, %c3_101] : memref<2x2x16x128xf32, #tpu.memory_space<vmem>>, vector<1x2x16x1xf32>
    %86 = vector.shape_cast %85 : vector<1x2x16x1xf32> to vector<2x16x1xf32>
    %87 = vector.shape_cast %84 : vector<2x16x1xf32> to vector<1x2x16x1xf32>
    tpu.vector_store %arg11[%c1_98, %c0_99, %c0_100, %c3_101], %87 {strides = array<i32>} : memref<2x2x16x128xf32, #tpu.memory_space<vmem>>, vector<1x2x16x1xf32>,
    %cst_102 = arith.constant 0.000000e+00 : f32
    %88 = vector.broadcast %cst_102 : f32 to vector<2x16x2xf32>
    %c0_103 = arith.constant 0 : index
    %c0_104 = arith.constant 0 : index
    %c0_105 = arith.constant 0 : index
    %c0_106 = arith.constant 0 : index
    %89 = vector.load %arg11[%c0_103, %c0_104, %c0_105, %c0_106] : memref<2x2x16x128xf32, #tpu.memory_space<vmem>>, vector<1x2x16x2xf32>
    %90 = vector.shape_cast %89 : vector<1x2x16x2xf32> to vector<2x16x2xf32>
    %91 = vector.shape_cast %88 : vector<2x16x2xf32> to vector<1x2x16x2xf32>
    tpu.vector_store %arg11[%c0_103, %c0_104, %c0_105, %c0_106], %91 {strides = array<i32>} : memref<2x2x16x128xf32, #tpu.memory_space<vmem>>, vector<1x2x16x2xf32>,
    %cst_107 = arith.constant 0.000000e+00 : f32
    %92 = vector.broadcast %cst_107 : f32 to vector<2x16x1xf32>
    %c0_108 = arith.constant 0 : index
    %c0_109 = arith.constant 0 : index
    %c0_110 = arith.constant 0 : index
    %c4_111 = arith.constant 4 : index
    %93 = vector.load %arg11[%c0_108, %c0_109, %c0_110, %c4_111] : memref<2x2x16x128xf32, #tpu.memory_space<vmem>>, vector<1x2x16x1xf32>
    %94 = vector.shape_cast %93 : vector<1x2x16x1xf32> to vector<2x16x1xf32>
    %95 = vector.shape_cast %92 : vector<2x16x1xf32> to vector<1x2x16x1xf32>
    tpu.vector_store %arg11[%c0_108, %c0_109, %c0_110, %c4_111], %95 {strides = array<i32>} : memref<2x2x16x128xf32, #tpu.memory_space<vmem>>, vector<1x2x16x1xf32>,
    %c0_112 = arith.constant 0 : index
    %c0_113 = arith.constant 0 : index
    %96 = vector.load %arg2[%c0_112, %c0_113] : memref<32x7xf32, #tpu.memory_space<vmem>>, vector<32x7xf32>
    %c0_114 = arith.constant 0 : index
    %c0_115 = arith.constant 0 : index
    %c0_116 = arith.constant 0 : index
    %97 = vector.load %arg4[%c0_114, %c0_115, %c0_116] : memref<7x16x32xf32, #tpu.memory_space<vmem>>, vector<7x16x32xf32>
    %c0_117 = arith.constant 0 : index
    %c0_118 = arith.constant 0 : index
    %c0_119 = arith.constant 0 : index
    %98 = vector.load %arg6[%c0_117, %c0_118, %c0_119] : memref<7x8x16xf32, #tpu.memory_space<vmem>>, vector<7x8x16xf32>
    %c0_120 = arith.constant 0 : index
    %c0_121 = arith.constant 0 : index
    %99 = vector.load %arg3[%c0_120, %c0_121] : memref<32x1xf32, #tpu.memory_space<vmem>>, vector<32x1xf32>
    %c0_122 = arith.constant 0 : index
    %c0_123 = arith.constant 0 : index
    %100 = vector.load %arg5[%c0_122, %c0_123] : memref<16x1xf32, #tpu.memory_space<vmem>>, vector<16x1xf32>
    %c0_124 = arith.constant 0 : index
    %c0_125 = arith.constant 0 : index
    %101 = vector.load %arg7[%c0_124, %c0_125] : memref<8x1xf32, #tpu.memory_space<vmem>>, vector<8x1xf32>
    %102 = vector.shape_cast %99 : vector<32x1xf32> to vector<32x1xf32>
    %103 = vector.broadcast %102 : vector<32x1xf32> to vector<32x2xf32>
    %c0_126 = arith.constant 0 : index
    %c0_127 = arith.constant 0 : index
    %c0_128 = arith.constant 0 : index
    %104 = vector.load %arg9[%c0_126, %c0_127, %c0_128] : memref<8x2x128xf32, #tpu.memory_space<vmem>>, vector<1x1x2xf32>
    %105 = vector.shape_cast %104 : vector<1x1x2xf32> to vector<1x2xf32>
    %106 = vector.extract_strided_slice %96 {offsets = [0, 0], sizes = [32, 1], strides = [1, 1]} : vector<32x7xf32> to vector<32x1xf32>
    %107 = vector.broadcast %106 : vector<32x1xf32> to vector<32x2xf32>
    %108 = vector.broadcast %105 : vector<1x2xf32> to vector<32x2xf32>
    %109 = arith.mulf %107, %108 : vector<32x2xf32>
    %110 = arith.addf %103, %109 : vector<32x2xf32>
    %c1_129 = arith.constant 1 : index
    %c0_130 = arith.constant 0 : index
    %c0_131 = arith.constant 0 : index
    %111 = vector.load %arg9[%c1_129, %c0_130, %c0_131] : memref<8x2x128xf32, #tpu.memory_space<vmem>>, vector<1x1x2xf32>
    %112 = vector.shape_cast %111 : vector<1x1x2xf32> to vector<1x2xf32>
    %113 = vector.extract_strided_slice %96 {offsets = [0, 1], sizes = [32, 1], strides = [1, 1]} : vector<32x7xf32> to vector<32x1xf32>
    %114 = vector.broadcast %113 : vector<32x1xf32> to vector<32x2xf32>
    %115 = vector.broadcast %112 : vector<1x2xf32> to vector<32x2xf32>
    %116 = arith.mulf %114, %115 : vector<32x2xf32>
    %117 = arith.addf %110, %116 : vector<32x2xf32>
    %c2_132 = arith.constant 2 : index
    %c0_133 = arith.constant 0 : index
    %c0_134 = arith.constant 0 : index
    %118 = vector.load %arg9[%c2_132, %c0_133, %c0_134] : memref<8x2x128xf32, #tpu.memory_space<vmem>>, vector<1x1x2xf32>
    %119 = vector.shape_cast %118 : vector<1x1x2xf32> to vector<1x2xf32>
    %120 = vector.extract_strided_slice %96 {offsets = [0, 2], sizes = [32, 1], strides = [1, 1]} : vector<32x7xf32> to vector<32x1xf32>
    %121 = vector.broadcast %120 : vector<32x1xf32> to vector<32x2xf32>
    %122 = vector.broadcast %119 : vector<1x2xf32> to vector<32x2xf32>
    %123 = arith.mulf %121, %122 : vector<32x2xf32>
    %124 = arith.addf %117, %123 : vector<32x2xf32>
    %c3_135 = arith.constant 3 : index
    %c0_136 = arith.constant 0 : index
    %c0_137 = arith.constant 0 : index
    %125 = vector.load %arg9[%c3_135, %c0_136, %c0_137] : memref<8x2x128xf32, #tpu.memory_space<vmem>>, vector<1x1x2xf32>
    %126 = vector.shape_cast %125 : vector<1x1x2xf32> to vector<1x2xf32>
    %127 = vector.extract_strided_slice %96 {offsets = [0, 3], sizes = [32, 1], strides = [1, 1]} : vector<32x7xf32> to vector<32x1xf32>
    %128 = vector.broadcast %127 : vector<32x1xf32> to vector<32x2xf32>
    %129 = vector.broadcast %126 : vector<1x2xf32> to vector<32x2xf32>
    %130 = arith.mulf %128, %129 : vector<32x2xf32>
    %131 = arith.addf %124, %130 : vector<32x2xf32>
    %c4_138 = arith.constant 4 : index
    %c0_139 = arith.constant 0 : index
    %c0_140 = arith.constant 0 : index
    %132 = vector.load %arg9[%c4_138, %c0_139, %c0_140] : memref<8x2x128xf32, #tpu.memory_space<vmem>>, vector<1x1x2xf32>
    %133 = vector.shape_cast %132 : vector<1x1x2xf32> to vector<1x2xf32>
    %134 = vector.extract_strided_slice %96 {offsets = [0, 4], sizes = [32, 1], strides = [1, 1]} : vector<32x7xf32> to vector<32x1xf32>
    %135 = vector.broadcast %134 : vector<32x1xf32> to vector<32x2xf32>
    %136 = vector.broadcast %133 : vector<1x2xf32> to vector<32x2xf32>
    %137 = arith.mulf %135, %136 : vector<32x2xf32>
    %138 = arith.addf %131, %137 : vector<32x2xf32>
    %c5_141 = arith.constant 5 : index
    %c0_142 = arith.constant 0 : index
    %c0_143 = arith.constant 0 : index
    %139 = vector.load %arg9[%c5_141, %c0_142, %c0_143] : memref<8x2x128xf32, #tpu.memory_space<vmem>>, vector<1x1x2xf32>
    %140 = vector.shape_cast %139 : vector<1x1x2xf32> to vector<1x2xf32>
    %141 = vector.extract_strided_slice %96 {offsets = [0, 5], sizes = [32, 1], strides = [1, 1]} : vector<32x7xf32> to vector<32x1xf32>
    %142 = vector.broadcast %141 : vector<32x1xf32> to vector<32x2xf32>
    %143 = vector.broadcast %140 : vector<1x2xf32> to vector<32x2xf32>
    %144 = arith.mulf %142, %143 : vector<32x2xf32>
    %145 = arith.addf %138, %144 : vector<32x2xf32>
    %c6_144 = arith.constant 6 : index
    %c0_145 = arith.constant 0 : index
    %c0_146 = arith.constant 0 : index
    %146 = vector.load %arg9[%c6_144, %c0_145, %c0_146] : memref<8x2x128xf32, #tpu.memory_space<vmem>>, vector<1x1x2xf32>
    %147 = vector.shape_cast %146 : vector<1x1x2xf32> to vector<1x2xf32>
    %148 = vector.extract_strided_slice %96 {offsets = [0, 6], sizes = [32, 1], strides = [1, 1]} : vector<32x7xf32> to vector<32x1xf32>
    %149 = vector.broadcast %148 : vector<32x1xf32> to vector<32x2xf32>
    %150 = vector.broadcast %147 : vector<1x2xf32> to vector<32x2xf32>
    %151 = arith.mulf %149, %150 : vector<32x2xf32>
    %152 = arith.addf %145, %151 : vector<32x2xf32>
    %cst_147 = arith.constant 0.000000e+00 : f32
    %153 = vector.broadcast %cst_147 : f32 to vector<32x2xf32>
    %154 = arith.maximumf %152, %153 : vector<32x2xf32>
    %c3_148 = arith.constant 3 : index
    %c0_149 = arith.constant 0 : index
    %c0_150 = arith.constant 0 : index
    %c0_151 = arith.constant 0 : index
    %155 = vector.load %arg10[%c3_148, %c0_149, %c0_150, %c0_151] : memref<4x2x32x128xf32, #tpu.memory_space<vmem>>, vector<1x1x32x2xf32>
    %156 = vector.shape_cast %155 : vector<1x1x32x2xf32> to vector<32x2xf32>
    %157 = vector.shape_cast %154 : vector<32x2xf32> to vector<1x1x32x2xf32>
    tpu.vector_store %arg10[%c3_148, %c0_149, %c0_150, %c0_151], %157 {strides = array<i32>} : memref<4x2x32x128xf32, #tpu.memory_space<vmem>>, vector<1x1x32x2xf32>,
    %158 = vector.shape_cast %99 : vector<32x1xf32> to vector<32x1xf32>
    %159 = vector.broadcast %158 : vector<32x1xf32> to vector<32x2xf32>
    %c0_152 = arith.constant 0 : index
    %c1_153 = arith.constant 1 : index
    %c0_154 = arith.constant 0 : index
    %160 = vector.load %arg9[%c0_152, %c1_153, %c0_154] : memref<8x2x128xf32, #tpu.memory_space<vmem>>, vector<1x1x2xf32>
    %161 = vector.shape_cast %160 : vector<1x1x2xf32> to vector<1x2xf32>
    %162 = vector.extract_strided_slice %96 {offsets = [0, 0], sizes = [32, 1], strides = [1, 1]} : vector<32x7xf32> to vector<32x1xf32>
    %163 = vector.broadcast %162 : vector<32x1xf32> to vector<32x2xf32>
    %164 = vector.broadcast %161 : vector<1x2xf32> to vector<32x2xf32>
    %165 = arith.mulf %163, %164 : vector<32x2xf32>
    %166 = arith.addf %159, %165 : vector<32x2xf32>
    %c1_155 = arith.constant 1 : index
    %c1_156 = arith.constant 1 : index
    %c0_157 = arith.constant 0 : index
    %167 = vector.load %arg9[%c1_155, %c1_156, %c0_157] : memref<8x2x128xf32, #tpu.memory_space<vmem>>, vector<1x1x2xf32>
    %168 = vector.shape_cast %167 : vector<1x1x2xf32> to vector<1x2xf32>
    %169 = vector.extract_strided_slice %96 {offsets = [0, 1], sizes = [32, 1], strides = [1, 1]} : vector<32x7xf32> to vector<32x1xf32>
    %170 = vector.broadcast %169 : vector<32x1xf32> to vector<32x2xf32>
    %171 = vector.broadcast %168 : vector<1x2xf32> to vector<32x2xf32>
    %172 = arith.mulf %170, %171 : vector<32x2xf32>
    %173 = arith.addf %166, %172 : vector<32x2xf32>
    %c2_158 = arith.constant 2 : index
    %c1_159 = arith.constant 1 : index
    %c0_160 = arith.constant 0 : index
    %174 = vector.load %arg9[%c2_158, %c1_159, %c0_160] : memref<8x2x128xf32, #tpu.memory_space<vmem>>, vector<1x1x2xf32>
    %175 = vector.shape_cast %174 : vector<1x1x2xf32> to vector<1x2xf32>
    %176 = vector.extract_strided_slice %96 {offsets = [0, 2], sizes = [32, 1], strides = [1, 1]} : vector<32x7xf32> to vector<32x1xf32>
    %177 = vector.broadcast %176 : vector<32x1xf32> to vector<32x2xf32>
    %178 = vector.broadcast %175 : vector<1x2xf32> to vector<32x2xf32>
    %179 = arith.mulf %177, %178 : vector<32x2xf32>
    %180 = arith.addf %173, %179 : vector<32x2xf32>
    %c3_161 = arith.constant 3 : index
    %c1_162 = arith.constant 1 : index
    %c0_163 = arith.constant 0 : index
    %181 = vector.load %arg9[%c3_161, %c1_162, %c0_163] : memref<8x2x128xf32, #tpu.memory_space<vmem>>, vector<1x1x2xf32>
    %182 = vector.shape_cast %181 : vector<1x1x2xf32> to vector<1x2xf32>
    %183 = vector.extract_strided_slice %96 {offsets = [0, 3], sizes = [32, 1], strides = [1, 1]} : vector<32x7xf32> to vector<32x1xf32>
    %184 = vector.broadcast %183 : vector<32x1xf32> to vector<32x2xf32>
    %185 = vector.broadcast %182 : vector<1x2xf32> to vector<32x2xf32>
    %186 = arith.mulf %184, %185 : vector<32x2xf32>
    %187 = arith.addf %180, %186 : vector<32x2xf32>
    %c4_164 = arith.constant 4 : index
    %c1_165 = arith.constant 1 : index
    %c0_166 = arith.constant 0 : index
    %188 = vector.load %arg9[%c4_164, %c1_165, %c0_166] : memref<8x2x128xf32, #tpu.memory_space<vmem>>, vector<1x1x2xf32>
    %189 = vector.shape_cast %188 : vector<1x1x2xf32> to vector<1x2xf32>
    %190 = vector.extract_strided_slice %96 {offsets = [0, 4], sizes = [32, 1], strides = [1, 1]} : vector<32x7xf32> to vector<32x1xf32>
    %191 = vector.broadcast %190 : vector<32x1xf32> to vector<32x2xf32>
    %192 = vector.broadcast %189 : vector<1x2xf32> to vector<32x2xf32>
    %193 = arith.mulf %191, %192 : vector<32x2xf32>
    %194 = arith.addf %187, %193 : vector<32x2xf32>
    %c5_167 = arith.constant 5 : index
    %c1_168 = arith.constant 1 : index
    %c0_169 = arith.constant 0 : index
    %195 = vector.load %arg9[%c5_167, %c1_168, %c0_169] : memref<8x2x128xf32, #tpu.memory_space<vmem>>, vector<1x1x2xf32>
    %196 = vector.shape_cast %195 : vector<1x1x2xf32> to vector<1x2xf32>
    %197 = vector.extract_strided_slice %96 {offsets = [0, 5], sizes = [32, 1], strides = [1, 1]} : vector<32x7xf32> to vector<32x1xf32>
    %198 = vector.broadcast %197 : vector<32x1xf32> to vector<32x2xf32>
    %199 = vector.broadcast %196 : vector<1x2xf32> to vector<32x2xf32>
    %200 = arith.mulf %198, %199 : vector<32x2xf32>
    %201 = arith.addf %194, %200 : vector<32x2xf32>
    %c6_170 = arith.constant 6 : index
    %c1_171 = arith.constant 1 : index
    %c0_172 = arith.constant 0 : index
    %202 = vector.load %arg9[%c6_170, %c1_171, %c0_172] : memref<8x2x128xf32, #tpu.memory_space<vmem>>, vector<1x1x2xf32>
    %203 = vector.shape_cast %202 : vector<1x1x2xf32> to vector<1x2xf32>
    %204 = vector.extract_strided_slice %96 {offsets = [0, 6], sizes = [32, 1], strides = [1, 1]} : vector<32x7xf32> to vector<32x1xf32>
    %205 = vector.broadcast %204 : vector<32x1xf32> to vector<32x2xf32>
    %206 = vector.broadcast %203 : vector<1x2xf32> to vector<32x2xf32>
    %207 = arith.mulf %205, %206 : vector<32x2xf32>
    %208 = arith.addf %201, %207 : vector<32x2xf32>
    %cst_173 = arith.constant 0.000000e+00 : f32
    %209 = vector.broadcast %cst_173 : f32 to vector<32x2xf32>
    %210 = arith.maximumf %208, %209 : vector<32x2xf32>
    %c3_174 = arith.constant 3 : index
    %c1_175 = arith.constant 1 : index
    %c0_176 = arith.constant 0 : index
    %c0_177 = arith.constant 0 : index
    %211 = vector.load %arg10[%c3_174, %c1_175, %c0_176, %c0_177] : memref<4x2x32x128xf32, #tpu.memory_space<vmem>>, vector<1x1x32x2xf32>
    %212 = vector.shape_cast %211 : vector<1x1x32x2xf32> to vector<32x2xf32>
    %213 = vector.shape_cast %210 : vector<32x2xf32> to vector<1x1x32x2xf32>
    tpu.vector_store %arg10[%c3_174, %c1_175, %c0_176, %c0_177], %213 {strides = array<i32>} : memref<4x2x32x128xf32, #tpu.memory_space<vmem>>, vector<1x1x32x2xf32>,
    %214 = vector.shape_cast %99 : vector<32x1xf32> to vector<32x1xf32>
    %215 = vector.broadcast %214 : vector<32x1xf32> to vector<32x2xf32>
    %c2_178 = arith.constant 2 : index
    %c0_179 = arith.constant 0 : index
    %c0_180 = arith.constant 0 : index
    %216 = vector.load %arg9[%c2_178, %c0_179, %c0_180] : memref<8x2x128xf32, #tpu.memory_space<vmem>>, vector<1x1x2xf32>
    %217 = vector.shape_cast %216 : vector<1x1x2xf32> to vector<1x2xf32>
    %218 = vector.extract_strided_slice %96 {offsets = [0, 0], sizes = [32, 1], strides = [1, 1]} : vector<32x7xf32> to vector<32x1xf32>
    %219 = vector.broadcast %218 : vector<32x1xf32> to vector<32x2xf32>
    %220 = vector.broadcast %217 : vector<1x2xf32> to vector<32x2xf32>
    %221 = arith.mulf %219, %220 : vector<32x2xf32>
    %222 = arith.addf %215, %221 : vector<32x2xf32>
    %c3_181 = arith.constant 3 : index
    %c0_182 = arith.constant 0 : index
    %c0_183 = arith.constant 0 : index
    %223 = vector.load %arg9[%c3_181, %c0_182, %c0_183] : memref<8x2x128xf32, #tpu.memory_space<vmem>>, vector<1x1x2xf32>
    %224 = vector.shape_cast %223 : vector<1x1x2xf32> to vector<1x2xf32>
    %225 = vector.extract_strided_slice %96 {offsets = [0, 1], sizes = [32, 1], strides = [1, 1]} : vector<32x7xf32> to vector<32x1xf32>
    %226 = vector.broadcast %225 : vector<32x1xf32> to vector<32x2xf32>
    %227 = vector.broadcast %224 : vector<1x2xf32> to vector<32x2xf32>
    %228 = arith.mulf %226, %227 : vector<32x2xf32>
    %229 = arith.addf %222, %228 : vector<32x2xf32>
    %c4_184 = arith.constant 4 : index
    %c0_185 = arith.constant 0 : index
    %c0_186 = arith.constant 0 : index
    %230 = vector.load %arg9[%c4_184, %c0_185, %c0_186] : memref<8x2x128xf32, #tpu.memory_space<vmem>>, vector<1x1x2xf32>
    %231 = vector.shape_cast %230 : vector<1x1x2xf32> to vector<1x2xf32>
    %232 = vector.extract_strided_slice %96 {offsets = [0, 2], sizes = [32, 1], strides = [1, 1]} : vector<32x7xf32> to vector<32x1xf32>
    %233 = vector.broadcast %232 : vector<32x1xf32> to vector<32x2xf32>
    %234 = vector.broadcast %231 : vector<1x2xf32> to vector<32x2xf32>
    %235 = arith.mulf %233, %234 : vector<32x2xf32>
    %236 = arith.addf %229, %235 : vector<32x2xf32>
    %c5_187 = arith.constant 5 : index
    %c0_188 = arith.constant 0 : index
    %c0_189 = arith.constant 0 : index
    %237 = vector.load %arg9[%c5_187, %c0_188, %c0_189] : memref<8x2x128xf32, #tpu.memory_space<vmem>>, vector<1x1x2xf32>
    %238 = vector.shape_cast %237 : vector<1x1x2xf32> to vector<1x2xf32>
    %239 = vector.extract_strided_slice %96 {offsets = [0, 3], sizes = [32, 1], strides = [1, 1]} : vector<32x7xf32> to vector<32x1xf32>
    %240 = vector.broadcast %239 : vector<32x1xf32> to vector<32x2xf32>
    %241 = vector.broadcast %238 : vector<1x2xf32> to vector<32x2xf32>
    %242 = arith.mulf %240, %241 : vector<32x2xf32>
    %243 = arith.addf %236, %242 : vector<32x2xf32>
    %c6_190 = arith.constant 6 : index
    %c0_191 = arith.constant 0 : index
    %c0_192 = arith.constant 0 : index
    %244 = vector.load %arg9[%c6_190, %c0_191, %c0_192] : memref<8x2x128xf32, #tpu.memory_space<vmem>>, vector<1x1x2xf32>
    %245 = vector.shape_cast %244 : vector<1x1x2xf32> to vector<1x2xf32>
    %246 = vector.extract_strided_slice %96 {offsets = [0, 4], sizes = [32, 1], strides = [1, 1]} : vector<32x7xf32> to vector<32x1xf32>
    %247 = vector.broadcast %246 : vector<32x1xf32> to vector<32x2xf32>
    %248 = vector.broadcast %245 : vector<1x2xf32> to vector<32x2xf32>
    %249 = arith.mulf %247, %248 : vector<32x2xf32>
    %250 = arith.addf %243, %249 : vector<32x2xf32>
    %c7_193 = arith.constant 7 : index
    %c0_194 = arith.constant 0 : index
    %c0_195 = arith.constant 0 : index
    %251 = vector.load %arg9[%c7_193, %c0_194, %c0_195] : memref<8x2x128xf32, #tpu.memory_space<vmem>>, vector<1x1x2xf32>
    %252 = vector.shape_cast %251 : vector<1x1x2xf32> to vector<1x2xf32>
    %253 = vector.extract_strided_slice %96 {offsets = [0, 5], sizes = [32, 1], strides = [1, 1]} : vector<32x7xf32> to vector<32x1xf32>
    %254 = vector.broadcast %253 : vector<32x1xf32> to vector<32x2xf32>
    %255 = vector.broadcast %252 : vector<1x2xf32> to vector<32x2xf32>
    %256 = arith.mulf %254, %255 : vector<32x2xf32>
    %257 = arith.addf %250, %256 : vector<32x2xf32>
    %c0_196 = arith.constant 0 : index
    %c0_197 = arith.constant 0 : index
    %c1_198 = arith.constant 1 : index
    %258 = vector.load %arg9[%c0_196, %c0_197, %c1_198] : memref<8x2x128xf32, #tpu.memory_space<vmem>>, vector<1x1x2xf32>
    %259 = vector.shape_cast %258 : vector<1x1x2xf32> to vector<1x2xf32>
    %260 = vector.extract_strided_slice %96 {offsets = [0, 6], sizes = [32, 1], strides = [1, 1]} : vector<32x7xf32> to vector<32x1xf32>
    %261 = vector.broadcast %260 : vector<32x1xf32> to vector<32x2xf32>
    %262 = vector.broadcast %259 : vector<1x2xf32> to vector<32x2xf32>
    %263 = arith.mulf %261, %262 : vector<32x2xf32>
    %264 = arith.addf %257, %263 : vector<32x2xf32>
    %cst_199 = arith.constant 0.000000e+00 : f32
    %265 = vector.broadcast %cst_199 : f32 to vector<32x2xf32>
    %266 = arith.maximumf %264, %265 : vector<32x2xf32>
    %c0_200 = arith.constant 0 : index
    %c0_201 = arith.constant 0 : index
    %c0_202 = arith.constant 0 : index
    %c1_203 = arith.constant 1 : index
    %267 = vector.load %arg10[%c0_200, %c0_201, %c0_202, %c1_203] : memref<4x2x32x128xf32, #tpu.memory_space<vmem>>, vector<1x1x32x2xf32>
    %268 = vector.shape_cast %267 : vector<1x1x32x2xf32> to vector<32x2xf32>
    %269 = vector.shape_cast %266 : vector<32x2xf32> to vector<1x1x32x2xf32>
    tpu.vector_store %arg10[%c0_200, %c0_201, %c0_202, %c1_203], %269 {strides = array<i32>} : memref<4x2x32x128xf32, #tpu.memory_space<vmem>>, vector<1x1x32x2xf32>,
    %270 = vector.shape_cast %99 : vector<32x1xf32> to vector<32x1xf32>
    %271 = vector.broadcast %270 : vector<32x1xf32> to vector<32x2xf32>
    %c2_204 = arith.constant 2 : index
    %c1_205 = arith.constant 1 : index
    %c0_206 = arith.constant 0 : index
    %272 = vector.load %arg9[%c2_204, %c1_205, %c0_206] : memref<8x2x128xf32, #tpu.memory_space<vmem>>, vector<1x1x2xf32>
    %273 = vector.shape_cast %272 : vector<1x1x2xf32> to vector<1x2xf32>
    %274 = vector.extract_strided_slice %96 {offsets = [0, 0], sizes = [32, 1], strides = [1, 1]} : vector<32x7xf32> to vector<32x1xf32>
    %275 = vector.broadcast %274 : vector<32x1xf32> to vector<32x2xf32>
    %276 = vector.broadcast %273 : vector<1x2xf32> to vector<32x2xf32>
    %277 = arith.mulf %275, %276 : vector<32x2xf32>
    %278 = arith.addf %271, %277 : vector<32x2xf32>
    %c3_207 = arith.constant 3 : index
    %c1_208 = arith.constant 1 : index
    %c0_209 = arith.constant 0 : index
    %279 = vector.load %arg9[%c3_207, %c1_208, %c0_209] : memref<8x2x128xf32, #tpu.memory_space<vmem>>, vector<1x1x2xf32>
    %280 = vector.shape_cast %279 : vector<1x1x2xf32> to vector<1x2xf32>
    %281 = vector.extract_strided_slice %96 {offsets = [0, 1], sizes = [32, 1], strides = [1, 1]} : vector<32x7xf32> to vector<32x1xf32>
    %282 = vector.broadcast %281 : vector<32x1xf32> to vector<32x2xf32>
    %283 = vector.broadcast %280 : vector<1x2xf32> to vector<32x2xf32>
    %284 = arith.mulf %282, %283 : vector<32x2xf32>
    %285 = arith.addf %278, %284 : vector<32x2xf32>
    %c4_210 = arith.constant 4 : index
    %c1_211 = arith.constant 1 : index
    %c0_212 = arith.constant 0 : index
    %286 = vector.load %arg9[%c4_210, %c1_211, %c0_212] : memref<8x2x128xf32, #tpu.memory_space<vmem>>, vector<1x1x2xf32>
    %287 = vector.shape_cast %286 : vector<1x1x2xf32> to vector<1x2xf32>
    %288 = vector.extract_strided_slice %96 {offsets = [0, 2], sizes = [32, 1], strides = [1, 1]} : vector<32x7xf32> to vector<32x1xf32>
    %289 = vector.broadcast %288 : vector<32x1xf32> to vector<32x2xf32>
    %290 = vector.broadcast %287 : vector<1x2xf32> to vector<32x2xf32>
    %291 = arith.mulf %289, %290 : vector<32x2xf32>
    %292 = arith.addf %285, %291 : vector<32x2xf32>
    %c5_213 = arith.constant 5 : index
    %c1_214 = arith.constant 1 : index
    %c0_215 = arith.constant 0 : index
    %293 = vector.load %arg9[%c5_213, %c1_214, %c0_215] : memref<8x2x128xf32, #tpu.memory_space<vmem>>, vector<1x1x2xf32>
    %294 = vector.shape_cast %293 : vector<1x1x2xf32> to vector<1x2xf32>
    %295 = vector.extract_strided_slice %96 {offsets = [0, 3], sizes = [32, 1], strides = [1, 1]} : vector<32x7xf32> to vector<32x1xf32>
    %296 = vector.broadcast %295 : vector<32x1xf32> to vector<32x2xf32>
    %297 = vector.broadcast %294 : vector<1x2xf32> to vector<32x2xf32>
    %298 = arith.mulf %296, %297 : vector<32x2xf32>
    %299 = arith.addf %292, %298 : vector<32x2xf32>
    %c6_216 = arith.constant 6 : index
    %c1_217 = arith.constant 1 : index
    %c0_218 = arith.constant 0 : index
    %300 = vector.load %arg9[%c6_216, %c1_217, %c0_218] : memref<8x2x128xf32, #tpu.memory_space<vmem>>, vector<1x1x2xf32>
    %301 = vector.shape_cast %300 : vector<1x1x2xf32> to vector<1x2xf32>
    %302 = vector.extract_strided_slice %96 {offsets = [0, 4], sizes = [32, 1], strides = [1, 1]} : vector<32x7xf32> to vector<32x1xf32>
    %303 = vector.broadcast %302 : vector<32x1xf32> to vector<32x2xf32>
    %304 = vector.broadcast %301 : vector<1x2xf32> to vector<32x2xf32>
    %305 = arith.mulf %303, %304 : vector<32x2xf32>
    %306 = arith.addf %299, %305 : vector<32x2xf32>
    %c7_219 = arith.constant 7 : index
    %c1_220 = arith.constant 1 : index
    %c0_221 = arith.constant 0 : index
    %307 = vector.load %arg9[%c7_219, %c1_220, %c0_221] : memref<8x2x128xf32, #tpu.memory_space<vmem>>, vector<1x1x2xf32>
    %308 = vector.shape_cast %307 : vector<1x1x2xf32> to vector<1x2xf32>
    %309 = vector.extract_strided_slice %96 {offsets = [0, 5], sizes = [32, 1], strides = [1, 1]} : vector<32x7xf32> to vector<32x1xf32>
    %310 = vector.broadcast %309 : vector<32x1xf32> to vector<32x2xf32>
    %311 = vector.broadcast %308 : vector<1x2xf32> to vector<32x2xf32>
    %312 = arith.mulf %310, %311 : vector<32x2xf32>
    %313 = arith.addf %306, %312 : vector<32x2xf32>
    %c0_222 = arith.constant 0 : index
    %c1_223 = arith.constant 1 : index
    %c1_224 = arith.constant 1 : index
    %314 = vector.load %arg9[%c0_222, %c1_223, %c1_224] : memref<8x2x128xf32, #tpu.memory_space<vmem>>, vector<1x1x2xf32>
    %315 = vector.shape_cast %314 : vector<1x1x2xf32> to vector<1x2xf32>
    %316 = vector.extract_strided_slice %96 {offsets = [0, 6], sizes = [32, 1], strides = [1, 1]} : vector<32x7xf32> to vector<32x1xf32>
    %317 = vector.broadcast %316 : vector<32x1xf32> to vector<32x2xf32>
    %318 = vector.broadcast %315 : vector<1x2xf32> to vector<32x2xf32>
    %319 = arith.mulf %317, %318 : vector<32x2xf32>
    %320 = arith.addf %313, %319 : vector<32x2xf32>
    %cst_225 = arith.constant 0.000000e+00 : f32
    %321 = vector.broadcast %cst_225 : f32 to vector<32x2xf32>
    %322 = arith.maximumf %320, %321 : vector<32x2xf32>
    %c0_226 = arith.constant 0 : index
    %c1_227 = arith.constant 1 : index
    %c0_228 = arith.constant 0 : index
    %c1_229 = arith.constant 1 : index
    %323 = vector.load %arg10[%c0_226, %c1_227, %c0_228, %c1_229] : memref<4x2x32x128xf32, #tpu.memory_space<vmem>>, vector<1x1x32x2xf32>
    %324 = vector.shape_cast %323 : vector<1x1x32x2xf32> to vector<32x2xf32>
    %325 = vector.shape_cast %322 : vector<32x2xf32> to vector<1x1x32x2xf32>
    tpu.vector_store %arg10[%c0_226, %c1_227, %c0_228, %c1_229], %325 {strides = array<i32>} : memref<4x2x32x128xf32, #tpu.memory_space<vmem>>, vector<1x1x32x2xf32>,
    %326 = vector.shape_cast %99 : vector<32x1xf32> to vector<32x1xf32>
    %327 = vector.broadcast %326 : vector<32x1xf32> to vector<32x2xf32>
    %c4_230 = arith.constant 4 : index
    %c0_231 = arith.constant 0 : index
    %c0_232 = arith.constant 0 : index
    %328 = vector.load %arg9[%c4_230, %c0_231, %c0_232] : memref<8x2x128xf32, #tpu.memory_space<vmem>>, vector<1x1x2xf32>
    %329 = vector.shape_cast %328 : vector<1x1x2xf32> to vector<1x2xf32>
    %330 = vector.extract_strided_slice %96 {offsets = [0, 0], sizes = [32, 1], strides = [1, 1]} : vector<32x7xf32> to vector<32x1xf32>
    %331 = vector.broadcast %330 : vector<32x1xf32> to vector<32x2xf32>
    %332 = vector.broadcast %329 : vector<1x2xf32> to vector<32x2xf32>
    %333 = arith.mulf %331, %332 : vector<32x2xf32>
    %334 = arith.addf %327, %333 : vector<32x2xf32>
    %c5_233 = arith.constant 5 : index
    %c0_234 = arith.constant 0 : index
    %c0_235 = arith.constant 0 : index
    %335 = vector.load %arg9[%c5_233, %c0_234, %c0_235] : memref<8x2x128xf32, #tpu.memory_space<vmem>>, vector<1x1x2xf32>
    %336 = vector.shape_cast %335 : vector<1x1x2xf32> to vector<1x2xf32>
    %337 = vector.extract_strided_slice %96 {offsets = [0, 1], sizes = [32, 1], strides = [1, 1]} : vector<32x7xf32> to vector<32x1xf32>
    %338 = vector.broadcast %337 : vector<32x1xf32> to vector<32x2xf32>
    %339 = vector.broadcast %336 : vector<1x2xf32> to vector<32x2xf32>
    %340 = arith.mulf %338, %339 : vector<32x2xf32>
    %341 = arith.addf %334, %340 : vector<32x2xf32>
    %c6_236 = arith.constant 6 : index
    %c0_237 = arith.constant 0 : index
    %c0_238 = arith.constant 0 : index
    %342 = vector.load %arg9[%c6_236, %c0_237, %c0_238] : memref<8x2x128xf32, #tpu.memory_space<vmem>>, vector<1x1x2xf32>
    %343 = vector.shape_cast %342 : vector<1x1x2xf32> to vector<1x2xf32>
    %344 = vector.extract_strided_slice %96 {offsets = [0, 2], sizes = [32, 1], strides = [1, 1]} : vector<32x7xf32> to vector<32x1xf32>
    %345 = vector.broadcast %344 : vector<32x1xf32> to vector<32x2xf32>
    %346 = vector.broadcast %343 : vector<1x2xf32> to vector<32x2xf32>
    %347 = arith.mulf %345, %346 : vector<32x2xf32>
    %348 = arith.addf %341, %347 : vector<32x2xf32>
    %c7_239 = arith.constant 7 : index
    %c0_240 = arith.constant 0 : index
    %c0_241 = arith.constant 0 : index
    %349 = vector.load %arg9[%c7_239, %c0_240, %c0_241] : memref<8x2x128xf32, #tpu.memory_space<vmem>>, vector<1x1x2xf32>
    %350 = vector.shape_cast %349 : vector<1x1x2xf32> to vector<1x2xf32>
    %351 = vector.extract_strided_slice %96 {offsets = [0, 3], sizes = [32, 1], strides = [1, 1]} : vector<32x7xf32> to vector<32x1xf32>
    %352 = vector.broadcast %351 : vector<32x1xf32> to vector<32x2xf32>
    %353 = vector.broadcast %350 : vector<1x2xf32> to vector<32x2xf32>
    %354 = arith.mulf %352, %353 : vector<32x2xf32>
    %355 = arith.addf %348, %354 : vector<32x2xf32>
    %c0_242 = arith.constant 0 : index
    %c0_243 = arith.constant 0 : index
    %c1_244 = arith.constant 1 : index
    %356 = vector.load %arg9[%c0_242, %c0_243, %c1_244] : memref<8x2x128xf32, #tpu.memory_space<vmem>>, vector<1x1x2xf32>
    %357 = vector.shape_cast %356 : vector<1x1x2xf32> to vector<1x2xf32>
    %358 = vector.extract_strided_slice %96 {offsets = [0, 4], sizes = [32, 1], strides = [1, 1]} : vector<32x7xf32> to vector<32x1xf32>
    %359 = vector.broadcast %358 : vector<32x1xf32> to vector<32x2xf32>
    %360 = vector.broadcast %357 : vector<1x2xf32> to vector<32x2xf32>
    %361 = arith.mulf %359, %360 : vector<32x2xf32>
    %362 = arith.addf %355, %361 : vector<32x2xf32>
    %c1_245 = arith.constant 1 : index
    %c0_246 = arith.constant 0 : index
    %c1_247 = arith.constant 1 : index
    %363 = vector.load %arg9[%c1_245, %c0_246, %c1_247] : memref<8x2x128xf32, #tpu.memory_space<vmem>>, vector<1x1x2xf32>
    %364 = vector.shape_cast %363 : vector<1x1x2xf32> to vector<1x2xf32>
    %365 = vector.extract_strided_slice %96 {offsets = [0, 5], sizes = [32, 1], strides = [1, 1]} : vector<32x7xf32> to vector<32x1xf32>
    %366 = vector.broadcast %365 : vector<32x1xf32> to vector<32x2xf32>
    %367 = vector.broadcast %364 : vector<1x2xf32> to vector<32x2xf32>
    %368 = arith.mulf %366, %367 : vector<32x2xf32>
    %369 = arith.addf %362, %368 : vector<32x2xf32>
    %c2_248 = arith.constant 2 : index
    %c0_249 = arith.constant 0 : index
    %c1_250 = arith.constant 1 : index
    %370 = vector.load %arg9[%c2_248, %c0_249, %c1_250] : memref<8x2x128xf32, #tpu.memory_space<vmem>>, vector<1x1x2xf32>
    %371 = vector.shape_cast %370 : vector<1x1x2xf32> to vector<1x2xf32>
    %372 = vector.extract_strided_slice %96 {offsets = [0, 6], sizes = [32, 1], strides = [1, 1]} : vector<32x7xf32> to vector<32x1xf32>
    %373 = vector.broadcast %372 : vector<32x1xf32> to vector<32x2xf32>
    %374 = vector.broadcast %371 : vector<1x2xf32> to vector<32x2xf32>
    %375 = arith.mulf %373, %374 : vector<32x2xf32>
    %376 = arith.addf %369, %375 : vector<32x2xf32>
    %cst_251 = arith.constant 0.000000e+00 : f32
    %377 = vector.broadcast %cst_251 : f32 to vector<32x2xf32>
    %378 = arith.maximumf %376, %377 : vector<32x2xf32>
    %c1_252 = arith.constant 1 : index
    %c0_253 = arith.constant 0 : index
    %c0_254 = arith.constant 0 : index
    %c1_255 = arith.constant 1 : index
    %379 = vector.load %arg10[%c1_252, %c0_253, %c0_254, %c1_255] : memref<4x2x32x128xf32, #tpu.memory_space<vmem>>, vector<1x1x32x2xf32>
    %380 = vector.shape_cast %379 : vector<1x1x32x2xf32> to vector<32x2xf32>
    %381 = vector.shape_cast %378 : vector<32x2xf32> to vector<1x1x32x2xf32>
    tpu.vector_store %arg10[%c1_252, %c0_253, %c0_254, %c1_255], %381 {strides = array<i32>} : memref<4x2x32x128xf32, #tpu.memory_space<vmem>>, vector<1x1x32x2xf32>,
    %382 = vector.shape_cast %99 : vector<32x1xf32> to vector<32x1xf32>
    %383 = vector.broadcast %382 : vector<32x1xf32> to vector<32x2xf32>
    %c4_256 = arith.constant 4 : index
    %c1_257 = arith.constant 1 : index
    %c0_258 = arith.constant 0 : index
    %384 = vector.load %arg9[%c4_256, %c1_257, %c0_258] : memref<8x2x128xf32, #tpu.memory_space<vmem>>, vector<1x1x2xf32>
    %385 = vector.shape_cast %384 : vector<1x1x2xf32> to vector<1x2xf32>
    %386 = vector.extract_strided_slice %96 {offsets = [0, 0], sizes = [32, 1], strides = [1, 1]} : vector<32x7xf32> to vector<32x1xf32>
    %387 = vector.broadcast %386 : vector<32x1xf32> to vector<32x2xf32>
    %388 = vector.broadcast %385 : vector<1x2xf32> to vector<32x2xf32>
    %389 = arith.mulf %387, %388 : vector<32x2xf32>
    %390 = arith.addf %383, %389 : vector<32x2xf32>
    %c5_259 = arith.constant 5 : index
    %c1_260 = arith.constant 1 : index
    %c0_261 = arith.constant 0 : index
    %391 = vector.load %arg9[%c5_259, %c1_260, %c0_261] : memref<8x2x128xf32, #tpu.memory_space<vmem>>, vector<1x1x2xf32>
    %392 = vector.shape_cast %391 : vector<1x1x2xf32> to vector<1x2xf32>
    %393 = vector.extract_strided_slice %96 {offsets = [0, 1], sizes = [32, 1], strides = [1, 1]} : vector<32x7xf32> to vector<32x1xf32>
    %394 = vector.broadcast %393 : vector<32x1xf32> to vector<32x2xf32>
    %395 = vector.broadcast %392 : vector<1x2xf32> to vector<32x2xf32>
    %396 = arith.mulf %394, %395 : vector<32x2xf32>
    %397 = arith.addf %390, %396 : vector<32x2xf32>
    %c6_262 = arith.constant 6 : index
    %c1_263 = arith.constant 1 : index
    %c0_264 = arith.constant 0 : index
    %398 = vector.load %arg9[%c6_262, %c1_263, %c0_264] : memref<8x2x128xf32, #tpu.memory_space<vmem>>, vector<1x1x2xf32>
    %399 = vector.shape_cast %398 : vector<1x1x2xf32> to vector<1x2xf32>
    %400 = vector.extract_strided_slice %96 {offsets = [0, 2], sizes = [32, 1], strides = [1, 1]} : vector<32x7xf32> to vector<32x1xf32>
    %401 = vector.broadcast %400 : vector<32x1xf32> to vector<32x2xf32>
    %402 = vector.broadcast %399 : vector<1x2xf32> to vector<32x2xf32>
    %403 = arith.mulf %401, %402 : vector<32x2xf32>
    %404 = arith.addf %397, %403 : vector<32x2xf32>
    %c7_265 = arith.constant 7 : index
    %c1_266 = arith.constant 1 : index
    %c0_267 = arith.constant 0 : index
    %405 = vector.load %arg9[%c7_265, %c1_266, %c0_267] : memref<8x2x128xf32, #tpu.memory_space<vmem>>, vector<1x1x2xf32>
    %406 = vector.shape_cast %405 : vector<1x1x2xf32> to vector<1x2xf32>
    %407 = vector.extract_strided_slice %96 {offsets = [0, 3], sizes = [32, 1], strides = [1, 1]} : vector<32x7xf32> to vector<32x1xf32>
    %408 = vector.broadcast %407 : vector<32x1xf32> to vector<32x2xf32>
    %409 = vector.broadcast %406 : vector<1x2xf32> to vector<32x2xf32>
    %410 = arith.mulf %408, %409 : vector<32x2xf32>
    %411 = arith.addf %404, %410 : vector<32x2xf32>
    %c0_268 = arith.constant 0 : index
    %c1_269 = arith.constant 1 : index
    %c1_270 = arith.constant 1 : index
    %412 = vector.load %arg9[%c0_268, %c1_269, %c1_270] : memref<8x2x128xf32, #tpu.memory_space<vmem>>, vector<1x1x2xf32>
    %413 = vector.shape_cast %412 : vector<1x1x2xf32> to vector<1x2xf32>
    %414 = vector.extract_strided_slice %96 {offsets = [0, 4], sizes = [32, 1], strides = [1, 1]} : vector<32x7xf32> to vector<32x1xf32>
    %415 = vector.broadcast %414 : vector<32x1xf32> to vector<32x2xf32>
    %416 = vector.broadcast %413 : vector<1x2xf32> to vector<32x2xf32>
    %417 = arith.mulf %415, %416 : vector<32x2xf32>
    %418 = arith.addf %411, %417 : vector<32x2xf32>
    %c1_271 = arith.constant 1 : index
    %c1_272 = arith.constant 1 : index
    %c1_273 = arith.constant 1 : index
    %419 = vector.load %arg9[%c1_271, %c1_272, %c1_273] : memref<8x2x128xf32, #tpu.memory_space<vmem>>, vector<1x1x2xf32>
    %420 = vector.shape_cast %419 : vector<1x1x2xf32> to vector<1x2xf32>
    %421 = vector.extract_strided_slice %96 {offsets = [0, 5], sizes = [32, 1], strides = [1, 1]} : vector<32x7xf32> to vector<32x1xf32>
    %422 = vector.broadcast %421 : vector<32x1xf32> to vector<32x2xf32>
    %423 = vector.broadcast %420 : vector<1x2xf32> to vector<32x2xf32>
    %424 = arith.mulf %422, %423 : vector<32x2xf32>
    %425 = arith.addf %418, %424 : vector<32x2xf32>
    %c2_274 = arith.constant 2 : index
    %c1_275 = arith.constant 1 : index
    %c1_276 = arith.constant 1 : index
    %426 = vector.load %arg9[%c2_274, %c1_275, %c1_276] : memref<8x2x128xf32, #tpu.memory_space<vmem>>, vector<1x1x2xf32>
    %427 = vector.shape_cast %426 : vector<1x1x2xf32> to vector<1x2xf32>
    %428 = vector.extract_strided_slice %96 {offsets = [0, 6], sizes = [32, 1], strides = [1, 1]} : vector<32x7xf32> to vector<32x1xf32>
    %429 = vector.broadcast %428 : vector<32x1xf32> to vector<32x2xf32>
    %430 = vector.broadcast %427 : vector<1x2xf32> to vector<32x2xf32>
    %431 = arith.mulf %429, %430 : vector<32x2xf32>
    %432 = arith.addf %425, %431 : vector<32x2xf32>
    %cst_277 = arith.constant 0.000000e+00 : f32
    %433 = vector.broadcast %cst_277 : f32 to vector<32x2xf32>
    %434 = arith.maximumf %432, %433 : vector<32x2xf32>
    %c1_278 = arith.constant 1 : index
    %c1_279 = arith.constant 1 : index
    %c0_280 = arith.constant 0 : index
    %c1_281 = arith.constant 1 : index
    %435 = vector.load %arg10[%c1_278, %c1_279, %c0_280, %c1_281] : memref<4x2x32x128xf32, #tpu.memory_space<vmem>>, vector<1x1x32x2xf32>
    %436 = vector.shape_cast %435 : vector<1x1x32x2xf32> to vector<32x2xf32>
    %437 = vector.shape_cast %434 : vector<32x2xf32> to vector<1x1x32x2xf32>
    tpu.vector_store %arg10[%c1_278, %c1_279, %c0_280, %c1_281], %437 {strides = array<i32>} : memref<4x2x32x128xf32, #tpu.memory_space<vmem>>, vector<1x1x32x2xf32>,
    %438 = vector.shape_cast %99 : vector<32x1xf32> to vector<32x1xf32>
    %439 = vector.broadcast %438 : vector<32x1xf32> to vector<32x2xf32>
    %c6_282 = arith.constant 6 : index
    %c0_283 = arith.constant 0 : index
    %c0_284 = arith.constant 0 : index
    %440 = vector.load %arg9[%c6_282, %c0_283, %c0_284] : memref<8x2x128xf32, #tpu.memory_space<vmem>>, vector<1x1x2xf32>
    %441 = vector.shape_cast %440 : vector<1x1x2xf32> to vector<1x2xf32>
    %442 = vector.extract_strided_slice %96 {offsets = [0, 0], sizes = [32, 1], strides = [1, 1]} : vector<32x7xf32> to vector<32x1xf32>
    %443 = vector.broadcast %442 : vector<32x1xf32> to vector<32x2xf32>
    %444 = vector.broadcast %441 : vector<1x2xf32> to vector<32x2xf32>
    %445 = arith.mulf %443, %444 : vector<32x2xf32>
    %446 = arith.addf %439, %445 : vector<32x2xf32>
    %c7_285 = arith.constant 7 : index
    %c0_286 = arith.constant 0 : index
    %c0_287 = arith.constant 0 : index
    %447 = vector.load %arg9[%c7_285, %c0_286, %c0_287] : memref<8x2x128xf32, #tpu.memory_space<vmem>>, vector<1x1x2xf32>
    %448 = vector.shape_cast %447 : vector<1x1x2xf32> to vector<1x2xf32>
    %449 = vector.extract_strided_slice %96 {offsets = [0, 1], sizes = [32, 1], strides = [1, 1]} : vector<32x7xf32> to vector<32x1xf32>
    %450 = vector.broadcast %449 : vector<32x1xf32> to vector<32x2xf32>
    %451 = vector.broadcast %448 : vector<1x2xf32> to vector<32x2xf32>
    %452 = arith.mulf %450, %451 : vector<32x2xf32>
    %453 = arith.addf %446, %452 : vector<32x2xf32>
    %c0_288 = arith.constant 0 : index
    %c0_289 = arith.constant 0 : index
    %c1_290 = arith.constant 1 : index
    %454 = vector.load %arg9[%c0_288, %c0_289, %c1_290] : memref<8x2x128xf32, #tpu.memory_space<vmem>>, vector<1x1x2xf32>
    %455 = vector.shape_cast %454 : vector<1x1x2xf32> to vector<1x2xf32>
    %456 = vector.extract_strided_slice %96 {offsets = [0, 2], sizes = [32, 1], strides = [1, 1]} : vector<32x7xf32> to vector<32x1xf32>
    %457 = vector.broadcast %456 : vector<32x1xf32> to vector<32x2xf32>
    %458 = vector.broadcast %455 : vector<1x2xf32> to vector<32x2xf32>
    %459 = arith.mulf %457, %458 : vector<32x2xf32>
    %460 = arith.addf %453, %459 : vector<32x2xf32>
    %c1_291 = arith.constant 1 : index
    %c0_292 = arith.constant 0 : index
    %c1_293 = arith.constant 1 : index
    %461 = vector.load %arg9[%c1_291, %c0_292, %c1_293] : memref<8x2x128xf32, #tpu.memory_space<vmem>>, vector<1x1x2xf32>
    %462 = vector.shape_cast %461 : vector<1x1x2xf32> to vector<1x2xf32>
    %463 = vector.extract_strided_slice %96 {offsets = [0, 3], sizes = [32, 1], strides = [1, 1]} : vector<32x7xf32> to vector<32x1xf32>
    %464 = vector.broadcast %463 : vector<32x1xf32> to vector<32x2xf32>
    %465 = vector.broadcast %462 : vector<1x2xf32> to vector<32x2xf32>
    %466 = arith.mulf %464, %465 : vector<32x2xf32>
    %467 = arith.addf %460, %466 : vector<32x2xf32>
    %c2_294 = arith.constant 2 : index
    %c0_295 = arith.constant 0 : index
    %c1_296 = arith.constant 1 : index
    %468 = vector.load %arg9[%c2_294, %c0_295, %c1_296] : memref<8x2x128xf32, #tpu.memory_space<vmem>>, vector<1x1x2xf32>
    %469 = vector.shape_cast %468 : vector<1x1x2xf32> to vector<1x2xf32>
    %470 = vector.extract_strided_slice %96 {offsets = [0, 4], sizes = [32, 1], strides = [1, 1]} : vector<32x7xf32> to vector<32x1xf32>
    %471 = vector.broadcast %470 : vector<32x1xf32> to vector<32x2xf32>
    %472 = vector.broadcast %469 : vector<1x2xf32> to vector<32x2xf32>
    %473 = arith.mulf %471, %472 : vector<32x2xf32>
    %474 = arith.addf %467, %473 : vector<32x2xf32>
    %c3_297 = arith.constant 3 : index
    %c0_298 = arith.constant 0 : index
    %c1_299 = arith.constant 1 : index
    %475 = vector.load %arg9[%c3_297, %c0_298, %c1_299] : memref<8x2x128xf32, #tpu.memory_space<vmem>>, vector<1x1x2xf32>
    %476 = vector.shape_cast %475 : vector<1x1x2xf32> to vector<1x2xf32>
    %477 = vector.extract_strided_slice %96 {offsets = [0, 5], sizes = [32, 1], strides = [1, 1]} : vector<32x7xf32> to vector<32x1xf32>
    %478 = vector.broadcast %477 : vector<32x1xf32> to vector<32x2xf32>
    %479 = vector.broadcast %476 : vector<1x2xf32> to vector<32x2xf32>
    %480 = arith.mulf %478, %479 : vector<32x2xf32>
    %481 = arith.addf %474, %480 : vector<32x2xf32>
    %c4_300 = arith.constant 4 : index
    %c0_301 = arith.constant 0 : index
    %c1_302 = arith.constant 1 : index
    %482 = vector.load %arg9[%c4_300, %c0_301, %c1_302] : memref<8x2x128xf32, #tpu.memory_space<vmem>>, vector<1x1x2xf32>
    %483 = vector.shape_cast %482 : vector<1x1x2xf32> to vector<1x2xf32>
    %484 = vector.extract_strided_slice %96 {offsets = [0, 6], sizes = [32, 1], strides = [1, 1]} : vector<32x7xf32> to vector<32x1xf32>
    %485 = vector.broadcast %484 : vector<32x1xf32> to vector<32x2xf32>
    %486 = vector.broadcast %483 : vector<1x2xf32> to vector<32x2xf32>
    %487 = arith.mulf %485, %486 : vector<32x2xf32>
    %488 = arith.addf %481, %487 : vector<32x2xf32>
    %cst_303 = arith.constant 0.000000e+00 : f32
    %489 = vector.broadcast %cst_303 : f32 to vector<32x2xf32>
    %490 = arith.maximumf %488, %489 : vector<32x2xf32>
    %c2_304 = arith.constant 2 : index
    %c0_305 = arith.constant 0 : index
    %c0_306 = arith.constant 0 : index
    %c1_307 = arith.constant 1 : index
    %491 = vector.load %arg10[%c2_304, %c0_305, %c0_306, %c1_307] : memref<4x2x32x128xf32, #tpu.memory_space<vmem>>, vector<1x1x32x2xf32>
    %492 = vector.shape_cast %491 : vector<1x1x32x2xf32> to vector<32x2xf32>
    %493 = vector.shape_cast %490 : vector<32x2xf32> to vector<1x1x32x2xf32>
    tpu.vector_store %arg10[%c2_304, %c0_305, %c0_306, %c1_307], %493 {strides = array<i32>} : memref<4x2x32x128xf32, #tpu.memory_space<vmem>>, vector<1x1x32x2xf32>,
    %494 = vector.shape_cast %99 : vector<32x1xf32> to vector<32x1xf32>
    %495 = vector.broadcast %494 : vector<32x1xf32> to vector<32x2xf32>
    %c6_308 = arith.constant 6 : index
    %c1_309 = arith.constant 1 : index
    %c0_310 = arith.constant 0 : index
    %496 = vector.load %arg9[%c6_308, %c1_309, %c0_310] : memref<8x2x128xf32, #tpu.memory_space<vmem>>, vector<1x1x2xf32>
    %497 = vector.shape_cast %496 : vector<1x1x2xf32> to vector<1x2xf32>
    %498 = vector.extract_strided_slice %96 {offsets = [0, 0], sizes = [32, 1], strides = [1, 1]} : vector<32x7xf32> to vector<32x1xf32>
    %499 = vector.broadcast %498 : vector<32x1xf32> to vector<32x2xf32>
    %500 = vector.broadcast %497 : vector<1x2xf32> to vector<32x2xf32>
    %501 = arith.mulf %499, %500 : vector<32x2xf32>
    %502 = arith.addf %495, %501 : vector<32x2xf32>
    %c7_311 = arith.constant 7 : index
    %c1_312 = arith.constant 1 : index
    %c0_313 = arith.constant 0 : index
    %503 = vector.load %arg9[%c7_311, %c1_312, %c0_313] : memref<8x2x128xf32, #tpu.memory_space<vmem>>, vector<1x1x2xf32>
    %504 = vector.shape_cast %503 : vector<1x1x2xf32> to vector<1x2xf32>
    %505 = vector.extract_strided_slice %96 {offsets = [0, 1], sizes = [32, 1], strides = [1, 1]} : vector<32x7xf32> to vector<32x1xf32>
    %506 = vector.broadcast %505 : vector<32x1xf32> to vector<32x2xf32>
    %507 = vector.broadcast %504 : vector<1x2xf32> to vector<32x2xf32>
    %508 = arith.mulf %506, %507 : vector<32x2xf32>
    %509 = arith.addf %502, %508 : vector<32x2xf32>
    %c0_314 = arith.constant 0 : index
    %c1_315 = arith.constant 1 : index
    %c1_316 = arith.constant 1 : index
    %510 = vector.load %arg9[%c0_314, %c1_315, %c1_316] : memref<8x2x128xf32, #tpu.memory_space<vmem>>, vector<1x1x2xf32>
    %511 = vector.shape_cast %510 : vector<1x1x2xf32> to vector<1x2xf32>
    %512 = vector.extract_strided_slice %96 {offsets = [0, 2], sizes = [32, 1], strides = [1, 1]} : vector<32x7xf32> to vector<32x1xf32>
    %513 = vector.broadcast %512 : vector<32x1xf32> to vector<32x2xf32>
    %514 = vector.broadcast %511 : vector<1x2xf32> to vector<32x2xf32>
    %515 = arith.mulf %513, %514 : vector<32x2xf32>
    %516 = arith.addf %509, %515 : vector<32x2xf32>
    %c1_317 = arith.constant 1 : index
    %c1_318 = arith.constant 1 : index
    %c1_319 = arith.constant 1 : index
    %517 = vector.load %arg9[%c1_317, %c1_318, %c1_319] : memref<8x2x128xf32, #tpu.memory_space<vmem>>, vector<1x1x2xf32>
    %518 = vector.shape_cast %517 : vector<1x1x2xf32> to vector<1x2xf32>
    %519 = vector.extract_strided_slice %96 {offsets = [0, 3], sizes = [32, 1], strides = [1, 1]} : vector<32x7xf32> to vector<32x1xf32>
    %520 = vector.broadcast %519 : vector<32x1xf32> to vector<32x2xf32>
    %521 = vector.broadcast %518 : vector<1x2xf32> to vector<32x2xf32>
    %522 = arith.mulf %520, %521 : vector<32x2xf32>
    %523 = arith.addf %516, %522 : vector<32x2xf32>
    %c2_320 = arith.constant 2 : index
    %c1_321 = arith.constant 1 : index
    %c1_322 = arith.constant 1 : index
    %524 = vector.load %arg9[%c2_320, %c1_321, %c1_322] : memref<8x2x128xf32, #tpu.memory_space<vmem>>, vector<1x1x2xf32>
    %525 = vector.shape_cast %524 : vector<1x1x2xf32> to vector<1x2xf32>
    %526 = vector.extract_strided_slice %96 {offsets = [0, 4], sizes = [32, 1], strides = [1, 1]} : vector<32x7xf32> to vector<32x1xf32>
    %527 = vector.broadcast %526 : vector<32x1xf32> to vector<32x2xf32>
    %528 = vector.broadcast %525 : vector<1x2xf32> to vector<32x2xf32>
    %529 = arith.mulf %527, %528 : vector<32x2xf32>
    %530 = arith.addf %523, %529 : vector<32x2xf32>
    %c3_323 = arith.constant 3 : index
    %c1_324 = arith.constant 1 : index
    %c1_325 = arith.constant 1 : index
    %531 = vector.load %arg9[%c3_323, %c1_324, %c1_325] : memref<8x2x128xf32, #tpu.memory_space<vmem>>, vector<1x1x2xf32>
    %532 = vector.shape_cast %531 : vector<1x1x2xf32> to vector<1x2xf32>
    %533 = vector.extract_strided_slice %96 {offsets = [0, 5], sizes = [32, 1], strides = [1, 1]} : vector<32x7xf32> to vector<32x1xf32>
    %534 = vector.broadcast %533 : vector<32x1xf32> to vector<32x2xf32>
    %535 = vector.broadcast %532 : vector<1x2xf32> to vector<32x2xf32>
    %536 = arith.mulf %534, %535 : vector<32x2xf32>
    %537 = arith.addf %530, %536 : vector<32x2xf32>
    %c4_326 = arith.constant 4 : index
    %c1_327 = arith.constant 1 : index
    %c1_328 = arith.constant 1 : index
    %538 = vector.load %arg9[%c4_326, %c1_327, %c1_328] : memref<8x2x128xf32, #tpu.memory_space<vmem>>, vector<1x1x2xf32>
    %539 = vector.shape_cast %538 : vector<1x1x2xf32> to vector<1x2xf32>
    %540 = vector.extract_strided_slice %96 {offsets = [0, 6], sizes = [32, 1], strides = [1, 1]} : vector<32x7xf32> to vector<32x1xf32>
    %541 = vector.broadcast %540 : vector<32x1xf32> to vector<32x2xf32>
    %542 = vector.broadcast %539 : vector<1x2xf32> to vector<32x2xf32>
    %543 = arith.mulf %541, %542 : vector<32x2xf32>
    %544 = arith.addf %537, %543 : vector<32x2xf32>
    %cst_329 = arith.constant 0.000000e+00 : f32
    %545 = vector.broadcast %cst_329 : f32 to vector<32x2xf32>
    %546 = arith.maximumf %544, %545 : vector<32x2xf32>
    %c2_330 = arith.constant 2 : index
    %c1_331 = arith.constant 1 : index
    %c0_332 = arith.constant 0 : index
    %c1_333 = arith.constant 1 : index
    %547 = vector.load %arg10[%c2_330, %c1_331, %c0_332, %c1_333] : memref<4x2x32x128xf32, #tpu.memory_space<vmem>>, vector<1x1x32x2xf32>
    %548 = vector.shape_cast %547 : vector<1x1x32x2xf32> to vector<32x2xf32>
    %549 = vector.shape_cast %546 : vector<32x2xf32> to vector<1x1x32x2xf32>
    tpu.vector_store %arg10[%c2_330, %c1_331, %c0_332, %c1_333], %549 {strides = array<i32>} : memref<4x2x32x128xf32, #tpu.memory_space<vmem>>, vector<1x1x32x2xf32>,
    %550 = vector.shape_cast %100 : vector<16x1xf32> to vector<16x1xf32>
    %551 = vector.broadcast %550 : vector<16x1xf32> to vector<16x2xf32>
    %c0_334 = arith.constant 0 : index
    %c0_335 = arith.constant 0 : index
    %c0_336 = arith.constant 0 : index
    %c0_337 = arith.constant 0 : index
    %552 = vector.load %arg10[%c0_334, %c0_335, %c0_336, %c0_337] : memref<4x2x32x128xf32, #tpu.memory_space<vmem>>, vector<1x1x32x2xf32>
    %553 = vector.shape_cast %552 : vector<1x1x32x2xf32> to vector<32x2xf32>
    %554 = vector.extract_strided_slice %97 {offsets = [0, 0, 0], sizes = [1, 16, 32], strides = [1, 1, 1]} : vector<7x16x32xf32> to vector<1x16x32xf32>
    %555 = vector.shape_cast %554 : vector<1x16x32xf32> to vector<16x32xf32>
    %cst_338 = arith.constant dense<0.000000e+00> : vector<16x2xf32>
    %556 = tpu.matmul %555, %553, %cst_338 {dimension_numbers = #tpu.dot_dimension_numbers<[1], [0], [0], [1], [0, 0, 1, 1], [], []>} : vector<16x32xf32>, vector<32x2xf32>, vector<16x2xf32> -> vector<16x2xf32>
    %557 = arith.addf %551, %556 : vector<16x2xf32>
    %c1_339 = arith.constant 1 : index
    %c0_340 = arith.constant 0 : index
    %c0_341 = arith.constant 0 : index
    %c0_342 = arith.constant 0 : index
    %558 = vector.load %arg10[%c1_339, %c0_340, %c0_341, %c0_342] : memref<4x2x32x128xf32, #tpu.memory_space<vmem>>, vector<1x1x32x2xf32>
    %559 = vector.shape_cast %558 : vector<1x1x32x2xf32> to vector<32x2xf32>
    %560 = vector.extract_strided_slice %97 {offsets = [1, 0, 0], sizes = [1, 16, 32], strides = [1, 1, 1]} : vector<7x16x32xf32> to vector<1x16x32xf32>
    %561 = vector.shape_cast %560 : vector<1x16x32xf32> to vector<16x32xf32>
    %cst_343 = arith.constant dense<0.000000e+00> : vector<16x2xf32>
    %562 = tpu.matmul %561, %559, %cst_343 {dimension_numbers = #tpu.dot_dimension_numbers<[1], [0], [0], [1], [0, 0, 1, 1], [], []>} : vector<16x32xf32>, vector<32x2xf32>, vector<16x2xf32> -> vector<16x2xf32>
    %563 = arith.addf %557, %562 : vector<16x2xf32>
    %c2_344 = arith.constant 2 : index
    %c0_345 = arith.constant 0 : index
    %c0_346 = arith.constant 0 : index
    %c0_347 = arith.constant 0 : index
    %564 = vector.load %arg10[%c2_344, %c0_345, %c0_346, %c0_347] : memref<4x2x32x128xf32, #tpu.memory_space<vmem>>, vector<1x1x32x2xf32>
    %565 = vector.shape_cast %564 : vector<1x1x32x2xf32> to vector<32x2xf32>
    %566 = vector.extract_strided_slice %97 {offsets = [2, 0, 0], sizes = [1, 16, 32], strides = [1, 1, 1]} : vector<7x16x32xf32> to vector<1x16x32xf32>
    %567 = vector.shape_cast %566 : vector<1x16x32xf32> to vector<16x32xf32>
    %cst_348 = arith.constant dense<0.000000e+00> : vector<16x2xf32>
    %568 = tpu.matmul %567, %565, %cst_348 {dimension_numbers = #tpu.dot_dimension_numbers<[1], [0], [0], [1], [0, 0, 1, 1], [], []>} : vector<16x32xf32>, vector<32x2xf32>, vector<16x2xf32> -> vector<16x2xf32>
    %569 = arith.addf %563, %568 : vector<16x2xf32>
    %c3_349 = arith.constant 3 : index
    %c0_350 = arith.constant 0 : index
    %c0_351 = arith.constant 0 : index
    %c0_352 = arith.constant 0 : index
    %570 = vector.load %arg10[%c3_349, %c0_350, %c0_351, %c0_352] : memref<4x2x32x128xf32, #tpu.memory_space<vmem>>, vector<1x1x32x2xf32>
    %571 = vector.shape_cast %570 : vector<1x1x32x2xf32> to vector<32x2xf32>
    %572 = vector.extract_strided_slice %97 {offsets = [3, 0, 0], sizes = [1, 16, 32], strides = [1, 1, 1]} : vector<7x16x32xf32> to vector<1x16x32xf32>
    %573 = vector.shape_cast %572 : vector<1x16x32xf32> to vector<16x32xf32>
    %cst_353 = arith.constant dense<0.000000e+00> : vector<16x2xf32>
    %574 = tpu.matmul %573, %571, %cst_353 {dimension_numbers = #tpu.dot_dimension_numbers<[1], [0], [0], [1], [0, 0, 1, 1], [], []>} : vector<16x32xf32>, vector<32x2xf32>, vector<16x2xf32> -> vector<16x2xf32>
    %575 = arith.addf %569, %574 : vector<16x2xf32>
    %c0_354 = arith.constant 0 : index
    %c0_355 = arith.constant 0 : index
    %c0_356 = arith.constant 0 : index
    %c1_357 = arith.constant 1 : index
    %576 = vector.load %arg10[%c0_354, %c0_355, %c0_356, %c1_357] : memref<4x2x32x128xf32, #tpu.memory_space<vmem>>, vector<1x1x32x2xf32>
    %577 = vector.shape_cast %576 : vector<1x1x32x2xf32> to vector<32x2xf32>
    %578 = vector.extract_strided_slice %97 {offsets = [4, 0, 0], sizes = [1, 16, 32], strides = [1, 1, 1]} : vector<7x16x32xf32> to vector<1x16x32xf32>
    %579 = vector.shape_cast %578 : vector<1x16x32xf32> to vector<16x32xf32>
    %cst_358 = arith.constant dense<0.000000e+00> : vector<16x2xf32>
    %580 = tpu.matmul %579, %577, %cst_358 {dimension_numbers = #tpu.dot_dimension_numbers<[1], [0], [0], [1], [0, 0, 1, 1], [], []>} : vector<16x32xf32>, vector<32x2xf32>, vector<16x2xf32> -> vector<16x2xf32>
    %581 = arith.addf %575, %580 : vector<16x2xf32>
    %c1_359 = arith.constant 1 : index
    %c0_360 = arith.constant 0 : index
    %c0_361 = arith.constant 0 : index
    %c1_362 = arith.constant 1 : index
    %582 = vector.load %arg10[%c1_359, %c0_360, %c0_361, %c1_362] : memref<4x2x32x128xf32, #tpu.memory_space<vmem>>, vector<1x1x32x2xf32>
    %583 = vector.shape_cast %582 : vector<1x1x32x2xf32> to vector<32x2xf32>
    %584 = vector.extract_strided_slice %97 {offsets = [5, 0, 0], sizes = [1, 16, 32], strides = [1, 1, 1]} : vector<7x16x32xf32> to vector<1x16x32xf32>
    %585 = vector.shape_cast %584 : vector<1x16x32xf32> to vector<16x32xf32>
    %cst_363 = arith.constant dense<0.000000e+00> : vector<16x2xf32>
    %586 = tpu.matmul %585, %583, %cst_363 {dimension_numbers = #tpu.dot_dimension_numbers<[1], [0], [0], [1], [0, 0, 1, 1], [], []>} : vector<16x32xf32>, vector<32x2xf32>, vector<16x2xf32> -> vector<16x2xf32>
    %587 = arith.addf %581, %586 : vector<16x2xf32>
    %c2_364 = arith.constant 2 : index
    %c0_365 = arith.constant 0 : index
    %c0_366 = arith.constant 0 : index
    %c1_367 = arith.constant 1 : index
    %588 = vector.load %arg10[%c2_364, %c0_365, %c0_366, %c1_367] : memref<4x2x32x128xf32, #tpu.memory_space<vmem>>, vector<1x1x32x2xf32>
    %589 = vector.shape_cast %588 : vector<1x1x32x2xf32> to vector<32x2xf32>
    %590 = vector.extract_strided_slice %97 {offsets = [6, 0, 0], sizes = [1, 16, 32], strides = [1, 1, 1]} : vector<7x16x32xf32> to vector<1x16x32xf32>
    %591 = vector.shape_cast %590 : vector<1x16x32xf32> to vector<16x32xf32>
    %cst_368 = arith.constant dense<0.000000e+00> : vector<16x2xf32>
    %592 = tpu.matmul %591, %589, %cst_368 {dimension_numbers = #tpu.dot_dimension_numbers<[1], [0], [0], [1], [0, 0, 1, 1], [], []>} : vector<16x32xf32>, vector<32x2xf32>, vector<16x2xf32> -> vector<16x2xf32>
    %593 = arith.addf %587, %592 : vector<16x2xf32>
    %cst_369 = arith.constant 0.000000e+00 : f32
    %594 = vector.broadcast %cst_369 : f32 to vector<16x2xf32>
    %595 = arith.maximumf %593, %594 : vector<16x2xf32>
    %c1_370 = arith.constant 1 : index
    %c0_371 = arith.constant 0 : index
    %c0_372 = arith.constant 0 : index
    %c1_373 = arith.constant 1 : index
    %596 = vector.load %arg11[%c1_370, %c0_371, %c0_372, %c1_373] : memref<2x2x16x128xf32, #tpu.memory_space<vmem>>, vector<1x1x16x2xf32>
    %597 = vector.shape_cast %596 : vector<1x1x16x2xf32> to vector<16x2xf32>
    %598 = vector.shape_cast %595 : vector<16x2xf32> to vector<1x1x16x2xf32>
    tpu.vector_store %arg11[%c1_370, %c0_371, %c0_372, %c1_373], %598 {strides = array<i32>} : memref<2x2x16x128xf32, #tpu.memory_space<vmem>>, vector<1x1x16x2xf32>,
    %599 = vector.shape_cast %100 : vector<16x1xf32> to vector<16x1xf32>
    %600 = vector.broadcast %599 : vector<16x1xf32> to vector<16x2xf32>
    %c0_374 = arith.constant 0 : index
    %c1_375 = arith.constant 1 : index
    %c0_376 = arith.constant 0 : index
    %c0_377 = arith.constant 0 : index
    %601 = vector.load %arg10[%c0_374, %c1_375, %c0_376, %c0_377] : memref<4x2x32x128xf32, #tpu.memory_space<vmem>>, vector<1x1x32x2xf32>
    %602 = vector.shape_cast %601 : vector<1x1x32x2xf32> to vector<32x2xf32>
    %603 = vector.extract_strided_slice %97 {offsets = [0, 0, 0], sizes = [1, 16, 32], strides = [1, 1, 1]} : vector<7x16x32xf32> to vector<1x16x32xf32>
    %604 = vector.shape_cast %603 : vector<1x16x32xf32> to vector<16x32xf32>
    %cst_378 = arith.constant dense<0.000000e+00> : vector<16x2xf32>
    %605 = tpu.matmul %604, %602, %cst_378 {dimension_numbers = #tpu.dot_dimension_numbers<[1], [0], [0], [1], [0, 0, 1, 1], [], []>} : vector<16x32xf32>, vector<32x2xf32>, vector<16x2xf32> -> vector<16x2xf32>
    %606 = arith.addf %600, %605 : vector<16x2xf32>
    %c1_379 = arith.constant 1 : index
    %c1_380 = arith.constant 1 : index
    %c0_381 = arith.constant 0 : index
    %c0_382 = arith.constant 0 : index
    %607 = vector.load %arg10[%c1_379, %c1_380, %c0_381, %c0_382] : memref<4x2x32x128xf32, #tpu.memory_space<vmem>>, vector<1x1x32x2xf32>
    %608 = vector.shape_cast %607 : vector<1x1x32x2xf32> to vector<32x2xf32>
    %609 = vector.extract_strided_slice %97 {offsets = [1, 0, 0], sizes = [1, 16, 32], strides = [1, 1, 1]} : vector<7x16x32xf32> to vector<1x16x32xf32>
    %610 = vector.shape_cast %609 : vector<1x16x32xf32> to vector<16x32xf32>
    %cst_383 = arith.constant dense<0.000000e+00> : vector<16x2xf32>
    %611 = tpu.matmul %610, %608, %cst_383 {dimension_numbers = #tpu.dot_dimension_numbers<[1], [0], [0], [1], [0, 0, 1, 1], [], []>} : vector<16x32xf32>, vector<32x2xf32>, vector<16x2xf32> -> vector<16x2xf32>
    %612 = arith.addf %606, %611 : vector<16x2xf32>
    %c2_384 = arith.constant 2 : index
    %c1_385 = arith.constant 1 : index
    %c0_386 = arith.constant 0 : index
    %c0_387 = arith.constant 0 : index
    %613 = vector.load %arg10[%c2_384, %c1_385, %c0_386, %c0_387] : memref<4x2x32x128xf32, #tpu.memory_space<vmem>>, vector<1x1x32x2xf32>
    %614 = vector.shape_cast %613 : vector<1x1x32x2xf32> to vector<32x2xf32>
    %615 = vector.extract_strided_slice %97 {offsets = [2, 0, 0], sizes = [1, 16, 32], strides = [1, 1, 1]} : vector<7x16x32xf32> to vector<1x16x32xf32>
    %616 = vector.shape_cast %615 : vector<1x16x32xf32> to vector<16x32xf32>
    %cst_388 = arith.constant dense<0.000000e+00> : vector<16x2xf32>
    %617 = tpu.matmul %616, %614, %cst_388 {dimension_numbers = #tpu.dot_dimension_numbers<[1], [0], [0], [1], [0, 0, 1, 1], [], []>} : vector<16x32xf32>, vector<32x2xf32>, vector<16x2xf32> -> vector<16x2xf32>
    %618 = arith.addf %612, %617 : vector<16x2xf32>
    %c3_389 = arith.constant 3 : index
    %c1_390 = arith.constant 1 : index
    %c0_391 = arith.constant 0 : index
    %c0_392 = arith.constant 0 : index
    %619 = vector.load %arg10[%c3_389, %c1_390, %c0_391, %c0_392] : memref<4x2x32x128xf32, #tpu.memory_space<vmem>>, vector<1x1x32x2xf32>
    %620 = vector.shape_cast %619 : vector<1x1x32x2xf32> to vector<32x2xf32>
    %621 = vector.extract_strided_slice %97 {offsets = [3, 0, 0], sizes = [1, 16, 32], strides = [1, 1, 1]} : vector<7x16x32xf32> to vector<1x16x32xf32>
    %622 = vector.shape_cast %621 : vector<1x16x32xf32> to vector<16x32xf32>
    %cst_393 = arith.constant dense<0.000000e+00> : vector<16x2xf32>
    %623 = tpu.matmul %622, %620, %cst_393 {dimension_numbers = #tpu.dot_dimension_numbers<[1], [0], [0], [1], [0, 0, 1, 1], [], []>} : vector<16x32xf32>, vector<32x2xf32>, vector<16x2xf32> -> vector<16x2xf32>
    %624 = arith.addf %618, %623 : vector<16x2xf32>
    %c0_394 = arith.constant 0 : index
    %c1_395 = arith.constant 1 : index
    %c0_396 = arith.constant 0 : index
    %c1_397 = arith.constant 1 : index
    %625 = vector.load %arg10[%c0_394, %c1_395, %c0_396, %c1_397] : memref<4x2x32x128xf32, #tpu.memory_space<vmem>>, vector<1x1x32x2xf32>
    %626 = vector.shape_cast %625 : vector<1x1x32x2xf32> to vector<32x2xf32>
    %627 = vector.extract_strided_slice %97 {offsets = [4, 0, 0], sizes = [1, 16, 32], strides = [1, 1, 1]} : vector<7x16x32xf32> to vector<1x16x32xf32>
    %628 = vector.shape_cast %627 : vector<1x16x32xf32> to vector<16x32xf32>
    %cst_398 = arith.constant dense<0.000000e+00> : vector<16x2xf32>
    %629 = tpu.matmul %628, %626, %cst_398 {dimension_numbers = #tpu.dot_dimension_numbers<[1], [0], [0], [1], [0, 0, 1, 1], [], []>} : vector<16x32xf32>, vector<32x2xf32>, vector<16x2xf32> -> vector<16x2xf32>
    %630 = arith.addf %624, %629 : vector<16x2xf32>
    %c1_399 = arith.constant 1 : index
    %c1_400 = arith.constant 1 : index
    %c0_401 = arith.constant 0 : index
    %c1_402 = arith.constant 1 : index
    %631 = vector.load %arg10[%c1_399, %c1_400, %c0_401, %c1_402] : memref<4x2x32x128xf32, #tpu.memory_space<vmem>>, vector<1x1x32x2xf32>
    %632 = vector.shape_cast %631 : vector<1x1x32x2xf32> to vector<32x2xf32>
    %633 = vector.extract_strided_slice %97 {offsets = [5, 0, 0], sizes = [1, 16, 32], strides = [1, 1, 1]} : vector<7x16x32xf32> to vector<1x16x32xf32>
    %634 = vector.shape_cast %633 : vector<1x16x32xf32> to vector<16x32xf32>
    %cst_403 = arith.constant dense<0.000000e+00> : vector<16x2xf32>
    %635 = tpu.matmul %634, %632, %cst_403 {dimension_numbers = #tpu.dot_dimension_numbers<[1], [0], [0], [1], [0, 0, 1, 1], [], []>} : vector<16x32xf32>, vector<32x2xf32>, vector<16x2xf32> -> vector<16x2xf32>
    %636 = arith.addf %630, %635 : vector<16x2xf32>
    %c2_404 = arith.constant 2 : index
    %c1_405 = arith.constant 1 : index
    %c0_406 = arith.constant 0 : index
    %c1_407 = arith.constant 1 : index
    %637 = vector.load %arg10[%c2_404, %c1_405, %c0_406, %c1_407] : memref<4x2x32x128xf32, #tpu.memory_space<vmem>>, vector<1x1x32x2xf32>
    %638 = vector.shape_cast %637 : vector<1x1x32x2xf32> to vector<32x2xf32>
    %639 = vector.extract_strided_slice %97 {offsets = [6, 0, 0], sizes = [1, 16, 32], strides = [1, 1, 1]} : vector<7x16x32xf32> to vector<1x16x32xf32>
    %640 = vector.shape_cast %639 : vector<1x16x32xf32> to vector<16x32xf32>
    %cst_408 = arith.constant dense<0.000000e+00> : vector<16x2xf32>
    %641 = tpu.matmul %640, %638, %cst_408 {dimension_numbers = #tpu.dot_dimension_numbers<[1], [0], [0], [1], [0, 0, 1, 1], [], []>} : vector<16x32xf32>, vector<32x2xf32>, vector<16x2xf32> -> vector<16x2xf32>
    %642 = arith.addf %636, %641 : vector<16x2xf32>
    %cst_409 = arith.constant 0.000000e+00 : f32
    %643 = vector.broadcast %cst_409 : f32 to vector<16x2xf32>
    %644 = arith.maximumf %642, %643 : vector<16x2xf32>
    %c1_410 = arith.constant 1 : index
    %c1_411 = arith.constant 1 : index
    %c0_412 = arith.constant 0 : index
    %c1_413 = arith.constant 1 : index
    %645 = vector.load %arg11[%c1_410, %c1_411, %c0_412, %c1_413] : memref<2x2x16x128xf32, #tpu.memory_space<vmem>>, vector<1x1x16x2xf32>
    %646 = vector.shape_cast %645 : vector<1x1x16x2xf32> to vector<16x2xf32>
    %647 = vector.shape_cast %644 : vector<16x2xf32> to vector<1x1x16x2xf32>
    tpu.vector_store %arg11[%c1_410, %c1_411, %c0_412, %c1_413], %647 {strides = array<i32>} : memref<2x2x16x128xf32, #tpu.memory_space<vmem>>, vector<1x1x16x2xf32>,
    %648 = vector.shape_cast %100 : vector<16x1xf32> to vector<16x1xf32>
    %649 = vector.broadcast %648 : vector<16x1xf32> to vector<16x2xf32>
    %c2_414 = arith.constant 2 : index
    %c0_415 = arith.constant 0 : index
    %c0_416 = arith.constant 0 : index
    %c0_417 = arith.constant 0 : index
    %650 = vector.load %arg10[%c2_414, %c0_415, %c0_416, %c0_417] : memref<4x2x32x128xf32, #tpu.memory_space<vmem>>, vector<1x1x32x2xf32>
    %651 = vector.shape_cast %650 : vector<1x1x32x2xf32> to vector<32x2xf32>
    %652 = vector.extract_strided_slice %97 {offsets = [0, 0, 0], sizes = [1, 16, 32], strides = [1, 1, 1]} : vector<7x16x32xf32> to vector<1x16x32xf32>
    %653 = vector.shape_cast %652 : vector<1x16x32xf32> to vector<16x32xf32>
    %cst_418 = arith.constant dense<0.000000e+00> : vector<16x2xf32>
    %654 = tpu.matmul %653, %651, %cst_418 {dimension_numbers = #tpu.dot_dimension_numbers<[1], [0], [0], [1], [0, 0, 1, 1], [], []>} : vector<16x32xf32>, vector<32x2xf32>, vector<16x2xf32> -> vector<16x2xf32>
    %655 = arith.addf %649, %654 : vector<16x2xf32>
    %c3_419 = arith.constant 3 : index
    %c0_420 = arith.constant 0 : index
    %c0_421 = arith.constant 0 : index
    %c0_422 = arith.constant 0 : index
    %656 = vector.load %arg10[%c3_419, %c0_420, %c0_421, %c0_422] : memref<4x2x32x128xf32, #tpu.memory_space<vmem>>, vector<1x1x32x2xf32>
    %657 = vector.shape_cast %656 : vector<1x1x32x2xf32> to vector<32x2xf32>
    %658 = vector.extract_strided_slice %97 {offsets = [1, 0, 0], sizes = [1, 16, 32], strides = [1, 1, 1]} : vector<7x16x32xf32> to vector<1x16x32xf32>
    %659 = vector.shape_cast %658 : vector<1x16x32xf32> to vector<16x32xf32>
    %cst_423 = arith.constant dense<0.000000e+00> : vector<16x2xf32>
    %660 = tpu.matmul %659, %657, %cst_423 {dimension_numbers = #tpu.dot_dimension_numbers<[1], [0], [0], [1], [0, 0, 1, 1], [], []>} : vector<16x32xf32>, vector<32x2xf32>, vector<16x2xf32> -> vector<16x2xf32>
    %661 = arith.addf %655, %660 : vector<16x2xf32>
    %c0_424 = arith.constant 0 : index
    %c0_425 = arith.constant 0 : index
    %c0_426 = arith.constant 0 : index
    %c1_427 = arith.constant 1 : index
    %662 = vector.load %arg10[%c0_424, %c0_425, %c0_426, %c1_427] : memref<4x2x32x128xf32, #tpu.memory_space<vmem>>, vector<1x1x32x2xf32>
    %663 = vector.shape_cast %662 : vector<1x1x32x2xf32> to vector<32x2xf32>
    %664 = vector.extract_strided_slice %97 {offsets = [2, 0, 0], sizes = [1, 16, 32], strides = [1, 1, 1]} : vector<7x16x32xf32> to vector<1x16x32xf32>
    %665 = vector.shape_cast %664 : vector<1x16x32xf32> to vector<16x32xf32>
    %cst_428 = arith.constant dense<0.000000e+00> : vector<16x2xf32>
    %666 = tpu.matmul %665, %663, %cst_428 {dimension_numbers = #tpu.dot_dimension_numbers<[1], [0], [0], [1], [0, 0, 1, 1], [], []>} : vector<16x32xf32>, vector<32x2xf32>, vector<16x2xf32> -> vector<16x2xf32>
    %667 = arith.addf %661, %666 : vector<16x2xf32>
    %c1_429 = arith.constant 1 : index
    %c0_430 = arith.constant 0 : index
    %c0_431 = arith.constant 0 : index
    %c1_432 = arith.constant 1 : index
    %668 = vector.load %arg10[%c1_429, %c0_430, %c0_431, %c1_432] : memref<4x2x32x128xf32, #tpu.memory_space<vmem>>, vector<1x1x32x2xf32>
    %669 = vector.shape_cast %668 : vector<1x1x32x2xf32> to vector<32x2xf32>
    %670 = vector.extract_strided_slice %97 {offsets = [3, 0, 0], sizes = [1, 16, 32], strides = [1, 1, 1]} : vector<7x16x32xf32> to vector<1x16x32xf32>
    %671 = vector.shape_cast %670 : vector<1x16x32xf32> to vector<16x32xf32>
    %cst_433 = arith.constant dense<0.000000e+00> : vector<16x2xf32>
    %672 = tpu.matmul %671, %669, %cst_433 {dimension_numbers = #tpu.dot_dimension_numbers<[1], [0], [0], [1], [0, 0, 1, 1], [], []>} : vector<16x32xf32>, vector<32x2xf32>, vector<16x2xf32> -> vector<16x2xf32>
    %673 = arith.addf %667, %672 : vector<16x2xf32>
    %c2_434 = arith.constant 2 : index
    %c0_435 = arith.constant 0 : index
    %c0_436 = arith.constant 0 : index
    %c1_437 = arith.constant 1 : index
    %674 = vector.load %arg10[%c2_434, %c0_435, %c0_436, %c1_437] : memref<4x2x32x128xf32, #tpu.memory_space<vmem>>, vector<1x1x32x2xf32>
    %675 = vector.shape_cast %674 : vector<1x1x32x2xf32> to vector<32x2xf32>
    %676 = vector.extract_strided_slice %97 {offsets = [4, 0, 0], sizes = [1, 16, 32], strides = [1, 1, 1]} : vector<7x16x32xf32> to vector<1x16x32xf32>
    %677 = vector.shape_cast %676 : vector<1x16x32xf32> to vector<16x32xf32>
    %cst_438 = arith.constant dense<0.000000e+00> : vector<16x2xf32>
    %678 = tpu.matmul %677, %675, %cst_438 {dimension_numbers = #tpu.dot_dimension_numbers<[1], [0], [0], [1], [0, 0, 1, 1], [], []>} : vector<16x32xf32>, vector<32x2xf32>, vector<16x2xf32> -> vector<16x2xf32>
    %679 = arith.addf %673, %678 : vector<16x2xf32>
    %c3_439 = arith.constant 3 : index
    %c0_440 = arith.constant 0 : index
    %c0_441 = arith.constant 0 : index
    %c1_442 = arith.constant 1 : index
    %680 = vector.load %arg10[%c3_439, %c0_440, %c0_441, %c1_442] : memref<4x2x32x128xf32, #tpu.memory_space<vmem>>, vector<1x1x32x2xf32>
    %681 = vector.shape_cast %680 : vector<1x1x32x2xf32> to vector<32x2xf32>
    %682 = vector.extract_strided_slice %97 {offsets = [5, 0, 0], sizes = [1, 16, 32], strides = [1, 1, 1]} : vector<7x16x32xf32> to vector<1x16x32xf32>
    %683 = vector.shape_cast %682 : vector<1x16x32xf32> to vector<16x32xf32>
    %cst_443 = arith.constant dense<0.000000e+00> : vector<16x2xf32>
    %684 = tpu.matmul %683, %681, %cst_443 {dimension_numbers = #tpu.dot_dimension_numbers<[1], [0], [0], [1], [0, 0, 1, 1], [], []>} : vector<16x32xf32>, vector<32x2xf32>, vector<16x2xf32> -> vector<16x2xf32>
    %685 = arith.addf %679, %684 : vector<16x2xf32>
    %c0_444 = arith.constant 0 : index
    %c0_445 = arith.constant 0 : index
    %c0_446 = arith.constant 0 : index
    %c2_447 = arith.constant 2 : index
    %686 = vector.load %arg10[%c0_444, %c0_445, %c0_446, %c2_447] : memref<4x2x32x128xf32, #tpu.memory_space<vmem>>, vector<1x1x32x2xf32>
    %687 = vector.shape_cast %686 : vector<1x1x32x2xf32> to vector<32x2xf32>
    %688 = vector.extract_strided_slice %97 {offsets = [6, 0, 0], sizes = [1, 16, 32], strides = [1, 1, 1]} : vector<7x16x32xf32> to vector<1x16x32xf32>
    %689 = vector.shape_cast %688 : vector<1x16x32xf32> to vector<16x32xf32>
    %cst_448 = arith.constant dense<0.000000e+00> : vector<16x2xf32>
    %690 = tpu.matmul %689, %687, %cst_448 {dimension_numbers = #tpu.dot_dimension_numbers<[1], [0], [0], [1], [0, 0, 1, 1], [], []>} : vector<16x32xf32>, vector<32x2xf32>, vector<16x2xf32> -> vector<16x2xf32>
    %691 = arith.addf %685, %690 : vector<16x2xf32>
    %cst_449 = arith.constant 0.000000e+00 : f32
    %692 = vector.broadcast %cst_449 : f32 to vector<16x2xf32>
    %693 = arith.maximumf %691, %692 : vector<16x2xf32>
    %c0_450 = arith.constant 0 : index
    %c0_451 = arith.constant 0 : index
    %c0_452 = arith.constant 0 : index
    %c2_453 = arith.constant 2 : index
    %694 = vector.load %arg11[%c0_450, %c0_451, %c0_452, %c2_453] : memref<2x2x16x128xf32, #tpu.memory_space<vmem>>, vector<1x1x16x2xf32>
    %695 = vector.shape_cast %694 : vector<1x1x16x2xf32> to vector<16x2xf32>
    %696 = vector.shape_cast %693 : vector<16x2xf32> to vector<1x1x16x2xf32>
    tpu.vector_store %arg11[%c0_450, %c0_451, %c0_452, %c2_453], %696 {strides = array<i32>} : memref<2x2x16x128xf32, #tpu.memory_space<vmem>>, vector<1x1x16x2xf32>,
    %697 = vector.shape_cast %100 : vector<16x1xf32> to vector<16x1xf32>
    %698 = vector.broadcast %697 : vector<16x1xf32> to vector<16x2xf32>
    %c2_454 = arith.constant 2 : index
    %c1_455 = arith.constant 1 : index
    %c0_456 = arith.constant 0 : index
    %c0_457 = arith.constant 0 : index
    %699 = vector.load %arg10[%c2_454, %c1_455, %c0_456, %c0_457] : memref<4x2x32x128xf32, #tpu.memory_space<vmem>>, vector<1x1x32x2xf32>
    %700 = vector.shape_cast %699 : vector<1x1x32x2xf32> to vector<32x2xf32>
    %701 = vector.extract_strided_slice %97 {offsets = [0, 0, 0], sizes = [1, 16, 32], strides = [1, 1, 1]} : vector<7x16x32xf32> to vector<1x16x32xf32>
    %702 = vector.shape_cast %701 : vector<1x16x32xf32> to vector<16x32xf32>
    %cst_458 = arith.constant dense<0.000000e+00> : vector<16x2xf32>
    %703 = tpu.matmul %702, %700, %cst_458 {dimension_numbers = #tpu.dot_dimension_numbers<[1], [0], [0], [1], [0, 0, 1, 1], [], []>} : vector<16x32xf32>, vector<32x2xf32>, vector<16x2xf32> -> vector<16x2xf32>
    %704 = arith.addf %698, %703 : vector<16x2xf32>
    %c3_459 = arith.constant 3 : index
    %c1_460 = arith.constant 1 : index
    %c0_461 = arith.constant 0 : index
    %c0_462 = arith.constant 0 : index
    %705 = vector.load %arg10[%c3_459, %c1_460, %c0_461, %c0_462] : memref<4x2x32x128xf32, #tpu.memory_space<vmem>>, vector<1x1x32x2xf32>
    %706 = vector.shape_cast %705 : vector<1x1x32x2xf32> to vector<32x2xf32>
    %707 = vector.extract_strided_slice %97 {offsets = [1, 0, 0], sizes = [1, 16, 32], strides = [1, 1, 1]} : vector<7x16x32xf32> to vector<1x16x32xf32>
    %708 = vector.shape_cast %707 : vector<1x16x32xf32> to vector<16x32xf32>
    %cst_463 = arith.constant dense<0.000000e+00> : vector<16x2xf32>
    %709 = tpu.matmul %708, %706, %cst_463 {dimension_numbers = #tpu.dot_dimension_numbers<[1], [0], [0], [1], [0, 0, 1, 1], [], []>} : vector<16x32xf32>, vector<32x2xf32>, vector<16x2xf32> -> vector<16x2xf32>
    %710 = arith.addf %704, %709 : vector<16x2xf32>
    %c0_464 = arith.constant 0 : index
    %c1_465 = arith.constant 1 : index
    %c0_466 = arith.constant 0 : index
    %c1_467 = arith.constant 1 : index
    %711 = vector.load %arg10[%c0_464, %c1_465, %c0_466, %c1_467] : memref<4x2x32x128xf32, #tpu.memory_space<vmem>>, vector<1x1x32x2xf32>
    %712 = vector.shape_cast %711 : vector<1x1x32x2xf32> to vector<32x2xf32>
    %713 = vector.extract_strided_slice %97 {offsets = [2, 0, 0], sizes = [1, 16, 32], strides = [1, 1, 1]} : vector<7x16x32xf32> to vector<1x16x32xf32>
    %714 = vector.shape_cast %713 : vector<1x16x32xf32> to vector<16x32xf32>
    %cst_468 = arith.constant dense<0.000000e+00> : vector<16x2xf32>
    %715 = tpu.matmul %714, %712, %cst_468 {dimension_numbers = #tpu.dot_dimension_numbers<[1], [0], [0], [1], [0, 0, 1, 1], [], []>} : vector<16x32xf32>, vector<32x2xf32>, vector<16x2xf32> -> vector<16x2xf32>
    %716 = arith.addf %710, %715 : vector<16x2xf32>
    %c1_469 = arith.constant 1 : index
    %c1_470 = arith.constant 1 : index
    %c0_471 = arith.constant 0 : index
    %c1_472 = arith.constant 1 : index
    %717 = vector.load %arg10[%c1_469, %c1_470, %c0_471, %c1_472] : memref<4x2x32x128xf32, #tpu.memory_space<vmem>>, vector<1x1x32x2xf32>
    %718 = vector.shape_cast %717 : vector<1x1x32x2xf32> to vector<32x2xf32>
    %719 = vector.extract_strided_slice %97 {offsets = [3, 0, 0], sizes = [1, 16, 32], strides = [1, 1, 1]} : vector<7x16x32xf32> to vector<1x16x32xf32>
    %720 = vector.shape_cast %719 : vector<1x16x32xf32> to vector<16x32xf32>
    %cst_473 = arith.constant dense<0.000000e+00> : vector<16x2xf32>
    %721 = tpu.matmul %720, %718, %cst_473 {dimension_numbers = #tpu.dot_dimension_numbers<[1], [0], [0], [1], [0, 0, 1, 1], [], []>} : vector<16x32xf32>, vector<32x2xf32>, vector<16x2xf32> -> vector<16x2xf32>
    %722 = arith.addf %716, %721 : vector<16x2xf32>
    %c2_474 = arith.constant 2 : index
    %c1_475 = arith.constant 1 : index
    %c0_476 = arith.constant 0 : index
    %c1_477 = arith.constant 1 : index
    %723 = vector.load %arg10[%c2_474, %c1_475, %c0_476, %c1_477] : memref<4x2x32x128xf32, #tpu.memory_space<vmem>>, vector<1x1x32x2xf32>
    %724 = vector.shape_cast %723 : vector<1x1x32x2xf32> to vector<32x2xf32>
    %725 = vector.extract_strided_slice %97 {offsets = [4, 0, 0], sizes = [1, 16, 32], strides = [1, 1, 1]} : vector<7x16x32xf32> to vector<1x16x32xf32>
    %726 = vector.shape_cast %725 : vector<1x16x32xf32> to vector<16x32xf32>
    %cst_478 = arith.constant dense<0.000000e+00> : vector<16x2xf32>
    %727 = tpu.matmul %726, %724, %cst_478 {dimension_numbers = #tpu.dot_dimension_numbers<[1], [0], [0], [1], [0, 0, 1, 1], [], []>} : vector<16x32xf32>, vector<32x2xf32>, vector<16x2xf32> -> vector<16x2xf32>
    %728 = arith.addf %722, %727 : vector<16x2xf32>
    %c3_479 = arith.constant 3 : index
    %c1_480 = arith.constant 1 : index
    %c0_481 = arith.constant 0 : index
    %c1_482 = arith.constant 1 : index
    %729 = vector.load %arg10[%c3_479, %c1_480, %c0_481, %c1_482] : memref<4x2x32x128xf32, #tpu.memory_space<vmem>>, vector<1x1x32x2xf32>
    %730 = vector.shape_cast %729 : vector<1x1x32x2xf32> to vector<32x2xf32>
    %731 = vector.extract_strided_slice %97 {offsets = [5, 0, 0], sizes = [1, 16, 32], strides = [1, 1, 1]} : vector<7x16x32xf32> to vector<1x16x32xf32>
    %732 = vector.shape_cast %731 : vector<1x16x32xf32> to vector<16x32xf32>
    %cst_483 = arith.constant dense<0.000000e+00> : vector<16x2xf32>
    %733 = tpu.matmul %732, %730, %cst_483 {dimension_numbers = #tpu.dot_dimension_numbers<[1], [0], [0], [1], [0, 0, 1, 1], [], []>} : vector<16x32xf32>, vector<32x2xf32>, vector<16x2xf32> -> vector<16x2xf32>
    %734 = arith.addf %728, %733 : vector<16x2xf32>
    %c0_484 = arith.constant 0 : index
    %c1_485 = arith.constant 1 : index
    %c0_486 = arith.constant 0 : index
    %c2_487 = arith.constant 2 : index
    %735 = vector.load %arg10[%c0_484, %c1_485, %c0_486, %c2_487] : memref<4x2x32x128xf32, #tpu.memory_space<vmem>>, vector<1x1x32x2xf32>
    %736 = vector.shape_cast %735 : vector<1x1x32x2xf32> to vector<32x2xf32>
    %737 = vector.extract_strided_slice %97 {offsets = [6, 0, 0], sizes = [1, 16, 32], strides = [1, 1, 1]} : vector<7x16x32xf32> to vector<1x16x32xf32>
    %738 = vector.shape_cast %737 : vector<1x16x32xf32> to vector<16x32xf32>
    %cst_488 = arith.constant dense<0.000000e+00> : vector<16x2xf32>
    %739 = tpu.matmul %738, %736, %cst_488 {dimension_numbers = #tpu.dot_dimension_numbers<[1], [0], [0], [1], [0, 0, 1, 1], [], []>} : vector<16x32xf32>, vector<32x2xf32>, vector<16x2xf32> -> vector<16x2xf32>
    %740 = arith.addf %734, %739 : vector<16x2xf32>
    %cst_489 = arith.constant 0.000000e+00 : f32
    %741 = vector.broadcast %cst_489 : f32 to vector<16x2xf32>
    %742 = arith.maximumf %740, %741 : vector<16x2xf32>
    %c0_490 = arith.constant 0 : index
    %c1_491 = arith.constant 1 : index
    %c0_492 = arith.constant 0 : index
    %c2_493 = arith.constant 2 : index
    %743 = vector.load %arg11[%c0_490, %c1_491, %c0_492, %c2_493] : memref<2x2x16x128xf32, #tpu.memory_space<vmem>>, vector<1x1x16x2xf32>
    %744 = vector.shape_cast %743 : vector<1x1x16x2xf32> to vector<16x2xf32>
    %745 = vector.shape_cast %742 : vector<16x2xf32> to vector<1x1x16x2xf32>
    tpu.vector_store %arg11[%c0_490, %c1_491, %c0_492, %c2_493], %745 {strides = array<i32>} : memref<2x2x16x128xf32, #tpu.memory_space<vmem>>, vector<1x1x16x2xf32>,
    %746 = vector.shape_cast %101 : vector<8x1xf32> to vector<8x1xf32>
    %747 = vector.broadcast %746 : vector<8x1xf32> to vector<8x2xf32>
    %c0_494 = arith.constant 0 : index
    %c0_495 = arith.constant 0 : index
    %c0_496 = arith.constant 0 : index
    %c0_497 = arith.constant 0 : index
    %748 = vector.load %arg11[%c0_494, %c0_495, %c0_496, %c0_497] : memref<2x2x16x128xf32, #tpu.memory_space<vmem>>, vector<1x1x16x2xf32>
    %749 = vector.shape_cast %748 : vector<1x1x16x2xf32> to vector<16x2xf32>
    %750 = vector.extract_strided_slice %98 {offsets = [0, 0, 0], sizes = [1, 8, 16], strides = [1, 1, 1]} : vector<7x8x16xf32> to vector<1x8x16xf32>
    %751 = vector.shape_cast %750 : vector<1x8x16xf32> to vector<8x16xf32>
    %cst_498 = arith.constant dense<0.000000e+00> : vector<8x2xf32>
    %752 = tpu.matmul %751, %749, %cst_498 {dimension_numbers = #tpu.dot_dimension_numbers<[1], [0], [0], [1], [0, 0, 1, 1], [], []>} : vector<8x16xf32>, vector<16x2xf32>, vector<8x2xf32> -> vector<8x2xf32>
    %753 = arith.addf %747, %752 : vector<8x2xf32>
    %c1_499 = arith.constant 1 : index
    %c0_500 = arith.constant 0 : index
    %c0_501 = arith.constant 0 : index
    %c0_502 = arith.constant 0 : index
    %754 = vector.load %arg11[%c1_499, %c0_500, %c0_501, %c0_502] : memref<2x2x16x128xf32, #tpu.memory_space<vmem>>, vector<1x1x16x2xf32>
    %755 = vector.shape_cast %754 : vector<1x1x16x2xf32> to vector<16x2xf32>
    %756 = vector.extract_strided_slice %98 {offsets = [1, 0, 0], sizes = [1, 8, 16], strides = [1, 1, 1]} : vector<7x8x16xf32> to vector<1x8x16xf32>
    %757 = vector.shape_cast %756 : vector<1x8x16xf32> to vector<8x16xf32>
    %cst_503 = arith.constant dense<0.000000e+00> : vector<8x2xf32>
    %758 = tpu.matmul %757, %755, %cst_503 {dimension_numbers = #tpu.dot_dimension_numbers<[1], [0], [0], [1], [0, 0, 1, 1], [], []>} : vector<8x16xf32>, vector<16x2xf32>, vector<8x2xf32> -> vector<8x2xf32>
    %759 = arith.addf %753, %758 : vector<8x2xf32>
    %c0_504 = arith.constant 0 : index
    %c0_505 = arith.constant 0 : index
    %c0_506 = arith.constant 0 : index
    %c1_507 = arith.constant 1 : index
    %760 = vector.load %arg11[%c0_504, %c0_505, %c0_506, %c1_507] : memref<2x2x16x128xf32, #tpu.memory_space<vmem>>, vector<1x1x16x2xf32>
    %761 = vector.shape_cast %760 : vector<1x1x16x2xf32> to vector<16x2xf32>
    %762 = vector.extract_strided_slice %98 {offsets = [2, 0, 0], sizes = [1, 8, 16], strides = [1, 1, 1]} : vector<7x8x16xf32> to vector<1x8x16xf32>
    %763 = vector.shape_cast %762 : vector<1x8x16xf32> to vector<8x16xf32>
    %cst_508 = arith.constant dense<0.000000e+00> : vector<8x2xf32>
    %764 = tpu.matmul %763, %761, %cst_508 {dimension_numbers = #tpu.dot_dimension_numbers<[1], [0], [0], [1], [0, 0, 1, 1], [], []>} : vector<8x16xf32>, vector<16x2xf32>, vector<8x2xf32> -> vector<8x2xf32>
    %765 = arith.addf %759, %764 : vector<8x2xf32>
    %c1_509 = arith.constant 1 : index
    %c0_510 = arith.constant 0 : index
    %c0_511 = arith.constant 0 : index
    %c1_512 = arith.constant 1 : index
    %766 = vector.load %arg11[%c1_509, %c0_510, %c0_511, %c1_512] : memref<2x2x16x128xf32, #tpu.memory_space<vmem>>, vector<1x1x16x2xf32>
    %767 = vector.shape_cast %766 : vector<1x1x16x2xf32> to vector<16x2xf32>
    %768 = vector.extract_strided_slice %98 {offsets = [3, 0, 0], sizes = [1, 8, 16], strides = [1, 1, 1]} : vector<7x8x16xf32> to vector<1x8x16xf32>
    %769 = vector.shape_cast %768 : vector<1x8x16xf32> to vector<8x16xf32>
    %cst_513 = arith.constant dense<0.000000e+00> : vector<8x2xf32>
    %770 = tpu.matmul %769, %767, %cst_513 {dimension_numbers = #tpu.dot_dimension_numbers<[1], [0], [0], [1], [0, 0, 1, 1], [], []>} : vector<8x16xf32>, vector<16x2xf32>, vector<8x2xf32> -> vector<8x2xf32>
    %771 = arith.addf %765, %770 : vector<8x2xf32>
    %c0_514 = arith.constant 0 : index
    %c0_515 = arith.constant 0 : index
    %c0_516 = arith.constant 0 : index
    %c2_517 = arith.constant 2 : index
    %772 = vector.load %arg11[%c0_514, %c0_515, %c0_516, %c2_517] : memref<2x2x16x128xf32, #tpu.memory_space<vmem>>, vector<1x1x16x2xf32>
    %773 = vector.shape_cast %772 : vector<1x1x16x2xf32> to vector<16x2xf32>
    %774 = vector.extract_strided_slice %98 {offsets = [4, 0, 0], sizes = [1, 8, 16], strides = [1, 1, 1]} : vector<7x8x16xf32> to vector<1x8x16xf32>
    %775 = vector.shape_cast %774 : vector<1x8x16xf32> to vector<8x16xf32>
    %cst_518 = arith.constant dense<0.000000e+00> : vector<8x2xf32>
    %776 = tpu.matmul %775, %773, %cst_518 {dimension_numbers = #tpu.dot_dimension_numbers<[1], [0], [0], [1], [0, 0, 1, 1], [], []>} : vector<8x16xf32>, vector<16x2xf32>, vector<8x2xf32> -> vector<8x2xf32>
    %777 = arith.addf %771, %776 : vector<8x2xf32>
    %c1_519 = arith.constant 1 : index
    %c0_520 = arith.constant 0 : index
    %c0_521 = arith.constant 0 : index
    %c2_522 = arith.constant 2 : index
    %778 = vector.load %arg11[%c1_519, %c0_520, %c0_521, %c2_522] : memref<2x2x16x128xf32, #tpu.memory_space<vmem>>, vector<1x1x16x2xf32>
    %779 = vector.shape_cast %778 : vector<1x1x16x2xf32> to vector<16x2xf32>
    %780 = vector.extract_strided_slice %98 {offsets = [5, 0, 0], sizes = [1, 8, 16], strides = [1, 1, 1]} : vector<7x8x16xf32> to vector<1x8x16xf32>
    %781 = vector.shape_cast %780 : vector<1x8x16xf32> to vector<8x16xf32>
    %cst_523 = arith.constant dense<0.000000e+00> : vector<8x2xf32>
    %782 = tpu.matmul %781, %779, %cst_523 {dimension_numbers = #tpu.dot_dimension_numbers<[1], [0], [0], [1], [0, 0, 1, 1], [], []>} : vector<8x16xf32>, vector<16x2xf32>, vector<8x2xf32> -> vector<8x2xf32>
    %783 = arith.addf %777, %782 : vector<8x2xf32>
    %c0_524 = arith.constant 0 : index
    %c0_525 = arith.constant 0 : index
    %c0_526 = arith.constant 0 : index
    %c3_527 = arith.constant 3 : index
    %784 = vector.load %arg11[%c0_524, %c0_525, %c0_526, %c3_527] : memref<2x2x16x128xf32, #tpu.memory_space<vmem>>, vector<1x1x16x2xf32>
    %785 = vector.shape_cast %784 : vector<1x1x16x2xf32> to vector<16x2xf32>
    %786 = vector.extract_strided_slice %98 {offsets = [6, 0, 0], sizes = [1, 8, 16], strides = [1, 1, 1]} : vector<7x8x16xf32> to vector<1x8x16xf32>
    %787 = vector.shape_cast %786 : vector<1x8x16xf32> to vector<8x16xf32>
    %cst_528 = arith.constant dense<0.000000e+00> : vector<8x2xf32>
    %788 = tpu.matmul %787, %785, %cst_528 {dimension_numbers = #tpu.dot_dimension_numbers<[1], [0], [0], [1], [0, 0, 1, 1], [], []>} : vector<8x16xf32>, vector<16x2xf32>, vector<8x2xf32> -> vector<8x2xf32>
    %789 = arith.addf %783, %788 : vector<8x2xf32>
    %cst_529 = arith.constant 0.000000e+00 : f32
    %790 = vector.broadcast %cst_529 : f32 to vector<8x2xf32>
    %791 = arith.maximumf %789, %790 : vector<8x2xf32>
    %c0_530 = arith.constant 0 : index
    %c0_531 = arith.constant 0 : index
    %c0_532 = arith.constant 0 : index
    %c0_533 = arith.constant 0 : index
    %792 = vector.load %arg8[%c0_530, %c0_531, %c0_532, %c0_533] : memref<1x2x8x2xf32, #tpu.memory_space<vmem>>, vector<1x1x8x2xf32>
    %793 = vector.shape_cast %792 : vector<1x1x8x2xf32> to vector<8x2xf32>
    %794 = vector.shape_cast %791 : vector<8x2xf32> to vector<1x1x8x2xf32>
    tpu.vector_store %arg8[%c0_530, %c0_531, %c0_532, %c0_533], %794 {strides = array<i32>} : memref<1x2x8x2xf32, #tpu.memory_space<vmem>>, vector<1x1x8x2xf32>,
    %795 = vector.shape_cast %101 : vector<8x1xf32> to vector<8x1xf32>
    %796 = vector.broadcast %795 : vector<8x1xf32> to vector<8x2xf32>
    %c0_534 = arith.constant 0 : index
    %c1_535 = arith.constant 1 : index
    %c0_536 = arith.constant 0 : index
    %c0_537 = arith.constant 0 : index
    %797 = vector.load %arg11[%c0_534, %c1_535, %c0_536, %c0_537] : memref<2x2x16x128xf32, #tpu.memory_space<vmem>>, vector<1x1x16x2xf32>
    %798 = vector.shape_cast %797 : vector<1x1x16x2xf32> to vector<16x2xf32>
    %799 = vector.extract_strided_slice %98 {offsets = [0, 0, 0], sizes = [1, 8, 16], strides = [1, 1, 1]} : vector<7x8x16xf32> to vector<1x8x16xf32>
    %800 = vector.shape_cast %799 : vector<1x8x16xf32> to vector<8x16xf32>
    %cst_538 = arith.constant dense<0.000000e+00> : vector<8x2xf32>
    %801 = tpu.matmul %800, %798, %cst_538 {dimension_numbers = #tpu.dot_dimension_numbers<[1], [0], [0], [1], [0, 0, 1, 1], [], []>} : vector<8x16xf32>, vector<16x2xf32>, vector<8x2xf32> -> vector<8x2xf32>
    %802 = arith.addf %796, %801 : vector<8x2xf32>
    %c1_539 = arith.constant 1 : index
    %c1_540 = arith.constant 1 : index
    %c0_541 = arith.constant 0 : index
    %c0_542 = arith.constant 0 : index
    %803 = vector.load %arg11[%c1_539, %c1_540, %c0_541, %c0_542] : memref<2x2x16x128xf32, #tpu.memory_space<vmem>>, vector<1x1x16x2xf32>
    %804 = vector.shape_cast %803 : vector<1x1x16x2xf32> to vector<16x2xf32>
    %805 = vector.extract_strided_slice %98 {offsets = [1, 0, 0], sizes = [1, 8, 16], strides = [1, 1, 1]} : vector<7x8x16xf32> to vector<1x8x16xf32>
    %806 = vector.shape_cast %805 : vector<1x8x16xf32> to vector<8x16xf32>
    %cst_543 = arith.constant dense<0.000000e+00> : vector<8x2xf32>
    %807 = tpu.matmul %806, %804, %cst_543 {dimension_numbers = #tpu.dot_dimension_numbers<[1], [0], [0], [1], [0, 0, 1, 1], [], []>} : vector<8x16xf32>, vector<16x2xf32>, vector<8x2xf32> -> vector<8x2xf32>
    %808 = arith.addf %802, %807 : vector<8x2xf32>
    %c0_544 = arith.constant 0 : index
    %c1_545 = arith.constant 1 : index
    %c0_546 = arith.constant 0 : index
    %c1_547 = arith.constant 1 : index
    %809 = vector.load %arg11[%c0_544, %c1_545, %c0_546, %c1_547] : memref<2x2x16x128xf32, #tpu.memory_space<vmem>>, vector<1x1x16x2xf32>
    %810 = vector.shape_cast %809 : vector<1x1x16x2xf32> to vector<16x2xf32>
    %811 = vector.extract_strided_slice %98 {offsets = [2, 0, 0], sizes = [1, 8, 16], strides = [1, 1, 1]} : vector<7x8x16xf32> to vector<1x8x16xf32>
    %812 = vector.shape_cast %811 : vector<1x8x16xf32> to vector<8x16xf32>
    %cst_548 = arith.constant dense<0.000000e+00> : vector<8x2xf32>
    %813 = tpu.matmul %812, %810, %cst_548 {dimension_numbers = #tpu.dot_dimension_numbers<[1], [0], [0], [1], [0, 0, 1, 1], [], []>} : vector<8x16xf32>, vector<16x2xf32>, vector<8x2xf32> -> vector<8x2xf32>
    %814 = arith.addf %808, %813 : vector<8x2xf32>
    %c1_549 = arith.constant 1 : index
    %c1_550 = arith.constant 1 : index
    %c0_551 = arith.constant 0 : index
    %c1_552 = arith.constant 1 : index
    %815 = vector.load %arg11[%c1_549, %c1_550, %c0_551, %c1_552] : memref<2x2x16x128xf32, #tpu.memory_space<vmem>>, vector<1x1x16x2xf32>
    %816 = vector.shape_cast %815 : vector<1x1x16x2xf32> to vector<16x2xf32>
    %817 = vector.extract_strided_slice %98 {offsets = [3, 0, 0], sizes = [1, 8, 16], strides = [1, 1, 1]} : vector<7x8x16xf32> to vector<1x8x16xf32>
    %818 = vector.shape_cast %817 : vector<1x8x16xf32> to vector<8x16xf32>
    %cst_553 = arith.constant dense<0.000000e+00> : vector<8x2xf32>
    %819 = tpu.matmul %818, %816, %cst_553 {dimension_numbers = #tpu.dot_dimension_numbers<[1], [0], [0], [1], [0, 0, 1, 1], [], []>} : vector<8x16xf32>, vector<16x2xf32>, vector<8x2xf32> -> vector<8x2xf32>
    %820 = arith.addf %814, %819 : vector<8x2xf32>
    %c0_554 = arith.constant 0 : index
    %c1_555 = arith.constant 1 : index
    %c0_556 = arith.constant 0 : index
    %c2_557 = arith.constant 2 : index
    %821 = vector.load %arg11[%c0_554, %c1_555, %c0_556, %c2_557] : memref<2x2x16x128xf32, #tpu.memory_space<vmem>>, vector<1x1x16x2xf32>
    %822 = vector.shape_cast %821 : vector<1x1x16x2xf32> to vector<16x2xf32>
    %823 = vector.extract_strided_slice %98 {offsets = [4, 0, 0], sizes = [1, 8, 16], strides = [1, 1, 1]} : vector<7x8x16xf32> to vector<1x8x16xf32>
    %824 = vector.shape_cast %823 : vector<1x8x16xf32> to vector<8x16xf32>
    %cst_558 = arith.constant dense<0.000000e+00> : vector<8x2xf32>
    %825 = tpu.matmul %824, %822, %cst_558 {dimension_numbers = #tpu.dot_dimension_numbers<[1], [0], [0], [1], [0, 0, 1, 1], [], []>} : vector<8x16xf32>, vector<16x2xf32>, vector<8x2xf32> -> vector<8x2xf32>
    %826 = arith.addf %820, %825 : vector<8x2xf32>
    %c1_559 = arith.constant 1 : index
    %c1_560 = arith.constant 1 : index
    %c0_561 = arith.constant 0 : index
    %c2_562 = arith.constant 2 : index
    %827 = vector.load %arg11[%c1_559, %c1_560, %c0_561, %c2_562] : memref<2x2x16x128xf32, #tpu.memory_space<vmem>>, vector<1x1x16x2xf32>
    %828 = vector.shape_cast %827 : vector<1x1x16x2xf32> to vector<16x2xf32>
    %829 = vector.extract_strided_slice %98 {offsets = [5, 0, 0], sizes = [1, 8, 16], strides = [1, 1, 1]} : vector<7x8x16xf32> to vector<1x8x16xf32>
    %830 = vector.shape_cast %829 : vector<1x8x16xf32> to vector<8x16xf32>
    %cst_563 = arith.constant dense<0.000000e+00> : vector<8x2xf32>
    %831 = tpu.matmul %830, %828, %cst_563 {dimension_numbers = #tpu.dot_dimension_numbers<[1], [0], [0], [1], [0, 0, 1, 1], [], []>} : vector<8x16xf32>, vector<16x2xf32>, vector<8x2xf32> -> vector<8x2xf32>
    %832 = arith.addf %826, %831 : vector<8x2xf32>
    %c0_564 = arith.constant 0 : index
    %c1_565 = arith.constant 1 : index
    %c0_566 = arith.constant 0 : index
    %c3_567 = arith.constant 3 : index
    %833 = vector.load %arg11[%c0_564, %c1_565, %c0_566, %c3_567] : memref<2x2x16x128xf32, #tpu.memory_space<vmem>>, vector<1x1x16x2xf32>
    %834 = vector.shape_cast %833 : vector<1x1x16x2xf32> to vector<16x2xf32>
    %835 = vector.extract_strided_slice %98 {offsets = [6, 0, 0], sizes = [1, 8, 16], strides = [1, 1, 1]} : vector<7x8x16xf32> to vector<1x8x16xf32>
    %836 = vector.shape_cast %835 : vector<1x8x16xf32> to vector<8x16xf32>
    %cst_568 = arith.constant dense<0.000000e+00> : vector<8x2xf32>
    %837 = tpu.matmul %836, %834, %cst_568 {dimension_numbers = #tpu.dot_dimension_numbers<[1], [0], [0], [1], [0, 0, 1, 1], [], []>} : vector<8x16xf32>, vector<16x2xf32>, vector<8x2xf32> -> vector<8x2xf32>
    %838 = arith.addf %832, %837 : vector<8x2xf32>
    %cst_569 = arith.constant 0.000000e+00 : f32
    %839 = vector.broadcast %cst_569 : f32 to vector<8x2xf32>
    %840 = arith.maximumf %838, %839 : vector<8x2xf32>
    %c0_570 = arith.constant 0 : index
    %c1_571 = arith.constant 1 : index
    %c0_572 = arith.constant 0 : index
    %c0_573 = arith.constant 0 : index
    %841 = vector.load %arg8[%c0_570, %c1_571, %c0_572, %c0_573] : memref<1x2x8x2xf32, #tpu.memory_space<vmem>>, vector<1x1x8x2xf32>
    %842 = vector.shape_cast %841 : vector<1x1x8x2xf32> to vector<8x2xf32>
    %843 = vector.shape_cast %840 : vector<8x2xf32> to vector<1x1x8x2xf32>
    tpu.vector_store %arg8[%c0_570, %c1_571, %c0_572, %c0_573], %843 {strides = array<i32>} : memref<1x2x8x2xf32, #tpu.memory_space<vmem>>, vector<1x1x8x2xf32>,
    return
  }
  func.func @transform_0(%arg0: i32) -> (i32, i32, i32, i32) {
    %c0_i32 = arith.constant 0 : i32
    %c0_i32_0 = arith.constant 0 : i32
    %c0_i32_1 = arith.constant 0 : i32
    %c0_i32_2 = arith.constant 0 : i32
    return %arg0, %c0_i32, %c0_i32_0, %c0_i32_1 : i32, i32, i32, i32
  }
  func.func @transform_1(%arg0: i32) -> (i32, i32) {
    %c0_i32 = arith.constant 0 : i32
    %c0_i32_0 = arith.constant 0 : i32
    %c0_i32_1 = arith.constant 0 : i32
    return %c0_i32, %c0_i32_0 : i32, i32
  }
  func.func @transform_2(%arg0: i32) -> (i32, i32) {
    %c0_i32 = arith.constant 0 : i32
    %c0_i32_0 = arith.constant 0 : i32
    %c0_i32_1 = arith.constant 0 : i32
    return %c0_i32, %c0_i32_0 : i32, i32
  }
  func.func @transform_3(%arg0: i32) -> (i32, i32, i32) {
    %c0_i32 = arith.constant 0 : i32
    %c0_i32_0 = arith.constant 0 : i32
    %c0_i32_1 = arith.constant 0 : i32
    %c0_i32_2 = arith.constant 0 : i32
    return %c0_i32, %c0_i32_0, %c0_i32_1 : i32, i32, i32
  }
  func.func @transform_4(%arg0: i32) -> (i32, i32) {
    %c0_i32 = arith.constant 0 : i32
    %c0_i32_0 = arith.constant 0 : i32
    %c0_i32_1 = arith.constant 0 : i32
    return %c0_i32, %c0_i32_0 : i32, i32
  }
  func.func @transform_5(%arg0: i32) -> (i32, i32, i32) {
    %c0_i32 = arith.constant 0 : i32
    %c0_i32_0 = arith.constant 0 : i32
    %c0_i32_1 = arith.constant 0 : i32
    %c0_i32_2 = arith.constant 0 : i32
    return %c0_i32, %c0_i32_0, %c0_i32_1 : i32, i32, i32
  }
  func.func @transform_6(%arg0: i32) -> (i32, i32) {
    %c0_i32 = arith.constant 0 : i32
    %c0_i32_0 = arith.constant 0 : i32
    %c0_i32_1 = arith.constant 0 : i32
    return %c0_i32, %c0_i32_0 : i32, i32
  }
  func.func @transform_7(%arg0: i32) -> (i32, i32, i32, i32) {
    %c0_i32 = arith.constant 0 : i32
    %c0_i32_0 = arith.constant 0 : i32
    %c0_i32_1 = arith.constant 0 : i32
    %c0_i32_2 = arith.constant 0 : i32
    return %arg0, %c0_i32, %c0_i32_0, %c0_i32_1 : i32, i32, i32, i32
  }
}

</mosaic_0001>

<llo_original>
// kernel: tpu_custom_call.1
$region0: #{tpu_custom_call.1}
  #allocation0 [shape = 'u32[]', space=smem, size = 0x4, offset = 0x4, fixed_abs, tag = 'smem constant byte address 0x4 - core index']
  #allocation1 [shape = 'u32[144,128]{1,0:T(1,128)}', space=vmem, size = 0x12000, scoped, tag = 'internal scratch']
  #allocation2 [shape = 'f32[8,2,128]{2,1,0:T(2,128)}', space=vmem, size = 0x2000, scoped, tag = 'scratch operand']
  #allocation3 [shape = 'f32[4,2,32,128]{3,2,1,0:T(8,128)}', space=vmem, size = 0x20000, scoped, tag = 'scratch operand']
  #allocation4 [shape = 'f32[2,2,16,128]{3,2,1,0:T(8,128)}', space=vmem, size = 0x8000, scoped, tag = 'scratch operand']
  %s0 = inlined_call_operand.vmem [shape: f32[1,8,2,2], index: 0, kind: input, shape index: {}]
  %s1 = inlined_call_operand.vmem [shape: f32[32,7], index: 1, kind: input, shape index: {}]
  %s2 = inlined_call_operand.vmem [shape: f32[32,1], index: 2, kind: input, shape index: {}]
  %s3 = inlined_call_operand.vmem [shape: f32[7,16,32], index: 3, kind: input, shape index: {}]
  %s4 = inlined_call_operand.vmem [shape: f32[16,1], index: 4, kind: input, shape index: {}]
  %s5 = inlined_call_operand.hbm [shape: f32[7,8,16], index: 5, kind: input, shape index: {}]
  %s6 = inlined_call_operand.vmem [shape: f32[8,1], index: 6, kind: input, shape index: {}]
  %s7 = inlined_call_operand.vmem [shape: f32[1,2,8,2], index: 7, kind: output, shape index: {}]
  %s8 = sld [smem:[#allocation0]]
  $region42: #{tpu_custom_call.1} parent=0
    _
  %s10 = ssub.s32 1, %s8
  %s11 = scalar_select 0, %s10, %s8
  $region1: #{tpu_custom_call.1} parent=0
    #allocation5 [shape = 'u8[28672]{0}', space=vmem, size = 0x7000, scoped, tag = 'input window, operand 5, single buffered']
    #allocation6 [shape = 's32[1]{0}', space=sflag, size = 0x4, scoped, tag = 'scoped memory for tpu_custom_call.1']
    %12 = vsyncpa [#allocation6], 0
    // Predicated region
    $region2: #{tpu_custom_call.1} parent=1 // pred_check
      _
    $region3: #{tpu_custom_call.1} parent=1 // pred_check_branch
      %14 = sbr.rel (0) target = $region5
    $region4: #{tpu_custom_call.1} parent=1 // pred_region
      _
    $region5: #{tpu_custom_call.1} parent=1 // pred_fallthru
      _
    // Predicated region
    $region6: #{tpu_custom_call.1} parent=1 // pred_check
      _
    $region7: #{tpu_custom_call.1} parent=1 // pred_check_branch
      %16 = sbr.rel (0) target = $region9
    $region8: #{tpu_custom_call.1} parent=1 // pred_region
      _
    $region9: #{tpu_custom_call.1} parent=1 // pred_fallthru
      _
    // Predicated region
    $region10: #{tpu_custom_call.1} parent=1 // pred_check
      _
    $region11: #{tpu_custom_call.1} parent=1 // pred_check_branch
      %18 = sbr.rel (0) target = $region13
    $region12: #{tpu_custom_call.1} parent=1 // pred_region
      _
    $region13: #{tpu_custom_call.1} parent=1 // pred_fallthru
      _
    // Predicated region
    $region14: #{tpu_custom_call.1} parent=1 // pred_check
      _
    $region15: #{tpu_custom_call.1} parent=1 // pred_check_branch
      %20 = sbr.rel (0) target = $region17
    $region16: #{tpu_custom_call.1} parent=1 // pred_region
      _
    $region17: #{tpu_custom_call.1} parent=1 // pred_fallthru
      _
    // Predicated region
    $region18: #{tpu_custom_call.1} parent=1 // pred_check
      _
    $region19: #{tpu_custom_call.1} parent=1 // pred_check_branch
      %22 = sbr.rel (0) target = $region21
    $region20: #{tpu_custom_call.1} parent=1 // pred_region
      _
    $region21: #{tpu_custom_call.1} parent=1 // pred_fallthru
      _
    // Predicated region
    $region22: #{tpu_custom_call.1} parent=1 // pred_check
      _
    $region23: #{tpu_custom_call.1} parent=1 // pred_check_branch
      %24 = sbr.rel (0) target = $region25
    $region24: #{tpu_custom_call.1} parent=1 // pred_region
      %s26 = ssub.s32 896, 896
      %27 = vsyncadd [#allocation6], %s26
      %s28 = sshll.u32 [#allocation5], 4
      %s29 = int_to_ptr.vmem [resolvable:$true] %s28
      %34 = dma.hbm_to_vmem [thread:$0]  %s5, 896, %s29, [#allocation6], 128, 128, 8
    $region25: #{tpu_custom_call.1} parent=1 // pred_fallthru
      _
    // Predicated region
    $region26: #{tpu_custom_call.1} parent=1 // pred_check
      _
    $region27: #{tpu_custom_call.1} parent=1 // pred_check_branch
      %36 = sbr.rel (0) target = $region29
    $region28: #{tpu_custom_call.1} parent=1 // pred_region
      _
    $region29: #{tpu_custom_call.1} parent=1 // pred_fallthru
      _
    // Predicated region
    $region30: #{tpu_custom_call.1} parent=1 // pred_check
      _
    $region31: #{tpu_custom_call.1} parent=1 // pred_check_branch
      %38 = sbr.rel (0) target = $region33
    $region32: #{tpu_custom_call.1} parent=1 // pred_region
      %39 = dma.done [#allocation6], 896
    $region33: #{tpu_custom_call.1} parent=1 // pred_fallthru
      _
    %v40 = vld [vmem:[%s0] sm:$0x3]
    %s41 = scalar_lea.vmem [#allocation2], 6
    %vm42 = vcmask 9216
    %43 = vst.msk [vmem:[%s41] sm:$0x3] %vm42, %v40
    %s44 = scalar_lea.vmem %s0, 2
    %v45 = vld [vmem:[%s44] sm:$0x3]
    %s46 = scalar_lea.vmem [#allocation2], 8
    %47 = vst.msk [vmem:[%s46] sm:$0x3] %vm42, %v45
    %s48 = scalar_lea.vmem %s0, 4
    %v49 = vld [vmem:[%s48] sm:$0x3]
    %s50 = scalar_lea.vmem [#allocation2], 10
    %51 = vst.msk [vmem:[%s50] sm:$0x3] %vm42, %v49
    %s52 = scalar_lea.vmem %s0, 6
    %v53 = vld [vmem:[%s52] sm:$0x3]
    %s54 = scalar_lea.vmem [#allocation2], 12
    %55 = vst.msk [vmem:[%s54] sm:$0x3] %vm42, %v53
    %s56 = scalar_lea.vmem %s0, 8
    %v57 = vld [vmem:[%s56] sm:$0x3]
    %s58 = scalar_lea.vmem [#allocation2], 14
    %59 = vst.msk [vmem:[%s58] sm:$0x3] %vm42, %v57
    %s60 = scalar_lea.vmem %s0, 10
    %v61 = vld [vmem:[%s60] sm:$0x3]
    %63 = vrot.lane.b32.xlu0 %v61, 1
    %v64 = vpop.permute.xlu0 %63
    %vm66 = vcmask 17416
    %67 = vst.msk [vmem:[#allocation2] sm:$0x3] %vm66, %v64
    %s68 = scalar_lea.vmem %s0, 12
    %v69 = vld [vmem:[%s68] sm:$0x3]
    %71 = vrot.lane.b32.xlu0 %v69, 1
    %v72 = vpop.permute.xlu0 %71
    %s74 = scalar_lea.vmem [#allocation2], 2
    %75 = vst.msk [vmem:[%s74] sm:$0x3] %vm66, %v72
    %s76 = scalar_lea.vmem %s0, 14
    %v77 = vld [vmem:[%s76] sm:$0x3]
    %79 = vrot.lane.b32.xlu0 %v77, 1
    %v80 = vpop.permute.xlu0 %79
    %s82 = scalar_lea.vmem [#allocation2], 4
    %83 = vst.msk [vmem:[%s82] sm:$0x3] %vm66, %v80
    %vm84 = vcmask 17424
    %85 = vst.msk [vmem:[%s41] sm:$0x3] %vm84, 0.0
    %86 = vst.msk [vmem:[%s46] sm:$0x3] %vm84, 0.0
    %vm87 = vcmask 1024
    %88 = vst.msk [vmem:[#allocation2] sm:$0x3] %vm87, 0.0
    %89 = vst.msk [vmem:[%s74] sm:$0x3] %vm87, 0.0
    %90 = vst.msk [vmem:[%s82] sm:$0x3] %vm87, 0.0
    %s91 = scalar_lea.vmem [#allocation3], 192
    %vm92 = vcmask 23568
    %93 = vst.msk [vmem:[%s91] sm:$0xff] %vm92, 0.0
    %94 = vst.msk [vmem:[%s91 + $0x8] sm:$0xff] %vm92, 0.0
    %95 = vst.msk [vmem:[%s91 + $0x10] sm:$0xff] %vm92, 0.0
    %96 = vst.msk [vmem:[%s91 + $0x18] sm:$0xff] %vm92, 0.0
    %97 = vst.msk [vmem:[%s91 + $0x20] sm:$0xff] %vm92, 0.0
    %98 = vst.msk [vmem:[%s91 + $0x28] sm:$0xff] %vm92, 0.0
    %99 = vst.msk [vmem:[%s91 + $0x30] sm:$0xff] %vm92, 0.0
    %100 = vst.msk [vmem:[%s91 + $0x38] sm:$0xff] %vm92, 0.0
    %vm101 = vcmask 7168
    %102 = vst.msk [vmem:[#allocation3] sm:$0xff] %vm101, 0.0
    %103 = vst.msk [vmem:[#allocation3 + $0x8] sm:$0xff] %vm101, 0.0
    %104 = vst.msk [vmem:[#allocation3 + $0x10] sm:$0xff] %vm101, 0.0
    %105 = vst.msk [vmem:[#allocation3 + $0x18] sm:$0xff] %vm101, 0.0
    %106 = vst.msk [vmem:[#allocation3 + $0x20] sm:$0xff] %vm101, 0.0
    %107 = vst.msk [vmem:[#allocation3 + $0x28] sm:$0xff] %vm101, 0.0
    %108 = vst.msk [vmem:[#allocation3 + $0x30] sm:$0xff] %vm101, 0.0
    %109 = vst.msk [vmem:[#allocation3 + $0x38] sm:$0xff] %vm101, 0.0
    %vm110 = vcmask 31768
    %111 = vst.msk [vmem:[#allocation3] sm:$0xff] %vm110, 0.0
    %112 = vst.msk [vmem:[#allocation3 + $0x8] sm:$0xff] %vm110, 0.0
    %113 = vst.msk [vmem:[#allocation3 + $0x10] sm:$0xff] %vm110, 0.0
    %114 = vst.msk [vmem:[#allocation3 + $0x18] sm:$0xff] %vm110, 0.0
    %115 = vst.msk [vmem:[#allocation3 + $0x20] sm:$0xff] %vm110, 0.0
    %116 = vst.msk [vmem:[#allocation3 + $0x28] sm:$0xff] %vm110, 0.0
    %117 = vst.msk [vmem:[#allocation3 + $0x30] sm:$0xff] %vm110, 0.0
    %118 = vst.msk [vmem:[#allocation3 + $0x38] sm:$0xff] %vm110, 0.0
    %s119 = scalar_lea.vmem [#allocation3], 64
    %120 = vst.msk [vmem:[%s119] sm:$0xff] %vm101, 0.0
    %121 = vst.msk [vmem:[%s119 + $0x8] sm:$0xff] %vm101, 0.0
    %122 = vst.msk [vmem:[%s119 + $0x10] sm:$0xff] %vm101, 0.0
    %123 = vst.msk [vmem:[%s119 + $0x18] sm:$0xff] %vm101, 0.0
    %124 = vst.msk [vmem:[%s119 + $0x20] sm:$0xff] %vm101, 0.0
    %125 = vst.msk [vmem:[%s119 + $0x28] sm:$0xff] %vm101, 0.0
    %126 = vst.msk [vmem:[%s119 + $0x30] sm:$0xff] %vm101, 0.0
    %127 = vst.msk [vmem:[%s119 + $0x38] sm:$0xff] %vm101, 0.0
    %s128 = scalar_lea.vmem [#allocation3], 128
    %129 = vst.msk [vmem:[%s128] sm:$0xff] %vm101, 0.0
    %130 = vst.msk [vmem:[%s128 + $0x8] sm:$0xff] %vm101, 0.0
    %131 = vst.msk [vmem:[%s128 + $0x10] sm:$0xff] %vm101, 0.0
    %132 = vst.msk [vmem:[%s128 + $0x18] sm:$0xff] %vm101, 0.0
    %133 = vst.msk [vmem:[%s128 + $0x20] sm:$0xff] %vm101, 0.0
    %134 = vst.msk [vmem:[%s128 + $0x28] sm:$0xff] %vm101, 0.0
    %135 = vst.msk [vmem:[%s128 + $0x30] sm:$0xff] %vm101, 0.0
    %136 = vst.msk [vmem:[%s128 + $0x38] sm:$0xff] %vm101, 0.0
    %s137 = scalar_lea.vmem [#allocation4], 32
    %138 = vst.msk [vmem:[%s137] sm:$0xff] %vm101, 0.0
    %139 = vst.msk [vmem:[%s137 + $0x8] sm:$0xff] %vm101, 0.0
    %140 = vst.msk [vmem:[%s137 + $0x10] sm:$0xff] %vm101, 0.0
    %141 = vst.msk [vmem:[%s137 + $0x18] sm:$0xff] %vm101, 0.0
    %142 = vst.msk [vmem:[%s137] sm:$0xff] %vm110, 0.0
    %143 = vst.msk [vmem:[%s137 + $0x8] sm:$0xff] %vm110, 0.0
    %144 = vst.msk [vmem:[%s137 + $0x10] sm:$0xff] %vm110, 0.0
    %145 = vst.msk [vmem:[%s137 + $0x18] sm:$0xff] %vm110, 0.0
    %vm146 = vcmask 15360
    %147 = vst.msk [vmem:[#allocation4] sm:$0xff] %vm146, 0.0
    %148 = vst.msk [vmem:[#allocation4 + $0x8] sm:$0xff] %vm146, 0.0
    %149 = vst.msk [vmem:[#allocation4 + $0x10] sm:$0xff] %vm146, 0.0
    %150 = vst.msk [vmem:[#allocation4 + $0x18] sm:$0xff] %vm146, 0.0
    %vm151 = vcmask 39968
    %152 = vst.msk [vmem:[#allocation4] sm:$0xff] %vm151, 0.0
    %153 = vst.msk [vmem:[#allocation4 + $0x8] sm:$0xff] %vm151, 0.0
    %154 = vst.msk [vmem:[#allocation4 + $0x10] sm:$0xff] %vm151, 0.0
    %155 = vst.msk [vmem:[#allocation4 + $0x18] sm:$0xff] %vm151, 0.0
    %v156 = vld [vmem:[%s1] sm:$0xff]
    %v157 = vld [vmem:[%s1 + $0x8] sm:$0xff]
    %v158 = vld [vmem:[%s1 + $0x10] sm:$0xff]
    %v159 = vld [vmem:[%s1 + $0x18] sm:$0xff]
    %v160 = vld [vmem:[%s3] sm:$0xff]
    %v161 = vld [vmem:[%s3 + $0x8] sm:$0xff]
    %v162 = vld [vmem:[%s3 + $0x10] sm:$0xff]
    %v163 = vld [vmem:[%s3 + $0x18] sm:$0xff]
    %v164 = vld [vmem:[%s3 + $0x20] sm:$0xff]
    %v165 = vld [vmem:[%s3 + $0x28] sm:$0xff]
    %v166 = vld [vmem:[%s3 + $0x30] sm:$0xff]
    %v167 = vld [vmem:[%s3 + $0x38] sm:$0xff]
    %v168 = vld [vmem:[%s3 + $0x40] sm:$0xff]
    %v169 = vld [vmem:[%s3 + $0x48] sm:$0xff]
    %v170 = vld [vmem:[%s3 + $0x50] sm:$0xff]
    %v171 = vld [vmem:[%s3 + $0x58] sm:$0xff]
    %v172 = vld [vmem:[%s3 + $0x60] sm:$0xff]
    %v173 = vld [vmem:[%s3 + $0x68] sm:$0xff]
    %v174 = vld [vmem:[#allocation5] sm:$0xff]
    %v175 = vld [vmem:[#allocation5 + $0x8] sm:$0xff]
    %v176 = vld [vmem:[#allocation5 + $0x10] sm:$0xff]
    %v177 = vld [vmem:[#allocation5 + $0x18] sm:$0xff]
    %v178 = vld [vmem:[#allocation5 + $0x20] sm:$0xff]
    %v179 = vld [vmem:[#allocation5 + $0x28] sm:$0xff]
    %v180 = vld [vmem:[#allocation5 + $0x30] sm:$0xff]
    %v181 = vld [vmem:[%s2] sm:$0xff]
    %v182 = vld [vmem:[%s2 + $0x8] sm:$0xff]
    %v183 = vld [vmem:[%s2 + $0x10] sm:$0xff]
    %v184 = vld [vmem:[%s2 + $0x18] sm:$0xff]
    %v185 = vld [vmem:[%s4] sm:$0xff]
    %v186 = vld [vmem:[%s4 + $0x8] sm:$0xff]
    %v187 = vld [vmem:[%s6] sm:$0xff]
    %189 = vset.pattern.permute.xlu0 0
    %190 = vperm.xlu0 %189, %v181
    %v191 = vpop.permute.xlu0 %190
    %194 = vset.pattern.permute.xlu0 0
    %195 = vperm.xlu0 %194, %v182
    %v196 = vpop.permute.xlu0 %195
    %199 = vset.pattern.permute.xlu0 0
    %200 = vperm.xlu0 %199, %v183
    %v201 = vpop.permute.xlu0 %200
    %204 = vset.pattern.permute.xlu0 0
    %205 = vperm.xlu0 %204, %v184
    %v206 = vpop.permute.xlu0 %205
    %v208 = vld [vmem:[#allocation2] sm:$0x1]
    %210 = vset.pattern.permute.xlu0 0
    %211 = vperm.xlu0 %210, %v156
    %v212 = vpop.permute.xlu0 %211
    %215 = vset.pattern.permute.xlu0 0
    %216 = vperm.xlu0 %215, %v157
    %v217 = vpop.permute.xlu0 %216
    %220 = vset.pattern.permute.xlu0 0
    %221 = vperm.xlu0 %220, %v158
    %v222 = vpop.permute.xlu0 %221
    %225 = vset.pattern.permute.xlu0 0
    %226 = vperm.xlu0 %225, %v159
    %v227 = vpop.permute.xlu0 %226
    %v229 = vlaneseq
    %v230 = vshrl.u32 %v229, 7
    %v231 = vsub.s32 0, %v230
    %v232 = vrot.slane %v208, %v231
    %v233 = vmul.f32 %v212, %v232
    %v234 = vmul.f32 %v217, %v232
    %v235 = vmul.f32 %v222, %v232
    %v236 = vmul.f32 %v227, %v232
    %v237 = vadd.f32 %v191, %v233
    %v238 = vadd.f32 %v196, %v234
    %v239 = vadd.f32 %v201, %v235
    %v240 = vadd.f32 %v206, %v236
    %v241 = vld [vmem:[%s74] sm:$0x1]
    %242 = vset.pattern.permute.xlu0 1
    %243 = vperm.xlu0 %242, %v156
    %v244 = vpop.permute.xlu0 %243
    %246 = vset.pattern.permute.xlu0 1
    %247 = vperm.xlu0 %246, %v157
    %v248 = vpop.permute.xlu0 %247
    %250 = vset.pattern.permute.xlu0 1
    %251 = vperm.xlu0 %250, %v158
    %v252 = vpop.permute.xlu0 %251
    %254 = vset.pattern.permute.xlu0 1
    %255 = vperm.xlu0 %254, %v159
    %v256 = vpop.permute.xlu0 %255
    %v258 = vlaneseq
    %v259 = vshrl.u32 %v258, 7
    %v260 = vsub.s32 0, %v259
    %v261 = vrot.slane %v241, %v260
    %v262 = vmul.f32 %v244, %v261
    %v263 = vmul.f32 %v248, %v261
    %v264 = vmul.f32 %v252, %v261
    %v265 = vmul.f32 %v256, %v261
    %v266 = vadd.f32 %v237, %v262
    %v267 = vadd.f32 %v238, %v263
    %v268 = vadd.f32 %v239, %v264
    %v269 = vadd.f32 %v240, %v265
    %v270 = vld [vmem:[%s82] sm:$0x1]
    %271 = vset.pattern.permute.xlu0 2
    %272 = vperm.xlu0 %271, %v156
    %v273 = vpop.permute.xlu0 %272
    %275 = vset.pattern.permute.xlu0 2
    %276 = vperm.xlu0 %275, %v157
    %v277 = vpop.permute.xlu0 %276
    %279 = vset.pattern.permute.xlu0 2
    %280 = vperm.xlu0 %279, %v158
    %v281 = vpop.permute.xlu0 %280
    %283 = vset.pattern.permute.xlu0 2
    %284 = vperm.xlu0 %283, %v159
    %v285 = vpop.permute.xlu0 %284
    %v287 = vlaneseq
    %v288 = vshrl.u32 %v287, 7
    %v289 = vsub.s32 0, %v288
    %v290 = vrot.slane %v270, %v289
    %v291 = vmul.f32 %v273, %v290
    %v292 = vmul.f32 %v277, %v290
    %v293 = vmul.f32 %v281, %v290
    %v294 = vmul.f32 %v285, %v290
    %v295 = vadd.f32 %v266, %v291
    %v296 = vadd.f32 %v267, %v292
    %v297 = vadd.f32 %v268, %v293
    %v298 = vadd.f32 %v269, %v294
    %v299 = vld [vmem:[%s41] sm:$0x1]
    %300 = vset.pattern.permute.xlu0 3
    %301 = vperm.xlu0 %300, %v156
    %v302 = vpop.permute.xlu0 %301
    %304 = vset.pattern.permute.xlu0 3
    %305 = vperm.xlu0 %304, %v157
    %v306 = vpop.permute.xlu0 %305
    %308 = vset.pattern.permute.xlu0 3
    %309 = vperm.xlu0 %308, %v158
    %v310 = vpop.permute.xlu0 %309
    %312 = vset.pattern.permute.xlu0 3
    %313 = vperm.xlu0 %312, %v159
    %v314 = vpop.permute.xlu0 %313
    %v316 = vlaneseq
    %v317 = vshrl.u32 %v316, 7
    %v318 = vsub.s32 0, %v317
    %v319 = vrot.slane %v299, %v318
    %v320 = vmul.f32 %v302, %v319
    %v321 = vmul.f32 %v306, %v319
    %v322 = vmul.f32 %v310, %v319
    %v323 = vmul.f32 %v314, %v319
    %v324 = vadd.f32 %v295, %v320
    %v325 = vadd.f32 %v296, %v321
    %v326 = vadd.f32 %v297, %v322
    %v327 = vadd.f32 %v298, %v323
    %v328 = vld [vmem:[%s46] sm:$0x1]
    %329 = vset.pattern.permute.xlu0 4
    %330 = vperm.xlu0 %329, %v156
    %v331 = vpop.permute.xlu0 %330
    %333 = vset.pattern.permute.xlu0 4
    %334 = vperm.xlu0 %333, %v157
    %v335 = vpop.permute.xlu0 %334
    %337 = vset.pattern.permute.xlu0 4
    %338 = vperm.xlu0 %337, %v158
    %v339 = vpop.permute.xlu0 %338
    %341 = vset.pattern.permute.xlu0 4
    %342 = vperm.xlu0 %341, %v159
    %v343 = vpop.permute.xlu0 %342
    %v345 = vlaneseq
    %v346 = vshrl.u32 %v345, 7
    %v347 = vsub.s32 0, %v346
    %v348 = vrot.slane %v328, %v347
    %v349 = vmul.f32 %v331, %v348
    %v350 = vmul.f32 %v335, %v348
    %v351 = vmul.f32 %v339, %v348
    %v352 = vmul.f32 %v343, %v348
    %v353 = vadd.f32 %v324, %v349
    %v354 = vadd.f32 %v325, %v350
    %v355 = vadd.f32 %v326, %v351
    %v356 = vadd.f32 %v327, %v352
    %v357 = vld [vmem:[%s50] sm:$0x1]
    %358 = vset.pattern.permute.xlu0 5
    %359 = vperm.xlu0 %358, %v156
    %v360 = vpop.permute.xlu0 %359
    %362 = vset.pattern.permute.xlu0 5
    %363 = vperm.xlu0 %362, %v157
    %v364 = vpop.permute.xlu0 %363
    %366 = vset.pattern.permute.xlu0 5
    %367 = vperm.xlu0 %366, %v158
    %v368 = vpop.permute.xlu0 %367
    %370 = vset.pattern.permute.xlu0 5
    %371 = vperm.xlu0 %370, %v159
    %v372 = vpop.permute.xlu0 %371
    %v374 = vlaneseq
    %v375 = vshrl.u32 %v374, 7
    %v376 = vsub.s32 0, %v375
    %v377 = vrot.slane %v357, %v376
    %v378 = vmul.f32 %v360, %v377
    %v379 = vmul.f32 %v364, %v377
    %v380 = vmul.f32 %v368, %v377
    %v381 = vmul.f32 %v372, %v377
    %v382 = vadd.f32 %v353, %v378
    %v383 = vadd.f32 %v354, %v379
    %v384 = vadd.f32 %v355, %v380
    %v385 = vadd.f32 %v356, %v381
    %v386 = vld [vmem:[%s54] sm:$0x1]
    %387 = vset.pattern.permute.xlu0 6
    %388 = vperm.xlu0 %387, %v156
    %v389 = vpop.permute.xlu0 %388
    %391 = vset.pattern.permute.xlu0 6
    %392 = vperm.xlu0 %391, %v157
    %v393 = vpop.permute.xlu0 %392
    %395 = vset.pattern.permute.xlu0 6
    %396 = vperm.xlu0 %395, %v158
    %v397 = vpop.permute.xlu0 %396
    %399 = vset.pattern.permute.xlu0 6
    %400 = vperm.xlu0 %399, %v159
    %v401 = vpop.permute.xlu0 %400
    %v403 = vlaneseq
    %v404 = vshrl.u32 %v403, 7
    %v405 = vsub.s32 0, %v404
    %v406 = vrot.slane %v386, %v405
    %v407 = vmul.f32 %v389, %v406
    %v408 = vmul.f32 %v393, %v406
    %v409 = vmul.f32 %v397, %v406
    %v410 = vmul.f32 %v401, %v406
    %v411 = vadd.f32 %v382, %v407
    %v412 = vadd.f32 %v383, %v408
    %v413 = vadd.f32 %v384, %v409
    %v414 = vadd.f32 %v385, %v410
    %v415 = vmax.f32 %v411, 0.0
    %v416 = vmax.f32 %v412, 0.0
    %v417 = vmax.f32 %v413, 0.0
    %v418 = vmax.f32 %v414, 0.0
    %419 = vst.msk [vmem:[%s91] sm:$0xff] %vm146, %v415
    %420 = vst.msk [vmem:[%s91 + $0x8] sm:$0xff] %vm146, %v416
    %421 = vst.msk [vmem:[%s91 + $0x10] sm:$0xff] %vm146, %v417
    %422 = vst.msk [vmem:[%s91 + $0x18] sm:$0xff] %vm146, %v418
    %v423 = vld [vmem:[#allocation2 + $0x1] sm:$0x1]
    %v424 = vlaneseq
    %v425 = vshrl.u32 %v424, 7
    %v426 = vsub.s32 0, %v425
    %v427 = vrot.slane %v423, %v426
    %v428 = vmul.f32 %v212, %v427
    %v429 = vmul.f32 %v217, %v427
    %v430 = vmul.f32 %v222, %v427
    %v431 = vmul.f32 %v227, %v427
    %v432 = vadd.f32 %v191, %v428
    %v433 = vadd.f32 %v196, %v429
    %v434 = vadd.f32 %v201, %v430
    %v435 = vadd.f32 %v206, %v431
    %v436 = vld [vmem:[%s74 + $0x1] sm:$0x1]
    %v437 = vlaneseq
    %v438 = vshrl.u32 %v437, 7
    %v439 = vsub.s32 0, %v438
    %v440 = vrot.slane %v436, %v439
    %v441 = vmul.f32 %v244, %v440
    %v442 = vmul.f32 %v248, %v440
    %v443 = vmul.f32 %v252, %v440
    %v444 = vmul.f32 %v256, %v440
    %v445 = vadd.f32 %v432, %v441
    %v446 = vadd.f32 %v433, %v442
    %v447 = vadd.f32 %v434, %v443
    %v448 = vadd.f32 %v435, %v444
    %v449 = vld [vmem:[%s82 + $0x1] sm:$0x1]
    %v450 = vlaneseq
    %v451 = vshrl.u32 %v450, 7
    %v452 = vsub.s32 0, %v451
    %v453 = vrot.slane %v449, %v452
    %v454 = vmul.f32 %v273, %v453
    %v455 = vmul.f32 %v277, %v453
    %v456 = vmul.f32 %v281, %v453
    %v457 = vmul.f32 %v285, %v453
    %v458 = vadd.f32 %v445, %v454
    %v459 = vadd.f32 %v446, %v455
    %v460 = vadd.f32 %v447, %v456
    %v461 = vadd.f32 %v448, %v457
    %v462 = vld [vmem:[%s41 + $0x1] sm:$0x1]
    %v463 = vlaneseq
    %v464 = vshrl.u32 %v463, 7
    %v465 = vsub.s32 0, %v464
    %v466 = vrot.slane %v462, %v465
    %v467 = vmul.f32 %v302, %v466
    %v468 = vmul.f32 %v306, %v466
    %v469 = vmul.f32 %v310, %v466
    %v470 = vmul.f32 %v314, %v466
    %v471 = vadd.f32 %v458, %v467
    %v472 = vadd.f32 %v459, %v468
    %v473 = vadd.f32 %v460, %v469
    %v474 = vadd.f32 %v461, %v470
    %v475 = vld [vmem:[%s46 + $0x1] sm:$0x1]
    %v476 = vlaneseq
    %v477 = vshrl.u32 %v476, 7
    %v478 = vsub.s32 0, %v477
    %v479 = vrot.slane %v475, %v478
    %v480 = vmul.f32 %v331, %v479
    %v481 = vmul.f32 %v335, %v479
    %v482 = vmul.f32 %v339, %v479
    %v483 = vmul.f32 %v343, %v479
    %v484 = vadd.f32 %v471, %v480
    %v485 = vadd.f32 %v472, %v481
    %v486 = vadd.f32 %v473, %v482
    %v487 = vadd.f32 %v474, %v483
    %v488 = vld [vmem:[%s50 + $0x1] sm:$0x1]
    %v489 = vlaneseq
    %v490 = vshrl.u32 %v489, 7
    %v491 = vsub.s32 0, %v490
    %v492 = vrot.slane %v488, %v491
    %v493 = vmul.f32 %v360, %v492
    %v494 = vmul.f32 %v364, %v492
    %v495 = vmul.f32 %v368, %v492
    %v496 = vmul.f32 %v372, %v492
    %v497 = vadd.f32 %v484, %v493
    %v498 = vadd.f32 %v485, %v494
    %v499 = vadd.f32 %v486, %v495
    %v500 = vadd.f32 %v487, %v496
    %v501 = vld [vmem:[%s54 + $0x1] sm:$0x1]
    %v502 = vlaneseq
    %v503 = vshrl.u32 %v502, 7
    %v504 = vsub.s32 0, %v503
    %v505 = vrot.slane %v501, %v504
    %v506 = vmul.f32 %v389, %v505
    %v507 = vmul.f32 %v393, %v505
    %v508 = vmul.f32 %v397, %v505
    %v509 = vmul.f32 %v401, %v505
    %v510 = vadd.f32 %v497, %v506
    %v511 = vadd.f32 %v498, %v507
    %v512 = vadd.f32 %v499, %v508
    %v513 = vadd.f32 %v500, %v509
    %v514 = vmax.f32 %v510, 0.0
    %v515 = vmax.f32 %v511, 0.0
    %v516 = vmax.f32 %v512, 0.0
    %v517 = vmax.f32 %v513, 0.0
    %s518 = scalar_lea.vmem [#allocation3], 224
    %519 = vst.msk [vmem:[%s518] sm:$0xff] %vm146, %v514
    %520 = vst.msk [vmem:[%s518 + $0x8] sm:$0xff] %vm146, %v515
    %521 = vst.msk [vmem:[%s518 + $0x10] sm:$0xff] %vm146, %v516
    %522 = vst.msk [vmem:[%s518 + $0x18] sm:$0xff] %vm146, %v517
    %v523 = vld [vmem:[%s82] sm:$0x1]
    %v524 = vlaneseq
    %v525 = vshrl.u32 %v524, 7
    %v526 = vsub.s32 0, %v525
    %v527 = vrot.slane %v523, %v526
    %v528 = vmul.f32 %v212, %v527
    %v529 = vmul.f32 %v217, %v527
    %v530 = vmul.f32 %v222, %v527
    %v531 = vmul.f32 %v227, %v527
    %v532 = vadd.f32 %v191, %v528
    %v533 = vadd.f32 %v196, %v529
    %v534 = vadd.f32 %v201, %v530
    %v535 = vadd.f32 %v206, %v531
    %v536 = vld [vmem:[%s41] sm:$0x1]
    %v537 = vlaneseq
    %v538 = vshrl.u32 %v537, 7
    %v539 = vsub.s32 0, %v538
    %v540 = vrot.slane %v536, %v539
    %v541 = vmul.f32 %v244, %v540
    %v542 = vmul.f32 %v248, %v540
    %v543 = vmul.f32 %v252, %v540
    %v544 = vmul.f32 %v256, %v540
    %v545 = vadd.f32 %v532, %v541
    %v546 = vadd.f32 %v533, %v542
    %v547 = vadd.f32 %v534, %v543
    %v548 = vadd.f32 %v535, %v544
    %v549 = vld [vmem:[%s46] sm:$0x1]
    %v550 = vlaneseq
    %v551 = vshrl.u32 %v550, 7
    %v552 = vsub.s32 0, %v551
    %v553 = vrot.slane %v549, %v552
    %v554 = vmul.f32 %v273, %v553
    %v555 = vmul.f32 %v277, %v553
    %v556 = vmul.f32 %v281, %v553
    %v557 = vmul.f32 %v285, %v553
    %v558 = vadd.f32 %v545, %v554
    %v559 = vadd.f32 %v546, %v555
    %v560 = vadd.f32 %v547, %v556
    %v561 = vadd.f32 %v548, %v557
    %v562 = vld [vmem:[%s50] sm:$0x1]
    %v563 = vlaneseq
    %v564 = vshrl.u32 %v563, 7
    %v565 = vsub.s32 0, %v564
    %v566 = vrot.slane %v562, %v565
    %v567 = vmul.f32 %v302, %v566
    %v568 = vmul.f32 %v306, %v566
    %v569 = vmul.f32 %v310, %v566
    %v570 = vmul.f32 %v314, %v566
    %v571 = vadd.f32 %v558, %v567
    %v572 = vadd.f32 %v559, %v568
    %v573 = vadd.f32 %v560, %v569
    %v574 = vadd.f32 %v561, %v570
    %v575 = vld [vmem:[%s54] sm:$0x1]
    %v576 = vlaneseq
    %v577 = vshrl.u32 %v576, 7
    %v578 = vsub.s32 0, %v577
    %v579 = vrot.slane %v575, %v578
    %v580 = vmul.f32 %v331, %v579
    %v581 = vmul.f32 %v335, %v579
    %v582 = vmul.f32 %v339, %v579
    %v583 = vmul.f32 %v343, %v579
    %v584 = vadd.f32 %v571, %v580
    %v585 = vadd.f32 %v572, %v581
    %v586 = vadd.f32 %v573, %v582
    %v587 = vadd.f32 %v574, %v583
    %v588 = vld [vmem:[%s58] sm:$0x1]
    %v589 = vlaneseq
    %v590 = vshrl.u32 %v589, 7
    %v591 = vsub.s32 0, %v590
    %v592 = vrot.slane %v588, %v591
    %v593 = vmul.f32 %v360, %v592
    %v594 = vmul.f32 %v364, %v592
    %v595 = vmul.f32 %v368, %v592
    %v596 = vmul.f32 %v372, %v592
    %v597 = vadd.f32 %v584, %v593
    %v598 = vadd.f32 %v585, %v594
    %v599 = vadd.f32 %v586, %v595
    %v600 = vadd.f32 %v587, %v596
    %v601 = vld [vmem:[#allocation2] sm:$0x1]
    %v602 = vlaneseq
    %v603 = vshrl.u32 %v602, 7
    %v604 = vsub.s32 0, %v603
    %v605 = vrot.slane %v601, %v604
    %v606 = vmul.f32 %v389, %v605
    %v607 = vmul.f32 %v393, %v605
    %v608 = vmul.f32 %v397, %v605
    %v609 = vmul.f32 %v401, %v605
    %614 = vrot.lane.b32.xlu0 %v606, 127
    %v615 = vpop.permute.xlu0 %614
    %616 = vrot.lane.b32.xlu0 %v607, 127
    %v617 = vpop.permute.xlu0 %616
    %618 = vrot.lane.b32.xlu0 %v608, 127
    %v619 = vpop.permute.xlu0 %618
    %620 = vrot.lane.b32.xlu0 %v609, 127
    %v621 = vpop.permute.xlu0 %620
    %v626 = vadd.f32 %v597, %v615
    %v627 = vadd.f32 %v598, %v617
    %v628 = vadd.f32 %v599, %v619
    %v629 = vadd.f32 %v600, %v621
    %v630 = vmax.f32 %v626, 0.0
    %v631 = vmax.f32 %v627, 0.0
    %v632 = vmax.f32 %v628, 0.0
    %v633 = vmax.f32 %v629, 0.0
    %638 = vrot.lane.b32.xlu0 %v630, 1
    %v639 = vpop.permute.xlu0 %638
    %640 = vrot.lane.b32.xlu0 %v631, 1
    %v641 = vpop.permute.xlu0 %640
    %642 = vrot.lane.b32.xlu0 %v632, 1
    %v643 = vpop.permute.xlu0 %642
    %644 = vrot.lane.b32.xlu0 %v633, 1
    %v645 = vpop.permute.xlu0 %644
    %vm650 = vcmask 23560
    %651 = vst.msk [vmem:[#allocation3] sm:$0xff] %vm650, %v639
    %652 = vst.msk [vmem:[#allocation3 + $0x8] sm:$0xff] %vm650, %v641
    %653 = vst.msk [vmem:[#allocation3 + $0x10] sm:$0xff] %vm650, %v643
    %654 = vst.msk [vmem:[#allocation3 + $0x18] sm:$0xff] %vm650, %v645
    %v655 = vld [vmem:[%s82 + $0x1] sm:$0x1]
    %v656 = vlaneseq
    %v657 = vshrl.u32 %v656, 7
    %v658 = vsub.s32 0, %v657
    %v659 = vrot.slane %v655, %v658
    %v660 = vmul.f32 %v212, %v659
    %v661 = vmul.f32 %v217, %v659
    %v662 = vmul.f32 %v222, %v659
    %v663 = vmul.f32 %v227, %v659
    %v664 = vadd.f32 %v191, %v660
    %v665 = vadd.f32 %v196, %v661
    %v666 = vadd.f32 %v201, %v662
    %v667 = vadd.f32 %v206, %v663
    %v668 = vld [vmem:[%s41 + $0x1] sm:$0x1]
    %v669 = vlaneseq
    %v670 = vshrl.u32 %v669, 7
    %v671 = vsub.s32 0, %v670
    %v672 = vrot.slane %v668, %v671
    %v673 = vmul.f32 %v244, %v672
    %v674 = vmul.f32 %v248, %v672
    %v675 = vmul.f32 %v252, %v672
    %v676 = vmul.f32 %v256, %v672
    %v677 = vadd.f32 %v664, %v673
    %v678 = vadd.f32 %v665, %v674
    %v679 = vadd.f32 %v666, %v675
    %v680 = vadd.f32 %v667, %v676
    %v681 = vld [vmem:[%s46 + $0x1] sm:$0x1]
    %v682 = vlaneseq
    %v683 = vshrl.u32 %v682, 7
    %v684 = vsub.s32 0, %v683
    %v685 = vrot.slane %v681, %v684
    %v686 = vmul.f32 %v273, %v685
    %v687 = vmul.f32 %v277, %v685
    %v688 = vmul.f32 %v281, %v685
    %v689 = vmul.f32 %v285, %v685
    %v690 = vadd.f32 %v677, %v686
    %v691 = vadd.f32 %v678, %v687
    %v692 = vadd.f32 %v679, %v688
    %v693 = vadd.f32 %v680, %v689
    %v694 = vld [vmem:[%s50 + $0x1] sm:$0x1]
    %v695 = vlaneseq
    %v696 = vshrl.u32 %v695, 7
    %v697 = vsub.s32 0, %v696
    %v698 = vrot.slane %v694, %v697
    %v699 = vmul.f32 %v302, %v698
    %v700 = vmul.f32 %v306, %v698
    %v701 = vmul.f32 %v310, %v698
    %v702 = vmul.f32 %v314, %v698
    %v703 = vadd.f32 %v690, %v699
    %v704 = vadd.f32 %v691, %v700
    %v705 = vadd.f32 %v692, %v701
    %v706 = vadd.f32 %v693, %v702
    %v707 = vld [vmem:[%s54 + $0x1] sm:$0x1]
    %v708 = vlaneseq
    %v709 = vshrl.u32 %v708, 7
    %v710 = vsub.s32 0, %v709
    %v711 = vrot.slane %v707, %v710
    %v712 = vmul.f32 %v331, %v711
    %v713 = vmul.f32 %v335, %v711
    %v714 = vmul.f32 %v339, %v711
    %v715 = vmul.f32 %v343, %v711
    %v716 = vadd.f32 %v703, %v712
    %v717 = vadd.f32 %v704, %v713
    %v718 = vadd.f32 %v705, %v714
    %v719 = vadd.f32 %v706, %v715
    %v720 = vld [vmem:[%s58 + $0x1] sm:$0x1]
    %v721 = vlaneseq
    %v722 = vshrl.u32 %v721, 7
    %v723 = vsub.s32 0, %v722
    %v724 = vrot.slane %v720, %v723
    %v725 = vmul.f32 %v360, %v724
    %v726 = vmul.f32 %v364, %v724
    %v727 = vmul.f32 %v368, %v724
    %v728 = vmul.f32 %v372, %v724
    %v729 = vadd.f32 %v716, %v725
    %v730 = vadd.f32 %v717, %v726
    %v731 = vadd.f32 %v718, %v727
    %v732 = vadd.f32 %v719, %v728
    %v733 = vld [vmem:[#allocation2 + $0x1] sm:$0x1]
    %v734 = vlaneseq
    %v735 = vshrl.u32 %v734, 7
    %v736 = vsub.s32 0, %v735
    %v737 = vrot.slane %v733, %v736
    %v738 = vmul.f32 %v389, %v737
    %v739 = vmul.f32 %v393, %v737
    %v740 = vmul.f32 %v397, %v737
    %v741 = vmul.f32 %v401, %v737
    %746 = vrot.lane.b32.xlu0 %v738, 127
    %v747 = vpop.permute.xlu0 %746
    %748 = vrot.lane.b32.xlu0 %v739, 127
    %v749 = vpop.permute.xlu0 %748
    %750 = vrot.lane.b32.xlu0 %v740, 127
    %v751 = vpop.permute.xlu0 %750
    %752 = vrot.lane.b32.xlu0 %v741, 127
    %v753 = vpop.permute.xlu0 %752
    %v758 = vadd.f32 %v729, %v747
    %v759 = vadd.f32 %v730, %v749
    %v760 = vadd.f32 %v731, %v751
    %v761 = vadd.f32 %v732, %v753
    %v762 = vmax.f32 %v758, 0.0
    %v763 = vmax.f32 %v759, 0.0
    %v764 = vmax.f32 %v760, 0.0
    %v765 = vmax.f32 %v761, 0.0
    %770 = vrot.lane.b32.xlu0 %v762, 1
    %v771 = vpop.permute.xlu0 %770
    %772 = vrot.lane.b32.xlu0 %v763, 1
    %v773 = vpop.permute.xlu0 %772
    %774 = vrot.lane.b32.xlu0 %v764, 1
    %v775 = vpop.permute.xlu0 %774
    %776 = vrot.lane.b32.xlu0 %v765, 1
    %v777 = vpop.permute.xlu0 %776
    %s782 = scalar_lea.vmem [#allocation3], 32
    %783 = vst.msk [vmem:[%s782] sm:$0xff] %vm650, %v771
    %784 = vst.msk [vmem:[%s782 + $0x8] sm:$0xff] %vm650, %v773
    %785 = vst.msk [vmem:[%s782 + $0x10] sm:$0xff] %vm650, %v775
    %786 = vst.msk [vmem:[%s782 + $0x18] sm:$0xff] %vm650, %v777
    %v787 = vld [vmem:[%s46] sm:$0x1]
    %v788 = vlaneseq
    %v789 = vshrl.u32 %v788, 7
    %v790 = vsub.s32 0, %v789
    %v791 = vrot.slane %v787, %v790
    %v792 = vmul.f32 %v212, %v791
    %v793 = vmul.f32 %v217, %v791
    %v794 = vmul.f32 %v222, %v791
    %v795 = vmul.f32 %v227, %v791
    %v796 = vadd.f32 %v191, %v792
    %v797 = vadd.f32 %v196, %v793
    %v798 = vadd.f32 %v201, %v794
    %v799 = vadd.f32 %v206, %v795
    %v800 = vld [vmem:[%s50] sm:$0x1]
    %v801 = vlaneseq
    %v802 = vshrl.u32 %v801, 7
    %v803 = vsub.s32 0, %v802
    %v804 = vrot.slane %v800, %v803
    %v805 = vmul.f32 %v244, %v804
    %v806 = vmul.f32 %v248, %v804
    %v807 = vmul.f32 %v252, %v804
    %v808 = vmul.f32 %v256, %v804
    %v809 = vadd.f32 %v796, %v805
    %v810 = vadd.f32 %v797, %v806
    %v811 = vadd.f32 %v798, %v807
    %v812 = vadd.f32 %v799, %v808
    %v813 = vld [vmem:[%s54] sm:$0x1]
    %v814 = vlaneseq
    %v815 = vshrl.u32 %v814, 7
    %v816 = vsub.s32 0, %v815
    %v817 = vrot.slane %v813, %v816
    %v818 = vmul.f32 %v273, %v817
    %v819 = vmul.f32 %v277, %v817
    %v820 = vmul.f32 %v281, %v817
    %v821 = vmul.f32 %v285, %v817
    %v822 = vadd.f32 %v809, %v818
    %v823 = vadd.f32 %v810, %v819
    %v824 = vadd.f32 %v811, %v820
    %v825 = vadd.f32 %v812, %v821
    %v826 = vld [vmem:[%s58] sm:$0x1]
    %v827 = vlaneseq
    %v828 = vshrl.u32 %v827, 7
    %v829 = vsub.s32 0, %v828
    %v830 = vrot.slane %v826, %v829
    %v831 = vmul.f32 %v302, %v830
    %v832 = vmul.f32 %v306, %v830
    %v833 = vmul.f32 %v310, %v830
    %v834 = vmul.f32 %v314, %v830
    %v835 = vadd.f32 %v822, %v831
    %v836 = vadd.f32 %v823, %v832
    %v837 = vadd.f32 %v824, %v833
    %v838 = vadd.f32 %v825, %v834
    %v839 = vld [vmem:[#allocation2] sm:$0x1]
    %v840 = vlaneseq
    %v841 = vshrl.u32 %v840, 7
    %v842 = vsub.s32 0, %v841
    %v843 = vrot.slane %v839, %v842
    %v844 = vmul.f32 %v331, %v843
    %v845 = vmul.f32 %v335, %v843
    %v846 = vmul.f32 %v339, %v843
    %v847 = vmul.f32 %v343, %v843
    %852 = vrot.lane.b32.xlu0 %v844, 127
    %v853 = vpop.permute.xlu0 %852
    %854 = vrot.lane.b32.xlu0 %v845, 127
    %v855 = vpop.permute.xlu0 %854
    %856 = vrot.lane.b32.xlu0 %v846, 127
    %v857 = vpop.permute.xlu0 %856
    %858 = vrot.lane.b32.xlu0 %v847, 127
    %v859 = vpop.permute.xlu0 %858
    %v864 = vadd.f32 %v835, %v853
    %v865 = vadd.f32 %v836, %v855
    %v866 = vadd.f32 %v837, %v857
    %v867 = vadd.f32 %v838, %v859
    %v868 = vld [vmem:[%s74] sm:$0x1]
    %v869 = vlaneseq
    %v870 = vshrl.u32 %v869, 7
    %v871 = vsub.s32 0, %v870
    %v872 = vrot.slane %v868, %v871
    %v873 = vmul.f32 %v360, %v872
    %v874 = vmul.f32 %v364, %v872
    %v875 = vmul.f32 %v368, %v872
    %v876 = vmul.f32 %v372, %v872
    %881 = vrot.lane.b32.xlu0 %v873, 127
    %v882 = vpop.permute.xlu0 %881
    %883 = vrot.lane.b32.xlu0 %v874, 127
    %v884 = vpop.permute.xlu0 %883
    %885 = vrot.lane.b32.xlu0 %v875, 127
    %v886 = vpop.permute.xlu0 %885
    %887 = vrot.lane.b32.xlu0 %v876, 127
    %v888 = vpop.permute.xlu0 %887
    %v893 = vadd.f32 %v864, %v882
    %v894 = vadd.f32 %v865, %v884
    %v895 = vadd.f32 %v866, %v886
    %v896 = vadd.f32 %v867, %v888
    %v897 = vld [vmem:[%s82] sm:$0x1]
    %v898 = vlaneseq
    %v899 = vshrl.u32 %v898, 7
    %v900 = vsub.s32 0, %v899
    %v901 = vrot.slane %v897, %v900
    %v902 = vmul.f32 %v389, %v901
    %v903 = vmul.f32 %v393, %v901
    %v904 = vmul.f32 %v397, %v901
    %v905 = vmul.f32 %v401, %v901
    %910 = vrot.lane.b32.xlu0 %v902, 127
    %v911 = vpop.permute.xlu0 %910
    %912 = vrot.lane.b32.xlu0 %v903, 127
    %v913 = vpop.permute.xlu0 %912
    %914 = vrot.lane.b32.xlu0 %v904, 127
    %v915 = vpop.permute.xlu0 %914
    %916 = vrot.lane.b32.xlu0 %v905, 127
    %v917 = vpop.permute.xlu0 %916
    %v922 = vadd.f32 %v893, %v911
    %v923 = vadd.f32 %v894, %v913
    %v924 = vadd.f32 %v895, %v915
    %v925 = vadd.f32 %v896, %v917
    %v926 = vmax.f32 %v922, 0.0
    %v927 = vmax.f32 %v923, 0.0
    %v928 = vmax.f32 %v924, 0.0
    %v929 = vmax.f32 %v925, 0.0
    %934 = vrot.lane.b32.xlu0 %v926, 1
    %v935 = vpop.permute.xlu0 %934
    %936 = vrot.lane.b32.xlu0 %v927, 1
    %v937 = vpop.permute.xlu0 %936
    %938 = vrot.lane.b32.xlu0 %v928, 1
    %v939 = vpop.permute.xlu0 %938
    %940 = vrot.lane.b32.xlu0 %v929, 1
    %v941 = vpop.permute.xlu0 %940
    %946 = vst.msk [vmem:[%s119] sm:$0xff] %vm650, %v935
    %947 = vst.msk [vmem:[%s119 + $0x8] sm:$0xff] %vm650, %v937
    %948 = vst.msk [vmem:[%s119 + $0x10] sm:$0xff] %vm650, %v939
    %949 = vst.msk [vmem:[%s119 + $0x18] sm:$0xff] %vm650, %v941
    %v950 = vld [vmem:[%s46 + $0x1] sm:$0x1]
    %v951 = vlaneseq
    %v952 = vshrl.u32 %v951, 7
    %v953 = vsub.s32 0, %v952
    %v954 = vrot.slane %v950, %v953
    %v955 = vmul.f32 %v212, %v954
    %v956 = vmul.f32 %v217, %v954
    %v957 = vmul.f32 %v222, %v954
    %v958 = vmul.f32 %v227, %v954
    %v959 = vadd.f32 %v191, %v955
    %v960 = vadd.f32 %v196, %v956
    %v961 = vadd.f32 %v201, %v957
    %v962 = vadd.f32 %v206, %v958
    %v963 = vld [vmem:[%s50 + $0x1] sm:$0x1]
    %v964 = vlaneseq
    %v965 = vshrl.u32 %v964, 7
    %v966 = vsub.s32 0, %v965
    %v967 = vrot.slane %v963, %v966
    %v968 = vmul.f32 %v244, %v967
    %v969 = vmul.f32 %v248, %v967
    %v970 = vmul.f32 %v252, %v967
    %v971 = vmul.f32 %v256, %v967
    %v972 = vadd.f32 %v959, %v968
    %v973 = vadd.f32 %v960, %v969
    %v974 = vadd.f32 %v961, %v970
    %v975 = vadd.f32 %v962, %v971
    %v976 = vld [vmem:[%s54 + $0x1] sm:$0x1]
    %v977 = vlaneseq
    %v978 = vshrl.u32 %v977, 7
    %v979 = vsub.s32 0, %v978
    %v980 = vrot.slane %v976, %v979
    %v981 = vmul.f32 %v273, %v980
    %v982 = vmul.f32 %v277, %v980
    %v983 = vmul.f32 %v281, %v980
    %v984 = vmul.f32 %v285, %v980
    %v985 = vadd.f32 %v972, %v981
    %v986 = vadd.f32 %v973, %v982
    %v987 = vadd.f32 %v974, %v983
    %v988 = vadd.f32 %v975, %v984
    %v989 = vld [vmem:[%s58 + $0x1] sm:$0x1]
    %v990 = vlaneseq
    %v991 = vshrl.u32 %v990, 7
    %v992 = vsub.s32 0, %v991
    %v993 = vrot.slane %v989, %v992
    %v994 = vmul.f32 %v302, %v993
    %v995 = vmul.f32 %v306, %v993
    %v996 = vmul.f32 %v310, %v993
    %v997 = vmul.f32 %v314, %v993
    %v998 = vadd.f32 %v985, %v994
    %v999 = vadd.f32 %v986, %v995
    %v1000 = vadd.f32 %v987, %v996
    %v1001 = vadd.f32 %v988, %v997
    %v1002 = vld [vmem:[#allocation2 + $0x1] sm:$0x1]
    %v1003 = vlaneseq
    %v1004 = vshrl.u32 %v1003, 7
    %v1005 = vsub.s32 0, %v1004
    %v1006 = vrot.slane %v1002, %v1005
    %v1007 = vmul.f32 %v331, %v1006
    %v1008 = vmul.f32 %v335, %v1006
    %v1009 = vmul.f32 %v339, %v1006
    %v1010 = vmul.f32 %v343, %v1006
    %1015 = vrot.lane.b32.xlu0 %v1007, 127
    %v1016 = vpop.permute.xlu0 %1015
    %1017 = vrot.lane.b32.xlu0 %v1008, 127
    %v1018 = vpop.permute.xlu0 %1017
    %1019 = vrot.lane.b32.xlu0 %v1009, 127
    %v1020 = vpop.permute.xlu0 %1019
    %1021 = vrot.lane.b32.xlu0 %v1010, 127
    %v1022 = vpop.permute.xlu0 %1021
    %v1027 = vadd.f32 %v998, %v1016
    %v1028 = vadd.f32 %v999, %v1018
    %v1029 = vadd.f32 %v1000, %v1020
    %v1030 = vadd.f32 %v1001, %v1022
    %v1031 = vld [vmem:[%s74 + $0x1] sm:$0x1]
    %v1032 = vlaneseq
    %v1033 = vshrl.u32 %v1032, 7
    %v1034 = vsub.s32 0, %v1033
    %v1035 = vrot.slane %v1031, %v1034
    %v1036 = vmul.f32 %v360, %v1035
    %v1037 = vmul.f32 %v364, %v1035
    %v1038 = vmul.f32 %v368, %v1035
    %v1039 = vmul.f32 %v372, %v1035
    %1044 = vrot.lane.b32.xlu0 %v1036, 127
    %v1045 = vpop.permute.xlu0 %1044
    %1046 = vrot.lane.b32.xlu0 %v1037, 127
    %v1047 = vpop.permute.xlu0 %1046
    %1048 = vrot.lane.b32.xlu0 %v1038, 127
    %v1049 = vpop.permute.xlu0 %1048
    %1050 = vrot.lane.b32.xlu0 %v1039, 127
    %v1051 = vpop.permute.xlu0 %1050
    %v1056 = vadd.f32 %v1027, %v1045
    %v1057 = vadd.f32 %v1028, %v1047
    %v1058 = vadd.f32 %v1029, %v1049
    %v1059 = vadd.f32 %v1030, %v1051
    %v1060 = vld [vmem:[%s82 + $0x1] sm:$0x1]
    %v1061 = vlaneseq
    %v1062 = vshrl.u32 %v1061, 7
    %v1063 = vsub.s32 0, %v1062
    %v1064 = vrot.slane %v1060, %v1063
    %v1065 = vmul.f32 %v389, %v1064
    %v1066 = vmul.f32 %v393, %v1064
    %v1067 = vmul.f32 %v397, %v1064
    %v1068 = vmul.f32 %v401, %v1064
    %1073 = vrot.lane.b32.xlu0 %v1065, 127
    %v1074 = vpop.permute.xlu0 %1073
    %1075 = vrot.lane.b32.xlu0 %v1066, 127
    %v1076 = vpop.permute.xlu0 %1075
    %1077 = vrot.lane.b32.xlu0 %v1067, 127
    %v1078 = vpop.permute.xlu0 %1077
    %1079 = vrot.lane.b32.xlu0 %v1068, 127
    %v1080 = vpop.permute.xlu0 %1079
    %v1085 = vadd.f32 %v1056, %v1074
    %v1086 = vadd.f32 %v1057, %v1076
    %v1087 = vadd.f32 %v1058, %v1078
    %v1088 = vadd.f32 %v1059, %v1080
    %v1089 = vmax.f32 %v1085, 0.0
    %v1090 = vmax.f32 %v1086, 0.0
    %v1091 = vmax.f32 %v1087, 0.0
    %v1092 = vmax.f32 %v1088, 0.0
    %1097 = vrot.lane.b32.xlu0 %v1089, 1
    %v1098 = vpop.permute.xlu0 %1097
    %1099 = vrot.lane.b32.xlu0 %v1090, 1
    %v1100 = vpop.permute.xlu0 %1099
    %1101 = vrot.lane.b32.xlu0 %v1091, 1
    %v1102 = vpop.permute.xlu0 %1101
    %1103 = vrot.lane.b32.xlu0 %v1092, 1
    %v1104 = vpop.permute.xlu0 %1103
    %s1109 = scalar_lea.vmem [#allocation3], 96
    %1110 = vst.msk [vmem:[%s1109] sm:$0xff] %vm650, %v1098
    %1111 = vst.msk [vmem:[%s1109 + $0x8] sm:$0xff] %vm650, %v1100
    %1112 = vst.msk [vmem:[%s1109 + $0x10] sm:$0xff] %vm650, %v1102
    %1113 = vst.msk [vmem:[%s1109 + $0x18] sm:$0xff] %vm650, %v1104
    %v1114 = vld [vmem:[%s54] sm:$0x1]
    %v1115 = vlaneseq
    %v1116 = vshrl.u32 %v1115, 7
    %v1117 = vsub.s32 0, %v1116
    %v1118 = vrot.slane %v1114, %v1117
    %v1119 = vmul.f32 %v212, %v1118
    %v1120 = vmul.f32 %v217, %v1118
    %v1121 = vmul.f32 %v222, %v1118
    %v1122 = vmul.f32 %v227, %v1118
    %v1123 = vadd.f32 %v191, %v1119
    %v1124 = vadd.f32 %v196, %v1120
    %v1125 = vadd.f32 %v201, %v1121
    %v1126 = vadd.f32 %v206, %v1122
    %v1127 = vld [vmem:[%s58] sm:$0x1]
    %v1128 = vlaneseq
    %v1129 = vshrl.u32 %v1128, 7
    %v1130 = vsub.s32 0, %v1129
    %v1131 = vrot.slane %v1127, %v1130
    %v1132 = vmul.f32 %v244, %v1131
    %v1133 = vmul.f32 %v248, %v1131
    %v1134 = vmul.f32 %v252, %v1131
    %v1135 = vmul.f32 %v256, %v1131
    %v1136 = vadd.f32 %v1123, %v1132
    %v1137 = vadd.f32 %v1124, %v1133
    %v1138 = vadd.f32 %v1125, %v1134
    %v1139 = vadd.f32 %v1126, %v1135
    %v1140 = vld [vmem:[#allocation2] sm:$0x1]
    %v1141 = vlaneseq
    %v1142 = vshrl.u32 %v1141, 7
    %v1143 = vsub.s32 0, %v1142
    %v1144 = vrot.slane %v1140, %v1143
    %v1145 = vmul.f32 %v273, %v1144
    %v1146 = vmul.f32 %v277, %v1144
    %v1147 = vmul.f32 %v281, %v1144
    %v1148 = vmul.f32 %v285, %v1144
    %1153 = vrot.lane.b32.xlu0 %v1145, 127
    %v1154 = vpop.permute.xlu0 %1153
    %1155 = vrot.lane.b32.xlu0 %v1146, 127
    %v1156 = vpop.permute.xlu0 %1155
    %1157 = vrot.lane.b32.xlu0 %v1147, 127
    %v1158 = vpop.permute.xlu0 %1157
    %1159 = vrot.lane.b32.xlu0 %v1148, 127
    %v1160 = vpop.permute.xlu0 %1159
    %v1165 = vadd.f32 %v1136, %v1154
    %v1166 = vadd.f32 %v1137, %v1156
    %v1167 = vadd.f32 %v1138, %v1158
    %v1168 = vadd.f32 %v1139, %v1160
    %v1169 = vld [vmem:[%s74] sm:$0x1]
    %v1170 = vlaneseq
    %v1171 = vshrl.u32 %v1170, 7
    %v1172 = vsub.s32 0, %v1171
    %v1173 = vrot.slane %v1169, %v1172
    %v1174 = vmul.f32 %v302, %v1173
    %v1175 = vmul.f32 %v306, %v1173
    %v1176 = vmul.f32 %v310, %v1173
    %v1177 = vmul.f32 %v314, %v1173
    %1182 = vrot.lane.b32.xlu0 %v1174, 127
    %v1183 = vpop.permute.xlu0 %1182
    %1184 = vrot.lane.b32.xlu0 %v1175, 127
    %v1185 = vpop.permute.xlu0 %1184
    %1186 = vrot.lane.b32.xlu0 %v1176, 127
    %v1187 = vpop.permute.xlu0 %1186
    %1188 = vrot.lane.b32.xlu0 %v1177, 127
    %v1189 = vpop.permute.xlu0 %1188
    %v1194 = vadd.f32 %v1165, %v1183
    %v1195 = vadd.f32 %v1166, %v1185
    %v1196 = vadd.f32 %v1167, %v1187
    %v1197 = vadd.f32 %v1168, %v1189
    %v1198 = vld [vmem:[%s82] sm:$0x1]
    %v1199 = vlaneseq
    %v1200 = vshrl.u32 %v1199, 7
    %v1201 = vsub.s32 0, %v1200
    %v1202 = vrot.slane %v1198, %v1201
    %v1203 = vmul.f32 %v331, %v1202
    %v1204 = vmul.f32 %v335, %v1202
    %v1205 = vmul.f32 %v339, %v1202
    %v1206 = vmul.f32 %v343, %v1202
    %1211 = vrot.lane.b32.xlu0 %v1203, 127
    %v1212 = vpop.permute.xlu0 %1211
    %1213 = vrot.lane.b32.xlu0 %v1204, 127
    %v1214 = vpop.permute.xlu0 %1213
    %1215 = vrot.lane.b32.xlu0 %v1205, 127
    %v1216 = vpop.permute.xlu0 %1215
    %1217 = vrot.lane.b32.xlu0 %v1206, 127
    %v1218 = vpop.permute.xlu0 %1217
    %v1223 = vadd.f32 %v1194, %v1212
    %v1224 = vadd.f32 %v1195, %v1214
    %v1225 = vadd.f32 %v1196, %v1216
    %v1226 = vadd.f32 %v1197, %v1218
    %v1227 = vld [vmem:[%s41] sm:$0x1]
    %v1228 = vlaneseq
    %v1229 = vshrl.u32 %v1228, 7
    %v1230 = vsub.s32 0, %v1229
    %v1231 = vrot.slane %v1227, %v1230
    %v1232 = vmul.f32 %v360, %v1231
    %v1233 = vmul.f32 %v364, %v1231
    %v1234 = vmul.f32 %v368, %v1231
    %v1235 = vmul.f32 %v372, %v1231
    %1240 = vrot.lane.b32.xlu0 %v1232, 127
    %v1241 = vpop.permute.xlu0 %1240
    %1242 = vrot.lane.b32.xlu0 %v1233, 127
    %v1243 = vpop.permute.xlu0 %1242
    %1244 = vrot.lane.b32.xlu0 %v1234, 127
    %v1245 = vpop.permute.xlu0 %1244
    %1246 = vrot.lane.b32.xlu0 %v1235, 127
    %v1247 = vpop.permute.xlu0 %1246
    %v1252 = vadd.f32 %v1223, %v1241
    %v1253 = vadd.f32 %v1224, %v1243
    %v1254 = vadd.f32 %v1225, %v1245
    %v1255 = vadd.f32 %v1226, %v1247
    %v1256 = vld [vmem:[%s46] sm:$0x1]
    %v1257 = vlaneseq
    %v1258 = vshrl.u32 %v1257, 7
    %v1259 = vsub.s32 0, %v1258
    %v1260 = vrot.slane %v1256, %v1259
    %v1261 = vmul.f32 %v389, %v1260
    %v1262 = vmul.f32 %v393, %v1260
    %v1263 = vmul.f32 %v397, %v1260
    %v1264 = vmul.f32 %v401, %v1260
    %1269 = vrot.lane.b32.xlu0 %v1261, 127
    %v1270 = vpop.permute.xlu0 %1269
    %1271 = vrot.lane.b32.xlu0 %v1262, 127
    %v1272 = vpop.permute.xlu0 %1271
    %1273 = vrot.lane.b32.xlu0 %v1263, 127
    %v1274 = vpop.permute.xlu0 %1273
    %1275 = vrot.lane.b32.xlu0 %v1264, 127
    %v1276 = vpop.permute.xlu0 %1275
    %v1281 = vadd.f32 %v1252, %v1270
    %v1282 = vadd.f32 %v1253, %v1272
    %v1283 = vadd.f32 %v1254, %v1274
    %v1284 = vadd.f32 %v1255, %v1276
    %v1285 = vmax.f32 %v1281, 0.0
    %v1286 = vmax.f32 %v1282, 0.0
    %v1287 = vmax.f32 %v1283, 0.0
    %v1288 = vmax.f32 %v1284, 0.0
    %1293 = vrot.lane.b32.xlu0 %v1285, 1
    %v1294 = vpop.permute.xlu0 %1293
    %1295 = vrot.lane.b32.xlu0 %v1286, 1
    %v1296 = vpop.permute.xlu0 %1295
    %1297 = vrot.lane.b32.xlu0 %v1287, 1
    %v1298 = vpop.permute.xlu0 %1297
    %1299 = vrot.lane.b32.xlu0 %v1288, 1
    %v1300 = vpop.permute.xlu0 %1299
    %1305 = vst.msk [vmem:[%s128] sm:$0xff] %vm650, %v1294
    %1306 = vst.msk [vmem:[%s128 + $0x8] sm:$0xff] %vm650, %v1296
    %1307 = vst.msk [vmem:[%s128 + $0x10] sm:$0xff] %vm650, %v1298
    %1308 = vst.msk [vmem:[%s128 + $0x18] sm:$0xff] %vm650, %v1300
    %v1309 = vld [vmem:[%s54 + $0x1] sm:$0x1]
    %v1310 = vlaneseq
    %v1311 = vshrl.u32 %v1310, 7
    %v1312 = vsub.s32 0, %v1311
    %v1313 = vrot.slane %v1309, %v1312
    %v1314 = vmul.f32 %v212, %v1313
    %v1315 = vmul.f32 %v217, %v1313
    %v1316 = vmul.f32 %v222, %v1313
    %v1317 = vmul.f32 %v227, %v1313
    %v1318 = vadd.f32 %v191, %v1314
    %v1319 = vadd.f32 %v196, %v1315
    %v1320 = vadd.f32 %v201, %v1316
    %v1321 = vadd.f32 %v206, %v1317
    %v1322 = vld [vmem:[%s58 + $0x1] sm:$0x1]
    %v1323 = vlaneseq
    %v1324 = vshrl.u32 %v1323, 7
    %v1325 = vsub.s32 0, %v1324
    %v1326 = vrot.slane %v1322, %v1325
    %v1327 = vmul.f32 %v244, %v1326
    %v1328 = vmul.f32 %v248, %v1326
    %v1329 = vmul.f32 %v252, %v1326
    %v1330 = vmul.f32 %v256, %v1326
    %v1331 = vadd.f32 %v1318, %v1327
    %v1332 = vadd.f32 %v1319, %v1328
    %v1333 = vadd.f32 %v1320, %v1329
    %v1334 = vadd.f32 %v1321, %v1330
    %v1335 = vld [vmem:[#allocation2 + $0x1] sm:$0x1]
    %v1336 = vlaneseq
    %v1337 = vshrl.u32 %v1336, 7
    %v1338 = vsub.s32 0, %v1337
    %v1339 = vrot.slane %v1335, %v1338
    %v1340 = vmul.f32 %v273, %v1339
    %v1341 = vmul.f32 %v277, %v1339
    %v1342 = vmul.f32 %v281, %v1339
    %v1343 = vmul.f32 %v285, %v1339
    %1348 = vrot.lane.b32.xlu0 %v1340, 127
    %v1349 = vpop.permute.xlu0 %1348
    %1350 = vrot.lane.b32.xlu0 %v1341, 127
    %v1351 = vpop.permute.xlu0 %1350
    %1352 = vrot.lane.b32.xlu0 %v1342, 127
    %v1353 = vpop.permute.xlu0 %1352
    %1354 = vrot.lane.b32.xlu0 %v1343, 127
    %v1355 = vpop.permute.xlu0 %1354
    %v1360 = vadd.f32 %v1331, %v1349
    %v1361 = vadd.f32 %v1332, %v1351
    %v1362 = vadd.f32 %v1333, %v1353
    %v1363 = vadd.f32 %v1334, %v1355
    %v1364 = vld [vmem:[%s74 + $0x1] sm:$0x1]
    %v1365 = vlaneseq
    %v1366 = vshrl.u32 %v1365, 7
    %v1367 = vsub.s32 0, %v1366
    %v1368 = vrot.slane %v1364, %v1367
    %v1369 = vmul.f32 %v302, %v1368
    %v1370 = vmul.f32 %v306, %v1368
    %v1371 = vmul.f32 %v310, %v1368
    %v1372 = vmul.f32 %v314, %v1368
    %1377 = vrot.lane.b32.xlu0 %v1369, 127
    %v1378 = vpop.permute.xlu0 %1377
    %1379 = vrot.lane.b32.xlu0 %v1370, 127
    %v1380 = vpop.permute.xlu0 %1379
    %1381 = vrot.lane.b32.xlu0 %v1371, 127
    %v1382 = vpop.permute.xlu0 %1381
    %1383 = vrot.lane.b32.xlu0 %v1372, 127
    %v1384 = vpop.permute.xlu0 %1383
    %v1389 = vadd.f32 %v1360, %v1378
    %v1390 = vadd.f32 %v1361, %v1380
    %v1391 = vadd.f32 %v1362, %v1382
    %v1392 = vadd.f32 %v1363, %v1384
    %v1393 = vld [vmem:[%s82 + $0x1] sm:$0x1]
    %v1394 = vlaneseq
    %v1395 = vshrl.u32 %v1394, 7
    %v1396 = vsub.s32 0, %v1395
    %v1397 = vrot.slane %v1393, %v1396
    %v1398 = vmul.f32 %v331, %v1397
    %v1399 = vmul.f32 %v335, %v1397
    %v1400 = vmul.f32 %v339, %v1397
    %v1401 = vmul.f32 %v343, %v1397
    %1406 = vrot.lane.b32.xlu0 %v1398, 127
    %v1407 = vpop.permute.xlu0 %1406
    %1408 = vrot.lane.b32.xlu0 %v1399, 127
    %v1409 = vpop.permute.xlu0 %1408
    %1410 = vrot.lane.b32.xlu0 %v1400, 127
    %v1411 = vpop.permute.xlu0 %1410
    %1412 = vrot.lane.b32.xlu0 %v1401, 127
    %v1413 = vpop.permute.xlu0 %1412
    %v1418 = vadd.f32 %v1389, %v1407
    %v1419 = vadd.f32 %v1390, %v1409
    %v1420 = vadd.f32 %v1391, %v1411
    %v1421 = vadd.f32 %v1392, %v1413
    %v1422 = vld [vmem:[%s41 + $0x1] sm:$0x1]
    %v1423 = vlaneseq
    %v1424 = vshrl.u32 %v1423, 7
    %v1425 = vsub.s32 0, %v1424
    %v1426 = vrot.slane %v1422, %v1425
    %v1427 = vmul.f32 %v360, %v1426
    %v1428 = vmul.f32 %v364, %v1426
    %v1429 = vmul.f32 %v368, %v1426
    %v1430 = vmul.f32 %v372, %v1426
    %1435 = vrot.lane.b32.xlu0 %v1427, 127
    %v1436 = vpop.permute.xlu0 %1435
    %1437 = vrot.lane.b32.xlu0 %v1428, 127
    %v1438 = vpop.permute.xlu0 %1437
    %1439 = vrot.lane.b32.xlu0 %v1429, 127
    %v1440 = vpop.permute.xlu0 %1439
    %1441 = vrot.lane.b32.xlu0 %v1430, 127
    %v1442 = vpop.permute.xlu0 %1441
    %v1447 = vadd.f32 %v1418, %v1436
    %v1448 = vadd.f32 %v1419, %v1438
    %v1449 = vadd.f32 %v1420, %v1440
    %v1450 = vadd.f32 %v1421, %v1442
    %v1451 = vld [vmem:[%s46 + $0x1] sm:$0x1]
    %v1452 = vlaneseq
    %v1453 = vshrl.u32 %v1452, 7
    %v1454 = vsub.s32 0, %v1453
    %v1455 = vrot.slane %v1451, %v1454
    %v1456 = vmul.f32 %v389, %v1455
    %v1457 = vmul.f32 %v393, %v1455
    %v1458 = vmul.f32 %v397, %v1455
    %v1459 = vmul.f32 %v401, %v1455
    %1464 = vrot.lane.b32.xlu0 %v1456, 127
    %v1465 = vpop.permute.xlu0 %1464
    %1466 = vrot.lane.b32.xlu0 %v1457, 127
    %v1467 = vpop.permute.xlu0 %1466
    %1468 = vrot.lane.b32.xlu0 %v1458, 127
    %v1469 = vpop.permute.xlu0 %1468
    %1470 = vrot.lane.b32.xlu0 %v1459, 127
    %v1471 = vpop.permute.xlu0 %1470
    %v1476 = vadd.f32 %v1447, %v1465
    %v1477 = vadd.f32 %v1448, %v1467
    %v1478 = vadd.f32 %v1449, %v1469
    %v1479 = vadd.f32 %v1450, %v1471
    %v1480 = vmax.f32 %v1476, 0.0
    %v1481 = vmax.f32 %v1477, 0.0
    %v1482 = vmax.f32 %v1478, 0.0
    %v1483 = vmax.f32 %v1479, 0.0
    %1488 = vrot.lane.b32.xlu0 %v1480, 1
    %v1489 = vpop.permute.xlu0 %1488
    %1490 = vrot.lane.b32.xlu0 %v1481, 1
    %v1491 = vpop.permute.xlu0 %1490
    %1492 = vrot.lane.b32.xlu0 %v1482, 1
    %v1493 = vpop.permute.xlu0 %1492
    %1494 = vrot.lane.b32.xlu0 %v1483, 1
    %v1495 = vpop.permute.xlu0 %1494
    %s1500 = scalar_lea.vmem [#allocation3], 160
    %1501 = vst.msk [vmem:[%s1500] sm:$0xff] %vm650, %v1489
    %1502 = vst.msk [vmem:[%s1500 + $0x8] sm:$0xff] %vm650, %v1491
    %1503 = vst.msk [vmem:[%s1500 + $0x10] sm:$0xff] %vm650, %v1493
    %1504 = vst.msk [vmem:[%s1500 + $0x18] sm:$0xff] %vm650, %v1495
    %1506 = vset.pattern.permute.xlu0 0
    %1507 = vperm.xlu0 %1506, %v185
    %v1508 = vpop.permute.xlu0 %1507
    %1511 = vset.pattern.permute.xlu0 0
    %1512 = vperm.xlu0 %1511, %v186
    %v1513 = vpop.permute.xlu0 %1512
    %v1515 = vld [vmem:[#allocation3] sm:$0xff]
    %v1516 = vld [vmem:[#allocation3 + $0x8] sm:$0xff]
    %v1517 = vld [vmem:[#allocation3 + $0x10] sm:$0xff]
    %v1518 = vld [vmem:[#allocation3 + $0x18] sm:$0xff]
    %vm1519 = vcmask 261120
    %v1521 = vsel %vm1519, %v160, 0
    %v1524 = vsel %vm1519, %v161, 0
    %1526 = vmatprep.subr.mxu0 0.0
    %1527 = vmatpush1.msra.mxu0 %v1515
    %1528 = vmatprep.subr.mxu0 0.0
    %1529 = vmatpush1.msra.mxu0 %v1516
    %1530 = vmatprep.subr.mxu0 0.0
    %1531 = vmatpush1.msra.mxu0 %v1517
    %1532 = vmatprep.subr.mxu0 0.0
    %1533 = vmatpush1.msra.mxu0 %v1518
    %1534 = vmatprep.subr.mxu0 0.0
    %1535 = vmatpush1.msra.mxu0 0.0
    %1536 = vmatprep.subr.mxu0 0.0
    %1537 = vmatpush1.msra.mxu0 0.0
    %1538 = vmatprep.subr.mxu0 0.0
    %1539 = vmatpush1.msra.mxu0 0.0
    %1540 = vmatprep.subr.mxu0 0.0
    %1541 = vmatpush1.msra.mxu0 0.0
    %1542 = vmatprep.subr.mxu0 0.0
    %1543 = vmatpush1.msra.mxu0 0.0
    %1544 = vmatprep.subr.mxu0 0.0
    %1545 = vmatpush1.msra.mxu0 0.0
    %1546 = vmatprep.subr.mxu0 0.0
    %1547 = vmatpush1.msra.mxu0 0.0
    %1548 = vmatprep.subr.mxu0 0.0
    %1549 = vmatpush1.msra.mxu0 0.0
    %1550 = vmatprep.subr.mxu0 0.0
    %1551 = vmatpush1.msra.mxu0 0.0
    %1552 = vmatprep.subr.mxu0 0.0
    %1553 = vmatpush1.msra.mxu0 0.0
    %1554 = vmatprep.subr.mxu0 0.0
    %1555 = vmatpush1.msra.mxu0 0.0
    %1556 = vmatprep.subr.mxu0 0.0
    %1557 = vmatpush1.msra.mxu0 0.0
    %1558 = vmatprep.subr.mxu0 0.0
    %1559 = vmatpush1.msra.mxu0 0.0
    %1560 = vmatprep.subr.mxu0 0.0
    %1561 = vmatpush1.msra.mxu0 0.0
    %1562 = vmatprep.subr.mxu0 0.0
    %1563 = vmatpush1.msra.mxu0 0.0
    %1564 = vmatprep.subr.mxu0 0.0
    %1565 = vmatpush1.msra.mxu0 0.0
    %1566 = vmatprep.subr.mxu0 0.0
    %1567 = vmatpush1.msra.mxu0 0.0
    %1568 = vmatprep.subr.mxu0 0.0
    %1569 = vmatpush1.msra.mxu0 0.0
    %1570 = vmatprep.subr.mxu0 0.0
    %1571 = vmatpush1.msra.mxu0 0.0
    %1572 = vmatprep.subr.mxu0 0.0
    %1573 = vmatpush1.msra.mxu0 0.0
    %1574 = vmatprep.subr.mxu0 0.0
    %1575 = vmatpush1.msra.mxu0 0.0
    %1576 = vmatprep.subr.mxu0 0.0
    %1577 = vmatpush1.msra.mxu0 0.0
    %1578 = vmatprep.subr.mxu0 0.0
    %1579 = vmatpush1.msra.mxu0 0.0
    %1580 = vmatprep.subr.mxu0 0.0
    %1581 = vmatpush1.msra.mxu0 0.0
    %1582 = vmatprep.subr.mxu0 0.0
    %1583 = vmatpush1.msra.mxu0 0.0
    %1584 = vmatprep.subr.mxu0 0.0
    %1585 = vmatpush1.msra.mxu0 0.0
    %1586 = vmatprep.subr.mxu0 0.0
    %1587 = vmatpush1.msra.mxu0 0.0
    %1588 = vmatprep.subr.mxu0 0.0
    %1589 = vmatpush1.msra.mxu0 0.0
    %1590 = vmatprep.mubr.f32.mxu0 0.0
    %1591 = vmatmul.mubr.f32.gmra.mrb[0].mxu0 %v1521
    %v1592 = vpop.f32.mrb[0].mxu0
    %v1593 = vadd.f32 0.0, %v1592
    %v1594 = vpop.f32.mrb[0].mxu0
    %1595 = vmatprep.mubr.f32.mxu0 0.0
    %1596 = vmatmul.mubr.f32.gmra.mrb[0].mxu0 %v1524
    %v1597 = vpop.f32.mrb[0].mxu0
    %v1598 = vadd.f32 0.0, %v1597
    %v1599 = vpop.f32.mrb[0].mxu0
    %1600 = vdwg.mxu0
    %v1601 = vadd.f32 %v1508, %v1593
    %v1602 = vadd.f32 %v1513, %v1598
    %v1603 = vld [vmem:[%s119] sm:$0xff]
    %v1604 = vld [vmem:[%s119 + $0x8] sm:$0xff]
    %v1605 = vld [vmem:[%s119 + $0x10] sm:$0xff]
    %v1606 = vld [vmem:[%s119 + $0x18] sm:$0xff]
    %v1608 = vsel %vm1519, %v162, 0
    %v1611 = vsel %vm1519, %v163, 0
    %1613 = vmatprep.subr.mxu0 0.0
    %1614 = vmatpush1.msra.mxu0 %v1603
    %1615 = vmatprep.subr.mxu0 0.0
    %1616 = vmatpush1.msra.mxu0 %v1604
    %1617 = vmatprep.subr.mxu0 0.0
    %1618 = vmatpush1.msra.mxu0 %v1605
    %1619 = vmatprep.subr.mxu0 0.0
    %1620 = vmatpush1.msra.mxu0 %v1606
    %1621 = vmatprep.subr.mxu0 0.0
    %1622 = vmatpush1.msra.mxu0 0.0
    %1623 = vmatprep.subr.mxu0 0.0
    %1624 = vmatpush1.msra.mxu0 0.0
    %1625 = vmatprep.subr.mxu0 0.0
    %1626 = vmatpush1.msra.mxu0 0.0
    %1627 = vmatprep.subr.mxu0 0.0
    %1628 = vmatpush1.msra.mxu0 0.0
    %1629 = vmatprep.subr.mxu0 0.0
    %1630 = vmatpush1.msra.mxu0 0.0
    %1631 = vmatprep.subr.mxu0 0.0
    %1632 = vmatpush1.msra.mxu0 0.0
    %1633 = vmatprep.subr.mxu0 0.0
    %1634 = vmatpush1.msra.mxu0 0.0
    %1635 = vmatprep.subr.mxu0 0.0
    %1636 = vmatpush1.msra.mxu0 0.0
    %1637 = vmatprep.subr.mxu0 0.0
    %1638 = vmatpush1.msra.mxu0 0.0
    %1639 = vmatprep.subr.mxu0 0.0
    %1640 = vmatpush1.msra.mxu0 0.0
    %1641 = vmatprep.subr.mxu0 0.0
    %1642 = vmatpush1.msra.mxu0 0.0
    %1643 = vmatprep.subr.mxu0 0.0
    %1644 = vmatpush1.msra.mxu0 0.0
    %1645 = vmatprep.subr.mxu0 0.0
    %1646 = vmatpush1.msra.mxu0 0.0
    %1647 = vmatprep.subr.mxu0 0.0
    %1648 = vmatpush1.msra.mxu0 0.0
    %1649 = vmatprep.subr.mxu0 0.0
    %1650 = vmatpush1.msra.mxu0 0.0
    %1651 = vmatprep.subr.mxu0 0.0
    %1652 = vmatpush1.msra.mxu0 0.0
    %1653 = vmatprep.subr.mxu0 0.0
    %1654 = vmatpush1.msra.mxu0 0.0
    %1655 = vmatprep.subr.mxu0 0.0
    %1656 = vmatpush1.msra.mxu0 0.0
    %1657 = vmatprep.subr.mxu0 0.0
    %1658 = vmatpush1.msra.mxu0 0.0
    %1659 = vmatprep.subr.mxu0 0.0
    %1660 = vmatpush1.msra.mxu0 0.0
    %1661 = vmatprep.subr.mxu0 0.0
    %1662 = vmatpush1.msra.mxu0 0.0
    %1663 = vmatprep.subr.mxu0 0.0
    %1664 = vmatpush1.msra.mxu0 0.0
    %1665 = vmatprep.subr.mxu0 0.0
    %1666 = vmatpush1.msra.mxu0 0.0
    %1667 = vmatprep.subr.mxu0 0.0
    %1668 = vmatpush1.msra.mxu0 0.0
    %1669 = vmatprep.subr.mxu0 0.0
    %1670 = vmatpush1.msra.mxu0 0.0
    %1671 = vmatprep.subr.mxu0 0.0
    %1672 = vmatpush1.msra.mxu0 0.0
    %1673 = vmatprep.subr.mxu0 0.0
    %1674 = vmatpush1.msra.mxu0 0.0
    %1675 = vmatprep.subr.mxu0 0.0
    %1676 = vmatpush1.msra.mxu0 0.0
    %1677 = vmatprep.mubr.f32.mxu0 0.0
    %1678 = vmatmul.mubr.f32.gmra.mrb[0].mxu0 %v1608
    %v1679 = vpop.f32.mrb[0].mxu0
    %v1680 = vadd.f32 0.0, %v1679
    %v1681 = vpop.f32.mrb[0].mxu0
    %1682 = vmatprep.mubr.f32.mxu0 0.0
    %1683 = vmatmul.mubr.f32.gmra.mrb[0].mxu0 %v1611
    %v1684 = vpop.f32.mrb[0].mxu0
    %v1685 = vadd.f32 0.0, %v1684
    %v1686 = vpop.f32.mrb[0].mxu0
    %1687 = vdwg.mxu0
    %v1688 = vadd.f32 %v1601, %v1680
    %v1689 = vadd.f32 %v1602, %v1685
    %v1690 = vld [vmem:[%s128] sm:$0xff]
    %v1691 = vld [vmem:[%s128 + $0x8] sm:$0xff]
    %v1692 = vld [vmem:[%s128 + $0x10] sm:$0xff]
    %v1693 = vld [vmem:[%s128 + $0x18] sm:$0xff]
    %v1695 = vsel %vm1519, %v164, 0
    %v1698 = vsel %vm1519, %v165, 0
    %1700 = vmatprep.subr.mxu0 0.0
    %1701 = vmatpush1.msra.mxu0 %v1690
    %1702 = vmatprep.subr.mxu0 0.0
    %1703 = vmatpush1.msra.mxu0 %v1691
    %1704 = vmatprep.subr.mxu0 0.0
    %1705 = vmatpush1.msra.mxu0 %v1692
    %1706 = vmatprep.subr.mxu0 0.0
    %1707 = vmatpush1.msra.mxu0 %v1693
    %1708 = vmatprep.subr.mxu0 0.0
    %1709 = vmatpush1.msra.mxu0 0.0
    %1710 = vmatprep.subr.mxu0 0.0
    %1711 = vmatpush1.msra.mxu0 0.0
    %1712 = vmatprep.subr.mxu0 0.0
    %1713 = vmatpush1.msra.mxu0 0.0
    %1714 = vmatprep.subr.mxu0 0.0
    %1715 = vmatpush1.msra.mxu0 0.0
    %1716 = vmatprep.subr.mxu0 0.0
    %1717 = vmatpush1.msra.mxu0 0.0
    %1718 = vmatprep.subr.mxu0 0.0
    %1719 = vmatpush1.msra.mxu0 0.0
    %1720 = vmatprep.subr.mxu0 0.0
    %1721 = vmatpush1.msra.mxu0 0.0
    %1722 = vmatprep.subr.mxu0 0.0
    %1723 = vmatpush1.msra.mxu0 0.0
    %1724 = vmatprep.subr.mxu0 0.0
    %1725 = vmatpush1.msra.mxu0 0.0
    %1726 = vmatprep.subr.mxu0 0.0
    %1727 = vmatpush1.msra.mxu0 0.0
    %1728 = vmatprep.subr.mxu0 0.0
    %1729 = vmatpush1.msra.mxu0 0.0
    %1730 = vmatprep.subr.mxu0 0.0
    %1731 = vmatpush1.msra.mxu0 0.0
    %1732 = vmatprep.subr.mxu0 0.0
    %1733 = vmatpush1.msra.mxu0 0.0
    %1734 = vmatprep.subr.mxu0 0.0
    %1735 = vmatpush1.msra.mxu0 0.0
    %1736 = vmatprep.subr.mxu0 0.0
    %1737 = vmatpush1.msra.mxu0 0.0
    %1738 = vmatprep.subr.mxu0 0.0
    %1739 = vmatpush1.msra.mxu0 0.0
    %1740 = vmatprep.subr.mxu0 0.0
    %1741 = vmatpush1.msra.mxu0 0.0
    %1742 = vmatprep.subr.mxu0 0.0
    %1743 = vmatpush1.msra.mxu0 0.0
    %1744 = vmatprep.subr.mxu0 0.0
    %1745 = vmatpush1.msra.mxu0 0.0
    %1746 = vmatprep.subr.mxu0 0.0
    %1747 = vmatpush1.msra.mxu0 0.0
    %1748 = vmatprep.subr.mxu0 0.0
    %1749 = vmatpush1.msra.mxu0 0.0
    %1750 = vmatprep.subr.mxu0 0.0
    %1751 = vmatpush1.msra.mxu0 0.0
    %1752 = vmatprep.subr.mxu0 0.0
    %1753 = vmatpush1.msra.mxu0 0.0
    %1754 = vmatprep.subr.mxu0 0.0
    %1755 = vmatpush1.msra.mxu0 0.0
    %1756 = vmatprep.subr.mxu0 0.0
    %1757 = vmatpush1.msra.mxu0 0.0
    %1758 = vmatprep.subr.mxu0 0.0
    %1759 = vmatpush1.msra.mxu0 0.0
    %1760 = vmatprep.subr.mxu0 0.0
    %1761 = vmatpush1.msra.mxu0 0.0
    %1762 = vmatprep.subr.mxu0 0.0
    %1763 = vmatpush1.msra.mxu0 0.0
    %1764 = vmatprep.mubr.f32.mxu0 0.0
    %1765 = vmatmul.mubr.f32.gmra.mrb[0].mxu0 %v1695
    %v1766 = vpop.f32.mrb[0].mxu0
    %v1767 = vadd.f32 0.0, %v1766
    %v1768 = vpop.f32.mrb[0].mxu0
    %1769 = vmatprep.mubr.f32.mxu0 0.0
    %1770 = vmatmul.mubr.f32.gmra.mrb[0].mxu0 %v1698
    %v1771 = vpop.f32.mrb[0].mxu0
    %v1772 = vadd.f32 0.0, %v1771
    %v1773 = vpop.f32.mrb[0].mxu0
    %1774 = vdwg.mxu0
    %v1775 = vadd.f32 %v1688, %v1767
    %v1776 = vadd.f32 %v1689, %v1772
    %v1777 = vld [vmem:[%s91] sm:$0xff]
    %v1778 = vld [vmem:[%s91 + $0x8] sm:$0xff]
    %v1779 = vld [vmem:[%s91 + $0x10] sm:$0xff]
    %v1780 = vld [vmem:[%s91 + $0x18] sm:$0xff]
    %v1782 = vsel %vm1519, %v166, 0
    %v1785 = vsel %vm1519, %v167, 0
    %1787 = vmatprep.subr.mxu0 0.0
    %1788 = vmatpush1.msra.mxu0 %v1777
    %1789 = vmatprep.subr.mxu0 0.0
    %1790 = vmatpush1.msra.mxu0 %v1778
    %1791 = vmatprep.subr.mxu0 0.0
    %1792 = vmatpush1.msra.mxu0 %v1779
    %1793 = vmatprep.subr.mxu0 0.0
    %1794 = vmatpush1.msra.mxu0 %v1780
    %1795 = vmatprep.subr.mxu0 0.0
    %1796 = vmatpush1.msra.mxu0 0.0
    %1797 = vmatprep.subr.mxu0 0.0
    %1798 = vmatpush1.msra.mxu0 0.0
    %1799 = vmatprep.subr.mxu0 0.0
    %1800 = vmatpush1.msra.mxu0 0.0
    %1801 = vmatprep.subr.mxu0 0.0
    %1802 = vmatpush1.msra.mxu0 0.0
    %1803 = vmatprep.subr.mxu0 0.0
    %1804 = vmatpush1.msra.mxu0 0.0
    %1805 = vmatprep.subr.mxu0 0.0
    %1806 = vmatpush1.msra.mxu0 0.0
    %1807 = vmatprep.subr.mxu0 0.0
    %1808 = vmatpush1.msra.mxu0 0.0
    %1809 = vmatprep.subr.mxu0 0.0
    %1810 = vmatpush1.msra.mxu0 0.0
    %1811 = vmatprep.subr.mxu0 0.0
    %1812 = vmatpush1.msra.mxu0 0.0
    %1813 = vmatprep.subr.mxu0 0.0
    %1814 = vmatpush1.msra.mxu0 0.0
    %1815 = vmatprep.subr.mxu0 0.0
    %1816 = vmatpush1.msra.mxu0 0.0
    %1817 = vmatprep.subr.mxu0 0.0
    %1818 = vmatpush1.msra.mxu0 0.0
    %1819 = vmatprep.subr.mxu0 0.0
    %1820 = vmatpush1.msra.mxu0 0.0
    %1821 = vmatprep.subr.mxu0 0.0
    %1822 = vmatpush1.msra.mxu0 0.0
    %1823 = vmatprep.subr.mxu0 0.0
    %1824 = vmatpush1.msra.mxu0 0.0
    %1825 = vmatprep.subr.mxu0 0.0
    %1826 = vmatpush1.msra.mxu0 0.0
    %1827 = vmatprep.subr.mxu0 0.0
    %1828 = vmatpush1.msra.mxu0 0.0
    %1829 = vmatprep.subr.mxu0 0.0
    %1830 = vmatpush1.msra.mxu0 0.0
    %1831 = vmatprep.subr.mxu0 0.0
    %1832 = vmatpush1.msra.mxu0 0.0
    %1833 = vmatprep.subr.mxu0 0.0
    %1834 = vmatpush1.msra.mxu0 0.0
    %1835 = vmatprep.subr.mxu0 0.0
    %1836 = vmatpush1.msra.mxu0 0.0
    %1837 = vmatprep.subr.mxu0 0.0
    %1838 = vmatpush1.msra.mxu0 0.0
    %1839 = vmatprep.subr.mxu0 0.0
    %1840 = vmatpush1.msra.mxu0 0.0
    %1841 = vmatprep.subr.mxu0 0.0
    %1842 = vmatpush1.msra.mxu0 0.0
    %1843 = vmatprep.subr.mxu0 0.0
    %1844 = vmatpush1.msra.mxu0 0.0
    %1845 = vmatprep.subr.mxu0 0.0
    %1846 = vmatpush1.msra.mxu0 0.0
    %1847 = vmatprep.subr.mxu0 0.0
    %1848 = vmatpush1.msra.mxu0 0.0
    %1849 = vmatprep.subr.mxu0 0.0
    %1850 = vmatpush1.msra.mxu0 0.0
    %1851 = vmatprep.mubr.f32.mxu0 0.0
    %1852 = vmatmul.mubr.f32.gmra.mrb[0].mxu0 %v1782
    %v1853 = vpop.f32.mrb[0].mxu0
    %v1854 = vadd.f32 0.0, %v1853
    %v1855 = vpop.f32.mrb[0].mxu0
    %1856 = vmatprep.mubr.f32.mxu0 0.0
    %1857 = vmatmul.mubr.f32.gmra.mrb[0].mxu0 %v1785
    %v1858 = vpop.f32.mrb[0].mxu0
    %v1859 = vadd.f32 0.0, %v1858
    %v1860 = vpop.f32.mrb[0].mxu0
    %1861 = vdwg.mxu0
    %v1862 = vadd.f32 %v1775, %v1854
    %v1863 = vadd.f32 %v1776, %v1859
    %1868 = vrot.lane.b32.xlu0 %v1515, 127
    %v1869 = vpop.permute.xlu0 %1868
    %1870 = vrot.lane.b32.xlu0 %v1516, 127
    %v1871 = vpop.permute.xlu0 %1870
    %1872 = vrot.lane.b32.xlu0 %v1517, 127
    %v1873 = vpop.permute.xlu0 %1872
    %1874 = vrot.lane.b32.xlu0 %v1518, 127
    %v1875 = vpop.permute.xlu0 %1874
    %v1881 = vsel %vm1519, %v168, 0
    %v1884 = vsel %vm1519, %v169, 0
    %1886 = vmatprep.subr.mxu0 0.0
    %1887 = vmatpush1.msra.mxu0 %v1869
    %1888 = vmatprep.subr.mxu0 0.0
    %1889 = vmatpush1.msra.mxu0 %v1871
    %1890 = vmatprep.subr.mxu0 0.0
    %1891 = vmatpush1.msra.mxu0 %v1873
    %1892 = vmatprep.subr.mxu0 0.0
    %1893 = vmatpush1.msra.mxu0 %v1875
    %1894 = vmatprep.subr.mxu0 0.0
    %1895 = vmatpush1.msra.mxu0 0.0
    %1896 = vmatprep.subr.mxu0 0.0
    %1897 = vmatpush1.msra.mxu0 0.0
    %1898 = vmatprep.subr.mxu0 0.0
    %1899 = vmatpush1.msra.mxu0 0.0
    %1900 = vmatprep.subr.mxu0 0.0
    %1901 = vmatpush1.msra.mxu0 0.0
    %1902 = vmatprep.subr.mxu0 0.0
    %1903 = vmatpush1.msra.mxu0 0.0
    %1904 = vmatprep.subr.mxu0 0.0
    %1905 = vmatpush1.msra.mxu0 0.0
    %1906 = vmatprep.subr.mxu0 0.0
    %1907 = vmatpush1.msra.mxu0 0.0
    %1908 = vmatprep.subr.mxu0 0.0
    %1909 = vmatpush1.msra.mxu0 0.0
    %1910 = vmatprep.subr.mxu0 0.0
    %1911 = vmatpush1.msra.mxu0 0.0
    %1912 = vmatprep.subr.mxu0 0.0
    %1913 = vmatpush1.msra.mxu0 0.0
    %1914 = vmatprep.subr.mxu0 0.0
    %1915 = vmatpush1.msra.mxu0 0.0
    %1916 = vmatprep.subr.mxu0 0.0
    %1917 = vmatpush1.msra.mxu0 0.0
    %1918 = vmatprep.subr.mxu0 0.0
    %1919 = vmatpush1.msra.mxu0 0.0
    %1920 = vmatprep.subr.mxu0 0.0
    %1921 = vmatpush1.msra.mxu0 0.0
    %1922 = vmatprep.subr.mxu0 0.0
    %1923 = vmatpush1.msra.mxu0 0.0
    %1924 = vmatprep.subr.mxu0 0.0
    %1925 = vmatpush1.msra.mxu0 0.0
    %1926 = vmatprep.subr.mxu0 0.0
    %1927 = vmatpush1.msra.mxu0 0.0
    %1928 = vmatprep.subr.mxu0 0.0
    %1929 = vmatpush1.msra.mxu0 0.0
    %1930 = vmatprep.subr.mxu0 0.0
    %1931 = vmatpush1.msra.mxu0 0.0
    %1932 = vmatprep.subr.mxu0 0.0
    %1933 = vmatpush1.msra.mxu0 0.0
    %1934 = vmatprep.subr.mxu0 0.0
    %1935 = vmatpush1.msra.mxu0 0.0
    %1936 = vmatprep.subr.mxu0 0.0
    %1937 = vmatpush1.msra.mxu0 0.0
    %1938 = vmatprep.subr.mxu0 0.0
    %1939 = vmatpush1.msra.mxu0 0.0
    %1940 = vmatprep.subr.mxu0 0.0
    %1941 = vmatpush1.msra.mxu0 0.0
    %1942 = vmatprep.subr.mxu0 0.0
    %1943 = vmatpush1.msra.mxu0 0.0
    %1944 = vmatprep.subr.mxu0 0.0
    %1945 = vmatpush1.msra.mxu0 0.0
    %1946 = vmatprep.subr.mxu0 0.0
    %1947 = vmatpush1.msra.mxu0 0.0
    %1948 = vmatprep.subr.mxu0 0.0
    %1949 = vmatpush1.msra.mxu0 0.0
    %1950 = vmatprep.mubr.f32.mxu0 0.0
    %1951 = vmatmul.mubr.f32.gmra.mrb[0].mxu0 %v1881
    %v1952 = vpop.f32.mrb[0].mxu0
    %v1953 = vadd.f32 0.0, %v1952
    %v1954 = vpop.f32.mrb[0].mxu0
    %1955 = vmatprep.mubr.f32.mxu0 0.0
    %1956 = vmatmul.mubr.f32.gmra.mrb[0].mxu0 %v1884
    %v1957 = vpop.f32.mrb[0].mxu0
    %v1958 = vadd.f32 0.0, %v1957
    %v1959 = vpop.f32.mrb[0].mxu0
    %1960 = vdwg.mxu0
    %v1961 = vadd.f32 %v1862, %v1953
    %v1962 = vadd.f32 %v1863, %v1958
    %1967 = vrot.lane.b32.xlu0 %v1603, 127
    %v1968 = vpop.permute.xlu0 %1967
    %1969 = vrot.lane.b32.xlu0 %v1604, 127
    %v1970 = vpop.permute.xlu0 %1969
    %1971 = vrot.lane.b32.xlu0 %v1605, 127
    %v1972 = vpop.permute.xlu0 %1971
    %1973 = vrot.lane.b32.xlu0 %v1606, 127
    %v1974 = vpop.permute.xlu0 %1973
    %v1980 = vsel %vm1519, %v170, 0
    %v1983 = vsel %vm1519, %v171, 0
    %1985 = vmatprep.subr.mxu0 0.0
    %1986 = vmatpush1.msra.mxu0 %v1968
    %1987 = vmatprep.subr.mxu0 0.0
    %1988 = vmatpush1.msra.mxu0 %v1970
    %1989 = vmatprep.subr.mxu0 0.0
    %1990 = vmatpush1.msra.mxu0 %v1972
    %1991 = vmatprep.subr.mxu0 0.0
    %1992 = vmatpush1.msra.mxu0 %v1974
    %1993 = vmatprep.subr.mxu0 0.0
    %1994 = vmatpush1.msra.mxu0 0.0
    %1995 = vmatprep.subr.mxu0 0.0
    %1996 = vmatpush1.msra.mxu0 0.0
    %1997 = vmatprep.subr.mxu0 0.0
    %1998 = vmatpush1.msra.mxu0 0.0
    %1999 = vmatprep.subr.mxu0 0.0
    %2000 = vmatpush1.msra.mxu0 0.0
    %2001 = vmatprep.subr.mxu0 0.0
    %2002 = vmatpush1.msra.mxu0 0.0
    %2003 = vmatprep.subr.mxu0 0.0
    %2004 = vmatpush1.msra.mxu0 0.0
    %2005 = vmatprep.subr.mxu0 0.0
    %2006 = vmatpush1.msra.mxu0 0.0
    %2007 = vmatprep.subr.mxu0 0.0
    %2008 = vmatpush1.msra.mxu0 0.0
    %2009 = vmatprep.subr.mxu0 0.0
    %2010 = vmatpush1.msra.mxu0 0.0
    %2011 = vmatprep.subr.mxu0 0.0
    %2012 = vmatpush1.msra.mxu0 0.0
    %2013 = vmatprep.subr.mxu0 0.0
    %2014 = vmatpush1.msra.mxu0 0.0
    %2015 = vmatprep.subr.mxu0 0.0
    %2016 = vmatpush1.msra.mxu0 0.0
    %2017 = vmatprep.subr.mxu0 0.0
    %2018 = vmatpush1.msra.mxu0 0.0
    %2019 = vmatprep.subr.mxu0 0.0
    %2020 = vmatpush1.msra.mxu0 0.0
    %2021 = vmatprep.subr.mxu0 0.0
    %2022 = vmatpush1.msra.mxu0 0.0
    %2023 = vmatprep.subr.mxu0 0.0
    %2024 = vmatpush1.msra.mxu0 0.0
    %2025 = vmatprep.subr.mxu0 0.0
    %2026 = vmatpush1.msra.mxu0 0.0
    %2027 = vmatprep.subr.mxu0 0.0
    %2028 = vmatpush1.msra.mxu0 0.0
    %2029 = vmatprep.subr.mxu0 0.0
    %2030 = vmatpush1.msra.mxu0 0.0
    %2031 = vmatprep.subr.mxu0 0.0
    %2032 = vmatpush1.msra.mxu0 0.0
    %2033 = vmatprep.subr.mxu0 0.0
    %2034 = vmatpush1.msra.mxu0 0.0
    %2035 = vmatprep.subr.mxu0 0.0
    %2036 = vmatpush1.msra.mxu0 0.0
    %2037 = vmatprep.subr.mxu0 0.0
    %2038 = vmatpush1.msra.mxu0 0.0
    %2039 = vmatprep.subr.mxu0 0.0
    %2040 = vmatpush1.msra.mxu0 0.0
    %2041 = vmatprep.subr.mxu0 0.0
    %2042 = vmatpush1.msra.mxu0 0.0
    %2043 = vmatprep.subr.mxu0 0.0
    %2044 = vmatpush1.msra.mxu0 0.0
    %2045 = vmatprep.subr.mxu0 0.0
    %2046 = vmatpush1.msra.mxu0 0.0
    %2047 = vmatprep.subr.mxu0 0.0
    %2048 = vmatpush1.msra.mxu0 0.0
    %2049 = vmatprep.mubr.f32.mxu0 0.0
    %2050 = vmatmul.mubr.f32.gmra.mrb[0].mxu0 %v1980
    %v2051 = vpop.f32.mrb[0].mxu0
    %v2052 = vadd.f32 0.0, %v2051
    %v2053 = vpop.f32.mrb[0].mxu0
    %2054 = vmatprep.mubr.f32.mxu0 0.0
    %2055 = vmatmul.mubr.f32.gmra.mrb[0].mxu0 %v1983
    %v2056 = vpop.f32.mrb[0].mxu0
    %v2057 = vadd.f32 0.0, %v2056
    %v2058 = vpop.f32.mrb[0].mxu0
    %2059 = vdwg.mxu0
    %v2060 = vadd.f32 %v1961, %v2052
    %v2061 = vadd.f32 %v1962, %v2057
    %2066 = vrot.lane.b32.xlu0 %v1690, 127
    %v2067 = vpop.permute.xlu0 %2066
    %2068 = vrot.lane.b32.xlu0 %v1691, 127
    %v2069 = vpop.permute.xlu0 %2068
    %2070 = vrot.lane.b32.xlu0 %v1692, 127
    %v2071 = vpop.permute.xlu0 %2070
    %2072 = vrot.lane.b32.xlu0 %v1693, 127
    %v2073 = vpop.permute.xlu0 %2072
    %v2079 = vsel %vm1519, %v172, 0
    %v2082 = vsel %vm1519, %v173, 0
    %2084 = vmatprep.subr.mxu0 0.0
    %2085 = vmatpush1.msra.mxu0 %v2067
    %2086 = vmatprep.subr.mxu0 0.0
    %2087 = vmatpush1.msra.mxu0 %v2069
    %2088 = vmatprep.subr.mxu0 0.0
    %2089 = vmatpush1.msra.mxu0 %v2071
    %2090 = vmatprep.subr.mxu0 0.0
    %2091 = vmatpush1.msra.mxu0 %v2073
    %2092 = vmatprep.subr.mxu0 0.0
    %2093 = vmatpush1.msra.mxu0 0.0
    %2094 = vmatprep.subr.mxu0 0.0
    %2095 = vmatpush1.msra.mxu0 0.0
    %2096 = vmatprep.subr.mxu0 0.0
    %2097 = vmatpush1.msra.mxu0 0.0
    %2098 = vmatprep.subr.mxu0 0.0
    %2099 = vmatpush1.msra.mxu0 0.0
    %2100 = vmatprep.subr.mxu0 0.0
    %2101 = vmatpush1.msra.mxu0 0.0
    %2102 = vmatprep.subr.mxu0 0.0
    %2103 = vmatpush1.msra.mxu0 0.0
    %2104 = vmatprep.subr.mxu0 0.0
    %2105 = vmatpush1.msra.mxu0 0.0
    %2106 = vmatprep.subr.mxu0 0.0
    %2107 = vmatpush1.msra.mxu0 0.0
    %2108 = vmatprep.subr.mxu0 0.0
    %2109 = vmatpush1.msra.mxu0 0.0
    %2110 = vmatprep.subr.mxu0 0.0
    %2111 = vmatpush1.msra.mxu0 0.0
    %2112 = vmatprep.subr.mxu0 0.0
    %2113 = vmatpush1.msra.mxu0 0.0
    %2114 = vmatprep.subr.mxu0 0.0
    %2115 = vmatpush1.msra.mxu0 0.0
    %2116 = vmatprep.subr.mxu0 0.0
    %2117 = vmatpush1.msra.mxu0 0.0
    %2118 = vmatprep.subr.mxu0 0.0
    %2119 = vmatpush1.msra.mxu0 0.0
    %2120 = vmatprep.subr.mxu0 0.0
    %2121 = vmatpush1.msra.mxu0 0.0
    %2122 = vmatprep.subr.mxu0 0.0
    %2123 = vmatpush1.msra.mxu0 0.0
    %2124 = vmatprep.subr.mxu0 0.0
    %2125 = vmatpush1.msra.mxu0 0.0
    %2126 = vmatprep.subr.mxu0 0.0
    %2127 = vmatpush1.msra.mxu0 0.0
    %2128 = vmatprep.subr.mxu0 0.0
    %2129 = vmatpush1.msra.mxu0 0.0
    %2130 = vmatprep.subr.mxu0 0.0
    %2131 = vmatpush1.msra.mxu0 0.0
    %2132 = vmatprep.subr.mxu0 0.0
    %2133 = vmatpush1.msra.mxu0 0.0
    %2134 = vmatprep.subr.mxu0 0.0
    %2135 = vmatpush1.msra.mxu0 0.0
    %2136 = vmatprep.subr.mxu0 0.0
    %2137 = vmatpush1.msra.mxu0 0.0
    %2138 = vmatprep.subr.mxu0 0.0
    %2139 = vmatpush1.msra.mxu0 0.0
    %2140 = vmatprep.subr.mxu0 0.0
    %2141 = vmatpush1.msra.mxu0 0.0
    %2142 = vmatprep.subr.mxu0 0.0
    %2143 = vmatpush1.msra.mxu0 0.0
    %2144 = vmatprep.subr.mxu0 0.0
    %2145 = vmatpush1.msra.mxu0 0.0
    %2146 = vmatprep.subr.mxu0 0.0
    %2147 = vmatpush1.msra.mxu0 0.0
    %2148 = vmatprep.mubr.f32.mxu0 0.0
    %2149 = vmatmul.mubr.f32.gmra.mrb[0].mxu0 %v2079
    %v2150 = vpop.f32.mrb[0].mxu0
    %v2151 = vadd.f32 0.0, %v2150
    %v2152 = vpop.f32.mrb[0].mxu0
    %2153 = vmatprep.mubr.f32.mxu0 0.0
    %2154 = vmatmul.mubr.f32.gmra.mrb[0].mxu0 %v2082
    %v2155 = vpop.f32.mrb[0].mxu0
    %v2156 = vadd.f32 0.0, %v2155
    %v2157 = vpop.f32.mrb[0].mxu0
    %2158 = vdwg.mxu0
    %v2159 = vadd.f32 %v2060, %v2151
    %v2160 = vadd.f32 %v2061, %v2156
    %v2161 = vmax.f32 %v2159, 0.0
    %v2162 = vmax.f32 %v2160, 0.0
    %2165 = vrot.lane.b32.xlu0 %v2161, 1
    %v2166 = vpop.permute.xlu0 %2165
    %2167 = vrot.lane.b32.xlu0 %v2162, 1
    %v2168 = vpop.permute.xlu0 %2167
    %2171 = vst.msk [vmem:[%s137] sm:$0xff] %vm650, %v2166
    %2172 = vst.msk [vmem:[%s137 + $0x8] sm:$0xff] %vm650, %v2168
    %v2173 = vld [vmem:[%s782] sm:$0xff]
    %v2174 = vld [vmem:[%s782 + $0x8] sm:$0xff]
    %v2175 = vld [vmem:[%s782 + $0x10] sm:$0xff]
    %v2176 = vld [vmem:[%s782 + $0x18] sm:$0xff]
    %2177 = vmatprep.subr.mxu0 0.0
    %2178 = vmatpush1.msra.mxu0 %v2173
    %2179 = vmatprep.subr.mxu0 0.0
    %2180 = vmatpush1.msra.mxu0 %v2174
    %2181 = vmatprep.subr.mxu0 0.0
    %2182 = vmatpush1.msra.mxu0 %v2175
    %2183 = vmatprep.subr.mxu0 0.0
    %2184 = vmatpush1.msra.mxu0 %v2176
    %2185 = vmatprep.subr.mxu0 0.0
    %2186 = vmatpush1.msra.mxu0 0.0
    %2187 = vmatprep.subr.mxu0 0.0
    %2188 = vmatpush1.msra.mxu0 0.0
    %2189 = vmatprep.subr.mxu0 0.0
    %2190 = vmatpush1.msra.mxu0 0.0
    %2191 = vmatprep.subr.mxu0 0.0
    %2192 = vmatpush1.msra.mxu0 0.0
    %2193 = vmatprep.subr.mxu0 0.0
    %2194 = vmatpush1.msra.mxu0 0.0
    %2195 = vmatprep.subr.mxu0 0.0
    %2196 = vmatpush1.msra.mxu0 0.0
    %2197 = vmatprep.subr.mxu0 0.0
    %2198 = vmatpush1.msra.mxu0 0.0
    %2199 = vmatprep.subr.mxu0 0.0
    %2200 = vmatpush1.msra.mxu0 0.0
    %2201 = vmatprep.subr.mxu0 0.0
    %2202 = vmatpush1.msra.mxu0 0.0
    %2203 = vmatprep.subr.mxu0 0.0
    %2204 = vmatpush1.msra.mxu0 0.0
    %2205 = vmatprep.subr.mxu0 0.0
    %2206 = vmatpush1.msra.mxu0 0.0
    %2207 = vmatprep.subr.mxu0 0.0
    %2208 = vmatpush1.msra.mxu0 0.0
    %2209 = vmatprep.subr.mxu0 0.0
    %2210 = vmatpush1.msra.mxu0 0.0
    %2211 = vmatprep.subr.mxu0 0.0
    %2212 = vmatpush1.msra.mxu0 0.0
    %2213 = vmatprep.subr.mxu0 0.0
    %2214 = vmatpush1.msra.mxu0 0.0
    %2215 = vmatprep.subr.mxu0 0.0
    %2216 = vmatpush1.msra.mxu0 0.0
    %2217 = vmatprep.subr.mxu0 0.0
    %2218 = vmatpush1.msra.mxu0 0.0
    %2219 = vmatprep.subr.mxu0 0.0
    %2220 = vmatpush1.msra.mxu0 0.0
    %2221 = vmatprep.subr.mxu0 0.0
    %2222 = vmatpush1.msra.mxu0 0.0
    %2223 = vmatprep.subr.mxu0 0.0
    %2224 = vmatpush1.msra.mxu0 0.0
    %2225 = vmatprep.subr.mxu0 0.0
    %2226 = vmatpush1.msra.mxu0 0.0
    %2227 = vmatprep.subr.mxu0 0.0
    %2228 = vmatpush1.msra.mxu0 0.0
    %2229 = vmatprep.subr.mxu0 0.0
    %2230 = vmatpush1.msra.mxu0 0.0
    %2231 = vmatprep.subr.mxu0 0.0
    %2232 = vmatpush1.msra.mxu0 0.0
    %2233 = vmatprep.subr.mxu0 0.0
    %2234 = vmatpush1.msra.mxu0 0.0
    %2235 = vmatprep.subr.mxu0 0.0
    %2236 = vmatpush1.msra.mxu0 0.0
    %2237 = vmatprep.subr.mxu0 0.0
    %2238 = vmatpush1.msra.mxu0 0.0
    %2239 = vmatprep.subr.mxu0 0.0
    %2240 = vmatpush1.msra.mxu0 0.0
    %2241 = vmatprep.mubr.f32.mxu0 0.0
    %2242 = vmatmul.mubr.f32.gmra.mrb[0].mxu0 %v1521
    %v2243 = vpop.f32.mrb[0].mxu0
    %v2244 = vadd.f32 0.0, %v2243
    %v2245 = vpop.f32.mrb[0].mxu0
    %2246 = vmatprep.mubr.f32.mxu0 0.0
    %2247 = vmatmul.mubr.f32.gmra.mrb[0].mxu0 %v1524
    %v2248 = vpop.f32.mrb[0].mxu0
    %v2249 = vadd.f32 0.0, %v2248
    %v2250 = vpop.f32.mrb[0].mxu0
    %2251 = vdwg.mxu0
    %v2252 = vadd.f32 %v1508, %v2244
    %v2253 = vadd.f32 %v1513, %v2249
    %v2254 = vld [vmem:[%s1109] sm:$0xff]
    %v2255 = vld [vmem:[%s1109 + $0x8] sm:$0xff]
    %v2256 = vld [vmem:[%s1109 + $0x10] sm:$0xff]
    %v2257 = vld [vmem:[%s1109 + $0x18] sm:$0xff]
    %2258 = vmatprep.subr.mxu0 0.0
    %2259 = vmatpush1.msra.mxu0 %v2254
    %2260 = vmatprep.subr.mxu0 0.0
    %2261 = vmatpush1.msra.mxu0 %v2255
    %2262 = vmatprep.subr.mxu0 0.0
    %2263 = vmatpush1.msra.mxu0 %v2256
    %2264 = vmatprep.subr.mxu0 0.0
    %2265 = vmatpush1.msra.mxu0 %v2257
    %2266 = vmatprep.subr.mxu0 0.0
    %2267 = vmatpush1.msra.mxu0 0.0
    %2268 = vmatprep.subr.mxu0 0.0
    %2269 = vmatpush1.msra.mxu0 0.0
    %2270 = vmatprep.subr.mxu0 0.0
    %2271 = vmatpush1.msra.mxu0 0.0
    %2272 = vmatprep.subr.mxu0 0.0
    %2273 = vmatpush1.msra.mxu0 0.0
    %2274 = vmatprep.subr.mxu0 0.0
    %2275 = vmatpush1.msra.mxu0 0.0
    %2276 = vmatprep.subr.mxu0 0.0
    %2277 = vmatpush1.msra.mxu0 0.0
    %2278 = vmatprep.subr.mxu0 0.0
    %2279 = vmatpush1.msra.mxu0 0.0
    %2280 = vmatprep.subr.mxu0 0.0
    %2281 = vmatpush1.msra.mxu0 0.0
    %2282 = vmatprep.subr.mxu0 0.0
    %2283 = vmatpush1.msra.mxu0 0.0
    %2284 = vmatprep.subr.mxu0 0.0
    %2285 = vmatpush1.msra.mxu0 0.0
    %2286 = vmatprep.subr.mxu0 0.0
    %2287 = vmatpush1.msra.mxu0 0.0
    %2288 = vmatprep.subr.mxu0 0.0
    %2289 = vmatpush1.msra.mxu0 0.0
    %2290 = vmatprep.subr.mxu0 0.0
    %2291 = vmatpush1.msra.mxu0 0.0
    %2292 = vmatprep.subr.mxu0 0.0
    %2293 = vmatpush1.msra.mxu0 0.0
    %2294 = vmatprep.subr.mxu0 0.0
    %2295 = vmatpush1.msra.mxu0 0.0
    %2296 = vmatprep.subr.mxu0 0.0
    %2297 = vmatpush1.msra.mxu0 0.0
    %2298 = vmatprep.subr.mxu0 0.0
    %2299 = vmatpush1.msra.mxu0 0.0
    %2300 = vmatprep.subr.mxu0 0.0
    %2301 = vmatpush1.msra.mxu0 0.0
    %2302 = vmatprep.subr.mxu0 0.0
    %2303 = vmatpush1.msra.mxu0 0.0
    %2304 = vmatprep.subr.mxu0 0.0
    %2305 = vmatpush1.msra.mxu0 0.0
    %2306 = vmatprep.subr.mxu0 0.0
    %2307 = vmatpush1.msra.mxu0 0.0
    %2308 = vmatprep.subr.mxu0 0.0
    %2309 = vmatpush1.msra.mxu0 0.0
    %2310 = vmatprep.subr.mxu0 0.0
    %2311 = vmatpush1.msra.mxu0 0.0
    %2312 = vmatprep.subr.mxu0 0.0
    %2313 = vmatpush1.msra.mxu0 0.0
    %2314 = vmatprep.subr.mxu0 0.0
    %2315 = vmatpush1.msra.mxu0 0.0
    %2316 = vmatprep.subr.mxu0 0.0
    %2317 = vmatpush1.msra.mxu0 0.0
    %2318 = vmatprep.subr.mxu0 0.0
    %2319 = vmatpush1.msra.mxu0 0.0
    %2320 = vmatprep.subr.mxu0 0.0
    %2321 = vmatpush1.msra.mxu0 0.0
    %2322 = vmatprep.mubr.f32.mxu0 0.0
    %2323 = vmatmul.mubr.f32.gmra.mrb[0].mxu0 %v1608
    %v2324 = vpop.f32.mrb[0].mxu0
    %v2325 = vadd.f32 0.0, %v2324
    %v2326 = vpop.f32.mrb[0].mxu0
    %2327 = vmatprep.mubr.f32.mxu0 0.0
    %2328 = vmatmul.mubr.f32.gmra.mrb[0].mxu0 %v1611
    %v2329 = vpop.f32.mrb[0].mxu0
    %v2330 = vadd.f32 0.0, %v2329
    %v2331 = vpop.f32.mrb[0].mxu0
    %2332 = vdwg.mxu0
    %v2333 = vadd.f32 %v2252, %v2325
    %v2334 = vadd.f32 %v2253, %v2330
    %v2335 = vld [vmem:[%s1500] sm:$0xff]
    %v2336 = vld [vmem:[%s1500 + $0x8] sm:$0xff]
    %v2337 = vld [vmem:[%s1500 + $0x10] sm:$0xff]
    %v2338 = vld [vmem:[%s1500 + $0x18] sm:$0xff]
    %2339 = vmatprep.subr.mxu0 0.0
    %2340 = vmatpush1.msra.mxu0 %v2335
    %2341 = vmatprep.subr.mxu0 0.0
    %2342 = vmatpush1.msra.mxu0 %v2336
    %2343 = vmatprep.subr.mxu0 0.0
    %2344 = vmatpush1.msra.mxu0 %v2337
    %2345 = vmatprep.subr.mxu0 0.0
    %2346 = vmatpush1.msra.mxu0 %v2338
    %2347 = vmatprep.subr.mxu0 0.0
    %2348 = vmatpush1.msra.mxu0 0.0
    %2349 = vmatprep.subr.mxu0 0.0
    %2350 = vmatpush1.msra.mxu0 0.0
    %2351 = vmatprep.subr.mxu0 0.0
    %2352 = vmatpush1.msra.mxu0 0.0
    %2353 = vmatprep.subr.mxu0 0.0
    %2354 = vmatpush1.msra.mxu0 0.0
    %2355 = vmatprep.subr.mxu0 0.0
    %2356 = vmatpush1.msra.mxu0 0.0
    %2357 = vmatprep.subr.mxu0 0.0
    %2358 = vmatpush1.msra.mxu0 0.0
    %2359 = vmatprep.subr.mxu0 0.0
    %2360 = vmatpush1.msra.mxu0 0.0
    %2361 = vmatprep.subr.mxu0 0.0
    %2362 = vmatpush1.msra.mxu0 0.0
    %2363 = vmatprep.subr.mxu0 0.0
    %2364 = vmatpush1.msra.mxu0 0.0
    %2365 = vmatprep.subr.mxu0 0.0
    %2366 = vmatpush1.msra.mxu0 0.0
    %2367 = vmatprep.subr.mxu0 0.0
    %2368 = vmatpush1.msra.mxu0 0.0
    %2369 = vmatprep.subr.mxu0 0.0
    %2370 = vmatpush1.msra.mxu0 0.0
    %2371 = vmatprep.subr.mxu0 0.0
    %2372 = vmatpush1.msra.mxu0 0.0
    %2373 = vmatprep.subr.mxu0 0.0
    %2374 = vmatpush1.msra.mxu0 0.0
    %2375 = vmatprep.subr.mxu0 0.0
    %2376 = vmatpush1.msra.mxu0 0.0
    %2377 = vmatprep.subr.mxu0 0.0
    %2378 = vmatpush1.msra.mxu0 0.0
    %2379 = vmatprep.subr.mxu0 0.0
    %2380 = vmatpush1.msra.mxu0 0.0
    %2381 = vmatprep.subr.mxu0 0.0
    %2382 = vmatpush1.msra.mxu0 0.0
    %2383 = vmatprep.subr.mxu0 0.0
    %2384 = vmatpush1.msra.mxu0 0.0
    %2385 = vmatprep.subr.mxu0 0.0
    %2386 = vmatpush1.msra.mxu0 0.0
    %2387 = vmatprep.subr.mxu0 0.0
    %2388 = vmatpush1.msra.mxu0 0.0
    %2389 = vmatprep.subr.mxu0 0.0
    %2390 = vmatpush1.msra.mxu0 0.0
    %2391 = vmatprep.subr.mxu0 0.0
    %2392 = vmatpush1.msra.mxu0 0.0
    %2393 = vmatprep.subr.mxu0 0.0
    %2394 = vmatpush1.msra.mxu0 0.0
    %2395 = vmatprep.subr.mxu0 0.0
    %2396 = vmatpush1.msra.mxu0 0.0
    %2397 = vmatprep.subr.mxu0 0.0
    %2398 = vmatpush1.msra.mxu0 0.0
    %2399 = vmatprep.subr.mxu0 0.0
    %2400 = vmatpush1.msra.mxu0 0.0
    %2401 = vmatprep.subr.mxu0 0.0
    %2402 = vmatpush1.msra.mxu0 0.0
    %2403 = vmatprep.mubr.f32.mxu0 0.0
    %2404 = vmatmul.mubr.f32.gmra.mrb[0].mxu0 %v1695
    %v2405 = vpop.f32.mrb[0].mxu0
    %v2406 = vadd.f32 0.0, %v2405
    %v2407 = vpop.f32.mrb[0].mxu0
    %2408 = vmatprep.mubr.f32.mxu0 0.0
    %2409 = vmatmul.mubr.f32.gmra.mrb[0].mxu0 %v1698
    %v2410 = vpop.f32.mrb[0].mxu0
    %v2411 = vadd.f32 0.0, %v2410
    %v2412 = vpop.f32.mrb[0].mxu0
    %2413 = vdwg.mxu0
    %v2414 = vadd.f32 %v2333, %v2406
    %v2415 = vadd.f32 %v2334, %v2411
    %v2416 = vld [vmem:[%s518] sm:$0xff]
    %v2417 = vld [vmem:[%s518 + $0x8] sm:$0xff]
    %v2418 = vld [vmem:[%s518 + $0x10] sm:$0xff]
    %v2419 = vld [vmem:[%s518 + $0x18] sm:$0xff]
    %2420 = vmatprep.subr.mxu0 0.0
    %2421 = vmatpush1.msra.mxu0 %v2416
    %2422 = vmatprep.subr.mxu0 0.0
    %2423 = vmatpush1.msra.mxu0 %v2417
    %2424 = vmatprep.subr.mxu0 0.0
    %2425 = vmatpush1.msra.mxu0 %v2418
    %2426 = vmatprep.subr.mxu0 0.0
    %2427 = vmatpush1.msra.mxu0 %v2419
    %2428 = vmatprep.subr.mxu0 0.0
    %2429 = vmatpush1.msra.mxu0 0.0
    %2430 = vmatprep.subr.mxu0 0.0
    %2431 = vmatpush1.msra.mxu0 0.0
    %2432 = vmatprep.subr.mxu0 0.0
    %2433 = vmatpush1.msra.mxu0 0.0
    %2434 = vmatprep.subr.mxu0 0.0
    %2435 = vmatpush1.msra.mxu0 0.0
    %2436 = vmatprep.subr.mxu0 0.0
    %2437 = vmatpush1.msra.mxu0 0.0
    %2438 = vmatprep.subr.mxu0 0.0
    %2439 = vmatpush1.msra.mxu0 0.0
    %2440 = vmatprep.subr.mxu0 0.0
    %2441 = vmatpush1.msra.mxu0 0.0
    %2442 = vmatprep.subr.mxu0 0.0
    %2443 = vmatpush1.msra.mxu0 0.0
    %2444 = vmatprep.subr.mxu0 0.0
    %2445 = vmatpush1.msra.mxu0 0.0
    %2446 = vmatprep.subr.mxu0 0.0
    %2447 = vmatpush1.msra.mxu0 0.0
    %2448 = vmatprep.subr.mxu0 0.0
    %2449 = vmatpush1.msra.mxu0 0.0
    %2450 = vmatprep.subr.mxu0 0.0
    %2451 = vmatpush1.msra.mxu0 0.0
    %2452 = vmatprep.subr.mxu0 0.0
    %2453 = vmatpush1.msra.mxu0 0.0
    %2454 = vmatprep.subr.mxu0 0.0
    %2455 = vmatpush1.msra.mxu0 0.0
    %2456 = vmatprep.subr.mxu0 0.0
    %2457 = vmatpush1.msra.mxu0 0.0
    %2458 = vmatprep.subr.mxu0 0.0
    %2459 = vmatpush1.msra.mxu0 0.0
    %2460 = vmatprep.subr.mxu0 0.0
    %2461 = vmatpush1.msra.mxu0 0.0
    %2462 = vmatprep.subr.mxu0 0.0
    %2463 = vmatpush1.msra.mxu0 0.0
    %2464 = vmatprep.subr.mxu0 0.0
    %2465 = vmatpush1.msra.mxu0 0.0
    %2466 = vmatprep.subr.mxu0 0.0
    %2467 = vmatpush1.msra.mxu0 0.0
    %2468 = vmatprep.subr.mxu0 0.0
    %2469 = vmatpush1.msra.mxu0 0.0
    %2470 = vmatprep.subr.mxu0 0.0
    %2471 = vmatpush1.msra.mxu0 0.0
    %2472 = vmatprep.subr.mxu0 0.0
    %2473 = vmatpush1.msra.mxu0 0.0
    %2474 = vmatprep.subr.mxu0 0.0
    %2475 = vmatpush1.msra.mxu0 0.0
    %2476 = vmatprep.subr.mxu0 0.0
    %2477 = vmatpush1.msra.mxu0 0.0
    %2478 = vmatprep.subr.mxu0 0.0
    %2479 = vmatpush1.msra.mxu0 0.0
    %2480 = vmatprep.subr.mxu0 0.0
    %2481 = vmatpush1.msra.mxu0 0.0
    %2482 = vmatprep.subr.mxu0 0.0
    %2483 = vmatpush1.msra.mxu0 0.0
    %2484 = vmatprep.mubr.f32.mxu0 0.0
    %2485 = vmatmul.mubr.f32.gmra.mrb[0].mxu0 %v1782
    %v2486 = vpop.f32.mrb[0].mxu0
    %v2487 = vadd.f32 0.0, %v2486
    %v2488 = vpop.f32.mrb[0].mxu0
    %2489 = vmatprep.mubr.f32.mxu0 0.0
    %2490 = vmatmul.mubr.f32.gmra.mrb[0].mxu0 %v1785
    %v2491 = vpop.f32.mrb[0].mxu0
    %v2492 = vadd.f32 0.0, %v2491
    %v2493 = vpop.f32.mrb[0].mxu0
    %2494 = vdwg.mxu0
    %v2495 = vadd.f32 %v2414, %v2487
    %v2496 = vadd.f32 %v2415, %v2492
    %2501 = vrot.lane.b32.xlu0 %v2173, 127
    %v2502 = vpop.permute.xlu0 %2501
    %2503 = vrot.lane.b32.xlu0 %v2174, 127
    %v2504 = vpop.permute.xlu0 %2503
    %2505 = vrot.lane.b32.xlu0 %v2175, 127
    %v2506 = vpop.permute.xlu0 %2505
    %2507 = vrot.lane.b32.xlu0 %v2176, 127
    %v2508 = vpop.permute.xlu0 %2507
    %2513 = vmatprep.subr.mxu0 0.0
    %2514 = vmatpush1.msra.mxu0 %v2502
    %2515 = vmatprep.subr.mxu0 0.0
    %2516 = vmatpush1.msra.mxu0 %v2504
    %2517 = vmatprep.subr.mxu0 0.0
    %2518 = vmatpush1.msra.mxu0 %v2506
    %2519 = vmatprep.subr.mxu0 0.0
    %2520 = vmatpush1.msra.mxu0 %v2508
    %2521 = vmatprep.subr.mxu0 0.0
    %2522 = vmatpush1.msra.mxu0 0.0
    %2523 = vmatprep.subr.mxu0 0.0
    %2524 = vmatpush1.msra.mxu0 0.0
    %2525 = vmatprep.subr.mxu0 0.0
    %2526 = vmatpush1.msra.mxu0 0.0
    %2527 = vmatprep.subr.mxu0 0.0
    %2528 = vmatpush1.msra.mxu0 0.0
    %2529 = vmatprep.subr.mxu0 0.0
    %2530 = vmatpush1.msra.mxu0 0.0
    %2531 = vmatprep.subr.mxu0 0.0
    %2532 = vmatpush1.msra.mxu0 0.0
    %2533 = vmatprep.subr.mxu0 0.0
    %2534 = vmatpush1.msra.mxu0 0.0
    %2535 = vmatprep.subr.mxu0 0.0
    %2536 = vmatpush1.msra.mxu0 0.0
    %2537 = vmatprep.subr.mxu0 0.0
    %2538 = vmatpush1.msra.mxu0 0.0
    %2539 = vmatprep.subr.mxu0 0.0
    %2540 = vmatpush1.msra.mxu0 0.0
    %2541 = vmatprep.subr.mxu0 0.0
    %2542 = vmatpush1.msra.mxu0 0.0
    %2543 = vmatprep.subr.mxu0 0.0
    %2544 = vmatpush1.msra.mxu0 0.0
    %2545 = vmatprep.subr.mxu0 0.0
    %2546 = vmatpush1.msra.mxu0 0.0
    %2547 = vmatprep.subr.mxu0 0.0
    %2548 = vmatpush1.msra.mxu0 0.0
    %2549 = vmatprep.subr.mxu0 0.0
    %2550 = vmatpush1.msra.mxu0 0.0
    %2551 = vmatprep.subr.mxu0 0.0
    %2552 = vmatpush1.msra.mxu0 0.0
    %2553 = vmatprep.subr.mxu0 0.0
    %2554 = vmatpush1.msra.mxu0 0.0
    %2555 = vmatprep.subr.mxu0 0.0
    %2556 = vmatpush1.msra.mxu0 0.0
    %2557 = vmatprep.subr.mxu0 0.0
    %2558 = vmatpush1.msra.mxu0 0.0
    %2559 = vmatprep.subr.mxu0 0.0
    %2560 = vmatpush1.msra.mxu0 0.0
    %2561 = vmatprep.subr.mxu0 0.0
    %2562 = vmatpush1.msra.mxu0 0.0
    %2563 = vmatprep.subr.mxu0 0.0
    %2564 = vmatpush1.msra.mxu0 0.0
    %2565 = vmatprep.subr.mxu0 0.0
    %2566 = vmatpush1.msra.mxu0 0.0
    %2567 = vmatprep.subr.mxu0 0.0
    %2568 = vmatpush1.msra.mxu0 0.0
    %2569 = vmatprep.subr.mxu0 0.0
    %2570 = vmatpush1.msra.mxu0 0.0
    %2571 = vmatprep.subr.mxu0 0.0
    %2572 = vmatpush1.msra.mxu0 0.0
    %2573 = vmatprep.subr.mxu0 0.0
    %2574 = vmatpush1.msra.mxu0 0.0
    %2575 = vmatprep.subr.mxu0 0.0
    %2576 = vmatpush1.msra.mxu0 0.0
    %2577 = vmatprep.mubr.f32.mxu0 0.0
    %2578 = vmatmul.mubr.f32.gmra.mrb[0].mxu0 %v1881
    %v2579 = vpop.f32.mrb[0].mxu0
    %v2580 = vadd.f32 0.0, %v2579
    %v2581 = vpop.f32.mrb[0].mxu0
    %2582 = vmatprep.mubr.f32.mxu0 0.0
    %2583 = vmatmul.mubr.f32.gmra.mrb[0].mxu0 %v1884
    %v2584 = vpop.f32.mrb[0].mxu0
    %v2585 = vadd.f32 0.0, %v2584
    %v2586 = vpop.f32.mrb[0].mxu0
    %2587 = vdwg.mxu0
    %v2588 = vadd.f32 %v2495, %v2580
    %v2589 = vadd.f32 %v2496, %v2585
    %2594 = vrot.lane.b32.xlu0 %v2254, 127
    %v2595 = vpop.permute.xlu0 %2594
    %2596 = vrot.lane.b32.xlu0 %v2255, 127
    %v2597 = vpop.permute.xlu0 %2596
    %2598 = vrot.lane.b32.xlu0 %v2256, 127
    %v2599 = vpop.permute.xlu0 %2598
    %2600 = vrot.lane.b32.xlu0 %v2257, 127
    %v2601 = vpop.permute.xlu0 %2600
    %2606 = vmatprep.subr.mxu0 0.0
    %2607 = vmatpush1.msra.mxu0 %v2595
    %2608 = vmatprep.subr.mxu0 0.0
    %2609 = vmatpush1.msra.mxu0 %v2597
    %2610 = vmatprep.subr.mxu0 0.0
    %2611 = vmatpush1.msra.mxu0 %v2599
    %2612 = vmatprep.subr.mxu0 0.0
    %2613 = vmatpush1.msra.mxu0 %v2601
    %2614 = vmatprep.subr.mxu0 0.0
    %2615 = vmatpush1.msra.mxu0 0.0
    %2616 = vmatprep.subr.mxu0 0.0
    %2617 = vmatpush1.msra.mxu0 0.0
    %2618 = vmatprep.subr.mxu0 0.0
    %2619 = vmatpush1.msra.mxu0 0.0
    %2620 = vmatprep.subr.mxu0 0.0
    %2621 = vmatpush1.msra.mxu0 0.0
    %2622 = vmatprep.subr.mxu0 0.0
    %2623 = vmatpush1.msra.mxu0 0.0
    %2624 = vmatprep.subr.mxu0 0.0
    %2625 = vmatpush1.msra.mxu0 0.0
    %2626 = vmatprep.subr.mxu0 0.0
    %2627 = vmatpush1.msra.mxu0 0.0
    %2628 = vmatprep.subr.mxu0 0.0
    %2629 = vmatpush1.msra.mxu0 0.0
    %2630 = vmatprep.subr.mxu0 0.0
    %2631 = vmatpush1.msra.mxu0 0.0
    %2632 = vmatprep.subr.mxu0 0.0
    %2633 = vmatpush1.msra.mxu0 0.0
    %2634 = vmatprep.subr.mxu0 0.0
    %2635 = vmatpush1.msra.mxu0 0.0
    %2636 = vmatprep.subr.mxu0 0.0
    %2637 = vmatpush1.msra.mxu0 0.0
    %2638 = vmatprep.subr.mxu0 0.0
    %2639 = vmatpush1.msra.mxu0 0.0
    %2640 = vmatprep.subr.mxu0 0.0
    %2641 = vmatpush1.msra.mxu0 0.0
    %2642 = vmatprep.subr.mxu0 0.0
    %2643 = vmatpush1.msra.mxu0 0.0
    %2644 = vmatprep.subr.mxu0 0.0
    %2645 = vmatpush1.msra.mxu0 0.0
    %2646 = vmatprep.subr.mxu0 0.0
    %2647 = vmatpush1.msra.mxu0 0.0
    %2648 = vmatprep.subr.mxu0 0.0
    %2649 = vmatpush1.msra.mxu0 0.0
    %2650 = vmatprep.subr.mxu0 0.0
    %2651 = vmatpush1.msra.mxu0 0.0
    %2652 = vmatprep.subr.mxu0 0.0
    %2653 = vmatpush1.msra.mxu0 0.0
    %2654 = vmatprep.subr.mxu0 0.0
    %2655 = vmatpush1.msra.mxu0 0.0
    %2656 = vmatprep.subr.mxu0 0.0
    %2657 = vmatpush1.msra.mxu0 0.0
    %2658 = vmatprep.subr.mxu0 0.0
    %2659 = vmatpush1.msra.mxu0 0.0
    %2660 = vmatprep.subr.mxu0 0.0
    %2661 = vmatpush1.msra.mxu0 0.0
    %2662 = vmatprep.subr.mxu0 0.0
    %2663 = vmatpush1.msra.mxu0 0.0
    %2664 = vmatprep.subr.mxu0 0.0
    %2665 = vmatpush1.msra.mxu0 0.0
    %2666 = vmatprep.subr.mxu0 0.0
    %2667 = vmatpush1.msra.mxu0 0.0
    %2668 = vmatprep.subr.mxu0 0.0
    %2669 = vmatpush1.msra.mxu0 0.0
    %2670 = vmatprep.mubr.f32.mxu0 0.0
    %2671 = vmatmul.mubr.f32.gmra.mrb[0].mxu0 %v1980
    %v2672 = vpop.f32.mrb[0].mxu0
    %v2673 = vadd.f32 0.0, %v2672
    %v2674 = vpop.f32.mrb[0].mxu0
    %2675 = vmatprep.mubr.f32.mxu0 0.0
    %2676 = vmatmul.mubr.f32.gmra.mrb[0].mxu0 %v1983
    %v2677 = vpop.f32.mrb[0].mxu0
    %v2678 = vadd.f32 0.0, %v2677
    %v2679 = vpop.f32.mrb[0].mxu0
    %2680 = vdwg.mxu0
    %v2681 = vadd.f32 %v2588, %v2673
    %v2682 = vadd.f32 %v2589, %v2678
    %2687 = vrot.lane.b32.xlu0 %v2335, 127
    %v2688 = vpop.permute.xlu0 %2687
    %2689 = vrot.lane.b32.xlu0 %v2336, 127
    %v2690 = vpop.permute.xlu0 %2689
    %2691 = vrot.lane.b32.xlu0 %v2337, 127
    %v2692 = vpop.permute.xlu0 %2691
    %2693 = vrot.lane.b32.xlu0 %v2338, 127
    %v2694 = vpop.permute.xlu0 %2693
    %2699 = vmatprep.subr.mxu0 0.0
    %2700 = vmatpush1.msra.mxu0 %v2688
    %2701 = vmatprep.subr.mxu0 0.0
    %2702 = vmatpush1.msra.mxu0 %v2690
    %2703 = vmatprep.subr.mxu0 0.0
    %2704 = vmatpush1.msra.mxu0 %v2692
    %2705 = vmatprep.subr.mxu0 0.0
    %2706 = vmatpush1.msra.mxu0 %v2694
    %2707 = vmatprep.subr.mxu0 0.0
    %2708 = vmatpush1.msra.mxu0 0.0
    %2709 = vmatprep.subr.mxu0 0.0
    %2710 = vmatpush1.msra.mxu0 0.0
    %2711 = vmatprep.subr.mxu0 0.0
    %2712 = vmatpush1.msra.mxu0 0.0
    %2713 = vmatprep.subr.mxu0 0.0
    %2714 = vmatpush1.msra.mxu0 0.0
    %2715 = vmatprep.subr.mxu0 0.0
    %2716 = vmatpush1.msra.mxu0 0.0
    %2717 = vmatprep.subr.mxu0 0.0
    %2718 = vmatpush1.msra.mxu0 0.0
    %2719 = vmatprep.subr.mxu0 0.0
    %2720 = vmatpush1.msra.mxu0 0.0
    %2721 = vmatprep.subr.mxu0 0.0
    %2722 = vmatpush1.msra.mxu0 0.0
    %2723 = vmatprep.subr.mxu0 0.0
    %2724 = vmatpush1.msra.mxu0 0.0
    %2725 = vmatprep.subr.mxu0 0.0
    %2726 = vmatpush1.msra.mxu0 0.0
    %2727 = vmatprep.subr.mxu0 0.0
    %2728 = vmatpush1.msra.mxu0 0.0
    %2729 = vmatprep.subr.mxu0 0.0
    %2730 = vmatpush1.msra.mxu0 0.0
    %2731 = vmatprep.subr.mxu0 0.0
    %2732 = vmatpush1.msra.mxu0 0.0
    %2733 = vmatprep.subr.mxu0 0.0
    %2734 = vmatpush1.msra.mxu0 0.0
    %2735 = vmatprep.subr.mxu0 0.0
    %2736 = vmatpush1.msra.mxu0 0.0
    %2737 = vmatprep.subr.mxu0 0.0
    %2738 = vmatpush1.msra.mxu0 0.0
    %2739 = vmatprep.subr.mxu0 0.0
    %2740 = vmatpush1.msra.mxu0 0.0
    %2741 = vmatprep.subr.mxu0 0.0
    %2742 = vmatpush1.msra.mxu0 0.0
    %2743 = vmatprep.subr.mxu0 0.0
    %2744 = vmatpush1.msra.mxu0 0.0
    %2745 = vmatprep.subr.mxu0 0.0
    %2746 = vmatpush1.msra.mxu0 0.0
    %2747 = vmatprep.subr.mxu0 0.0
    %2748 = vmatpush1.msra.mxu0 0.0
    %2749 = vmatprep.subr.mxu0 0.0
    %2750 = vmatpush1.msra.mxu0 0.0
    %2751 = vmatprep.subr.mxu0 0.0
    %2752 = vmatpush1.msra.mxu0 0.0
    %2753 = vmatprep.subr.mxu0 0.0
    %2754 = vmatpush1.msra.mxu0 0.0
    %2755 = vmatprep.subr.mxu0 0.0
    %2756 = vmatpush1.msra.mxu0 0.0
    %2757 = vmatprep.subr.mxu0 0.0
    %2758 = vmatpush1.msra.mxu0 0.0
    %2759 = vmatprep.subr.mxu0 0.0
    %2760 = vmatpush1.msra.mxu0 0.0
    %2761 = vmatprep.subr.mxu0 0.0
    %2762 = vmatpush1.msra.mxu0 0.0
    %2763 = vmatprep.mubr.f32.mxu0 0.0
    %2764 = vmatmul.mubr.f32.gmra.mrb[0].mxu0 %v2079
    %v2765 = vpop.f32.mrb[0].mxu0
    %v2766 = vadd.f32 0.0, %v2765
    %v2767 = vpop.f32.mrb[0].mxu0
    %2768 = vmatprep.mubr.f32.mxu0 0.0
    %2769 = vmatmul.mubr.f32.gmra.mrb[0].mxu0 %v2082
    %v2770 = vpop.f32.mrb[0].mxu0
    %v2771 = vadd.f32 0.0, %v2770
    %v2772 = vpop.f32.mrb[0].mxu0
    %2773 = vdwg.mxu0
    %v2774 = vadd.f32 %v2681, %v2766
    %v2775 = vadd.f32 %v2682, %v2771
    %v2776 = vmax.f32 %v2774, 0.0
    %v2777 = vmax.f32 %v2775, 0.0
    %2780 = vrot.lane.b32.xlu0 %v2776, 1
    %v2781 = vpop.permute.xlu0 %2780
    %2782 = vrot.lane.b32.xlu0 %v2777, 1
    %v2783 = vpop.permute.xlu0 %2782
    %s2786 = scalar_lea.vmem [#allocation4], 48
    %2787 = vst.msk [vmem:[%s2786] sm:$0xff] %vm650, %v2781
    %2788 = vst.msk [vmem:[%s2786 + $0x8] sm:$0xff] %vm650, %v2783
    %v2789 = vld [vmem:[%s128] sm:$0xff]
    %v2790 = vld [vmem:[%s128 + $0x8] sm:$0xff]
    %v2791 = vld [vmem:[%s128 + $0x10] sm:$0xff]
    %v2792 = vld [vmem:[%s128 + $0x18] sm:$0xff]
    %2793 = vmatprep.subr.mxu0 0.0
    %2794 = vmatpush1.msra.mxu0 %v2789
    %2795 = vmatprep.subr.mxu0 0.0
    %2796 = vmatpush1.msra.mxu0 %v2790
    %2797 = vmatprep.subr.mxu0 0.0
    %2798 = vmatpush1.msra.mxu0 %v2791
    %2799 = vmatprep.subr.mxu0 0.0
    %2800 = vmatpush1.msra.mxu0 %v2792
    %2801 = vmatprep.subr.mxu0 0.0
    %2802 = vmatpush1.msra.mxu0 0.0
    %2803 = vmatprep.subr.mxu0 0.0
    %2804 = vmatpush1.msra.mxu0 0.0
    %2805 = vmatprep.subr.mxu0 0.0
    %2806 = vmatpush1.msra.mxu0 0.0
    %2807 = vmatprep.subr.mxu0 0.0
    %2808 = vmatpush1.msra.mxu0 0.0
    %2809 = vmatprep.subr.mxu0 0.0
    %2810 = vmatpush1.msra.mxu0 0.0
    %2811 = vmatprep.subr.mxu0 0.0
    %2812 = vmatpush1.msra.mxu0 0.0
    %2813 = vmatprep.subr.mxu0 0.0
    %2814 = vmatpush1.msra.mxu0 0.0
    %2815 = vmatprep.subr.mxu0 0.0
    %2816 = vmatpush1.msra.mxu0 0.0
    %2817 = vmatprep.subr.mxu0 0.0
    %2818 = vmatpush1.msra.mxu0 0.0
    %2819 = vmatprep.subr.mxu0 0.0
    %2820 = vmatpush1.msra.mxu0 0.0
    %2821 = vmatprep.subr.mxu0 0.0
    %2822 = vmatpush1.msra.mxu0 0.0
    %2823 = vmatprep.subr.mxu0 0.0
    %2824 = vmatpush1.msra.mxu0 0.0
    %2825 = vmatprep.subr.mxu0 0.0
    %2826 = vmatpush1.msra.mxu0 0.0
    %2827 = vmatprep.subr.mxu0 0.0
    %2828 = vmatpush1.msra.mxu0 0.0
    %2829 = vmatprep.subr.mxu0 0.0
    %2830 = vmatpush1.msra.mxu0 0.0
    %2831 = vmatprep.subr.mxu0 0.0
    %2832 = vmatpush1.msra.mxu0 0.0
    %2833 = vmatprep.subr.mxu0 0.0
    %2834 = vmatpush1.msra.mxu0 0.0
    %2835 = vmatprep.subr.mxu0 0.0
    %2836 = vmatpush1.msra.mxu0 0.0
    %2837 = vmatprep.subr.mxu0 0.0
    %2838 = vmatpush1.msra.mxu0 0.0
    %2839 = vmatprep.subr.mxu0 0.0
    %2840 = vmatpush1.msra.mxu0 0.0
    %2841 = vmatprep.subr.mxu0 0.0
    %2842 = vmatpush1.msra.mxu0 0.0
    %2843 = vmatprep.subr.mxu0 0.0
    %2844 = vmatpush1.msra.mxu0 0.0
    %2845 = vmatprep.subr.mxu0 0.0
    %2846 = vmatpush1.msra.mxu0 0.0
    %2847 = vmatprep.subr.mxu0 0.0
    %2848 = vmatpush1.msra.mxu0 0.0
    %2849 = vmatprep.subr.mxu0 0.0
    %2850 = vmatpush1.msra.mxu0 0.0
    %2851 = vmatprep.subr.mxu0 0.0
    %2852 = vmatpush1.msra.mxu0 0.0
    %2853 = vmatprep.subr.mxu0 0.0
    %2854 = vmatpush1.msra.mxu0 0.0
    %2855 = vmatprep.subr.mxu0 0.0
    %2856 = vmatpush1.msra.mxu0 0.0
    %2857 = vmatprep.mubr.f32.mxu0 0.0
    %2858 = vmatmul.mubr.f32.gmra.mrb[0].mxu0 %v1521
    %v2859 = vpop.f32.mrb[0].mxu0
    %v2860 = vadd.f32 0.0, %v2859
    %v2861 = vpop.f32.mrb[0].mxu0
    %2862 = vmatprep.mubr.f32.mxu0 0.0
    %2863 = vmatmul.mubr.f32.gmra.mrb[0].mxu0 %v1524
    %v2864 = vpop.f32.mrb[0].mxu0
    %v2865 = vadd.f32 0.0, %v2864
    %v2866 = vpop.f32.mrb[0].mxu0
    %2867 = vdwg.mxu0
    %v2868 = vadd.f32 %v1508, %v2860
    %v2869 = vadd.f32 %v1513, %v2865
    %v2870 = vld [vmem:[%s91] sm:$0xff]
    %v2871 = vld [vmem:[%s91 + $0x8] sm:$0xff]
    %v2872 = vld [vmem:[%s91 + $0x10] sm:$0xff]
    %v2873 = vld [vmem:[%s91 + $0x18] sm:$0xff]
    %2874 = vmatprep.subr.mxu0 0.0
    %2875 = vmatpush1.msra.mxu0 %v2870
    %2876 = vmatprep.subr.mxu0 0.0
    %2877 = vmatpush1.msra.mxu0 %v2871
    %2878 = vmatprep.subr.mxu0 0.0
    %2879 = vmatpush1.msra.mxu0 %v2872
    %2880 = vmatprep.subr.mxu0 0.0
    %2881 = vmatpush1.msra.mxu0 %v2873
    %2882 = vmatprep.subr.mxu0 0.0
    %2883 = vmatpush1.msra.mxu0 0.0
    %2884 = vmatprep.subr.mxu0 0.0
    %2885 = vmatpush1.msra.mxu0 0.0
    %2886 = vmatprep.subr.mxu0 0.0
    %2887 = vmatpush1.msra.mxu0 0.0
    %2888 = vmatprep.subr.mxu0 0.0
    %2889 = vmatpush1.msra.mxu0 0.0
    %2890 = vmatprep.subr.mxu0 0.0
    %2891 = vmatpush1.msra.mxu0 0.0
    %2892 = vmatprep.subr.mxu0 0.0
    %2893 = vmatpush1.msra.mxu0 0.0
    %2894 = vmatprep.subr.mxu0 0.0
    %2895 = vmatpush1.msra.mxu0 0.0
    %2896 = vmatprep.subr.mxu0 0.0
    %2897 = vmatpush1.msra.mxu0 0.0
    %2898 = vmatprep.subr.mxu0 0.0
    %2899 = vmatpush1.msra.mxu0 0.0
    %2900 = vmatprep.subr.mxu0 0.0
    %2901 = vmatpush1.msra.mxu0 0.0
    %2902 = vmatprep.subr.mxu0 0.0
    %2903 = vmatpush1.msra.mxu0 0.0
    %2904 = vmatprep.subr.mxu0 0.0
    %2905 = vmatpush1.msra.mxu0 0.0
    %2906 = vmatprep.subr.mxu0 0.0
    %2907 = vmatpush1.msra.mxu0 0.0
    %2908 = vmatprep.subr.mxu0 0.0
    %2909 = vmatpush1.msra.mxu0 0.0
    %2910 = vmatprep.subr.mxu0 0.0
    %2911 = vmatpush1.msra.mxu0 0.0
    %2912 = vmatprep.subr.mxu0 0.0
    %2913 = vmatpush1.msra.mxu0 0.0
    %2914 = vmatprep.subr.mxu0 0.0
    %2915 = vmatpush1.msra.mxu0 0.0
    %2916 = vmatprep.subr.mxu0 0.0
    %2917 = vmatpush1.msra.mxu0 0.0
    %2918 = vmatprep.subr.mxu0 0.0
    %2919 = vmatpush1.msra.mxu0 0.0
    %2920 = vmatprep.subr.mxu0 0.0
    %2921 = vmatpush1.msra.mxu0 0.0
    %2922 = vmatprep.subr.mxu0 0.0
    %2923 = vmatpush1.msra.mxu0 0.0
    %2924 = vmatprep.subr.mxu0 0.0
    %2925 = vmatpush1.msra.mxu0 0.0
    %2926 = vmatprep.subr.mxu0 0.0
    %2927 = vmatpush1.msra.mxu0 0.0
    %2928 = vmatprep.subr.mxu0 0.0
    %2929 = vmatpush1.msra.mxu0 0.0
    %2930 = vmatprep.subr.mxu0 0.0
    %2931 = vmatpush1.msra.mxu0 0.0
    %2932 = vmatprep.subr.mxu0 0.0
    %2933 = vmatpush1.msra.mxu0 0.0
    %2934 = vmatprep.subr.mxu0 0.0
    %2935 = vmatpush1.msra.mxu0 0.0
    %2936 = vmatprep.subr.mxu0 0.0
    %2937 = vmatpush1.msra.mxu0 0.0
    %2938 = vmatprep.mubr.f32.mxu0 0.0
    %2939 = vmatmul.mubr.f32.gmra.mrb[0].mxu0 %v1608
    %v2940 = vpop.f32.mrb[0].mxu0
    %v2941 = vadd.f32 0.0, %v2940
    %v2942 = vpop.f32.mrb[0].mxu0
    %2943 = vmatprep.mubr.f32.mxu0 0.0
    %2944 = vmatmul.mubr.f32.gmra.mrb[0].mxu0 %v1611
    %v2945 = vpop.f32.mrb[0].mxu0
    %v2946 = vadd.f32 0.0, %v2945
    %v2947 = vpop.f32.mrb[0].mxu0
    %2948 = vdwg.mxu0
    %v2949 = vadd.f32 %v2868, %v2941
    %v2950 = vadd.f32 %v2869, %v2946
    %v2951 = vld [vmem:[#allocation3] sm:$0xff]
    %v2952 = vld [vmem:[#allocation3 + $0x8] sm:$0xff]
    %v2953 = vld [vmem:[#allocation3 + $0x10] sm:$0xff]
    %v2954 = vld [vmem:[#allocation3 + $0x18] sm:$0xff]
    %2959 = vrot.lane.b32.xlu0 %v2951, 127
    %v2960 = vpop.permute.xlu0 %2959
    %2961 = vrot.lane.b32.xlu0 %v2952, 127
    %v2962 = vpop.permute.xlu0 %2961
    %2963 = vrot.lane.b32.xlu0 %v2953, 127
    %v2964 = vpop.permute.xlu0 %2963
    %2965 = vrot.lane.b32.xlu0 %v2954, 127
    %v2966 = vpop.permute.xlu0 %2965
    %2971 = vmatprep.subr.mxu0 0.0
    %2972 = vmatpush1.msra.mxu0 %v2960
    %2973 = vmatprep.subr.mxu0 0.0
    %2974 = vmatpush1.msra.mxu0 %v2962
    %2975 = vmatprep.subr.mxu0 0.0
    %2976 = vmatpush1.msra.mxu0 %v2964
    %2977 = vmatprep.subr.mxu0 0.0
    %2978 = vmatpush1.msra.mxu0 %v2966
    %2979 = vmatprep.subr.mxu0 0.0
    %2980 = vmatpush1.msra.mxu0 0.0
    %2981 = vmatprep.subr.mxu0 0.0
    %2982 = vmatpush1.msra.mxu0 0.0
    %2983 = vmatprep.subr.mxu0 0.0
    %2984 = vmatpush1.msra.mxu0 0.0
    %2985 = vmatprep.subr.mxu0 0.0
    %2986 = vmatpush1.msra.mxu0 0.0
    %2987 = vmatprep.subr.mxu0 0.0
    %2988 = vmatpush1.msra.mxu0 0.0
    %2989 = vmatprep.subr.mxu0 0.0
    %2990 = vmatpush1.msra.mxu0 0.0
    %2991 = vmatprep.subr.mxu0 0.0
    %2992 = vmatpush1.msra.mxu0 0.0
    %2993 = vmatprep.subr.mxu0 0.0
    %2994 = vmatpush1.msra.mxu0 0.0
    %2995 = vmatprep.subr.mxu0 0.0
    %2996 = vmatpush1.msra.mxu0 0.0
    %2997 = vmatprep.subr.mxu0 0.0
    %2998 = vmatpush1.msra.mxu0 0.0
    %2999 = vmatprep.subr.mxu0 0.0
    %3000 = vmatpush1.msra.mxu0 0.0
    %3001 = vmatprep.subr.mxu0 0.0
    %3002 = vmatpush1.msra.mxu0 0.0
    %3003 = vmatprep.subr.mxu0 0.0
    %3004 = vmatpush1.msra.mxu0 0.0
    %3005 = vmatprep.subr.mxu0 0.0
    %3006 = vmatpush1.msra.mxu0 0.0
    %3007 = vmatprep.subr.mxu0 0.0
    %3008 = vmatpush1.msra.mxu0 0.0
    %3009 = vmatprep.subr.mxu0 0.0
    %3010 = vmatpush1.msra.mxu0 0.0
    %3011 = vmatprep.subr.mxu0 0.0
    %3012 = vmatpush1.msra.mxu0 0.0
    %3013 = vmatprep.subr.mxu0 0.0
    %3014 = vmatpush1.msra.mxu0 0.0
    %3015 = vmatprep.subr.mxu0 0.0
    %3016 = vmatpush1.msra.mxu0 0.0
    %3017 = vmatprep.subr.mxu0 0.0
    %3018 = vmatpush1.msra.mxu0 0.0
    %3019 = vmatprep.subr.mxu0 0.0
    %3020 = vmatpush1.msra.mxu0 0.0
    %3021 = vmatprep.subr.mxu0 0.0
    %3022 = vmatpush1.msra.mxu0 0.0
    %3023 = vmatprep.subr.mxu0 0.0
    %3024 = vmatpush1.msra.mxu0 0.0
    %3025 = vmatprep.subr.mxu0 0.0
    %3026 = vmatpush1.msra.mxu0 0.0
    %3027 = vmatprep.subr.mxu0 0.0
    %3028 = vmatpush1.msra.mxu0 0.0
    %3029 = vmatprep.subr.mxu0 0.0
    %3030 = vmatpush1.msra.mxu0 0.0
    %3031 = vmatprep.subr.mxu0 0.0
    %3032 = vmatpush1.msra.mxu0 0.0
    %3033 = vmatprep.subr.mxu0 0.0
    %3034 = vmatpush1.msra.mxu0 0.0
    %3035 = vmatprep.mubr.f32.mxu0 0.0
    %3036 = vmatmul.mubr.f32.gmra.mrb[0].mxu0 %v1695
    %v3037 = vpop.f32.mrb[0].mxu0
    %v3038 = vadd.f32 0.0, %v3037
    %v3039 = vpop.f32.mrb[0].mxu0
    %3040 = vmatprep.mubr.f32.mxu0 0.0
    %3041 = vmatmul.mubr.f32.gmra.mrb[0].mxu0 %v1698
    %v3042 = vpop.f32.mrb[0].mxu0
    %v3043 = vadd.f32 0.0, %v3042
    %v3044 = vpop.f32.mrb[0].mxu0
    %3045 = vdwg.mxu0
    %v3046 = vadd.f32 %v2949, %v3038
    %v3047 = vadd.f32 %v2950, %v3043
    %v3048 = vld [vmem:[%s119] sm:$0xff]
    %v3049 = vld [vmem:[%s119 + $0x8] sm:$0xff]
    %v3050 = vld [vmem:[%s119 + $0x10] sm:$0xff]
    %v3051 = vld [vmem:[%s119 + $0x18] sm:$0xff]
    %3056 = vrot.lane.b32.xlu0 %v3048, 127
    %v3057 = vpop.permute.xlu0 %3056
    %3058 = vrot.lane.b32.xlu0 %v3049, 127
    %v3059 = vpop.permute.xlu0 %3058
    %3060 = vrot.lane.b32.xlu0 %v3050, 127
    %v3061 = vpop.permute.xlu0 %3060
    %3062 = vrot.lane.b32.xlu0 %v3051, 127
    %v3063 = vpop.permute.xlu0 %3062
    %3068 = vmatprep.subr.mxu0 0.0
    %3069 = vmatpush1.msra.mxu0 %v3057
    %3070 = vmatprep.subr.mxu0 0.0
    %3071 = vmatpush1.msra.mxu0 %v3059
    %3072 = vmatprep.subr.mxu0 0.0
    %3073 = vmatpush1.msra.mxu0 %v3061
    %3074 = vmatprep.subr.mxu0 0.0
    %3075 = vmatpush1.msra.mxu0 %v3063
    %3076 = vmatprep.subr.mxu0 0.0
    %3077 = vmatpush1.msra.mxu0 0.0
    %3078 = vmatprep.subr.mxu0 0.0
    %3079 = vmatpush1.msra.mxu0 0.0
    %3080 = vmatprep.subr.mxu0 0.0
    %3081 = vmatpush1.msra.mxu0 0.0
    %3082 = vmatprep.subr.mxu0 0.0
    %3083 = vmatpush1.msra.mxu0 0.0
    %3084 = vmatprep.subr.mxu0 0.0
    %3085 = vmatpush1.msra.mxu0 0.0
    %3086 = vmatprep.subr.mxu0 0.0
    %3087 = vmatpush1.msra.mxu0 0.0
    %3088 = vmatprep.subr.mxu0 0.0
    %3089 = vmatpush1.msra.mxu0 0.0
    %3090 = vmatprep.subr.mxu0 0.0
    %3091 = vmatpush1.msra.mxu0 0.0
    %3092 = vmatprep.subr.mxu0 0.0
    %3093 = vmatpush1.msra.mxu0 0.0
    %3094 = vmatprep.subr.mxu0 0.0
    %3095 = vmatpush1.msra.mxu0 0.0
    %3096 = vmatprep.subr.mxu0 0.0
    %3097 = vmatpush1.msra.mxu0 0.0
    %3098 = vmatprep.subr.mxu0 0.0
    %3099 = vmatpush1.msra.mxu0 0.0
    %3100 = vmatprep.subr.mxu0 0.0
    %3101 = vmatpush1.msra.mxu0 0.0
    %3102 = vmatprep.subr.mxu0 0.0
    %3103 = vmatpush1.msra.mxu0 0.0
    %3104 = vmatprep.subr.mxu0 0.0
    %3105 = vmatpush1.msra.mxu0 0.0
    %3106 = vmatprep.subr.mxu0 0.0
    %3107 = vmatpush1.msra.mxu0 0.0
    %3108 = vmatprep.subr.mxu0 0.0
    %3109 = vmatpush1.msra.mxu0 0.0
    %3110 = vmatprep.subr.mxu0 0.0
    %3111 = vmatpush1.msra.mxu0 0.0
    %3112 = vmatprep.subr.mxu0 0.0
    %3113 = vmatpush1.msra.mxu0 0.0
    %3114 = vmatprep.subr.mxu0 0.0
    %3115 = vmatpush1.msra.mxu0 0.0
    %3116 = vmatprep.subr.mxu0 0.0
    %3117 = vmatpush1.msra.mxu0 0.0
    %3118 = vmatprep.subr.mxu0 0.0
    %3119 = vmatpush1.msra.mxu0 0.0
    %3120 = vmatprep.subr.mxu0 0.0
    %3121 = vmatpush1.msra.mxu0 0.0
    %3122 = vmatprep.subr.mxu0 0.0
    %3123 = vmatpush1.msra.mxu0 0.0
    %3124 = vmatprep.subr.mxu0 0.0
    %3125 = vmatpush1.msra.mxu0 0.0
    %3126 = vmatprep.subr.mxu0 0.0
    %3127 = vmatpush1.msra.mxu0 0.0
    %3128 = vmatprep.subr.mxu0 0.0
    %3129 = vmatpush1.msra.mxu0 0.0
    %3130 = vmatprep.subr.mxu0 0.0
    %3131 = vmatpush1.msra.mxu0 0.0
    %3132 = vmatprep.mubr.f32.mxu0 0.0
    %3133 = vmatmul.mubr.f32.gmra.mrb[0].mxu0 %v1782
    %v3134 = vpop.f32.mrb[0].mxu0
    %v3135 = vadd.f32 0.0, %v3134
    %v3136 = vpop.f32.mrb[0].mxu0
    %3137 = vmatprep.mubr.f32.mxu0 0.0
    %3138 = vmatmul.mubr.f32.gmra.mrb[0].mxu0 %v1785
    %v3139 = vpop.f32.mrb[0].mxu0
    %v3140 = vadd.f32 0.0, %v3139
    %v3141 = vpop.f32.mrb[0].mxu0
    %3142 = vdwg.mxu0
    %v3143 = vadd.f32 %v3046, %v3135
    %v3144 = vadd.f32 %v3047, %v3140
    %3149 = vrot.lane.b32.xlu0 %v2789, 127
    %v3150 = vpop.permute.xlu0 %3149
    %3151 = vrot.lane.b32.xlu0 %v2790, 127
    %v3152 = vpop.permute.xlu0 %3151
    %3153 = vrot.lane.b32.xlu0 %v2791, 127
    %v3154 = vpop.permute.xlu0 %3153
    %3155 = vrot.lane.b32.xlu0 %v2792, 127
    %v3156 = vpop.permute.xlu0 %3155
    %3161 = vmatprep.subr.mxu0 0.0
    %3162 = vmatpush1.msra.mxu0 %v3150
    %3163 = vmatprep.subr.mxu0 0.0
    %3164 = vmatpush1.msra.mxu0 %v3152
    %3165 = vmatprep.subr.mxu0 0.0
    %3166 = vmatpush1.msra.mxu0 %v3154
    %3167 = vmatprep.subr.mxu0 0.0
    %3168 = vmatpush1.msra.mxu0 %v3156
    %3169 = vmatprep.subr.mxu0 0.0
    %3170 = vmatpush1.msra.mxu0 0.0
    %3171 = vmatprep.subr.mxu0 0.0
    %3172 = vmatpush1.msra.mxu0 0.0
    %3173 = vmatprep.subr.mxu0 0.0
    %3174 = vmatpush1.msra.mxu0 0.0
    %3175 = vmatprep.subr.mxu0 0.0
    %3176 = vmatpush1.msra.mxu0 0.0
    %3177 = vmatprep.subr.mxu0 0.0
    %3178 = vmatpush1.msra.mxu0 0.0
    %3179 = vmatprep.subr.mxu0 0.0
    %3180 = vmatpush1.msra.mxu0 0.0
    %3181 = vmatprep.subr.mxu0 0.0
    %3182 = vmatpush1.msra.mxu0 0.0
    %3183 = vmatprep.subr.mxu0 0.0
    %3184 = vmatpush1.msra.mxu0 0.0
    %3185 = vmatprep.subr.mxu0 0.0
    %3186 = vmatpush1.msra.mxu0 0.0
    %3187 = vmatprep.subr.mxu0 0.0
    %3188 = vmatpush1.msra.mxu0 0.0
    %3189 = vmatprep.subr.mxu0 0.0
    %3190 = vmatpush1.msra.mxu0 0.0
    %3191 = vmatprep.subr.mxu0 0.0
    %3192 = vmatpush1.msra.mxu0 0.0
    %3193 = vmatprep.subr.mxu0 0.0
    %3194 = vmatpush1.msra.mxu0 0.0
    %3195 = vmatprep.subr.mxu0 0.0
    %3196 = vmatpush1.msra.mxu0 0.0
    %3197 = vmatprep.subr.mxu0 0.0
    %3198 = vmatpush1.msra.mxu0 0.0
    %3199 = vmatprep.subr.mxu0 0.0
    %3200 = vmatpush1.msra.mxu0 0.0
    %3201 = vmatprep.subr.mxu0 0.0
    %3202 = vmatpush1.msra.mxu0 0.0
    %3203 = vmatprep.subr.mxu0 0.0
    %3204 = vmatpush1.msra.mxu0 0.0
    %3205 = vmatprep.subr.mxu0 0.0
    %3206 = vmatpush1.msra.mxu0 0.0
    %3207 = vmatprep.subr.mxu0 0.0
    %3208 = vmatpush1.msra.mxu0 0.0
    %3209 = vmatprep.subr.mxu0 0.0
    %3210 = vmatpush1.msra.mxu0 0.0
    %3211 = vmatprep.subr.mxu0 0.0
    %3212 = vmatpush1.msra.mxu0 0.0
    %3213 = vmatprep.subr.mxu0 0.0
    %3214 = vmatpush1.msra.mxu0 0.0
    %3215 = vmatprep.subr.mxu0 0.0
    %3216 = vmatpush1.msra.mxu0 0.0
    %3217 = vmatprep.subr.mxu0 0.0
    %3218 = vmatpush1.msra.mxu0 0.0
    %3219 = vmatprep.subr.mxu0 0.0
    %3220 = vmatpush1.msra.mxu0 0.0
    %3221 = vmatprep.subr.mxu0 0.0
    %3222 = vmatpush1.msra.mxu0 0.0
    %3223 = vmatprep.subr.mxu0 0.0
    %3224 = vmatpush1.msra.mxu0 0.0
    %3225 = vmatprep.mubr.f32.mxu0 0.0
    %3226 = vmatmul.mubr.f32.gmra.mrb[0].mxu0 %v1881
    %v3227 = vpop.f32.mrb[0].mxu0
    %v3228 = vadd.f32 0.0, %v3227
    %v3229 = vpop.f32.mrb[0].mxu0
    %3230 = vmatprep.mubr.f32.mxu0 0.0
    %3231 = vmatmul.mubr.f32.gmra.mrb[0].mxu0 %v1884
    %v3232 = vpop.f32.mrb[0].mxu0
    %v3233 = vadd.f32 0.0, %v3232
    %v3234 = vpop.f32.mrb[0].mxu0
    %3235 = vdwg.mxu0
    %v3236 = vadd.f32 %v3143, %v3228
    %v3237 = vadd.f32 %v3144, %v3233
    %3242 = vrot.lane.b32.xlu0 %v2870, 127
    %v3243 = vpop.permute.xlu0 %3242
    %3244 = vrot.lane.b32.xlu0 %v2871, 127
    %v3245 = vpop.permute.xlu0 %3244
    %3246 = vrot.lane.b32.xlu0 %v2872, 127
    %v3247 = vpop.permute.xlu0 %3246
    %3248 = vrot.lane.b32.xlu0 %v2873, 127
    %v3249 = vpop.permute.xlu0 %3248
    %3254 = vmatprep.subr.mxu0 0.0
    %3255 = vmatpush1.msra.mxu0 %v3243
    %3256 = vmatprep.subr.mxu0 0.0
    %3257 = vmatpush1.msra.mxu0 %v3245
    %3258 = vmatprep.subr.mxu0 0.0
    %3259 = vmatpush1.msra.mxu0 %v3247
    %3260 = vmatprep.subr.mxu0 0.0
    %3261 = vmatpush1.msra.mxu0 %v3249
    %3262 = vmatprep.subr.mxu0 0.0
    %3263 = vmatpush1.msra.mxu0 0.0
    %3264 = vmatprep.subr.mxu0 0.0
    %3265 = vmatpush1.msra.mxu0 0.0
    %3266 = vmatprep.subr.mxu0 0.0
    %3267 = vmatpush1.msra.mxu0 0.0
    %3268 = vmatprep.subr.mxu0 0.0
    %3269 = vmatpush1.msra.mxu0 0.0
    %3270 = vmatprep.subr.mxu0 0.0
    %3271 = vmatpush1.msra.mxu0 0.0
    %3272 = vmatprep.subr.mxu0 0.0
    %3273 = vmatpush1.msra.mxu0 0.0
    %3274 = vmatprep.subr.mxu0 0.0
    %3275 = vmatpush1.msra.mxu0 0.0
    %3276 = vmatprep.subr.mxu0 0.0
    %3277 = vmatpush1.msra.mxu0 0.0
    %3278 = vmatprep.subr.mxu0 0.0
    %3279 = vmatpush1.msra.mxu0 0.0
    %3280 = vmatprep.subr.mxu0 0.0
    %3281 = vmatpush1.msra.mxu0 0.0
    %3282 = vmatprep.subr.mxu0 0.0
    %3283 = vmatpush1.msra.mxu0 0.0
    %3284 = vmatprep.subr.mxu0 0.0
    %3285 = vmatpush1.msra.mxu0 0.0
    %3286 = vmatprep.subr.mxu0 0.0
    %3287 = vmatpush1.msra.mxu0 0.0
    %3288 = vmatprep.subr.mxu0 0.0
    %3289 = vmatpush1.msra.mxu0 0.0
    %3290 = vmatprep.subr.mxu0 0.0
    %3291 = vmatpush1.msra.mxu0 0.0
    %3292 = vmatprep.subr.mxu0 0.0
    %3293 = vmatpush1.msra.mxu0 0.0
    %3294 = vmatprep.subr.mxu0 0.0
    %3295 = vmatpush1.msra.mxu0 0.0
    %3296 = vmatprep.subr.mxu0 0.0
    %3297 = vmatpush1.msra.mxu0 0.0
    %3298 = vmatprep.subr.mxu0 0.0
    %3299 = vmatpush1.msra.mxu0 0.0
    %3300 = vmatprep.subr.mxu0 0.0
    %3301 = vmatpush1.msra.mxu0 0.0
    %3302 = vmatprep.subr.mxu0 0.0
    %3303 = vmatpush1.msra.mxu0 0.0
    %3304 = vmatprep.subr.mxu0 0.0
    %3305 = vmatpush1.msra.mxu0 0.0
    %3306 = vmatprep.subr.mxu0 0.0
    %3307 = vmatpush1.msra.mxu0 0.0
    %3308 = vmatprep.subr.mxu0 0.0
    %3309 = vmatpush1.msra.mxu0 0.0
    %3310 = vmatprep.subr.mxu0 0.0
    %3311 = vmatpush1.msra.mxu0 0.0
    %3312 = vmatprep.subr.mxu0 0.0
    %3313 = vmatpush1.msra.mxu0 0.0
    %3314 = vmatprep.subr.mxu0 0.0
    %3315 = vmatpush1.msra.mxu0 0.0
    %3316 = vmatprep.subr.mxu0 0.0
    %3317 = vmatpush1.msra.mxu0 0.0
    %3318 = vmatprep.mubr.f32.mxu0 0.0
    %3319 = vmatmul.mubr.f32.gmra.mrb[0].mxu0 %v1980
    %v3320 = vpop.f32.mrb[0].mxu0
    %v3321 = vadd.f32 0.0, %v3320
    %v3322 = vpop.f32.mrb[0].mxu0
    %3323 = vmatprep.mubr.f32.mxu0 0.0
    %3324 = vmatmul.mubr.f32.gmra.mrb[0].mxu0 %v1983
    %v3325 = vpop.f32.mrb[0].mxu0
    %v3326 = vadd.f32 0.0, %v3325
    %v3327 = vpop.f32.mrb[0].mxu0
    %3328 = vdwg.mxu0
    %v3329 = vadd.f32 %v3236, %v3321
    %v3330 = vadd.f32 %v3237, %v3326
    %3331 = vrot.lane.b32.xlu0 %v2951, 126
    %v3332 = vpop.permute.xlu0 %3331
    %3333 = vrot.lane.b32.xlu0 %v2952, 126
    %v3334 = vpop.permute.xlu0 %3333
    %3335 = vrot.lane.b32.xlu0 %v2953, 126
    %v3336 = vpop.permute.xlu0 %3335
    %3337 = vrot.lane.b32.xlu0 %v2954, 126
    %v3338 = vpop.permute.xlu0 %3337
    %3343 = vmatprep.subr.mxu0 0.0
    %3344 = vmatpush1.msra.mxu0 %v3332
    %3345 = vmatprep.subr.mxu0 0.0
    %3346 = vmatpush1.msra.mxu0 %v3334
    %3347 = vmatprep.subr.mxu0 0.0
    %3348 = vmatpush1.msra.mxu0 %v3336
    %3349 = vmatprep.subr.mxu0 0.0
    %3350 = vmatpush1.msra.mxu0 %v3338
    %3351 = vmatprep.subr.mxu0 0.0
    %3352 = vmatpush1.msra.mxu0 0.0
    %3353 = vmatprep.subr.mxu0 0.0
    %3354 = vmatpush1.msra.mxu0 0.0
    %3355 = vmatprep.subr.mxu0 0.0
    %3356 = vmatpush1.msra.mxu0 0.0
    %3357 = vmatprep.subr.mxu0 0.0
    %3358 = vmatpush1.msra.mxu0 0.0
    %3359 = vmatprep.subr.mxu0 0.0
    %3360 = vmatpush1.msra.mxu0 0.0
    %3361 = vmatprep.subr.mxu0 0.0
    %3362 = vmatpush1.msra.mxu0 0.0
    %3363 = vmatprep.subr.mxu0 0.0
    %3364 = vmatpush1.msra.mxu0 0.0
    %3365 = vmatprep.subr.mxu0 0.0
    %3366 = vmatpush1.msra.mxu0 0.0
    %3367 = vmatprep.subr.mxu0 0.0
    %3368 = vmatpush1.msra.mxu0 0.0
    %3369 = vmatprep.subr.mxu0 0.0
    %3370 = vmatpush1.msra.mxu0 0.0
    %3371 = vmatprep.subr.mxu0 0.0
    %3372 = vmatpush1.msra.mxu0 0.0
    %3373 = vmatprep.subr.mxu0 0.0
    %3374 = vmatpush1.msra.mxu0 0.0
    %3375 = vmatprep.subr.mxu0 0.0
    %3376 = vmatpush1.msra.mxu0 0.0
    %3377 = vmatprep.subr.mxu0 0.0
    %3378 = vmatpush1.msra.mxu0 0.0
    %3379 = vmatprep.subr.mxu0 0.0
    %3380 = vmatpush1.msra.mxu0 0.0
    %3381 = vmatprep.subr.mxu0 0.0
    %3382 = vmatpush1.msra.mxu0 0.0
    %3383 = vmatprep.subr.mxu0 0.0
    %3384 = vmatpush1.msra.mxu0 0.0
    %3385 = vmatprep.subr.mxu0 0.0
    %3386 = vmatpush1.msra.mxu0 0.0
    %3387 = vmatprep.subr.mxu0 0.0
    %3388 = vmatpush1.msra.mxu0 0.0
    %3389 = vmatprep.subr.mxu0 0.0
    %3390 = vmatpush1.msra.mxu0 0.0
    %3391 = vmatprep.subr.mxu0 0.0
    %3392 = vmatpush1.msra.mxu0 0.0
    %3393 = vmatprep.subr.mxu0 0.0
    %3394 = vmatpush1.msra.mxu0 0.0
    %3395 = vmatprep.subr.mxu0 0.0
    %3396 = vmatpush1.msra.mxu0 0.0
    %3397 = vmatprep.subr.mxu0 0.0
    %3398 = vmatpush1.msra.mxu0 0.0
    %3399 = vmatprep.subr.mxu0 0.0
    %3400 = vmatpush1.msra.mxu0 0.0
    %3401 = vmatprep.subr.mxu0 0.0
    %3402 = vmatpush1.msra.mxu0 0.0
    %3403 = vmatprep.subr.mxu0 0.0
    %3404 = vmatpush1.msra.mxu0 0.0
    %3405 = vmatprep.subr.mxu0 0.0
    %3406 = vmatpush1.msra.mxu0 0.0
    %3407 = vmatprep.mubr.f32.mxu0 0.0
    %3408 = vmatmul.mubr.f32.gmra.mrb[0].mxu0 %v2079
    %v3409 = vpop.f32.mrb[0].mxu0
    %v3410 = vadd.f32 0.0, %v3409
    %v3411 = vpop.f32.mrb[0].mxu0
    %3412 = vmatprep.mubr.f32.mxu0 0.0
    %3413 = vmatmul.mubr.f32.gmra.mrb[0].mxu0 %v2082
    %v3414 = vpop.f32.mrb[0].mxu0
    %v3415 = vadd.f32 0.0, %v3414
    %v3416 = vpop.f32.mrb[0].mxu0
    %3417 = vdwg.mxu0
    %v3418 = vadd.f32 %v3329, %v3410
    %v3419 = vadd.f32 %v3330, %v3415
    %v3420 = vmax.f32 %v3418, 0.0
    %v3421 = vmax.f32 %v3419, 0.0
    %3424 = vrot.lane.b32.xlu0 %v3420, 2
    %v3425 = vpop.permute.xlu0 %3424
    %3426 = vrot.lane.b32.xlu0 %v3421, 2
    %v3427 = vpop.permute.xlu0 %3426
    %vm3430 = vcmask 31760
    %3431 = vst.msk [vmem:[#allocation4] sm:$0xff] %vm3430, %v3425
    %3432 = vst.msk [vmem:[#allocation4 + $0x8] sm:$0xff] %vm3430, %v3427
    %v3433 = vld [vmem:[%s1500] sm:$0xff]
    %v3434 = vld [vmem:[%s1500 + $0x8] sm:$0xff]
    %v3435 = vld [vmem:[%s1500 + $0x10] sm:$0xff]
    %v3436 = vld [vmem:[%s1500 + $0x18] sm:$0xff]
    %3437 = vmatprep.subr.mxu0 0.0
    %3438 = vmatpush1.msra.mxu0 %v3433
    %3439 = vmatprep.subr.mxu0 0.0
    %3440 = vmatpush1.msra.mxu0 %v3434
    %3441 = vmatprep.subr.mxu0 0.0
    %3442 = vmatpush1.msra.mxu0 %v3435
    %3443 = vmatprep.subr.mxu0 0.0
    %3444 = vmatpush1.msra.mxu0 %v3436
    %3445 = vmatprep.subr.mxu0 0.0
    %3446 = vmatpush1.msra.mxu0 0.0
    %3447 = vmatprep.subr.mxu0 0.0
    %3448 = vmatpush1.msra.mxu0 0.0
    %3449 = vmatprep.subr.mxu0 0.0
    %3450 = vmatpush1.msra.mxu0 0.0
    %3451 = vmatprep.subr.mxu0 0.0
    %3452 = vmatpush1.msra.mxu0 0.0
    %3453 = vmatprep.subr.mxu0 0.0
    %3454 = vmatpush1.msra.mxu0 0.0
    %3455 = vmatprep.subr.mxu0 0.0
    %3456 = vmatpush1.msra.mxu0 0.0
    %3457 = vmatprep.subr.mxu0 0.0
    %3458 = vmatpush1.msra.mxu0 0.0
    %3459 = vmatprep.subr.mxu0 0.0
    %3460 = vmatpush1.msra.mxu0 0.0
    %3461 = vmatprep.subr.mxu0 0.0
    %3462 = vmatpush1.msra.mxu0 0.0
    %3463 = vmatprep.subr.mxu0 0.0
    %3464 = vmatpush1.msra.mxu0 0.0
    %3465 = vmatprep.subr.mxu0 0.0
    %3466 = vmatpush1.msra.mxu0 0.0
    %3467 = vmatprep.subr.mxu0 0.0
    %3468 = vmatpush1.msra.mxu0 0.0
    %3469 = vmatprep.subr.mxu0 0.0
    %3470 = vmatpush1.msra.mxu0 0.0
    %3471 = vmatprep.subr.mxu0 0.0
    %3472 = vmatpush1.msra.mxu0 0.0
    %3473 = vmatprep.subr.mxu0 0.0
    %3474 = vmatpush1.msra.mxu0 0.0
    %3475 = vmatprep.subr.mxu0 0.0
    %3476 = vmatpush1.msra.mxu0 0.0
    %3477 = vmatprep.subr.mxu0 0.0
    %3478 = vmatpush1.msra.mxu0 0.0
    %3479 = vmatprep.subr.mxu0 0.0
    %3480 = vmatpush1.msra.mxu0 0.0
    %3481 = vmatprep.subr.mxu0 0.0
    %3482 = vmatpush1.msra.mxu0 0.0
    %3483 = vmatprep.subr.mxu0 0.0
    %3484 = vmatpush1.msra.mxu0 0.0
    %3485 = vmatprep.subr.mxu0 0.0
    %3486 = vmatpush1.msra.mxu0 0.0
    %3487 = vmatprep.subr.mxu0 0.0
    %3488 = vmatpush1.msra.mxu0 0.0
    %3489 = vmatprep.subr.mxu0 0.0
    %3490 = vmatpush1.msra.mxu0 0.0
    %3491 = vmatprep.subr.mxu0 0.0
    %3492 = vmatpush1.msra.mxu0 0.0
    %3493 = vmatprep.subr.mxu0 0.0
    %3494 = vmatpush1.msra.mxu0 0.0
    %3495 = vmatprep.subr.mxu0 0.0
    %3496 = vmatpush1.msra.mxu0 0.0
    %3497 = vmatprep.subr.mxu0 0.0
    %3498 = vmatpush1.msra.mxu0 0.0
    %3499 = vmatprep.subr.mxu0 0.0
    %3500 = vmatpush1.msra.mxu0 0.0
    %3501 = vmatprep.mubr.f32.mxu0 0.0
    %3502 = vmatmul.mubr.f32.gmra.mrb[0].mxu0 %v1521
    %v3503 = vpop.f32.mrb[0].mxu0
    %v3504 = vadd.f32 0.0, %v3503
    %v3505 = vpop.f32.mrb[0].mxu0
    %3506 = vmatprep.mubr.f32.mxu0 0.0
    %3507 = vmatmul.mubr.f32.gmra.mrb[0].mxu0 %v1524
    %v3508 = vpop.f32.mrb[0].mxu0
    %v3509 = vadd.f32 0.0, %v3508
    %v3510 = vpop.f32.mrb[0].mxu0
    %3511 = vdwg.mxu0
    %v3512 = vadd.f32 %v1508, %v3504
    %v3513 = vadd.f32 %v1513, %v3509
    %v3514 = vld [vmem:[%s518] sm:$0xff]
    %v3515 = vld [vmem:[%s518 + $0x8] sm:$0xff]
    %v3516 = vld [vmem:[%s518 + $0x10] sm:$0xff]
    %v3517 = vld [vmem:[%s518 + $0x18] sm:$0xff]
    %3518 = vmatprep.subr.mxu0 0.0
    %3519 = vmatpush1.msra.mxu0 %v3514
    %3520 = vmatprep.subr.mxu0 0.0
    %3521 = vmatpush1.msra.mxu0 %v3515
    %3522 = vmatprep.subr.mxu0 0.0
    %3523 = vmatpush1.msra.mxu0 %v3516
    %3524 = vmatprep.subr.mxu0 0.0
    %3525 = vmatpush1.msra.mxu0 %v3517
    %3526 = vmatprep.subr.mxu0 0.0
    %3527 = vmatpush1.msra.mxu0 0.0
    %3528 = vmatprep.subr.mxu0 0.0
    %3529 = vmatpush1.msra.mxu0 0.0
    %3530 = vmatprep.subr.mxu0 0.0
    %3531 = vmatpush1.msra.mxu0 0.0
    %3532 = vmatprep.subr.mxu0 0.0
    %3533 = vmatpush1.msra.mxu0 0.0
    %3534 = vmatprep.subr.mxu0 0.0
    %3535 = vmatpush1.msra.mxu0 0.0
    %3536 = vmatprep.subr.mxu0 0.0
    %3537 = vmatpush1.msra.mxu0 0.0
    %3538 = vmatprep.subr.mxu0 0.0
    %3539 = vmatpush1.msra.mxu0 0.0
    %3540 = vmatprep.subr.mxu0 0.0
    %3541 = vmatpush1.msra.mxu0 0.0
    %3542 = vmatprep.subr.mxu0 0.0
    %3543 = vmatpush1.msra.mxu0 0.0
    %3544 = vmatprep.subr.mxu0 0.0
    %3545 = vmatpush1.msra.mxu0 0.0
    %3546 = vmatprep.subr.mxu0 0.0
    %3547 = vmatpush1.msra.mxu0 0.0
    %3548 = vmatprep.subr.mxu0 0.0
    %3549 = vmatpush1.msra.mxu0 0.0
    %3550 = vmatprep.subr.mxu0 0.0
    %3551 = vmatpush1.msra.mxu0 0.0
    %3552 = vmatprep.subr.mxu0 0.0
    %3553 = vmatpush1.msra.mxu0 0.0
    %3554 = vmatprep.subr.mxu0 0.0
    %3555 = vmatpush1.msra.mxu0 0.0
    %3556 = vmatprep.subr.mxu0 0.0
    %3557 = vmatpush1.msra.mxu0 0.0
    %3558 = vmatprep.subr.mxu0 0.0
    %3559 = vmatpush1.msra.mxu0 0.0
    %3560 = vmatprep.subr.mxu0 0.0
    %3561 = vmatpush1.msra.mxu0 0.0
    %3562 = vmatprep.subr.mxu0 0.0
    %3563 = vmatpush1.msra.mxu0 0.0
    %3564 = vmatprep.subr.mxu0 0.0
    %3565 = vmatpush1.msra.mxu0 0.0
    %3566 = vmatprep.subr.mxu0 0.0
    %3567 = vmatpush1.msra.mxu0 0.0
    %3568 = vmatprep.subr.mxu0 0.0
    %3569 = vmatpush1.msra.mxu0 0.0
    %3570 = vmatprep.subr.mxu0 0.0
    %3571 = vmatpush1.msra.mxu0 0.0
    %3572 = vmatprep.subr.mxu0 0.0
    %3573 = vmatpush1.msra.mxu0 0.0
    %3574 = vmatprep.subr.mxu0 0.0
    %3575 = vmatpush1.msra.mxu0 0.0
    %3576 = vmatprep.subr.mxu0 0.0
    %3577 = vmatpush1.msra.mxu0 0.0
    %3578 = vmatprep.subr.mxu0 0.0
    %3579 = vmatpush1.msra.mxu0 0.0
    %3580 = vmatprep.subr.mxu0 0.0
    %3581 = vmatpush1.msra.mxu0 0.0
    %3582 = vmatprep.mubr.f32.mxu0 0.0
    %3583 = vmatmul.mubr.f32.gmra.mrb[0].mxu0 %v1608
    %v3584 = vpop.f32.mrb[0].mxu0
    %v3585 = vadd.f32 0.0, %v3584
    %v3586 = vpop.f32.mrb[0].mxu0
    %3587 = vmatprep.mubr.f32.mxu0 0.0
    %3588 = vmatmul.mubr.f32.gmra.mrb[0].mxu0 %v1611
    %v3589 = vpop.f32.mrb[0].mxu0
    %v3590 = vadd.f32 0.0, %v3589
    %v3591 = vpop.f32.mrb[0].mxu0
    %3592 = vdwg.mxu0
    %v3593 = vadd.f32 %v3512, %v3585
    %v3594 = vadd.f32 %v3513, %v3590
    %v3595 = vld [vmem:[%s782] sm:$0xff]
    %v3596 = vld [vmem:[%s782 + $0x8] sm:$0xff]
    %v3597 = vld [vmem:[%s782 + $0x10] sm:$0xff]
    %v3598 = vld [vmem:[%s782 + $0x18] sm:$0xff]
    %3603 = vrot.lane.b32.xlu0 %v3595, 127
    %v3604 = vpop.permute.xlu0 %3603
    %3605 = vrot.lane.b32.xlu0 %v3596, 127
    %v3606 = vpop.permute.xlu0 %3605
    %3607 = vrot.lane.b32.xlu0 %v3597, 127
    %v3608 = vpop.permute.xlu0 %3607
    %3609 = vrot.lane.b32.xlu0 %v3598, 127
    %v3610 = vpop.permute.xlu0 %3609
    %3615 = vmatprep.subr.mxu0 0.0
    %3616 = vmatpush1.msra.mxu0 %v3604
    %3617 = vmatprep.subr.mxu0 0.0
    %3618 = vmatpush1.msra.mxu0 %v3606
    %3619 = vmatprep.subr.mxu0 0.0
    %3620 = vmatpush1.msra.mxu0 %v3608
    %3621 = vmatprep.subr.mxu0 0.0
    %3622 = vmatpush1.msra.mxu0 %v3610
    %3623 = vmatprep.subr.mxu0 0.0
    %3624 = vmatpush1.msra.mxu0 0.0
    %3625 = vmatprep.subr.mxu0 0.0
    %3626 = vmatpush1.msra.mxu0 0.0
    %3627 = vmatprep.subr.mxu0 0.0
    %3628 = vmatpush1.msra.mxu0 0.0
    %3629 = vmatprep.subr.mxu0 0.0
    %3630 = vmatpush1.msra.mxu0 0.0
    %3631 = vmatprep.subr.mxu0 0.0
    %3632 = vmatpush1.msra.mxu0 0.0
    %3633 = vmatprep.subr.mxu0 0.0
    %3634 = vmatpush1.msra.mxu0 0.0
    %3635 = vmatprep.subr.mxu0 0.0
    %3636 = vmatpush1.msra.mxu0 0.0
    %3637 = vmatprep.subr.mxu0 0.0
    %3638 = vmatpush1.msra.mxu0 0.0
    %3639 = vmatprep.subr.mxu0 0.0
    %3640 = vmatpush1.msra.mxu0 0.0
    %3641 = vmatprep.subr.mxu0 0.0
    %3642 = vmatpush1.msra.mxu0 0.0
    %3643 = vmatprep.subr.mxu0 0.0
    %3644 = vmatpush1.msra.mxu0 0.0
    %3645 = vmatprep.subr.mxu0 0.0
    %3646 = vmatpush1.msra.mxu0 0.0
    %3647 = vmatprep.subr.mxu0 0.0
    %3648 = vmatpush1.msra.mxu0 0.0
    %3649 = vmatprep.subr.mxu0 0.0
    %3650 = vmatpush1.msra.mxu0 0.0
    %3651 = vmatprep.subr.mxu0 0.0
    %3652 = vmatpush1.msra.mxu0 0.0
    %3653 = vmatprep.subr.mxu0 0.0
    %3654 = vmatpush1.msra.mxu0 0.0
    %3655 = vmatprep.subr.mxu0 0.0
    %3656 = vmatpush1.msra.mxu0 0.0
    %3657 = vmatprep.subr.mxu0 0.0
    %3658 = vmatpush1.msra.mxu0 0.0
    %3659 = vmatprep.subr.mxu0 0.0
    %3660 = vmatpush1.msra.mxu0 0.0
    %3661 = vmatprep.subr.mxu0 0.0
    %3662 = vmatpush1.msra.mxu0 0.0
    %3663 = vmatprep.subr.mxu0 0.0
    %3664 = vmatpush1.msra.mxu0 0.0
    %3665 = vmatprep.subr.mxu0 0.0
    %3666 = vmatpush1.msra.mxu0 0.0
    %3667 = vmatprep.subr.mxu0 0.0
    %3668 = vmatpush1.msra.mxu0 0.0
    %3669 = vmatprep.subr.mxu0 0.0
    %3670 = vmatpush1.msra.mxu0 0.0
    %3671 = vmatprep.subr.mxu0 0.0
    %3672 = vmatpush1.msra.mxu0 0.0
    %3673 = vmatprep.subr.mxu0 0.0
    %3674 = vmatpush1.msra.mxu0 0.0
    %3675 = vmatprep.subr.mxu0 0.0
    %3676 = vmatpush1.msra.mxu0 0.0
    %3677 = vmatprep.subr.mxu0 0.0
    %3678 = vmatpush1.msra.mxu0 0.0
    %3679 = vmatprep.mubr.f32.mxu0 0.0
    %3680 = vmatmul.mubr.f32.gmra.mrb[0].mxu0 %v1695
    %v3681 = vpop.f32.mrb[0].mxu0
    %v3682 = vadd.f32 0.0, %v3681
    %v3683 = vpop.f32.mrb[0].mxu0
    %3684 = vmatprep.mubr.f32.mxu0 0.0
    %3685 = vmatmul.mubr.f32.gmra.mrb[0].mxu0 %v1698
    %v3686 = vpop.f32.mrb[0].mxu0
    %v3687 = vadd.f32 0.0, %v3686
    %v3688 = vpop.f32.mrb[0].mxu0
    %3689 = vdwg.mxu0
    %v3690 = vadd.f32 %v3593, %v3682
    %v3691 = vadd.f32 %v3594, %v3687
    %v3692 = vld [vmem:[%s1109] sm:$0xff]
    %v3693 = vld [vmem:[%s1109 + $0x8] sm:$0xff]
    %v3694 = vld [vmem:[%s1109 + $0x10] sm:$0xff]
    %v3695 = vld [vmem:[%s1109 + $0x18] sm:$0xff]
    %3700 = vrot.lane.b32.xlu0 %v3692, 127
    %v3701 = vpop.permute.xlu0 %3700
    %3702 = vrot.lane.b32.xlu0 %v3693, 127
    %v3703 = vpop.permute.xlu0 %3702
    %3704 = vrot.lane.b32.xlu0 %v3694, 127
    %v3705 = vpop.permute.xlu0 %3704
    %3706 = vrot.lane.b32.xlu0 %v3695, 127
    %v3707 = vpop.permute.xlu0 %3706
    %3712 = vmatprep.subr.mxu0 0.0
    %3713 = vmatpush1.msra.mxu0 %v3701
    %3714 = vmatprep.subr.mxu0 0.0
    %3715 = vmatpush1.msra.mxu0 %v3703
    %3716 = vmatprep.subr.mxu0 0.0
    %3717 = vmatpush1.msra.mxu0 %v3705
    %3718 = vmatprep.subr.mxu0 0.0
    %3719 = vmatpush1.msra.mxu0 %v3707
    %3720 = vmatprep.subr.mxu0 0.0
    %3721 = vmatpush1.msra.mxu0 0.0
    %3722 = vmatprep.subr.mxu0 0.0
    %3723 = vmatpush1.msra.mxu0 0.0
    %3724 = vmatprep.subr.mxu0 0.0
    %3725 = vmatpush1.msra.mxu0 0.0
    %3726 = vmatprep.subr.mxu0 0.0
    %3727 = vmatpush1.msra.mxu0 0.0
    %3728 = vmatprep.subr.mxu0 0.0
    %3729 = vmatpush1.msra.mxu0 0.0
    %3730 = vmatprep.subr.mxu0 0.0
    %3731 = vmatpush1.msra.mxu0 0.0
    %3732 = vmatprep.subr.mxu0 0.0
    %3733 = vmatpush1.msra.mxu0 0.0
    %3734 = vmatprep.subr.mxu0 0.0
    %3735 = vmatpush1.msra.mxu0 0.0
    %3736 = vmatprep.subr.mxu0 0.0
    %3737 = vmatpush1.msra.mxu0 0.0
    %3738 = vmatprep.subr.mxu0 0.0
    %3739 = vmatpush1.msra.mxu0 0.0
    %3740 = vmatprep.subr.mxu0 0.0
    %3741 = vmatpush1.msra.mxu0 0.0
    %3742 = vmatprep.subr.mxu0 0.0
    %3743 = vmatpush1.msra.mxu0 0.0
    %3744 = vmatprep.subr.mxu0 0.0
    %3745 = vmatpush1.msra.mxu0 0.0
    %3746 = vmatprep.subr.mxu0 0.0
    %3747 = vmatpush1.msra.mxu0 0.0
    %3748 = vmatprep.subr.mxu0 0.0
    %3749 = vmatpush1.msra.mxu0 0.0
    %3750 = vmatprep.subr.mxu0 0.0
    %3751 = vmatpush1.msra.mxu0 0.0
    %3752 = vmatprep.subr.mxu0 0.0
    %3753 = vmatpush1.msra.mxu0 0.0
    %3754 = vmatprep.subr.mxu0 0.0
    %3755 = vmatpush1.msra.mxu0 0.0
    %3756 = vmatprep.subr.mxu0 0.0
    %3757 = vmatpush1.msra.mxu0 0.0
    %3758 = vmatprep.subr.mxu0 0.0
    %3759 = vmatpush1.msra.mxu0 0.0
    %3760 = vmatprep.subr.mxu0 0.0
    %3761 = vmatpush1.msra.mxu0 0.0
    %3762 = vmatprep.subr.mxu0 0.0
    %3763 = vmatpush1.msra.mxu0 0.0
    %3764 = vmatprep.subr.mxu0 0.0
    %3765 = vmatpush1.msra.mxu0 0.0
    %3766 = vmatprep.subr.mxu0 0.0
    %3767 = vmatpush1.msra.mxu0 0.0
    %3768 = vmatprep.subr.mxu0 0.0
    %3769 = vmatpush1.msra.mxu0 0.0
    %3770 = vmatprep.subr.mxu0 0.0
    %3771 = vmatpush1.msra.mxu0 0.0
    %3772 = vmatprep.subr.mxu0 0.0
    %3773 = vmatpush1.msra.mxu0 0.0
    %3774 = vmatprep.subr.mxu0 0.0
    %3775 = vmatpush1.msra.mxu0 0.0
    %3776 = vmatprep.mubr.f32.mxu0 0.0
    %3777 = vmatmul.mubr.f32.gmra.mrb[0].mxu0 %v1782
    %v3778 = vpop.f32.mrb[0].mxu0
    %v3779 = vadd.f32 0.0, %v3778
    %v3780 = vpop.f32.mrb[0].mxu0
    %3781 = vmatprep.mubr.f32.mxu0 0.0
    %3782 = vmatmul.mubr.f32.gmra.mrb[0].mxu0 %v1785
    %v3783 = vpop.f32.mrb[0].mxu0
    %v3784 = vadd.f32 0.0, %v3783
    %v3785 = vpop.f32.mrb[0].mxu0
    %3786 = vdwg.mxu0
    %v3787 = vadd.f32 %v3690, %v3779
    %v3788 = vadd.f32 %v3691, %v3784
    %3793 = vrot.lane.b32.xlu0 %v3433, 127
    %v3794 = vpop.permute.xlu0 %3793
    %3795 = vrot.lane.b32.xlu0 %v3434, 127
    %v3796 = vpop.permute.xlu0 %3795
    %3797 = vrot.lane.b32.xlu0 %v3435, 127
    %v3798 = vpop.permute.xlu0 %3797
    %3799 = vrot.lane.b32.xlu0 %v3436, 127
    %v3800 = vpop.permute.xlu0 %3799
    %3805 = vmatprep.subr.mxu0 0.0
    %3806 = vmatpush1.msra.mxu0 %v3794
    %3807 = vmatprep.subr.mxu0 0.0
    %3808 = vmatpush1.msra.mxu0 %v3796
    %3809 = vmatprep.subr.mxu0 0.0
    %3810 = vmatpush1.msra.mxu0 %v3798
    %3811 = vmatprep.subr.mxu0 0.0
    %3812 = vmatpush1.msra.mxu0 %v3800
    %3813 = vmatprep.subr.mxu0 0.0
    %3814 = vmatpush1.msra.mxu0 0.0
    %3815 = vmatprep.subr.mxu0 0.0
    %3816 = vmatpush1.msra.mxu0 0.0
    %3817 = vmatprep.subr.mxu0 0.0
    %3818 = vmatpush1.msra.mxu0 0.0
    %3819 = vmatprep.subr.mxu0 0.0
    %3820 = vmatpush1.msra.mxu0 0.0
    %3821 = vmatprep.subr.mxu0 0.0
    %3822 = vmatpush1.msra.mxu0 0.0
    %3823 = vmatprep.subr.mxu0 0.0
    %3824 = vmatpush1.msra.mxu0 0.0
    %3825 = vmatprep.subr.mxu0 0.0
    %3826 = vmatpush1.msra.mxu0 0.0
    %3827 = vmatprep.subr.mxu0 0.0
    %3828 = vmatpush1.msra.mxu0 0.0
    %3829 = vmatprep.subr.mxu0 0.0
    %3830 = vmatpush1.msra.mxu0 0.0
    %3831 = vmatprep.subr.mxu0 0.0
    %3832 = vmatpush1.msra.mxu0 0.0
    %3833 = vmatprep.subr.mxu0 0.0
    %3834 = vmatpush1.msra.mxu0 0.0
    %3835 = vmatprep.subr.mxu0 0.0
    %3836 = vmatpush1.msra.mxu0 0.0
    %3837 = vmatprep.subr.mxu0 0.0
    %3838 = vmatpush1.msra.mxu0 0.0
    %3839 = vmatprep.subr.mxu0 0.0
    %3840 = vmatpush1.msra.mxu0 0.0
    %3841 = vmatprep.subr.mxu0 0.0
    %3842 = vmatpush1.msra.mxu0 0.0
    %3843 = vmatprep.subr.mxu0 0.0
    %3844 = vmatpush1.msra.mxu0 0.0
    %3845 = vmatprep.subr.mxu0 0.0
    %3846 = vmatpush1.msra.mxu0 0.0
    %3847 = vmatprep.subr.mxu0 0.0
    %3848 = vmatpush1.msra.mxu0 0.0
    %3849 = vmatprep.subr.mxu0 0.0
    %3850 = vmatpush1.msra.mxu0 0.0
    %3851 = vmatprep.subr.mxu0 0.0
    %3852 = vmatpush1.msra.mxu0 0.0
    %3853 = vmatprep.subr.mxu0 0.0
    %3854 = vmatpush1.msra.mxu0 0.0
    %3855 = vmatprep.subr.mxu0 0.0
    %3856 = vmatpush1.msra.mxu0 0.0
    %3857 = vmatprep.subr.mxu0 0.0
    %3858 = vmatpush1.msra.mxu0 0.0
    %3859 = vmatprep.subr.mxu0 0.0
    %3860 = vmatpush1.msra.mxu0 0.0
    %3861 = vmatprep.subr.mxu0 0.0
    %3862 = vmatpush1.msra.mxu0 0.0
    %3863 = vmatprep.subr.mxu0 0.0
    %3864 = vmatpush1.msra.mxu0 0.0
    %3865 = vmatprep.subr.mxu0 0.0
    %3866 = vmatpush1.msra.mxu0 0.0
    %3867 = vmatprep.subr.mxu0 0.0
    %3868 = vmatpush1.msra.mxu0 0.0
    %3869 = vmatprep.mubr.f32.mxu0 0.0
    %3870 = vmatmul.mubr.f32.gmra.mrb[0].mxu0 %v1881
    %v3871 = vpop.f32.mrb[0].mxu0
    %v3872 = vadd.f32 0.0, %v3871
    %v3873 = vpop.f32.mrb[0].mxu0
    %3874 = vmatprep.mubr.f32.mxu0 0.0
    %3875 = vmatmul.mubr.f32.gmra.mrb[0].mxu0 %v1884
    %v3876 = vpop.f32.mrb[0].mxu0
    %v3877 = vadd.f32 0.0, %v3876
    %v3878 = vpop.f32.mrb[0].mxu0
    %3879 = vdwg.mxu0
    %v3880 = vadd.f32 %v3787, %v3872
    %v3881 = vadd.f32 %v3788, %v3877
    %3886 = vrot.lane.b32.xlu0 %v3514, 127
    %v3887 = vpop.permute.xlu0 %3886
    %3888 = vrot.lane.b32.xlu0 %v3515, 127
    %v3889 = vpop.permute.xlu0 %3888
    %3890 = vrot.lane.b32.xlu0 %v3516, 127
    %v3891 = vpop.permute.xlu0 %3890
    %3892 = vrot.lane.b32.xlu0 %v3517, 127
    %v3893 = vpop.permute.xlu0 %3892
    %3898 = vmatprep.subr.mxu0 0.0
    %3899 = vmatpush1.msra.mxu0 %v3887
    %3900 = vmatprep.subr.mxu0 0.0
    %3901 = vmatpush1.msra.mxu0 %v3889
    %3902 = vmatprep.subr.mxu0 0.0
    %3903 = vmatpush1.msra.mxu0 %v3891
    %3904 = vmatprep.subr.mxu0 0.0
    %3905 = vmatpush1.msra.mxu0 %v3893
    %3906 = vmatprep.subr.mxu0 0.0
    %3907 = vmatpush1.msra.mxu0 0.0
    %3908 = vmatprep.subr.mxu0 0.0
    %3909 = vmatpush1.msra.mxu0 0.0
    %3910 = vmatprep.subr.mxu0 0.0
    %3911 = vmatpush1.msra.mxu0 0.0
    %3912 = vmatprep.subr.mxu0 0.0
    %3913 = vmatpush1.msra.mxu0 0.0
    %3914 = vmatprep.subr.mxu0 0.0
    %3915 = vmatpush1.msra.mxu0 0.0
    %3916 = vmatprep.subr.mxu0 0.0
    %3917 = vmatpush1.msra.mxu0 0.0
    %3918 = vmatprep.subr.mxu0 0.0
    %3919 = vmatpush1.msra.mxu0 0.0
    %3920 = vmatprep.subr.mxu0 0.0
    %3921 = vmatpush1.msra.mxu0 0.0
    %3922 = vmatprep.subr.mxu0 0.0
    %3923 = vmatpush1.msra.mxu0 0.0
    %3924 = vmatprep.subr.mxu0 0.0
    %3925 = vmatpush1.msra.mxu0 0.0
    %3926 = vmatprep.subr.mxu0 0.0
    %3927 = vmatpush1.msra.mxu0 0.0
    %3928 = vmatprep.subr.mxu0 0.0
    %3929 = vmatpush1.msra.mxu0 0.0
    %3930 = vmatprep.subr.mxu0 0.0
    %3931 = vmatpush1.msra.mxu0 0.0
    %3932 = vmatprep.subr.mxu0 0.0
    %3933 = vmatpush1.msra.mxu0 0.0
    %3934 = vmatprep.subr.mxu0 0.0
    %3935 = vmatpush1.msra.mxu0 0.0
    %3936 = vmatprep.subr.mxu0 0.0
    %3937 = vmatpush1.msra.mxu0 0.0
    %3938 = vmatprep.subr.mxu0 0.0
    %3939 = vmatpush1.msra.mxu0 0.0
    %3940 = vmatprep.subr.mxu0 0.0
    %3941 = vmatpush1.msra.mxu0 0.0
    %3942 = vmatprep.subr.mxu0 0.0
    %3943 = vmatpush1.msra.mxu0 0.0
    %3944 = vmatprep.subr.mxu0 0.0
    %3945 = vmatpush1.msra.mxu0 0.0
    %3946 = vmatprep.subr.mxu0 0.0
    %3947 = vmatpush1.msra.mxu0 0.0
    %3948 = vmatprep.subr.mxu0 0.0
    %3949 = vmatpush1.msra.mxu0 0.0
    %3950 = vmatprep.subr.mxu0 0.0
    %3951 = vmatpush1.msra.mxu0 0.0
    %3952 = vmatprep.subr.mxu0 0.0
    %3953 = vmatpush1.msra.mxu0 0.0
    %3954 = vmatprep.subr.mxu0 0.0
    %3955 = vmatpush1.msra.mxu0 0.0
    %3956 = vmatprep.subr.mxu0 0.0
    %3957 = vmatpush1.msra.mxu0 0.0
    %3958 = vmatprep.subr.mxu0 0.0
    %3959 = vmatpush1.msra.mxu0 0.0
    %3960 = vmatprep.subr.mxu0 0.0
    %3961 = vmatpush1.msra.mxu0 0.0
    %3962 = vmatprep.mubr.f32.mxu0 0.0
    %3963 = vmatmul.mubr.f32.gmra.mrb[0].mxu0 %v1980
    %v3964 = vpop.f32.mrb[0].mxu0
    %v3965 = vadd.f32 0.0, %v3964
    %v3966 = vpop.f32.mrb[0].mxu0
    %3967 = vmatprep.mubr.f32.mxu0 0.0
    %3968 = vmatmul.mubr.f32.gmra.mrb[0].mxu0 %v1983
    %v3969 = vpop.f32.mrb[0].mxu0
    %v3970 = vadd.f32 0.0, %v3969
    %v3971 = vpop.f32.mrb[0].mxu0
    %3972 = vdwg.mxu0
    %v3973 = vadd.f32 %v3880, %v3965
    %v3974 = vadd.f32 %v3881, %v3970
    %3975 = vrot.lane.b32.xlu0 %v3595, 126
    %v3976 = vpop.permute.xlu0 %3975
    %3977 = vrot.lane.b32.xlu0 %v3596, 126
    %v3978 = vpop.permute.xlu0 %3977
    %3979 = vrot.lane.b32.xlu0 %v3597, 126
    %v3980 = vpop.permute.xlu0 %3979
    %3981 = vrot.lane.b32.xlu0 %v3598, 126
    %v3982 = vpop.permute.xlu0 %3981
    %3987 = vmatprep.subr.mxu0 0.0
    %3988 = vmatpush1.msra.mxu0 %v3976
    %3989 = vmatprep.subr.mxu0 0.0
    %3990 = vmatpush1.msra.mxu0 %v3978
    %3991 = vmatprep.subr.mxu0 0.0
    %3992 = vmatpush1.msra.mxu0 %v3980
    %3993 = vmatprep.subr.mxu0 0.0
    %3994 = vmatpush1.msra.mxu0 %v3982
    %3995 = vmatprep.subr.mxu0 0.0
    %3996 = vmatpush1.msra.mxu0 0.0
    %3997 = vmatprep.subr.mxu0 0.0
    %3998 = vmatpush1.msra.mxu0 0.0
    %3999 = vmatprep.subr.mxu0 0.0
    %4000 = vmatpush1.msra.mxu0 0.0
    %4001 = vmatprep.subr.mxu0 0.0
    %4002 = vmatpush1.msra.mxu0 0.0
    %4003 = vmatprep.subr.mxu0 0.0
    %4004 = vmatpush1.msra.mxu0 0.0
    %4005 = vmatprep.subr.mxu0 0.0
    %4006 = vmatpush1.msra.mxu0 0.0
    %4007 = vmatprep.subr.mxu0 0.0
    %4008 = vmatpush1.msra.mxu0 0.0
    %4009 = vmatprep.subr.mxu0 0.0
    %4010 = vmatpush1.msra.mxu0 0.0
    %4011 = vmatprep.subr.mxu0 0.0
    %4012 = vmatpush1.msra.mxu0 0.0
    %4013 = vmatprep.subr.mxu0 0.0
    %4014 = vmatpush1.msra.mxu0 0.0
    %4015 = vmatprep.subr.mxu0 0.0
    %4016 = vmatpush1.msra.mxu0 0.0
    %4017 = vmatprep.subr.mxu0 0.0
    %4018 = vmatpush1.msra.mxu0 0.0
    %4019 = vmatprep.subr.mxu0 0.0
    %4020 = vmatpush1.msra.mxu0 0.0
    %4021 = vmatprep.subr.mxu0 0.0
    %4022 = vmatpush1.msra.mxu0 0.0
    %4023 = vmatprep.subr.mxu0 0.0
    %4024 = vmatpush1.msra.mxu0 0.0
    %4025 = vmatprep.subr.mxu0 0.0
    %4026 = vmatpush1.msra.mxu0 0.0
    %4027 = vmatprep.subr.mxu0 0.0
    %4028 = vmatpush1.msra.mxu0 0.0
    %4029 = vmatprep.subr.mxu0 0.0
    %4030 = vmatpush1.msra.mxu0 0.0
    %4031 = vmatprep.subr.mxu0 0.0
    %4032 = vmatpush1.msra.mxu0 0.0
    %4033 = vmatprep.subr.mxu0 0.0
    %4034 = vmatpush1.msra.mxu0 0.0
    %4035 = vmatprep.subr.mxu0 0.0
    %4036 = vmatpush1.msra.mxu0 0.0
    %4037 = vmatprep.subr.mxu0 0.0
    %4038 = vmatpush1.msra.mxu0 0.0
    %4039 = vmatprep.subr.mxu0 0.0
    %4040 = vmatpush1.msra.mxu0 0.0
    %4041 = vmatprep.subr.mxu0 0.0
    %4042 = vmatpush1.msra.mxu0 0.0
    %4043 = vmatprep.subr.mxu0 0.0
    %4044 = vmatpush1.msra.mxu0 0.0
    %4045 = vmatprep.subr.mxu0 0.0
    %4046 = vmatpush1.msra.mxu0 0.0
    %4047 = vmatprep.subr.mxu0 0.0
    %4048 = vmatpush1.msra.mxu0 0.0
    %4049 = vmatprep.subr.mxu0 0.0
    %4050 = vmatpush1.msra.mxu0 0.0
    %4051 = vmatprep.mubr.f32.mxu0 0.0
    %4052 = vmatmul.mubr.f32.gmra.mrb[0].mxu0 %v2079
    %v4053 = vpop.f32.mrb[0].mxu0
    %v4054 = vadd.f32 0.0, %v4053
    %v4055 = vpop.f32.mrb[0].mxu0
    %4056 = vmatprep.mubr.f32.mxu0 0.0
    %4057 = vmatmul.mubr.f32.gmra.mrb[0].mxu0 %v2082
    %v4058 = vpop.f32.mrb[0].mxu0
    %v4059 = vadd.f32 0.0, %v4058
    %v4060 = vpop.f32.mrb[0].mxu0
    %4061 = vdwg.mxu0
    %v4062 = vadd.f32 %v3973, %v4054
    %v4063 = vadd.f32 %v3974, %v4059
    %v4064 = vmax.f32 %v4062, 0.0
    %v4065 = vmax.f32 %v4063, 0.0
    %4068 = vrot.lane.b32.xlu0 %v4064, 2
    %v4069 = vpop.permute.xlu0 %4068
    %4070 = vrot.lane.b32.xlu0 %v4065, 2
    %v4071 = vpop.permute.xlu0 %4070
    %s4074 = scalar_lea.vmem [#allocation4], 16
    %4075 = vst.msk [vmem:[%s4074] sm:$0xff] %vm3430, %v4069
    %4076 = vst.msk [vmem:[%s4074 + $0x8] sm:$0xff] %vm3430, %v4071
    %4078 = vset.pattern.permute.xlu0 0
    %4079 = vperm.xlu0 %4078, %v187
    %v4080 = vpop.permute.xlu0 %4079
    %v4082 = vld [vmem:[#allocation4] sm:$0xff]
    %v4083 = vld [vmem:[#allocation4 + $0x8] sm:$0xff]
    %vm4084 = vcmask 130048
    %v4086 = vsel %vm4084, %v174, 0
    %4088 = vmatprep.subr.mxu0 0.0
    %4089 = vmatpush1.msra.mxu0 %v4082
    %4090 = vmatprep.subr.mxu0 0.0
    %4091 = vmatpush1.msra.mxu0 %v4083
    %4092 = vmatprep.subr.mxu0 0.0
    %4093 = vmatpush1.msra.mxu0 0.0
    %4094 = vmatprep.subr.mxu0 0.0
    %4095 = vmatpush1.msra.mxu0 0.0
    %4096 = vmatprep.subr.mxu0 0.0
    %4097 = vmatpush1.msra.mxu0 0.0
    %4098 = vmatprep.subr.mxu0 0.0
    %4099 = vmatpush1.msra.mxu0 0.0
    %4100 = vmatprep.subr.mxu0 0.0
    %4101 = vmatpush1.msra.mxu0 0.0
    %4102 = vmatprep.subr.mxu0 0.0
    %4103 = vmatpush1.msra.mxu0 0.0
    %4104 = vmatprep.subr.mxu0 0.0
    %4105 = vmatpush1.msra.mxu0 0.0
    %4106 = vmatprep.subr.mxu0 0.0
    %4107 = vmatpush1.msra.mxu0 0.0
    %4108 = vmatprep.subr.mxu0 0.0
    %4109 = vmatpush1.msra.mxu0 0.0
    %4110 = vmatprep.subr.mxu0 0.0
    %4111 = vmatpush1.msra.mxu0 0.0
    %4112 = vmatprep.subr.mxu0 0.0
    %4113 = vmatpush1.msra.mxu0 0.0
    %4114 = vmatprep.subr.mxu0 0.0
    %4115 = vmatpush1.msra.mxu0 0.0
    %4116 = vmatprep.subr.mxu0 0.0
    %4117 = vmatpush1.msra.mxu0 0.0
    %4118 = vmatprep.subr.mxu0 0.0
    %4119 = vmatpush1.msra.mxu0 0.0
    %4120 = vmatprep.subr.mxu0 0.0
    %4121 = vmatpush1.msra.mxu0 0.0
    %4122 = vmatprep.subr.mxu0 0.0
    %4123 = vmatpush1.msra.mxu0 0.0
    %4124 = vmatprep.subr.mxu0 0.0
    %4125 = vmatpush1.msra.mxu0 0.0
    %4126 = vmatprep.subr.mxu0 0.0
    %4127 = vmatpush1.msra.mxu0 0.0
    %4128 = vmatprep.subr.mxu0 0.0
    %4129 = vmatpush1.msra.mxu0 0.0
    %4130 = vmatprep.subr.mxu0 0.0
    %4131 = vmatpush1.msra.mxu0 0.0
    %4132 = vmatprep.subr.mxu0 0.0
    %4133 = vmatpush1.msra.mxu0 0.0
    %4134 = vmatprep.subr.mxu0 0.0
    %4135 = vmatpush1.msra.mxu0 0.0
    %4136 = vmatprep.subr.mxu0 0.0
    %4137 = vmatpush1.msra.mxu0 0.0
    %4138 = vmatprep.subr.mxu0 0.0
    %4139 = vmatpush1.msra.mxu0 0.0
    %4140 = vmatprep.subr.mxu0 0.0
    %4141 = vmatpush1.msra.mxu0 0.0
    %4142 = vmatprep.subr.mxu0 0.0
    %4143 = vmatpush1.msra.mxu0 0.0
    %4144 = vmatprep.subr.mxu0 0.0
    %4145 = vmatpush1.msra.mxu0 0.0
    %4146 = vmatprep.subr.mxu0 0.0
    %4147 = vmatpush1.msra.mxu0 0.0
    %4148 = vmatprep.subr.mxu0 0.0
    %4149 = vmatpush1.msra.mxu0 0.0
    %4150 = vmatprep.subr.mxu0 0.0
    %4151 = vmatpush1.msra.mxu0 0.0
    %4152 = vmatprep.mubr.f32.mxu0 0.0
    %4153 = vmatmul.mubr.f32.gmra.mrb[0].mxu0 %v4086
    %v4154 = vpop.f32.mrb[0].mxu0
    %v4155 = vadd.f32 0.0, %v4154
    %v4156 = vpop.f32.mrb[0].mxu0
    %4157 = vdwg.mxu0
    %v4158 = vadd.f32 %v4080, %v4155
    %v4159 = vld [vmem:[%s137] sm:$0xff]
    %v4160 = vld [vmem:[%s137 + $0x8] sm:$0xff]
    %v4162 = vsel %vm4084, %v175, 0
    %4164 = vmatprep.subr.mxu0 0.0
    %4165 = vmatpush1.msra.mxu0 %v4159
    %4166 = vmatprep.subr.mxu0 0.0
    %4167 = vmatpush1.msra.mxu0 %v4160
    %4168 = vmatprep.subr.mxu0 0.0
    %4169 = vmatpush1.msra.mxu0 0.0
    %4170 = vmatprep.subr.mxu0 0.0
    %4171 = vmatpush1.msra.mxu0 0.0
    %4172 = vmatprep.subr.mxu0 0.0
    %4173 = vmatpush1.msra.mxu0 0.0
    %4174 = vmatprep.subr.mxu0 0.0
    %4175 = vmatpush1.msra.mxu0 0.0
    %4176 = vmatprep.subr.mxu0 0.0
    %4177 = vmatpush1.msra.mxu0 0.0
    %4178 = vmatprep.subr.mxu0 0.0
    %4179 = vmatpush1.msra.mxu0 0.0
    %4180 = vmatprep.subr.mxu0 0.0
    %4181 = vmatpush1.msra.mxu0 0.0
    %4182 = vmatprep.subr.mxu0 0.0
    %4183 = vmatpush1.msra.mxu0 0.0
    %4184 = vmatprep.subr.mxu0 0.0
    %4185 = vmatpush1.msra.mxu0 0.0
    %4186 = vmatprep.subr.mxu0 0.0
    %4187 = vmatpush1.msra.mxu0 0.0
    %4188 = vmatprep.subr.mxu0 0.0
    %4189 = vmatpush1.msra.mxu0 0.0
    %4190 = vmatprep.subr.mxu0 0.0
    %4191 = vmatpush1.msra.mxu0 0.0
    %4192 = vmatprep.subr.mxu0 0.0
    %4193 = vmatpush1.msra.mxu0 0.0
    %4194 = vmatprep.subr.mxu0 0.0
    %4195 = vmatpush1.msra.mxu0 0.0
    %4196 = vmatprep.subr.mxu0 0.0
    %4197 = vmatpush1.msra.mxu0 0.0
    %4198 = vmatprep.subr.mxu0 0.0
    %4199 = vmatpush1.msra.mxu0 0.0
    %4200 = vmatprep.subr.mxu0 0.0
    %4201 = vmatpush1.msra.mxu0 0.0
    %4202 = vmatprep.subr.mxu0 0.0
    %4203 = vmatpush1.msra.mxu0 0.0
    %4204 = vmatprep.subr.mxu0 0.0
    %4205 = vmatpush1.msra.mxu0 0.0
    %4206 = vmatprep.subr.mxu0 0.0
    %4207 = vmatpush1.msra.mxu0 0.0
    %4208 = vmatprep.subr.mxu0 0.0
    %4209 = vmatpush1.msra.mxu0 0.0
    %4210 = vmatprep.subr.mxu0 0.0
    %4211 = vmatpush1.msra.mxu0 0.0
    %4212 = vmatprep.subr.mxu0 0.0
    %4213 = vmatpush1.msra.mxu0 0.0
    %4214 = vmatprep.subr.mxu0 0.0
    %4215 = vmatpush1.msra.mxu0 0.0
    %4216 = vmatprep.subr.mxu0 0.0
    %4217 = vmatpush1.msra.mxu0 0.0
    %4218 = vmatprep.subr.mxu0 0.0
    %4219 = vmatpush1.msra.mxu0 0.0
    %4220 = vmatprep.subr.mxu0 0.0
    %4221 = vmatpush1.msra.mxu0 0.0
    %4222 = vmatprep.subr.mxu0 0.0
    %4223 = vmatpush1.msra.mxu0 0.0
    %4224 = vmatprep.subr.mxu0 0.0
    %4225 = vmatpush1.msra.mxu0 0.0
    %4226 = vmatprep.subr.mxu0 0.0
    %4227 = vmatpush1.msra.mxu0 0.0
    %4228 = vmatprep.mubr.f32.mxu0 0.0
    %4229 = vmatmul.mubr.f32.gmra.mrb[0].mxu0 %v4162
    %v4230 = vpop.f32.mrb[0].mxu0
    %v4231 = vadd.f32 0.0, %v4230
    %v4232 = vpop.f32.mrb[0].mxu0
    %4233 = vdwg.mxu0
    %v4234 = vadd.f32 %v4158, %v4231
    %4237 = vrot.lane.b32.xlu0 %v4082, 127
    %v4238 = vpop.permute.xlu0 %4237
    %4239 = vrot.lane.b32.xlu0 %v4083, 127
    %v4240 = vpop.permute.xlu0 %4239
    %v4244 = vsel %vm4084, %v176, 0
    %4246 = vmatprep.subr.mxu0 0.0
    %4247 = vmatpush1.msra.mxu0 %v4238
    %4248 = vmatprep.subr.mxu0 0.0
    %4249 = vmatpush1.msra.mxu0 %v4240
    %4250 = vmatprep.subr.mxu0 0.0
    %4251 = vmatpush1.msra.mxu0 0.0
    %4252 = vmatprep.subr.mxu0 0.0
    %4253 = vmatpush1.msra.mxu0 0.0
    %4254 = vmatprep.subr.mxu0 0.0
    %4255 = vmatpush1.msra.mxu0 0.0
    %4256 = vmatprep.subr.mxu0 0.0
    %4257 = vmatpush1.msra.mxu0 0.0
    %4258 = vmatprep.subr.mxu0 0.0
    %4259 = vmatpush1.msra.mxu0 0.0
    %4260 = vmatprep.subr.mxu0 0.0
    %4261 = vmatpush1.msra.mxu0 0.0
    %4262 = vmatprep.subr.mxu0 0.0
    %4263 = vmatpush1.msra.mxu0 0.0
    %4264 = vmatprep.subr.mxu0 0.0
    %4265 = vmatpush1.msra.mxu0 0.0
    %4266 = vmatprep.subr.mxu0 0.0
    %4267 = vmatpush1.msra.mxu0 0.0
    %4268 = vmatprep.subr.mxu0 0.0
    %4269 = vmatpush1.msra.mxu0 0.0
    %4270 = vmatprep.subr.mxu0 0.0
    %4271 = vmatpush1.msra.mxu0 0.0
    %4272 = vmatprep.subr.mxu0 0.0
    %4273 = vmatpush1.msra.mxu0 0.0
    %4274 = vmatprep.subr.mxu0 0.0
    %4275 = vmatpush1.msra.mxu0 0.0
    %4276 = vmatprep.subr.mxu0 0.0
    %4277 = vmatpush1.msra.mxu0 0.0
    %4278 = vmatprep.subr.mxu0 0.0
    %4279 = vmatpush1.msra.mxu0 0.0
    %4280 = vmatprep.subr.mxu0 0.0
    %4281 = vmatpush1.msra.mxu0 0.0
    %4282 = vmatprep.subr.mxu0 0.0
    %4283 = vmatpush1.msra.mxu0 0.0
    %4284 = vmatprep.subr.mxu0 0.0
    %4285 = vmatpush1.msra.mxu0 0.0
    %4286 = vmatprep.subr.mxu0 0.0
    %4287 = vmatpush1.msra.mxu0 0.0
    %4288 = vmatprep.subr.mxu0 0.0
    %4289 = vmatpush1.msra.mxu0 0.0
    %4290 = vmatprep.subr.mxu0 0.0
    %4291 = vmatpush1.msra.mxu0 0.0
    %4292 = vmatprep.subr.mxu0 0.0
    %4293 = vmatpush1.msra.mxu0 0.0
    %4294 = vmatprep.subr.mxu0 0.0
    %4295 = vmatpush1.msra.mxu0 0.0
    %4296 = vmatprep.subr.mxu0 0.0
    %4297 = vmatpush1.msra.mxu0 0.0
    %4298 = vmatprep.subr.mxu0 0.0
    %4299 = vmatpush1.msra.mxu0 0.0
    %4300 = vmatprep.subr.mxu0 0.0
    %4301 = vmatpush1.msra.mxu0 0.0
    %4302 = vmatprep.subr.mxu0 0.0
    %4303 = vmatpush1.msra.mxu0 0.0
    %4304 = vmatprep.subr.mxu0 0.0
    %4305 = vmatpush1.msra.mxu0 0.0
    %4306 = vmatprep.subr.mxu0 0.0
    %4307 = vmatpush1.msra.mxu0 0.0
    %4308 = vmatprep.subr.mxu0 0.0
    %4309 = vmatpush1.msra.mxu0 0.0
    %4310 = vmatprep.mubr.f32.mxu0 0.0
    %4311 = vmatmul.mubr.f32.gmra.mrb[0].mxu0 %v4244
    %v4312 = vpop.f32.mrb[0].mxu0
    %v4313 = vadd.f32 0.0, %v4312
    %v4314 = vpop.f32.mrb[0].mxu0
    %4315 = vdwg.mxu0
    %v4316 = vadd.f32 %v4234, %v4313
    %4319 = vrot.lane.b32.xlu0 %v4159, 127
    %v4320 = vpop.permute.xlu0 %4319
    %4321 = vrot.lane.b32.xlu0 %v4160, 127
    %v4322 = vpop.permute.xlu0 %4321
    %v4326 = vsel %vm4084, %v177, 0
    %4328 = vmatprep.subr.mxu0 0.0
    %4329 = vmatpush1.msra.mxu0 %v4320
    %4330 = vmatprep.subr.mxu0 0.0
    %4331 = vmatpush1.msra.mxu0 %v4322
    %4332 = vmatprep.subr.mxu0 0.0
    %4333 = vmatpush1.msra.mxu0 0.0
    %4334 = vmatprep.subr.mxu0 0.0
    %4335 = vmatpush1.msra.mxu0 0.0
    %4336 = vmatprep.subr.mxu0 0.0
    %4337 = vmatpush1.msra.mxu0 0.0
    %4338 = vmatprep.subr.mxu0 0.0
    %4339 = vmatpush1.msra.mxu0 0.0
    %4340 = vmatprep.subr.mxu0 0.0
    %4341 = vmatpush1.msra.mxu0 0.0
    %4342 = vmatprep.subr.mxu0 0.0
    %4343 = vmatpush1.msra.mxu0 0.0
    %4344 = vmatprep.subr.mxu0 0.0
    %4345 = vmatpush1.msra.mxu0 0.0
    %4346 = vmatprep.subr.mxu0 0.0
    %4347 = vmatpush1.msra.mxu0 0.0
    %4348 = vmatprep.subr.mxu0 0.0
    %4349 = vmatpush1.msra.mxu0 0.0
    %4350 = vmatprep.subr.mxu0 0.0
    %4351 = vmatpush1.msra.mxu0 0.0
    %4352 = vmatprep.subr.mxu0 0.0
    %4353 = vmatpush1.msra.mxu0 0.0
    %4354 = vmatprep.subr.mxu0 0.0
    %4355 = vmatpush1.msra.mxu0 0.0
    %4356 = vmatprep.subr.mxu0 0.0
    %4357 = vmatpush1.msra.mxu0 0.0
    %4358 = vmatprep.subr.mxu0 0.0
    %4359 = vmatpush1.msra.mxu0 0.0
    %4360 = vmatprep.subr.mxu0 0.0
    %4361 = vmatpush1.msra.mxu0 0.0
    %4362 = vmatprep.subr.mxu0 0.0
    %4363 = vmatpush1.msra.mxu0 0.0
    %4364 = vmatprep.subr.mxu0 0.0
    %4365 = vmatpush1.msra.mxu0 0.0
    %4366 = vmatprep.subr.mxu0 0.0
    %4367 = vmatpush1.msra.mxu0 0.0
    %4368 = vmatprep.subr.mxu0 0.0
    %4369 = vmatpush1.msra.mxu0 0.0
    %4370 = vmatprep.subr.mxu0 0.0
    %4371 = vmatpush1.msra.mxu0 0.0
    %4372 = vmatprep.subr.mxu0 0.0
    %4373 = vmatpush1.msra.mxu0 0.0
    %4374 = vmatprep.subr.mxu0 0.0
    %4375 = vmatpush1.msra.mxu0 0.0
    %4376 = vmatprep.subr.mxu0 0.0
    %4377 = vmatpush1.msra.mxu0 0.0
    %4378 = vmatprep.subr.mxu0 0.0
    %4379 = vmatpush1.msra.mxu0 0.0
    %4380 = vmatprep.subr.mxu0 0.0
    %4381 = vmatpush1.msra.mxu0 0.0
    %4382 = vmatprep.subr.mxu0 0.0
    %4383 = vmatpush1.msra.mxu0 0.0
    %4384 = vmatprep.subr.mxu0 0.0
    %4385 = vmatpush1.msra.mxu0 0.0
    %4386 = vmatprep.subr.mxu0 0.0
    %4387 = vmatpush1.msra.mxu0 0.0
    %4388 = vmatprep.subr.mxu0 0.0
    %4389 = vmatpush1.msra.mxu0 0.0
    %4390 = vmatprep.subr.mxu0 0.0
    %4391 = vmatpush1.msra.mxu0 0.0
    %4392 = vmatprep.mubr.f32.mxu0 0.0
    %4393 = vmatmul.mubr.f32.gmra.mrb[0].mxu0 %v4326
    %v4394 = vpop.f32.mrb[0].mxu0
    %v4395 = vadd.f32 0.0, %v4394
    %v4396 = vpop.f32.mrb[0].mxu0
    %4397 = vdwg.mxu0
    %v4398 = vadd.f32 %v4316, %v4395
    %4399 = vrot.lane.b32.xlu0 %v4082, 126
    %v4400 = vpop.permute.xlu0 %4399
    %4401 = vrot.lane.b32.xlu0 %v4083, 126
    %v4402 = vpop.permute.xlu0 %4401
    %v4406 = vsel %vm4084, %v178, 0
    %4408 = vmatprep.subr.mxu0 0.0
    %4409 = vmatpush1.msra.mxu0 %v4400
    %4410 = vmatprep.subr.mxu0 0.0
    %4411 = vmatpush1.msra.mxu0 %v4402
    %4412 = vmatprep.subr.mxu0 0.0
    %4413 = vmatpush1.msra.mxu0 0.0
    %4414 = vmatprep.subr.mxu0 0.0
    %4415 = vmatpush1.msra.mxu0 0.0
    %4416 = vmatprep.subr.mxu0 0.0
    %4417 = vmatpush1.msra.mxu0 0.0
    %4418 = vmatprep.subr.mxu0 0.0
    %4419 = vmatpush1.msra.mxu0 0.0
    %4420 = vmatprep.subr.mxu0 0.0
    %4421 = vmatpush1.msra.mxu0 0.0
    %4422 = vmatprep.subr.mxu0 0.0
    %4423 = vmatpush1.msra.mxu0 0.0
    %4424 = vmatprep.subr.mxu0 0.0
    %4425 = vmatpush1.msra.mxu0 0.0
    %4426 = vmatprep.subr.mxu0 0.0
    %4427 = vmatpush1.msra.mxu0 0.0
    %4428 = vmatprep.subr.mxu0 0.0
    %4429 = vmatpush1.msra.mxu0 0.0
    %4430 = vmatprep.subr.mxu0 0.0
    %4431 = vmatpush1.msra.mxu0 0.0
    %4432 = vmatprep.subr.mxu0 0.0
    %4433 = vmatpush1.msra.mxu0 0.0
    %4434 = vmatprep.subr.mxu0 0.0
    %4435 = vmatpush1.msra.mxu0 0.0
    %4436 = vmatprep.subr.mxu0 0.0
    %4437 = vmatpush1.msra.mxu0 0.0
    %4438 = vmatprep.subr.mxu0 0.0
    %4439 = vmatpush1.msra.mxu0 0.0
    %4440 = vmatprep.subr.mxu0 0.0
    %4441 = vmatpush1.msra.mxu0 0.0
    %4442 = vmatprep.subr.mxu0 0.0
    %4443 = vmatpush1.msra.mxu0 0.0
    %4444 = vmatprep.subr.mxu0 0.0
    %4445 = vmatpush1.msra.mxu0 0.0
    %4446 = vmatprep.subr.mxu0 0.0
    %4447 = vmatpush1.msra.mxu0 0.0
    %4448 = vmatprep.subr.mxu0 0.0
    %4449 = vmatpush1.msra.mxu0 0.0
    %4450 = vmatprep.subr.mxu0 0.0
    %4451 = vmatpush1.msra.mxu0 0.0
    %4452 = vmatprep.subr.mxu0 0.0
    %4453 = vmatpush1.msra.mxu0 0.0
    %4454 = vmatprep.subr.mxu0 0.0
    %4455 = vmatpush1.msra.mxu0 0.0
    %4456 = vmatprep.subr.mxu0 0.0
    %4457 = vmatpush1.msra.mxu0 0.0
    %4458 = vmatprep.subr.mxu0 0.0
    %4459 = vmatpush1.msra.mxu0 0.0
    %4460 = vmatprep.subr.mxu0 0.0
    %4461 = vmatpush1.msra.mxu0 0.0
    %4462 = vmatprep.subr.mxu0 0.0
    %4463 = vmatpush1.msra.mxu0 0.0
    %4464 = vmatprep.subr.mxu0 0.0
    %4465 = vmatpush1.msra.mxu0 0.0
    %4466 = vmatprep.subr.mxu0 0.0
    %4467 = vmatpush1.msra.mxu0 0.0
    %4468 = vmatprep.subr.mxu0 0.0
    %4469 = vmatpush1.msra.mxu0 0.0
    %4470 = vmatprep.subr.mxu0 0.0
    %4471 = vmatpush1.msra.mxu0 0.0
    %4472 = vmatprep.mubr.f32.mxu0 0.0
    %4473 = vmatmul.mubr.f32.gmra.mrb[0].mxu0 %v4406
    %v4474 = vpop.f32.mrb[0].mxu0
    %v4475 = vadd.f32 0.0, %v4474
    %v4476 = vpop.f32.mrb[0].mxu0
    %4477 = vdwg.mxu0
    %v4478 = vadd.f32 %v4398, %v4475
    %4479 = vrot.lane.b32.xlu0 %v4159, 126
    %v4480 = vpop.permute.xlu0 %4479
    %4481 = vrot.lane.b32.xlu0 %v4160, 126
    %v4482 = vpop.permute.xlu0 %4481
    %v4486 = vsel %vm4084, %v179, 0
    %4488 = vmatprep.subr.mxu0 0.0
    %4489 = vmatpush1.msra.mxu0 %v4480
    %4490 = vmatprep.subr.mxu0 0.0
    %4491 = vmatpush1.msra.mxu0 %v4482
    %4492 = vmatprep.subr.mxu0 0.0
    %4493 = vmatpush1.msra.mxu0 0.0
    %4494 = vmatprep.subr.mxu0 0.0
    %4495 = vmatpush1.msra.mxu0 0.0
    %4496 = vmatprep.subr.mxu0 0.0
    %4497 = vmatpush1.msra.mxu0 0.0
    %4498 = vmatprep.subr.mxu0 0.0
    %4499 = vmatpush1.msra.mxu0 0.0
    %4500 = vmatprep.subr.mxu0 0.0
    %4501 = vmatpush1.msra.mxu0 0.0
    %4502 = vmatprep.subr.mxu0 0.0
    %4503 = vmatpush1.msra.mxu0 0.0
    %4504 = vmatprep.subr.mxu0 0.0
    %4505 = vmatpush1.msra.mxu0 0.0
    %4506 = vmatprep.subr.mxu0 0.0
    %4507 = vmatpush1.msra.mxu0 0.0
    %4508 = vmatprep.subr.mxu0 0.0
    %4509 = vmatpush1.msra.mxu0 0.0
    %4510 = vmatprep.subr.mxu0 0.0
    %4511 = vmatpush1.msra.mxu0 0.0
    %4512 = vmatprep.subr.mxu0 0.0
    %4513 = vmatpush1.msra.mxu0 0.0
    %4514 = vmatprep.subr.mxu0 0.0
    %4515 = vmatpush1.msra.mxu0 0.0
    %4516 = vmatprep.subr.mxu0 0.0
    %4517 = vmatpush1.msra.mxu0 0.0
    %4518 = vmatprep.subr.mxu0 0.0
    %4519 = vmatpush1.msra.mxu0 0.0
    %4520 = vmatprep.subr.mxu0 0.0
    %4521 = vmatpush1.msra.mxu0 0.0
    %4522 = vmatprep.subr.mxu0 0.0
    %4523 = vmatpush1.msra.mxu0 0.0
    %4524 = vmatprep.subr.mxu0 0.0
    %4525 = vmatpush1.msra.mxu0 0.0
    %4526 = vmatprep.subr.mxu0 0.0
    %4527 = vmatpush1.msra.mxu0 0.0
    %4528 = vmatprep.subr.mxu0 0.0
    %4529 = vmatpush1.msra.mxu0 0.0
    %4530 = vmatprep.subr.mxu0 0.0
    %4531 = vmatpush1.msra.mxu0 0.0
    %4532 = vmatprep.subr.mxu0 0.0
    %4533 = vmatpush1.msra.mxu0 0.0
    %4534 = vmatprep.subr.mxu0 0.0
    %4535 = vmatpush1.msra.mxu0 0.0
    %4536 = vmatprep.subr.mxu0 0.0
    %4537 = vmatpush1.msra.mxu0 0.0
    %4538 = vmatprep.subr.mxu0 0.0
    %4539 = vmatpush1.msra.mxu0 0.0
    %4540 = vmatprep.subr.mxu0 0.0
    %4541 = vmatpush1.msra.mxu0 0.0
    %4542 = vmatprep.subr.mxu0 0.0
    %4543 = vmatpush1.msra.mxu0 0.0
    %4544 = vmatprep.subr.mxu0 0.0
    %4545 = vmatpush1.msra.mxu0 0.0
    %4546 = vmatprep.subr.mxu0 0.0
    %4547 = vmatpush1.msra.mxu0 0.0
    %4548 = vmatprep.subr.mxu0 0.0
    %4549 = vmatpush1.msra.mxu0 0.0
    %4550 = vmatprep.subr.mxu0 0.0
    %4551 = vmatpush1.msra.mxu0 0.0
    %4552 = vmatprep.mubr.f32.mxu0 0.0
    %4553 = vmatmul.mubr.f32.gmra.mrb[0].mxu0 %v4486
    %v4554 = vpop.f32.mrb[0].mxu0
    %v4555 = vadd.f32 0.0, %v4554
    %v4556 = vpop.f32.mrb[0].mxu0
    %4557 = vdwg.mxu0
    %v4558 = vadd.f32 %v4478, %v4555
    %4559 = vrot.lane.b32.xlu0 %v4082, 125
    %v4560 = vpop.permute.xlu0 %4559
    %4561 = vrot.lane.b32.xlu0 %v4083, 125
    %v4562 = vpop.permute.xlu0 %4561
    %v4566 = vsel %vm4084, %v180, 0
    %4568 = vmatprep.subr.mxu0 0.0
    %4569 = vmatpush1.msra.mxu0 %v4560
    %4570 = vmatprep.subr.mxu0 0.0
    %4571 = vmatpush1.msra.mxu0 %v4562
    %4572 = vmatprep.subr.mxu0 0.0
    %4573 = vmatpush1.msra.mxu0 0.0
    %4574 = vmatprep.subr.mxu0 0.0
    %4575 = vmatpush1.msra.mxu0 0.0
    %4576 = vmatprep.subr.mxu0 0.0
    %4577 = vmatpush1.msra.mxu0 0.0
    %4578 = vmatprep.subr.mxu0 0.0
    %4579 = vmatpush1.msra.mxu0 0.0
    %4580 = vmatprep.subr.mxu0 0.0
    %4581 = vmatpush1.msra.mxu0 0.0
    %4582 = vmatprep.subr.mxu0 0.0
    %4583 = vmatpush1.msra.mxu0 0.0
    %4584 = vmatprep.subr.mxu0 0.0
    %4585 = vmatpush1.msra.mxu0 0.0
    %4586 = vmatprep.subr.mxu0 0.0
    %4587 = vmatpush1.msra.mxu0 0.0
    %4588 = vmatprep.subr.mxu0 0.0
    %4589 = vmatpush1.msra.mxu0 0.0
    %4590 = vmatprep.subr.mxu0 0.0
    %4591 = vmatpush1.msra.mxu0 0.0
    %4592 = vmatprep.subr.mxu0 0.0
    %4593 = vmatpush1.msra.mxu0 0.0
    %4594 = vmatprep.subr.mxu0 0.0
    %4595 = vmatpush1.msra.mxu0 0.0
    %4596 = vmatprep.subr.mxu0 0.0
    %4597 = vmatpush1.msra.mxu0 0.0
    %4598 = vmatprep.subr.mxu0 0.0
    %4599 = vmatpush1.msra.mxu0 0.0
    %4600 = vmatprep.subr.mxu0 0.0
    %4601 = vmatpush1.msra.mxu0 0.0
    %4602 = vmatprep.subr.mxu0 0.0
    %4603 = vmatpush1.msra.mxu0 0.0
    %4604 = vmatprep.subr.mxu0 0.0
    %4605 = vmatpush1.msra.mxu0 0.0
    %4606 = vmatprep.subr.mxu0 0.0
    %4607 = vmatpush1.msra.mxu0 0.0
    %4608 = vmatprep.subr.mxu0 0.0
    %4609 = vmatpush1.msra.mxu0 0.0
    %4610 = vmatprep.subr.mxu0 0.0
    %4611 = vmatpush1.msra.mxu0 0.0
    %4612 = vmatprep.subr.mxu0 0.0
    %4613 = vmatpush1.msra.mxu0 0.0
    %4614 = vmatprep.subr.mxu0 0.0
    %4615 = vmatpush1.msra.mxu0 0.0
    %4616 = vmatprep.subr.mxu0 0.0
    %4617 = vmatpush1.msra.mxu0 0.0
    %4618 = vmatprep.subr.mxu0 0.0
    %4619 = vmatpush1.msra.mxu0 0.0
    %4620 = vmatprep.subr.mxu0 0.0
    %4621 = vmatpush1.msra.mxu0 0.0
    %4622 = vmatprep.subr.mxu0 0.0
    %4623 = vmatpush1.msra.mxu0 0.0
    %4624 = vmatprep.subr.mxu0 0.0
    %4625 = vmatpush1.msra.mxu0 0.0
    %4626 = vmatprep.subr.mxu0 0.0
    %4627 = vmatpush1.msra.mxu0 0.0
    %4628 = vmatprep.subr.mxu0 0.0
    %4629 = vmatpush1.msra.mxu0 0.0
    %4630 = vmatprep.subr.mxu0 0.0
    %4631 = vmatpush1.msra.mxu0 0.0
    %4632 = vmatprep.mubr.f32.mxu0 0.0
    %4633 = vmatmul.mubr.f32.gmra.mrb[0].mxu0 %v4566
    %v4634 = vpop.f32.mrb[0].mxu0
    %v4635 = vadd.f32 0.0, %v4634
    %v4636 = vpop.f32.mrb[0].mxu0
    %4637 = vdwg.mxu0
    %v4638 = vadd.f32 %v4558, %v4635
    %v4639 = vmax.f32 %v4638, 0.0
    %4640 = vst.msk [vmem:[%s7] sm:$0xff] %vm146, %v4639
    %v4641 = vld [vmem:[%s4074] sm:$0xff]
    %v4642 = vld [vmem:[%s4074 + $0x8] sm:$0xff]
    %4643 = vmatprep.subr.mxu0 0.0
    %4644 = vmatpush1.msra.mxu0 %v4641
    %4645 = vmatprep.subr.mxu0 0.0
    %4646 = vmatpush1.msra.mxu0 %v4642
    %4647 = vmatprep.subr.mxu0 0.0
    %4648 = vmatpush1.msra.mxu0 0.0
    %4649 = vmatprep.subr.mxu0 0.0
    %4650 = vmatpush1.msra.mxu0 0.0
    %4651 = vmatprep.subr.mxu0 0.0
    %4652 = vmatpush1.msra.mxu0 0.0
    %4653 = vmatprep.subr.mxu0 0.0
    %4654 = vmatpush1.msra.mxu0 0.0
    %4655 = vmatprep.subr.mxu0 0.0
    %4656 = vmatpush1.msra.mxu0 0.0
    %4657 = vmatprep.subr.mxu0 0.0
    %4658 = vmatpush1.msra.mxu0 0.0
    %4659 = vmatprep.subr.mxu0 0.0
    %4660 = vmatpush1.msra.mxu0 0.0
    %4661 = vmatprep.subr.mxu0 0.0
    %4662 = vmatpush1.msra.mxu0 0.0
    %4663 = vmatprep.subr.mxu0 0.0
    %4664 = vmatpush1.msra.mxu0 0.0
    %4665 = vmatprep.subr.mxu0 0.0
    %4666 = vmatpush1.msra.mxu0 0.0
    %4667 = vmatprep.subr.mxu0 0.0
    %4668 = vmatpush1.msra.mxu0 0.0
    %4669 = vmatprep.subr.mxu0 0.0
    %4670 = vmatpush1.msra.mxu0 0.0
    %4671 = vmatprep.subr.mxu0 0.0
    %4672 = vmatpush1.msra.mxu0 0.0
    %4673 = vmatprep.subr.mxu0 0.0
    %4674 = vmatpush1.msra.mxu0 0.0
    %4675 = vmatprep.subr.mxu0 0.0
    %4676 = vmatpush1.msra.mxu0 0.0
    %4677 = vmatprep.subr.mxu0 0.0
    %4678 = vmatpush1.msra.mxu0 0.0
    %4679 = vmatprep.subr.mxu0 0.0
    %4680 = vmatpush1.msra.mxu0 0.0
    %4681 = vmatprep.subr.mxu0 0.0
    %4682 = vmatpush1.msra.mxu0 0.0
    %4683 = vmatprep.subr.mxu0 0.0
    %4684 = vmatpush1.msra.mxu0 0.0
    %4685 = vmatprep.subr.mxu0 0.0
    %4686 = vmatpush1.msra.mxu0 0.0
    %4687 = vmatprep.subr.mxu0 0.0
    %4688 = vmatpush1.msra.mxu0 0.0
    %4689 = vmatprep.subr.mxu0 0.0
    %4690 = vmatpush1.msra.mxu0 0.0
    %4691 = vmatprep.subr.mxu0 0.0
    %4692 = vmatpush1.msra.mxu0 0.0
    %4693 = vmatprep.subr.mxu0 0.0
    %4694 = vmatpush1.msra.mxu0 0.0
    %4695 = vmatprep.subr.mxu0 0.0
    %4696 = vmatpush1.msra.mxu0 0.0
    %4697 = vmatprep.subr.mxu0 0.0
    %4698 = vmatpush1.msra.mxu0 0.0
    %4699 = vmatprep.subr.mxu0 0.0
    %4700 = vmatpush1.msra.mxu0 0.0
    %4701 = vmatprep.subr.mxu0 0.0
    %4702 = vmatpush1.msra.mxu0 0.0
    %4703 = vmatprep.subr.mxu0 0.0
    %4704 = vmatpush1.msra.mxu0 0.0
    %4705 = vmatprep.subr.mxu0 0.0
    %4706 = vmatpush1.msra.mxu0 0.0
    %4707 = vmatprep.mubr.f32.mxu0 0.0
    %4708 = vmatmul.mubr.f32.gmra.mrb[0].mxu0 %v4086
    %v4709 = vpop.f32.mrb[0].mxu0
    %v4710 = vadd.f32 0.0, %v4709
    %v4711 = vpop.f32.mrb[0].mxu0
    %4712 = vdwg.mxu0
    %v4713 = vadd.f32 %v4080, %v4710
    %v4714 = vld [vmem:[%s2786] sm:$0xff]
    %v4715 = vld [vmem:[%s2786 + $0x8] sm:$0xff]
    %4716 = vmatprep.subr.mxu0 0.0
    %4717 = vmatpush1.msra.mxu0 %v4714
    %4718 = vmatprep.subr.mxu0 0.0
    %4719 = vmatpush1.msra.mxu0 %v4715
    %4720 = vmatprep.subr.mxu0 0.0
    %4721 = vmatpush1.msra.mxu0 0.0
    %4722 = vmatprep.subr.mxu0 0.0
    %4723 = vmatpush1.msra.mxu0 0.0
    %4724 = vmatprep.subr.mxu0 0.0
    %4725 = vmatpush1.msra.mxu0 0.0
    %4726 = vmatprep.subr.mxu0 0.0
    %4727 = vmatpush1.msra.mxu0 0.0
    %4728 = vmatprep.subr.mxu0 0.0
    %4729 = vmatpush1.msra.mxu0 0.0
    %4730 = vmatprep.subr.mxu0 0.0
    %4731 = vmatpush1.msra.mxu0 0.0
    %4732 = vmatprep.subr.mxu0 0.0
    %4733 = vmatpush1.msra.mxu0 0.0
    %4734 = vmatprep.subr.mxu0 0.0
    %4735 = vmatpush1.msra.mxu0 0.0
    %4736 = vmatprep.subr.mxu0 0.0
    %4737 = vmatpush1.msra.mxu0 0.0
    %4738 = vmatprep.subr.mxu0 0.0
    %4739 = vmatpush1.msra.mxu0 0.0
    %4740 = vmatprep.subr.mxu0 0.0
    %4741 = vmatpush1.msra.mxu0 0.0
    %4742 = vmatprep.subr.mxu0 0.0
    %4743 = vmatpush1.msra.mxu0 0.0
    %4744 = vmatprep.subr.mxu0 0.0
    %4745 = vmatpush1.msra.mxu0 0.0
    %4746 = vmatprep.subr.mxu0 0.0
    %4747 = vmatpush1.msra.mxu0 0.0
    %4748 = vmatprep.subr.mxu0 0.0
    %4749 = vmatpush1.msra.mxu0 0.0
    %4750 = vmatprep.subr.mxu0 0.0
    %4751 = vmatpush1.msra.mxu0 0.0
    %4752 = vmatprep.subr.mxu0 0.0
    %4753 = vmatpush1.msra.mxu0 0.0
    %4754 = vmatprep.subr.mxu0 0.0
    %4755 = vmatpush1.msra.mxu0 0.0
    %4756 = vmatprep.subr.mxu0 0.0
    %4757 = vmatpush1.msra.mxu0 0.0
    %4758 = vmatprep.subr.mxu0 0.0
    %4759 = vmatpush1.msra.mxu0 0.0
    %4760 = vmatprep.subr.mxu0 0.0
    %4761 = vmatpush1.msra.mxu0 0.0
    %4762 = vmatprep.subr.mxu0 0.0
    %4763 = vmatpush1.msra.mxu0 0.0
    %4764 = vmatprep.subr.mxu0 0.0
    %4765 = vmatpush1.msra.mxu0 0.0
    %4766 = vmatprep.subr.mxu0 0.0
    %4767 = vmatpush1.msra.mxu0 0.0
    %4768 = vmatprep.subr.mxu0 0.0
    %4769 = vmatpush1.msra.mxu0 0.0
    %4770 = vmatprep.subr.mxu0 0.0
    %4771 = vmatpush1.msra.mxu0 0.0
    %4772 = vmatprep.subr.mxu0 0.0
    %4773 = vmatpush1.msra.mxu0 0.0
    %4774 = vmatprep.subr.mxu0 0.0
    %4775 = vmatpush1.msra.mxu0 0.0
    %4776 = vmatprep.subr.mxu0 0.0
    %4777 = vmatpush1.msra.mxu0 0.0
    %4778 = vmatprep.subr.mxu0 0.0
    %4779 = vmatpush1.msra.mxu0 0.0
    %4780 = vmatprep.mubr.f32.mxu0 0.0
    %4781 = vmatmul.mubr.f32.gmra.mrb[0].mxu0 %v4162
    %v4782 = vpop.f32.mrb[0].mxu0
    %v4783 = vadd.f32 0.0, %v4782
    %v4784 = vpop.f32.mrb[0].mxu0
    %4785 = vdwg.mxu0
    %v4786 = vadd.f32 %v4713, %v4783
    %4789 = vrot.lane.b32.xlu0 %v4641, 127
    %v4790 = vpop.permute.xlu0 %4789
    %4791 = vrot.lane.b32.xlu0 %v4642, 127
    %v4792 = vpop.permute.xlu0 %4791
    %4795 = vmatprep.subr.mxu0 0.0
    %4796 = vmatpush1.msra.mxu0 %v4790
    %4797 = vmatprep.subr.mxu0 0.0
    %4798 = vmatpush1.msra.mxu0 %v4792
    %4799 = vmatprep.subr.mxu0 0.0
    %4800 = vmatpush1.msra.mxu0 0.0
    %4801 = vmatprep.subr.mxu0 0.0
    %4802 = vmatpush1.msra.mxu0 0.0
    %4803 = vmatprep.subr.mxu0 0.0
    %4804 = vmatpush1.msra.mxu0 0.0
    %4805 = vmatprep.subr.mxu0 0.0
    %4806 = vmatpush1.msra.mxu0 0.0
    %4807 = vmatprep.subr.mxu0 0.0
    %4808 = vmatpush1.msra.mxu0 0.0
    %4809 = vmatprep.subr.mxu0 0.0
    %4810 = vmatpush1.msra.mxu0 0.0
    %4811 = vmatprep.subr.mxu0 0.0
    %4812 = vmatpush1.msra.mxu0 0.0
    %4813 = vmatprep.subr.mxu0 0.0
    %4814 = vmatpush1.msra.mxu0 0.0
    %4815 = vmatprep.subr.mxu0 0.0
    %4816 = vmatpush1.msra.mxu0 0.0
    %4817 = vmatprep.subr.mxu0 0.0
    %4818 = vmatpush1.msra.mxu0 0.0
    %4819 = vmatprep.subr.mxu0 0.0
    %4820 = vmatpush1.msra.mxu0 0.0
    %4821 = vmatprep.subr.mxu0 0.0
    %4822 = vmatpush1.msra.mxu0 0.0
    %4823 = vmatprep.subr.mxu0 0.0
    %4824 = vmatpush1.msra.mxu0 0.0
    %4825 = vmatprep.subr.mxu0 0.0
    %4826 = vmatpush1.msra.mxu0 0.0
    %4827 = vmatprep.subr.mxu0 0.0
    %4828 = vmatpush1.msra.mxu0 0.0
    %4829 = vmatprep.subr.mxu0 0.0
    %4830 = vmatpush1.msra.mxu0 0.0
    %4831 = vmatprep.subr.mxu0 0.0
    %4832 = vmatpush1.msra.mxu0 0.0
    %4833 = vmatprep.subr.mxu0 0.0
    %4834 = vmatpush1.msra.mxu0 0.0
    %4835 = vmatprep.subr.mxu0 0.0
    %4836 = vmatpush1.msra.mxu0 0.0
    %4837 = vmatprep.subr.mxu0 0.0
    %4838 = vmatpush1.msra.mxu0 0.0
    %4839 = vmatprep.subr.mxu0 0.0
    %4840 = vmatpush1.msra.mxu0 0.0
    %4841 = vmatprep.subr.mxu0 0.0
    %4842 = vmatpush1.msra.mxu0 0.0
    %4843 = vmatprep.subr.mxu0 0.0
    %4844 = vmatpush1.msra.mxu0 0.0
    %4845 = vmatprep.subr.mxu0 0.0
    %4846 = vmatpush1.msra.mxu0 0.0
    %4847 = vmatprep.subr.mxu0 0.0
    %4848 = vmatpush1.msra.mxu0 0.0
    %4849 = vmatprep.subr.mxu0 0.0
    %4850 = vmatpush1.msra.mxu0 0.0
    %4851 = vmatprep.subr.mxu0 0.0
    %4852 = vmatpush1.msra.mxu0 0.0
    %4853 = vmatprep.subr.mxu0 0.0
    %4854 = vmatpush1.msra.mxu0 0.0
    %4855 = vmatprep.subr.mxu0 0.0
    %4856 = vmatpush1.msra.mxu0 0.0
    %4857 = vmatprep.subr.mxu0 0.0
    %4858 = vmatpush1.msra.mxu0 0.0
    %4859 = vmatprep.mubr.f32.mxu0 0.0
    %4860 = vmatmul.mubr.f32.gmra.mrb[0].mxu0 %v4244
    %v4861 = vpop.f32.mrb[0].mxu0
    %v4862 = vadd.f32 0.0, %v4861
    %v4863 = vpop.f32.mrb[0].mxu0
    %4864 = vdwg.mxu0
    %v4865 = vadd.f32 %v4786, %v4862
    %4868 = vrot.lane.b32.xlu0 %v4714, 127
    %v4869 = vpop.permute.xlu0 %4868
    %4870 = vrot.lane.b32.xlu0 %v4715, 127
    %v4871 = vpop.permute.xlu0 %4870
    %4874 = vmatprep.subr.mxu0 0.0
    %4875 = vmatpush1.msra.mxu0 %v4869
    %4876 = vmatprep.subr.mxu0 0.0
    %4877 = vmatpush1.msra.mxu0 %v4871
    %4878 = vmatprep.subr.mxu0 0.0
    %4879 = vmatpush1.msra.mxu0 0.0
    %4880 = vmatprep.subr.mxu0 0.0
    %4881 = vmatpush1.msra.mxu0 0.0
    %4882 = vmatprep.subr.mxu0 0.0
    %4883 = vmatpush1.msra.mxu0 0.0
    %4884 = vmatprep.subr.mxu0 0.0
    %4885 = vmatpush1.msra.mxu0 0.0
    %4886 = vmatprep.subr.mxu0 0.0
    %4887 = vmatpush1.msra.mxu0 0.0
    %4888 = vmatprep.subr.mxu0 0.0
    %4889 = vmatpush1.msra.mxu0 0.0
    %4890 = vmatprep.subr.mxu0 0.0
    %4891 = vmatpush1.msra.mxu0 0.0
    %4892 = vmatprep.subr.mxu0 0.0
    %4893 = vmatpush1.msra.mxu0 0.0
    %4894 = vmatprep.subr.mxu0 0.0
    %4895 = vmatpush1.msra.mxu0 0.0
    %4896 = vmatprep.subr.mxu0 0.0
    %4897 = vmatpush1.msra.mxu0 0.0
    %4898 = vmatprep.subr.mxu0 0.0
    %4899 = vmatpush1.msra.mxu0 0.0
    %4900 = vmatprep.subr.mxu0 0.0
    %4901 = vmatpush1.msra.mxu0 0.0
    %4902 = vmatprep.subr.mxu0 0.0
    %4903 = vmatpush1.msra.mxu0 0.0
    %4904 = vmatprep.subr.mxu0 0.0
    %4905 = vmatpush1.msra.mxu0 0.0
    %4906 = vmatprep.subr.mxu0 0.0
    %4907 = vmatpush1.msra.mxu0 0.0
    %4908 = vmatprep.subr.mxu0 0.0
    %4909 = vmatpush1.msra.mxu0 0.0
    %4910 = vmatprep.subr.mxu0 0.0
    %4911 = vmatpush1.msra.mxu0 0.0
    %4912 = vmatprep.subr.mxu0 0.0
    %4913 = vmatpush1.msra.mxu0 0.0
    %4914 = vmatprep.subr.mxu0 0.0
    %4915 = vmatpush1.msra.mxu0 0.0
    %4916 = vmatprep.subr.mxu0 0.0
    %4917 = vmatpush1.msra.mxu0 0.0
    %4918 = vmatprep.subr.mxu0 0.0
    %4919 = vmatpush1.msra.mxu0 0.0
    %4920 = vmatprep.subr.mxu0 0.0
    %4921 = vmatpush1.msra.mxu0 0.0
    %4922 = vmatprep.subr.mxu0 0.0
    %4923 = vmatpush1.msra.mxu0 0.0
    %4924 = vmatprep.subr.mxu0 0.0
    %4925 = vmatpush1.msra.mxu0 0.0
    %4926 = vmatprep.subr.mxu0 0.0
    %4927 = vmatpush1.msra.mxu0 0.0
    %4928 = vmatprep.subr.mxu0 0.0
    %4929 = vmatpush1.msra.mxu0 0.0
    %4930 = vmatprep.subr.mxu0 0.0
    %4931 = vmatpush1.msra.mxu0 0.0
    %4932 = vmatprep.subr.mxu0 0.0
    %4933 = vmatpush1.msra.mxu0 0.0
    %4934 = vmatprep.subr.mxu0 0.0
    %4935 = vmatpush1.msra.mxu0 0.0
    %4936 = vmatprep.subr.mxu0 0.0
    %4937 = vmatpush1.msra.mxu0 0.0
    %4938 = vmatprep.mubr.f32.mxu0 0.0
    %4939 = vmatmul.mubr.f32.gmra.mrb[0].mxu0 %v4326
    %v4940 = vpop.f32.mrb[0].mxu0
    %v4941 = vadd.f32 0.0, %v4940
    %v4942 = vpop.f32.mrb[0].mxu0
    %4943 = vdwg.mxu0
    %v4944 = vadd.f32 %v4865, %v4941
    %4945 = vrot.lane.b32.xlu0 %v4641, 126
    %v4946 = vpop.permute.xlu0 %4945
    %4947 = vrot.lane.b32.xlu0 %v4642, 126
    %v4948 = vpop.permute.xlu0 %4947
    %4951 = vmatprep.subr.mxu0 0.0
    %4952 = vmatpush1.msra.mxu0 %v4946
    %4953 = vmatprep.subr.mxu0 0.0
    %4954 = vmatpush1.msra.mxu0 %v4948
    %4955 = vmatprep.subr.mxu0 0.0
    %4956 = vmatpush1.msra.mxu0 0.0
    %4957 = vmatprep.subr.mxu0 0.0
    %4958 = vmatpush1.msra.mxu0 0.0
    %4959 = vmatprep.subr.mxu0 0.0
    %4960 = vmatpush1.msra.mxu0 0.0
    %4961 = vmatprep.subr.mxu0 0.0
    %4962 = vmatpush1.msra.mxu0 0.0
    %4963 = vmatprep.subr.mxu0 0.0
    %4964 = vmatpush1.msra.mxu0 0.0
    %4965 = vmatprep.subr.mxu0 0.0
    %4966 = vmatpush1.msra.mxu0 0.0
    %4967 = vmatprep.subr.mxu0 0.0
    %4968 = vmatpush1.msra.mxu0 0.0
    %4969 = vmatprep.subr.mxu0 0.0
    %4970 = vmatpush1.msra.mxu0 0.0
    %4971 = vmatprep.subr.mxu0 0.0
    %4972 = vmatpush1.msra.mxu0 0.0
    %4973 = vmatprep.subr.mxu0 0.0
    %4974 = vmatpush1.msra.mxu0 0.0
    %4975 = vmatprep.subr.mxu0 0.0
    %4976 = vmatpush1.msra.mxu0 0.0
    %4977 = vmatprep.subr.mxu0 0.0
    %4978 = vmatpush1.msra.mxu0 0.0
    %4979 = vmatprep.subr.mxu0 0.0
    %4980 = vmatpush1.msra.mxu0 0.0
    %4981 = vmatprep.subr.mxu0 0.0
    %4982 = vmatpush1.msra.mxu0 0.0
    %4983 = vmatprep.subr.mxu0 0.0
    %4984 = vmatpush1.msra.mxu0 0.0
    %4985 = vmatprep.subr.mxu0 0.0
    %4986 = vmatpush1.msra.mxu0 0.0
    %4987 = vmatprep.subr.mxu0 0.0
    %4988 = vmatpush1.msra.mxu0 0.0
    %4989 = vmatprep.subr.mxu0 0.0
    %4990 = vmatpush1.msra.mxu0 0.0
    %4991 = vmatprep.subr.mxu0 0.0
    %4992 = vmatpush1.msra.mxu0 0.0
    %4993 = vmatprep.subr.mxu0 0.0
    %4994 = vmatpush1.msra.mxu0 0.0
    %4995 = vmatprep.subr.mxu0 0.0
    %4996 = vmatpush1.msra.mxu0 0.0
    %4997 = vmatprep.subr.mxu0 0.0
    %4998 = vmatpush1.msra.mxu0 0.0
    %4999 = vmatprep.subr.mxu0 0.0
    %5000 = vmatpush1.msra.mxu0 0.0
    %5001 = vmatprep.subr.mxu0 0.0
    %5002 = vmatpush1.msra.mxu0 0.0
    %5003 = vmatprep.subr.mxu0 0.0
    %5004 = vmatpush1.msra.mxu0 0.0
    %5005 = vmatprep.subr.mxu0 0.0
    %5006 = vmatpush1.msra.mxu0 0.0
    %5007 = vmatprep.subr.mxu0 0.0
    %5008 = vmatpush1.msra.mxu0 0.0
    %5009 = vmatprep.subr.mxu0 0.0
    %5010 = vmatpush1.msra.mxu0 0.0
    %5011 = vmatprep.subr.mxu0 0.0
    %5012 = vmatpush1.msra.mxu0 0.0
    %5013 = vmatprep.subr.mxu0 0.0
    %5014 = vmatpush1.msra.mxu0 0.0
    %5015 = vmatprep.mubr.f32.mxu0 0.0
    %5016 = vmatmul.mubr.f32.gmra.mrb[0].mxu0 %v4406
    %v5017 = vpop.f32.mrb[0].mxu0
    %v5018 = vadd.f32 0.0, %v5017
    %v5019 = vpop.f32.mrb[0].mxu0
    %5020 = vdwg.mxu0
    %v5021 = vadd.f32 %v4944, %v5018
    %5022 = vrot.lane.b32.xlu0 %v4714, 126
    %v5023 = vpop.permute.xlu0 %5022
    %5024 = vrot.lane.b32.xlu0 %v4715, 126
    %v5025 = vpop.permute.xlu0 %5024
    %5028 = vmatprep.subr.mxu0 0.0
    %5029 = vmatpush1.msra.mxu0 %v5023
    %5030 = vmatprep.subr.mxu0 0.0
    %5031 = vmatpush1.msra.mxu0 %v5025
    %5032 = vmatprep.subr.mxu0 0.0
    %5033 = vmatpush1.msra.mxu0 0.0
    %5034 = vmatprep.subr.mxu0 0.0
    %5035 = vmatpush1.msra.mxu0 0.0
    %5036 = vmatprep.subr.mxu0 0.0
    %5037 = vmatpush1.msra.mxu0 0.0
    %5038 = vmatprep.subr.mxu0 0.0
    %5039 = vmatpush1.msra.mxu0 0.0
    %5040 = vmatprep.subr.mxu0 0.0
    %5041 = vmatpush1.msra.mxu0 0.0
    %5042 = vmatprep.subr.mxu0 0.0
    %5043 = vmatpush1.msra.mxu0 0.0
    %5044 = vmatprep.subr.mxu0 0.0
    %5045 = vmatpush1.msra.mxu0 0.0
    %5046 = vmatprep.subr.mxu0 0.0
    %5047 = vmatpush1.msra.mxu0 0.0
    %5048 = vmatprep.subr.mxu0 0.0
    %5049 = vmatpush1.msra.mxu0 0.0
    %5050 = vmatprep.subr.mxu0 0.0
    %5051 = vmatpush1.msra.mxu0 0.0
    %5052 = vmatprep.subr.mxu0 0.0
    %5053 = vmatpush1.msra.mxu0 0.0
    %5054 = vmatprep.subr.mxu0 0.0
    %5055 = vmatpush1.msra.mxu0 0.0
    %5056 = vmatprep.subr.mxu0 0.0
    %5057 = vmatpush1.msra.mxu0 0.0
    %5058 = vmatprep.subr.mxu0 0.0
    %5059 = vmatpush1.msra.mxu0 0.0
    %5060 = vmatprep.subr.mxu0 0.0
    %5061 = vmatpush1.msra.mxu0 0.0
    %5062 = vmatprep.subr.mxu0 0.0
    %5063 = vmatpush1.msra.mxu0 0.0
    %5064 = vmatprep.subr.mxu0 0.0
    %5065 = vmatpush1.msra.mxu0 0.0
    %5066 = vmatprep.subr.mxu0 0.0
    %5067 = vmatpush1.msra.mxu0 0.0
    %5068 = vmatprep.subr.mxu0 0.0
    %5069 = vmatpush1.msra.mxu0 0.0
    %5070 = vmatprep.subr.mxu0 0.0
    %5071 = vmatpush1.msra.mxu0 0.0
    %5072 = vmatprep.subr.mxu0 0.0
    %5073 = vmatpush1.msra.mxu0 0.0
    %5074 = vmatprep.subr.mxu0 0.0
    %5075 = vmatpush1.msra.mxu0 0.0
    %5076 = vmatprep.subr.mxu0 0.0
    %5077 = vmatpush1.msra.mxu0 0.0
    %5078 = vmatprep.subr.mxu0 0.0
    %5079 = vmatpush1.msra.mxu0 0.0
    %5080 = vmatprep.subr.mxu0 0.0
    %5081 = vmatpush1.msra.mxu0 0.0
    %5082 = vmatprep.subr.mxu0 0.0
    %5083 = vmatpush1.msra.mxu0 0.0
    %5084 = vmatprep.subr.mxu0 0.0
    %5085 = vmatpush1.msra.mxu0 0.0
    %5086 = vmatprep.subr.mxu0 0.0
    %5087 = vmatpush1.msra.mxu0 0.0
    %5088 = vmatprep.subr.mxu0 0.0
    %5089 = vmatpush1.msra.mxu0 0.0
    %5090 = vmatprep.subr.mxu0 0.0
    %5091 = vmatpush1.msra.mxu0 0.0
    %5092 = vmatprep.mubr.f32.mxu0 0.0
    %5093 = vmatmul.mubr.f32.gmra.mrb[0].mxu0 %v4486
    %v5094 = vpop.f32.mrb[0].mxu0
    %v5095 = vadd.f32 0.0, %v5094
    %v5096 = vpop.f32.mrb[0].mxu0
    %5097 = vdwg.mxu0
    %v5098 = vadd.f32 %v5021, %v5095
    %5099 = vrot.lane.b32.xlu0 %v4641, 125
    %v5100 = vpop.permute.xlu0 %5099
    %5101 = vrot.lane.b32.xlu0 %v4642, 125
    %v5102 = vpop.permute.xlu0 %5101
    %5105 = vmatprep.subr.mxu0 0.0
    %5106 = vmatpush1.msra.mxu0 %v5100
    %5107 = vmatprep.subr.mxu0 0.0
    %5108 = vmatpush1.msra.mxu0 %v5102
    %5109 = vmatprep.subr.mxu0 0.0
    %5110 = vmatpush1.msra.mxu0 0.0
    %5111 = vmatprep.subr.mxu0 0.0
    %5112 = vmatpush1.msra.mxu0 0.0
    %5113 = vmatprep.subr.mxu0 0.0
    %5114 = vmatpush1.msra.mxu0 0.0
    %5115 = vmatprep.subr.mxu0 0.0
    %5116 = vmatpush1.msra.mxu0 0.0
    %5117 = vmatprep.subr.mxu0 0.0
    %5118 = vmatpush1.msra.mxu0 0.0
    %5119 = vmatprep.subr.mxu0 0.0
    %5120 = vmatpush1.msra.mxu0 0.0
    %5121 = vmatprep.subr.mxu0 0.0
    %5122 = vmatpush1.msra.mxu0 0.0
    %5123 = vmatprep.subr.mxu0 0.0
    %5124 = vmatpush1.msra.mxu0 0.0
    %5125 = vmatprep.subr.mxu0 0.0
    %5126 = vmatpush1.msra.mxu0 0.0
    %5127 = vmatprep.subr.mxu0 0.0
    %5128 = vmatpush1.msra.mxu0 0.0
    %5129 = vmatprep.subr.mxu0 0.0
    %5130 = vmatpush1.msra.mxu0 0.0
    %5131 = vmatprep.subr.mxu0 0.0
    %5132 = vmatpush1.msra.mxu0 0.0
    %5133 = vmatprep.subr.mxu0 0.0
    %5134 = vmatpush1.msra.mxu0 0.0
    %5135 = vmatprep.subr.mxu0 0.0
    %5136 = vmatpush1.msra.mxu0 0.0
    %5137 = vmatprep.subr.mxu0 0.0
    %5138 = vmatpush1.msra.mxu0 0.0
    %5139 = vmatprep.subr.mxu0 0.0
    %5140 = vmatpush1.msra.mxu0 0.0
    %5141 = vmatprep.subr.mxu0 0.0
    %5142 = vmatpush1.msra.mxu0 0.0
    %5143 = vmatprep.subr.mxu0 0.0
    %5144 = vmatpush1.msra.mxu0 0.0
    %5145 = vmatprep.subr.mxu0 0.0
    %5146 = vmatpush1.msra.mxu0 0.0
    %5147 = vmatprep.subr.mxu0 0.0
    %5148 = vmatpush1.msra.mxu0 0.0
    %5149 = vmatprep.subr.mxu0 0.0
    %5150 = vmatpush1.msra.mxu0 0.0
    %5151 = vmatprep.subr.mxu0 0.0
    %5152 = vmatpush1.msra.mxu0 0.0
    %5153 = vmatprep.subr.mxu0 0.0
    %5154 = vmatpush1.msra.mxu0 0.0
    %5155 = vmatprep.subr.mxu0 0.0
    %5156 = vmatpush1.msra.mxu0 0.0
    %5157 = vmatprep.subr.mxu0 0.0
    %5158 = vmatpush1.msra.mxu0 0.0
    %5159 = vmatprep.subr.mxu0 0.0
    %5160 = vmatpush1.msra.mxu0 0.0
    %5161 = vmatprep.subr.mxu0 0.0
    %5162 = vmatpush1.msra.mxu0 0.0
    %5163 = vmatprep.subr.mxu0 0.0
    %5164 = vmatpush1.msra.mxu0 0.0
    %5165 = vmatprep.subr.mxu0 0.0
    %5166 = vmatpush1.msra.mxu0 0.0
    %5167 = vmatprep.subr.mxu0 0.0
    %5168 = vmatpush1.msra.mxu0 0.0
    %5169 = vmatprep.mubr.f32.mxu0 0.0
    %5170 = vmatmul.mubr.f32.gmra.mrb[0].mxu0 %v4566
    %v5171 = vpop.f32.mrb[0].mxu0
    %v5172 = vadd.f32 0.0, %v5171
    %v5173 = vpop.f32.mrb[0].mxu0
    %5174 = vdwg.mxu0
    %v5175 = vadd.f32 %v5098, %v5172
    %v5176 = vmax.f32 %v5175, 0.0
    %s5177 = scalar_lea.vmem %s7, 8
    %5178 = vst.msk [vmem:[%s5177] sm:$0xff] %vm146, %v5176
    // Predicated region
    $region34: #{tpu_custom_call.1} parent=1 // pred_check
      _
    $region35: #{tpu_custom_call.1} parent=1 // pred_check_branch
      %5180 = sbr.rel (0) target = $region37
    $region36: #{tpu_custom_call.1} parent=1 // pred_region
      _
    $region37: #{tpu_custom_call.1} parent=1 // pred_fallthru
      _
    // Predicated region
    $region38: #{tpu_custom_call.1} parent=1 // pred_check
      _
    $region39: #{tpu_custom_call.1} parent=1 // pred_check_branch
      %5182 = sbr.rel (0) target = $region41
    $region40: #{tpu_custom_call.1} parent=1 // pred_region
      _
    $region41: #{tpu_custom_call.1} parent=1 // pred_fallthru
      _
    %5183 = vsyncpa [#allocation6], 1

</llo_original>
